<compile_context>
chip_gen: v7x
topology: tpu7x:2x2x1
jax: 0.10.0
libtpu: 0.0.40
codegen_flags: <defaults>
</compile_context>

<pallas_src>
import functools
import numpy as np

import jax
import jax.numpy as jnp
from jax.experimental import pallas as pl
from jax.experimental.pallas import tpu as pltpu


# ----------------------------------------------------------------------------
# Pallas kernel: one MSPA forward pass for a block of Bt batch elements.
# ----------------------------------------------------------------------------
def _mspa_kernel(x_ref, w_ref, bnb_ref, pmask_ref, fc1w_ref, fc1b_ref,
                 fc2w_ref, fc2b_ref, out_ref, pad_ref, patch_ref, pool_ref,
                 *, H, W, C, S, Bt):
    HW = H * W
    f32 = jnp.float32
    bf16 = jnp.bfloat16

    # Zero only the 1-pixel halo each step (perimeter, not area).  The
    # interior is rewritten every scale; doing this per-step (instead of
    # @pl.when(program_id==0)) keeps it correct if grid steps are sharded
    # across multiple TensorCores, and it is still cheap.
    zrow = jnp.zeros((Bt, 1, W + 2, C), bf16)
    zcol = jnp.zeros((Bt, H + 2, 1, C), bf16)
    pad_ref[:, 0:1, :, :] = zrow
    pad_ref[:, H + 1:H + 2, :, :] = zrow
    pad_ref[:, :, 0:1, :] = zcol
    pad_ref[:, :, W + 1:W + 2, :] = zcol

    sp = None                         # Res2Net carry, (Bt, H, W, C) f32
    for i in range(S):
        xi = x_ref[:, :, :, i * C:(i + 1) * C].astype(f32)
        sp = xi if i == 0 else sp + xi

        # Single bf16 cast of the carry into the padded interior.
        pad_ref[:, 1:H + 1, 1:W + 1, :] = sp.astype(bf16)

        # im2col: 9 shifted windows -> persistent (Bt*HW, 9C) bf16 scratch.
        for ky in range(3):
            for kx in range(3):
                t = ky * 3 + kx
                patch_ref[:, t * C:(t + 1) * C] = (
                    pad_ref[:, ky:ky + H, kx:kx + W, :].reshape(Bt * HW, C))

        # 3x3 conv (+ folded BN scale) as ONE matmul, then BN bias.
        # NOTE: the matmul N dim is only C; for small C the kernel is
        # layout/copy bound rather than MXU bound.
        feat = jnp.dot(patch_ref[...], w_ref[i],
                       preferred_element_type=f32) + bnb_ref[i]   # (Bt*HW, C)
        feat4 = feat.reshape(Bt, H, W, C)

        # Unscaled feature -> its output channel slab (rescaled in place later)
        out_ref[:, :, :, i * C:(i + 1) * C] = feat4
        sp = feat4                                                # carry

        # All 5 SPR pools for all Bt batch elements in one mask matmul:
        # rows ordered (pool q, batch b) = q*Bt + b.
        pool_ref[i] = jnp.dot(pmask_ref[...], feat,
                              preferred_element_type=f32)         # (5*Bt, C)

    # ---- SPR MLP, batched over all (scale, batch) rows ----------------------
    P = pool_ref[...]                                             # (S, 5*Bt, C)
    h = None
    for q in range(5):
        pq = P[:, q * Bt:(q + 1) * Bt, :].reshape(S * Bt, C)
        hq = jnp.dot(pq, fc1w_ref[q], preferred_element_type=f32)
        h = hq if h is None else h + hq
    h = jnp.maximum(h + fc1b_ref[...], 0.0)                       # (S*Bt, HID)
    logit = jnp.dot(h, fc2w_ref[...],
                    preferred_element_type=f32) + fc2b_ref[...]   # (S*Bt, C)

    # Numerically-stable sigmoid; reciprocal on the EUP.
    z = jnp.exp(-jnp.abs(logit))
    r = pl.reciprocal(1.0 + z, approx=True)
    sig = jnp.where(logit >= 0.0, r, z * r)                       # (S*Bt, C)

    # Softmax across scales (per batch element, per channel).
    per = [sig[i * Bt:(i + 1) * Bt, :] for i in range(S)]         # (Bt, C) each
    m = per[0]
    for i in range(1, S):
        m = jnp.maximum(m, per[i])
    exps = [jnp.exp(p - m) for p in per]
    den = exps[0]
    for i in range(1, S):
        den = den + exps[i]
    inv = pl.reciprocal(den, approx=True)
    attn = jnp.concatenate([e * inv for e in exps], axis=-1)      # (Bt, S*C)

    # Single vectorized rescale of the whole output block.
    out_ref[...] = (out_ref[...] * attn[:, None, None, :]).astype(out_ref.dtype)


# ----------------------------------------------------------------------------
# Wrapper helpers
# ----------------------------------------------------------------------------
def _make_pool_mask(H, W, Bt):
    """Block-diagonal (5*Bt, Bt*HW) mask: per batch b, rows q*Bt+b give the
    global mean (q=0) and the 2x2 quadrant means (q=1..4)."""
    HW = H * W
    Hh, Wh = H // 2, W // 2
    base = np.zeros((5, HW), np.float32)
    base[0, :] = 1.0 / HW
    q = 1
    for (h0, h1) in [(0, Hh), (Hh, H)]:
        for (w0, w1) in [(0, Wh), (Wh, W)]:
            area = max((h1 - h0) * (w1 - w0), 1)
            for y in range(h0, h1):
                base[q, y * W + w0:y * W + w1] = 1.0 / area
            q += 1
    mask = np.zeros((5 * Bt, Bt * HW), np.float32)
    for b in range(Bt):
        for q in range(5):
            mask[q * Bt + b, b * HW:(b + 1) * HW] = base[q]
    return jnp.asarray(mask)


def _vmem_budget_bytes():
    """~75% of physical VMEM: ~48 MiB on v7x, ~96 MiB on v5e/v6e."""
    try:
        cap = int(pltpu.get_tpu_info().vmem_capacity_bytes)
    except Exception:
        cap = 64 << 20                       # conservative (v7x per-core VMEM)
    return min(int(cap * 0.75), 96 << 20)


def _vmem_footprint(Bt, H, W, S, C, HID):
    HW = H * W
    io_block = Bt * HW * S * C * 4                     # one f32 in/out block
    blocks = 2 * 2 * io_block                          # in + out, double-buffered
    consts = (S * 9 * C * C * 2                        # folded conv weights bf16
              + 5 * Bt * Bt * HW * 4                   # block-diag pool mask
              + S * C * 4                              # bn bias
              + 5 * C * HID * 4 + HID * 4
              + HID * C * 4 + C * 4)
    consts *= 2                                        # default double-buffering
    scratch = (Bt * (H + 2) * (W + 2) * C * 2          # bf16 padded conv input
               + Bt * HW * 9 * C * 2                   # bf16 im2col patches
               + S * 5 * Bt * C * 4)                   # pooled rows
    return blocks + consts + scratch


def _pick_batch_tile(B, H, W, S, C, HID, budget):
    """Largest divisor of B that fits the VMEM budget, keeps the per-step M
    moderate, and leaves >= 2 grid steps (so both v7x TensorCores get work)."""
    HW = H * W
    best = 1
    cap = B if B == 1 else max(B // 2, 1)
    for bt in range(1, cap + 1):
        if B % bt:
            continue
        if bt * HW > 8192:
            continue
        if _vmem_footprint(bt, H, W, S, C, HID) + (6 << 20) <= budget:
            best = bt
    return best


def mspa_forward(x_nchw, params):
    S = int(params["scale"])
    B, Ctot, H, W = x_nchw.shape
    assert Ctot % S == 0
    C = Ctot // S
    HID = params["fc1_b"].shape[-1]
    HW = H * W

    budget = _vmem_budget_bytes()
    Bt = _pick_batch_tile(B, H, W, S, C, HID, budget)
    grid = (B // Bt,)

    x = jnp.transpose(x_nchw, (0, 2, 3, 1)).astype(jnp.float32)        # NHWC

    # Fold BN eval-mode scale into conv weights, flatten to im2col layout
    # (row order ky, kx, cin), cast to bf16 once.
    w_fold = params["w"] * params["bn_scale"][:, None, None, None, :]  # (S,3,3,Ci,Co)
    w_flat = w_fold.reshape(S, 9 * C, C).astype(jnp.bfloat16)

    pmask = _make_pool_mask(H, W, Bt)                                  # (5Bt, Bt*HW)

    foot = _vmem_footprint(Bt, H, W, S, C, HID)
    vmem_limit = int(min(max(foot + (6 << 20), 32 << 20), budget))

    kernel = functools.partial(_mspa_kernel, H=H, W=W, C=C, S=S, Bt=Bt)
    out_nhwc = pl.pallas_call(
        kernel,
        out_shape=jax.ShapeDtypeStruct((B, H, W, S * C), jnp.float32),
        grid=grid,
        in_specs=[
            pl.BlockSpec((Bt, H, W, S * C), lambda g: (g, 0, 0, 0)),
            pl.BlockSpec((S, 9 * C, C), lambda g: (0, 0, 0)),
            pl.BlockSpec((S, 1, C), lambda g: (0, 0, 0)),
            pl.BlockSpec((5 * Bt, Bt * HW), lambda g: (0, 0)),
            pl.BlockSpec((5, C, HID), lambda g: (0, 0, 0)),
            pl.BlockSpec((1, HID), lambda g: (0, 0)),
            pl.BlockSpec((HID, C), lambda g: (0, 0)),
            pl.BlockSpec((1, C), lambda g: (0, 0)),
        ],
        out_specs=pl.BlockSpec((Bt, H, W, S * C), lambda g: (g, 0, 0, 0)),
        scratch_shapes=[
            pltpu.VMEM((Bt, H + 2, W + 2, C), jnp.bfloat16),   # padded conv input
            pltpu.VMEM((Bt * HW, 9 * C), jnp.bfloat16),        # im2col patches
            pltpu.VMEM((S, 5 * Bt, C), jnp.float32),           # SPR pooled rows
        ],
        compiler_params=pltpu.CompilerParams(
            dimension_semantics=("parallel",),
            vmem_limit_bytes=vmem_limit),
    )(x, w_flat, params["bn_bias"], pmask,
      params["fc1_w"], params["fc1_b"], params["fc2_w"], params["fc2_b"])

    return jnp.transpose(out_nhwc, (0, 3, 1, 2))                       # NCHW


# ----------------------------------------------------------------------------
# Pure-JAX reference (same folded-BN / bf16 conv rounding path) for checking.
# ----------------------------------------------------------------------------
def mspa_reference(x_nchw, params):
    S = int(params["scale"])
    B, Ctot, H, W = x_nchw.shape
    C = Ctot // S
    hp = jax.lax.Precision.HIGHEST

    # BN eval mode is an affine map; folding its scale into the conv weights
    # is mathematically identical and matches the kernel's rounding path.
    w_fold = (params["w"] * params["bn_scale"][:, None, None, None, :]
              ).astype(jnp.bfloat16)

    x = jnp.transpose(x_nchw, (0, 2, 3, 1)).astype(jnp.float32)
    feats, attn = [], []
    sp = None
    for i in range(S):
        xi = x[..., i * C:(i + 1) * C]
        sp = xi if i == 0 else sp + xi
        sp = jax.lax.conv_general_dilated(
            sp.astype(jnp.bfloat16), w_fold[i],
            window_strides=(1, 1), padding="SAME",
            dimension_numbers=("NHWC", "HWIO", "NHWC"),
            preferred_element_type=jnp.float32)
        sp = sp + params["bn_bias"][i, 0]
        feats.append(sp)
        Hh, Wh = H // 2, W // 2
        pool1 = jnp.mean(sp, axis=(1, 2))
        q00 = jnp.mean(sp[:, :Hh, :Wh], axis=(1, 2))
        q01 = jnp.mean(sp[:, :Hh, Wh:], axis=(1, 2))
        q10 = jnp.mean(sp[:, Hh:, :Wh], axis=(1, 2))
        q11 = jnp.mean(sp[:, Hh:, Wh:], axis=(1, 2))
        pooled = jnp.stack([pool1, q00, q01, q10, q11], axis=0)        # (5,B,C)
        h = jnp.einsum("qbc,qch->bh", pooled, params["fc1_w"],
                       precision=hp) + params["fc1_b"]
        h = jnp.maximum(h, 0.0)
        logit = jnp.dot(h, params["fc2_w"], precision=hp) + params["fc2_b"]
        attn.append(jax.nn.sigmoid(logit))
    a = jax.nn.softmax(jnp.stack(attn, axis=1), axis=1)                # (B,S,C)
    out = jnp.concatenate(
        [feats[i] * a[:, i][:, None, None, :] for i in range(S)], axis=-1)
    return jnp.transpose(out, (0, 3, 1, 2))


# ----------------------------------------------------------------------------
# Deterministic parameter construction (PyTorch layouts -> kernel layouts)
# ----------------------------------------------------------------------------
def make_params(key, inplanes, scale, reduction=16):
    C, S = inplanes, scale
    HID = max(C // reduction, 1)
    ks = jax.random.split(key, 9)

    # conv3x3 weights, PyTorch (S, Cout, Cin, 3, 3) -> (S, kh, kw, Cin, Cout)
    w_pt = jax.random.normal(ks[0], (S, C, C, 3, 3), jnp.float32) / np.sqrt(9 * C)
    w = jnp.transpose(w_pt, (0, 3, 4, 2, 1))

    # BatchNorm2d params (eval mode, folded running stats)
    gamma = jax.random.uniform(ks[1], (S, C), jnp.float32, 0.8, 1.2)
    beta = 0.1 * jax.random.normal(ks[2], (S, C), jnp.float32)
    r_mean = 0.1 * jax.random.normal(ks[3], (S, C), jnp.float32)
    r_var = jax.random.uniform(ks[4], (S, C), jnp.float32, 0.5, 1.5)
    bn_scale = gamma / jnp.sqrt(r_var + 1e-5)
    bn_bias = beta - r_mean * bn_scale

    # SPR fc1: Conv2d(5C -> HID, 1x1) weight (HID, 5C).  PyTorch input order is
    # [pool1: c] ++ [pool2: C + c*4 + (h*2+w)]; repack to (pool q, C, HID) with
    # q order [pool1, q00, q01, q10, q11].
    fc1_pt = np.asarray(jax.random.normal(ks[5], (HID, 5 * C), jnp.float32)
                        ) / np.sqrt(5 * C)
    fc1_w = np.empty((5, C, HID), np.float32)
    fc1_w[0] = fc1_pt[:, :C].T
    for q in range(4):
        fc1_w[q + 1] = fc1_pt[:, C + np.arange(C) * 4 + q].T
    fc1_b = (0.1 * jax.random.normal(ks[6], (HID,), jnp.float32)).reshape(1, HID)

    # SPR fc2: Conv2d(HID -> C, 1x1) weight (C, HID) -> (HID, C)
    fc2_pt = jax.random.normal(ks[7], (C, HID), jnp.float32) / np.sqrt(HID)
    fc2_w = fc2_pt.T
    fc2_b = (0.1 * jax.random.normal(ks[8], (C,), jnp.float32)).reshape(1, C)

    return {
        "scale": S,
        "w": w,                                    # (S, 3, 3, Cin, Cout) f32
        "bn_scale": bn_scale,                      # (S, C)
        "bn_bias": bn_bias.reshape(S, 1, C),       # (S, 1, C)
        "fc1_w": jnp.asarray(fc1_w), "fc1_b": fc1_b,
        "fc2_w": fc2_w, "fc2_b": fc2_b,
    }


if __name__ == "__main__":
    # input channels = inplanes*scale = 128 (lane-dense S*C for the example)
    B, inplanes, scale, H, W = 2, 32, 4, 8, 8
    key = jax.random.PRNGKey(0)
    kx, kp = jax.random.split(key)
    x = jax.random.normal(kx, (B, inplanes * scale, H, W), jnp.float32)
    params = make_params(kp, inplanes, scale)

    out = jax.block_until_ready(mspa_forward(x, params))
    ref = jax.block_until_ready(mspa_reference(x, params))

    assert out.shape == (B, inplanes * scale, H, W)
    np.testing.assert_allclose(np.asarray(out), np.asarray(ref),
                               rtol=5e-3, atol=5e-3)
    print("KERNEL_OK")
</pallas_src>

<mosaic_0001>
module attributes {stable_mosaic.version = 11 : i64} {
  func.func @_mspa_kernel(%arg0: i32, %arg1: memref<1x8x8x128xf32, #tpu.memory_space<vmem>>, %arg2: memref<4x288x32xbf16, #tpu.memory_space<vmem>>, %arg3: memref<4x1x32xf32, #tpu.memory_space<vmem>>, %arg4: memref<5x64xf32, #tpu.memory_space<vmem>>, %arg5: memref<5x32x2xf32, #tpu.memory_space<vmem>>, %arg6: memref<1x2xf32, #tpu.memory_space<vmem>>, %arg7: memref<2x32xf32, #tpu.memory_space<vmem>>, %arg8: memref<1x32xf32, #tpu.memory_space<vmem>>, %arg9: memref<1x8x8x128xf32, #tpu.memory_space<vmem>>, %arg10: memref<1x10x10x32xbf16, #tpu.memory_space<vmem>>, %arg11: memref<64x288xbf16, #tpu.memory_space<vmem>>, %arg12: memref<4x5x32xf32, #tpu.memory_space<vmem>>) attributes {dimension_semantics = [#tpu.dimension_semantics<parallel>], iteration_bounds = array<i64: 2>, scalar_prefetch = 0 : i64, scratch_operands = 3 : i64, tpu.core_type = #tpu.core_type<tc>, window_params = [{transform_indices = @transform_0, window_bounds = array<i64: 1, 8, 8, 128>}, {pipeline_mode = #tpu.pipeline_mode<synchronous>, transform_indices = @transform_1, window_bounds = array<i64: 4, 288, 32>}, {pipeline_mode = #tpu.pipeline_mode<synchronous>, transform_indices = @transform_2, window_bounds = array<i64: 4, 1, 32>}, {pipeline_mode = #tpu.pipeline_mode<synchronous>, transform_indices = @transform_3, window_bounds = array<i64: 5, 64>}, {pipeline_mode = #tpu.pipeline_mode<synchronous>, transform_indices = @transform_4, window_bounds = array<i64: 5, 32, 2>}, {pipeline_mode = #tpu.pipeline_mode<synchronous>, transform_indices = @transform_5, window_bounds = array<i64: 1, 2>}, {pipeline_mode = #tpu.pipeline_mode<synchronous>, transform_indices = @transform_6, window_bounds = array<i64: 2, 32>}, {pipeline_mode = #tpu.pipeline_mode<synchronous>, transform_indices = @transform_7, window_bounds = array<i64: 1, 32>}, {transform_indices = @transform_8, window_bounds = array<i64: 1, 8, 8, 128>}]} {
    %cst = arith.constant 0.000000e+00 : bf16
    %0 = vector.broadcast %cst : bf16 to vector<1x1x10x32xbf16>
    %cst_0 = arith.constant 0.000000e+00 : bf16
    %1 = vector.broadcast %cst_0 : bf16 to vector<1x10x1x32xbf16>
    %c0 = arith.constant 0 : index
    %c0_1 = arith.constant 0 : index
    %c0_2 = arith.constant 0 : index
    %c0_3 = arith.constant 0 : index
    %2 = vector.load %arg10[%c0, %c0_1, %c0_2, %c0_3] : memref<1x10x10x32xbf16, #tpu.memory_space<vmem>>, vector<1x1x10x32xbf16>
    tpu.vector_store %arg10[%c0, %c0_1, %c0_2, %c0_3], %0 {strides = array<i32>} : memref<1x10x10x32xbf16, #tpu.memory_space<vmem>>, vector<1x1x10x32xbf16>,
    %c0_4 = arith.constant 0 : index
    %c9 = arith.constant 9 : index
    %c0_5 = arith.constant 0 : index
    %c0_6 = arith.constant 0 : index
    %3 = vector.load %arg10[%c0_4, %c9, %c0_5, %c0_6] : memref<1x10x10x32xbf16, #tpu.memory_space<vmem>>, vector<1x1x10x32xbf16>
    tpu.vector_store %arg10[%c0_4, %c9, %c0_5, %c0_6], %0 {strides = array<i32>} : memref<1x10x10x32xbf16, #tpu.memory_space<vmem>>, vector<1x1x10x32xbf16>,
    %c0_7 = arith.constant 0 : index
    %c0_8 = arith.constant 0 : index
    %c0_9 = arith.constant 0 : index
    %c0_10 = arith.constant 0 : index
    %4 = vector.load %arg10[%c0_7, %c0_8, %c0_9, %c0_10] : memref<1x10x10x32xbf16, #tpu.memory_space<vmem>>, vector<1x10x1x32xbf16>
    tpu.vector_store %arg10[%c0_7, %c0_8, %c0_9, %c0_10], %1 {strides = array<i32>} : memref<1x10x10x32xbf16, #tpu.memory_space<vmem>>, vector<1x10x1x32xbf16>,
    %c0_11 = arith.constant 0 : index
    %c0_12 = arith.constant 0 : index
    %c9_13 = arith.constant 9 : index
    %c0_14 = arith.constant 0 : index
    %5 = vector.load %arg10[%c0_11, %c0_12, %c9_13, %c0_14] : memref<1x10x10x32xbf16, #tpu.memory_space<vmem>>, vector<1x10x1x32xbf16>
    tpu.vector_store %arg10[%c0_11, %c0_12, %c9_13, %c0_14], %1 {strides = array<i32>} : memref<1x10x10x32xbf16, #tpu.memory_space<vmem>>, vector<1x10x1x32xbf16>,
    %c0_15 = arith.constant 0 : index
    %c0_16 = arith.constant 0 : index
    %c0_17 = arith.constant 0 : index
    %c0_18 = arith.constant 0 : index
    %6 = vector.load %arg1[%c0_15, %c0_16, %c0_17, %c0_18] : memref<1x8x8x128xf32, #tpu.memory_space<vmem>>, vector<1x8x8x32xf32>
    %7 = arith.truncf %6 : vector<1x8x8x32xf32> to vector<1x8x8x32xbf16>
    %c0_19 = arith.constant 0 : index
    %c1 = arith.constant 1 : index
    %c1_20 = arith.constant 1 : index
    %c0_21 = arith.constant 0 : index
    %8 = vector.load %arg10[%c0_19, %c1, %c1_20, %c0_21] : memref<1x10x10x32xbf16, #tpu.memory_space<vmem>>, vector<1x8x8x32xbf16>
    tpu.vector_store %arg10[%c0_19, %c1, %c1_20, %c0_21], %7 {strides = array<i32>} : memref<1x10x10x32xbf16, #tpu.memory_space<vmem>>, vector<1x8x8x32xbf16>,
    %c0_22 = arith.constant 0 : index
    %c0_23 = arith.constant 0 : index
    %c0_24 = arith.constant 0 : index
    %c0_25 = arith.constant 0 : index
    %9 = vector.load %arg10[%c0_22, %c0_23, %c0_24, %c0_25] : memref<1x10x10x32xbf16, #tpu.memory_space<vmem>>, vector<1x8x8x32xbf16>
    %10 = vector.shape_cast %9 : vector<1x8x8x32xbf16> to vector<64x32xbf16>
    %c0_26 = arith.constant 0 : index
    %c0_27 = arith.constant 0 : index
    %11 = vector.load %arg11[%c0_26, %c0_27] : memref<64x288xbf16, #tpu.memory_space<vmem>>, vector<64x32xbf16>
    tpu.vector_store %arg11[%c0_26, %c0_27], %10 {strides = array<i32>} : memref<64x288xbf16, #tpu.memory_space<vmem>>, vector<64x32xbf16>,
    %c0_28 = arith.constant 0 : index
    %c0_29 = arith.constant 0 : index
    %c1_30 = arith.constant 1 : index
    %c0_31 = arith.constant 0 : index
    %12 = vector.load %arg10[%c0_28, %c0_29, %c1_30, %c0_31] : memref<1x10x10x32xbf16, #tpu.memory_space<vmem>>, vector<1x8x8x32xbf16>
    %13 = vector.shape_cast %12 : vector<1x8x8x32xbf16> to vector<64x32xbf16>
    %c0_32 = arith.constant 0 : index
    %c32 = arith.constant 32 : index
    %14 = vector.load %arg11[%c0_32, %c32] : memref<64x288xbf16, #tpu.memory_space<vmem>>, vector<64x32xbf16>
    tpu.vector_store %arg11[%c0_32, %c32], %13 {strides = array<i32>} : memref<64x288xbf16, #tpu.memory_space<vmem>>, vector<64x32xbf16>,
    %c0_33 = arith.constant 0 : index
    %c0_34 = arith.constant 0 : index
    %c2 = arith.constant 2 : index
    %c0_35 = arith.constant 0 : index
    %15 = vector.load %arg10[%c0_33, %c0_34, %c2, %c0_35] : memref<1x10x10x32xbf16, #tpu.memory_space<vmem>>, vector<1x8x8x32xbf16>
    %16 = vector.shape_cast %15 : vector<1x8x8x32xbf16> to vector<64x32xbf16>
    %c0_36 = arith.constant 0 : index
    %c64 = arith.constant 64 : index
    %17 = vector.load %arg11[%c0_36, %c64] : memref<64x288xbf16, #tpu.memory_space<vmem>>, vector<64x32xbf16>
    tpu.vector_store %arg11[%c0_36, %c64], %16 {strides = array<i32>} : memref<64x288xbf16, #tpu.memory_space<vmem>>, vector<64x32xbf16>,
    %c0_37 = arith.constant 0 : index
    %c1_38 = arith.constant 1 : index
    %c0_39 = arith.constant 0 : index
    %c0_40 = arith.constant 0 : index
    %18 = vector.load %arg10[%c0_37, %c1_38, %c0_39, %c0_40] : memref<1x10x10x32xbf16, #tpu.memory_space<vmem>>, vector<1x8x8x32xbf16>
    %19 = vector.shape_cast %18 : vector<1x8x8x32xbf16> to vector<64x32xbf16>
    %c0_41 = arith.constant 0 : index
    %c96 = arith.constant 96 : index
    %20 = vector.load %arg11[%c0_41, %c96] : memref<64x288xbf16, #tpu.memory_space<vmem>>, vector<64x32xbf16>
    tpu.vector_store %arg11[%c0_41, %c96], %19 {strides = array<i32>} : memref<64x288xbf16, #tpu.memory_space<vmem>>, vector<64x32xbf16>,
    %c0_42 = arith.constant 0 : index
    %c1_43 = arith.constant 1 : index
    %c1_44 = arith.constant 1 : index
    %c0_45 = arith.constant 0 : index
    %21 = vector.load %arg10[%c0_42, %c1_43, %c1_44, %c0_45] : memref<1x10x10x32xbf16, #tpu.memory_space<vmem>>, vector<1x8x8x32xbf16>
    %22 = vector.shape_cast %21 : vector<1x8x8x32xbf16> to vector<64x32xbf16>
    %c0_46 = arith.constant 0 : index
    %c128 = arith.constant 128 : index
    %23 = vector.load %arg11[%c0_46, %c128] : memref<64x288xbf16, #tpu.memory_space<vmem>>, vector<64x32xbf16>
    tpu.vector_store %arg11[%c0_46, %c128], %22 {strides = array<i32>} : memref<64x288xbf16, #tpu.memory_space<vmem>>, vector<64x32xbf16>,
    %c0_47 = arith.constant 0 : index
    %c1_48 = arith.constant 1 : index
    %c2_49 = arith.constant 2 : index
    %c0_50 = arith.constant 0 : index
    %24 = vector.load %arg10[%c0_47, %c1_48, %c2_49, %c0_50] : memref<1x10x10x32xbf16, #tpu.memory_space<vmem>>, vector<1x8x8x32xbf16>
    %25 = vector.shape_cast %24 : vector<1x8x8x32xbf16> to vector<64x32xbf16>
    %c0_51 = arith.constant 0 : index
    %c160 = arith.constant 160 : index
    %26 = vector.load %arg11[%c0_51, %c160] : memref<64x288xbf16, #tpu.memory_space<vmem>>, vector<64x32xbf16>
    tpu.vector_store %arg11[%c0_51, %c160], %25 {strides = array<i32>} : memref<64x288xbf16, #tpu.memory_space<vmem>>, vector<64x32xbf16>,
    %c0_52 = arith.constant 0 : index
    %c2_53 = arith.constant 2 : index
    %c0_54 = arith.constant 0 : index
    %c0_55 = arith.constant 0 : index
    %27 = vector.load %arg10[%c0_52, %c2_53, %c0_54, %c0_55] : memref<1x10x10x32xbf16, #tpu.memory_space<vmem>>, vector<1x8x8x32xbf16>
    %28 = vector.shape_cast %27 : vector<1x8x8x32xbf16> to vector<64x32xbf16>
    %c0_56 = arith.constant 0 : index
    %c192 = arith.constant 192 : index
    %29 = vector.load %arg11[%c0_56, %c192] : memref<64x288xbf16, #tpu.memory_space<vmem>>, vector<64x32xbf16>
    tpu.vector_store %arg11[%c0_56, %c192], %28 {strides = array<i32>} : memref<64x288xbf16, #tpu.memory_space<vmem>>, vector<64x32xbf16>,
    %c0_57 = arith.constant 0 : index
    %c2_58 = arith.constant 2 : index
    %c1_59 = arith.constant 1 : index
    %c0_60 = arith.constant 0 : index
    %30 = vector.load %arg10[%c0_57, %c2_58, %c1_59, %c0_60] : memref<1x10x10x32xbf16, #tpu.memory_space<vmem>>, vector<1x8x8x32xbf16>
    %31 = vector.shape_cast %30 : vector<1x8x8x32xbf16> to vector<64x32xbf16>
    %c0_61 = arith.constant 0 : index
    %c224 = arith.constant 224 : index
    %32 = vector.load %arg11[%c0_61, %c224] : memref<64x288xbf16, #tpu.memory_space<vmem>>, vector<64x32xbf16>
    tpu.vector_store %arg11[%c0_61, %c224], %31 {strides = array<i32>} : memref<64x288xbf16, #tpu.memory_space<vmem>>, vector<64x32xbf16>,
    %c0_62 = arith.constant 0 : index
    %c2_63 = arith.constant 2 : index
    %c2_64 = arith.constant 2 : index
    %c0_65 = arith.constant 0 : index
    %33 = vector.load %arg10[%c0_62, %c2_63, %c2_64, %c0_65] : memref<1x10x10x32xbf16, #tpu.memory_space<vmem>>, vector<1x8x8x32xbf16>
    %34 = vector.shape_cast %33 : vector<1x8x8x32xbf16> to vector<64x32xbf16>
    %c0_66 = arith.constant 0 : index
    %c256 = arith.constant 256 : index
    %35 = vector.load %arg11[%c0_66, %c256] : memref<64x288xbf16, #tpu.memory_space<vmem>>, vector<64x32xbf16>
    tpu.vector_store %arg11[%c0_66, %c256], %34 {strides = array<i32>} : memref<64x288xbf16, #tpu.memory_space<vmem>>, vector<64x32xbf16>,
    %c0_67 = arith.constant 0 : index
    %c0_68 = arith.constant 0 : index
    %36 = vector.load %arg11[%c0_67, %c0_68] : memref<64x288xbf16, #tpu.memory_space<vmem>>, vector<64x288xbf16>
    %c0_69 = arith.constant 0 : index
    %c0_70 = arith.constant 0 : index
    %c0_71 = arith.constant 0 : index
    %37 = vector.load %arg2[%c0_69, %c0_70, %c0_71] : memref<4x288x32xbf16, #tpu.memory_space<vmem>>, vector<1x288x32xbf16>
    %38 = vector.shape_cast %37 : vector<1x288x32xbf16> to vector<288x32xbf16>
    %cst_72 = arith.constant dense<0.000000e+00> : vector<64x32xf32>
    %39 = tpu.matmul %36, %38, %cst_72 {dimension_numbers = #tpu.dot_dimension_numbers<[1], [0], [0], [1], [0, 0, 1, 1], [], []>} : vector<64x288xbf16>, vector<288x32xbf16>, vector<64x32xf32> -> vector<64x32xf32>
    %c0_73 = arith.constant 0 : index
    %c0_74 = arith.constant 0 : index
    %c0_75 = arith.constant 0 : index
    %40 = vector.load %arg3[%c0_73, %c0_74, %c0_75] : memref<4x1x32xf32, #tpu.memory_space<vmem>>, vector<1x1x32xf32>
    %41 = vector.shape_cast %40 : vector<1x1x32xf32> to vector<1x32xf32>
    %42 = vector.broadcast %41 : vector<1x32xf32> to vector<64x32xf32>
    %43 = arith.addf %39, %42 : vector<64x32xf32>
    %44 = vector.shape_cast %43 : vector<64x32xf32> to vector<1x8x8x32xf32>
    %c0_76 = arith.constant 0 : index
    %c0_77 = arith.constant 0 : index
    %c0_78 = arith.constant 0 : index
    %c0_79 = arith.constant 0 : index
    %45 = vector.load %arg9[%c0_76, %c0_77, %c0_78, %c0_79] : memref<1x8x8x128xf32, #tpu.memory_space<vmem>>, vector<1x8x8x32xf32>
    tpu.vector_store %arg9[%c0_76, %c0_77, %c0_78, %c0_79], %44 {strides = array<i32>} : memref<1x8x8x128xf32, #tpu.memory_space<vmem>>, vector<1x8x8x32xf32>,
    %c0_80 = arith.constant 0 : index
    %c0_81 = arith.constant 0 : index
    %46 = vector.load %arg4[%c0_80, %c0_81] : memref<5x64xf32, #tpu.memory_space<vmem>>, vector<5x64xf32>
    %cst_82 = arith.constant dense<0.000000e+00> : vector<5x32xf32>
    %47 = tpu.matmul %46, %43, %cst_82 {dimension_numbers = #tpu.dot_dimension_numbers<[1], [0], [0], [1], [0, 0, 1, 1], [], []>} : vector<5x64xf32>, vector<64x32xf32>, vector<5x32xf32> -> vector<5x32xf32>
    %c0_83 = arith.constant 0 : index
    %c0_84 = arith.constant 0 : index
    %c0_85 = arith.constant 0 : index
    %48 = vector.load %arg12[%c0_83, %c0_84, %c0_85] : memref<4x5x32xf32, #tpu.memory_space<vmem>>, vector<1x5x32xf32>
    %49 = vector.shape_cast %48 : vector<1x5x32xf32> to vector<5x32xf32>
    %50 = vector.shape_cast %47 : vector<5x32xf32> to vector<1x5x32xf32>
    tpu.vector_store %arg12[%c0_83, %c0_84, %c0_85], %50 {strides = array<i32>} : memref<4x5x32xf32, #tpu.memory_space<vmem>>, vector<1x5x32xf32>,
    %c0_86 = arith.constant 0 : index
    %c0_87 = arith.constant 0 : index
    %c0_88 = arith.constant 0 : index
    %c32_89 = arith.constant 32 : index
    %51 = vector.load %arg1[%c0_86, %c0_87, %c0_88, %c32_89] : memref<1x8x8x128xf32, #tpu.memory_space<vmem>>, vector<1x8x8x32xf32>
    %52 = arith.addf %44, %51 : vector<1x8x8x32xf32>
    %53 = arith.truncf %52 : vector<1x8x8x32xf32> to vector<1x8x8x32xbf16>
    %c0_90 = arith.constant 0 : index
    %c1_91 = arith.constant 1 : index
    %c1_92 = arith.constant 1 : index
    %c0_93 = arith.constant 0 : index
    %54 = vector.load %arg10[%c0_90, %c1_91, %c1_92, %c0_93] : memref<1x10x10x32xbf16, #tpu.memory_space<vmem>>, vector<1x8x8x32xbf16>
    tpu.vector_store %arg10[%c0_90, %c1_91, %c1_92, %c0_93], %53 {strides = array<i32>} : memref<1x10x10x32xbf16, #tpu.memory_space<vmem>>, vector<1x8x8x32xbf16>,
    %c0_94 = arith.constant 0 : index
    %c0_95 = arith.constant 0 : index
    %c0_96 = arith.constant 0 : index
    %c0_97 = arith.constant 0 : index
    %55 = vector.load %arg10[%c0_94, %c0_95, %c0_96, %c0_97] : memref<1x10x10x32xbf16, #tpu.memory_space<vmem>>, vector<1x8x8x32xbf16>
    %56 = vector.shape_cast %55 : vector<1x8x8x32xbf16> to vector<64x32xbf16>
    %c0_98 = arith.constant 0 : index
    %c0_99 = arith.constant 0 : index
    %57 = vector.load %arg11[%c0_98, %c0_99] : memref<64x288xbf16, #tpu.memory_space<vmem>>, vector<64x32xbf16>
    tpu.vector_store %arg11[%c0_98, %c0_99], %56 {strides = array<i32>} : memref<64x288xbf16, #tpu.memory_space<vmem>>, vector<64x32xbf16>,
    %c0_100 = arith.constant 0 : index
    %c0_101 = arith.constant 0 : index
    %c1_102 = arith.constant 1 : index
    %c0_103 = arith.constant 0 : index
    %58 = vector.load %arg10[%c0_100, %c0_101, %c1_102, %c0_103] : memref<1x10x10x32xbf16, #tpu.memory_space<vmem>>, vector<1x8x8x32xbf16>
    %59 = vector.shape_cast %58 : vector<1x8x8x32xbf16> to vector<64x32xbf16>
    %c0_104 = arith.constant 0 : index
    %c32_105 = arith.constant 32 : index
    %60 = vector.load %arg11[%c0_104, %c32_105] : memref<64x288xbf16, #tpu.memory_space<vmem>>, vector<64x32xbf16>
    tpu.vector_store %arg11[%c0_104, %c32_105], %59 {strides = array<i32>} : memref<64x288xbf16, #tpu.memory_space<vmem>>, vector<64x32xbf16>,
    %c0_106 = arith.constant 0 : index
    %c0_107 = arith.constant 0 : index
    %c2_108 = arith.constant 2 : index
    %c0_109 = arith.constant 0 : index
    %61 = vector.load %arg10[%c0_106, %c0_107, %c2_108, %c0_109] : memref<1x10x10x32xbf16, #tpu.memory_space<vmem>>, vector<1x8x8x32xbf16>
    %62 = vector.shape_cast %61 : vector<1x8x8x32xbf16> to vector<64x32xbf16>
    %c0_110 = arith.constant 0 : index
    %c64_111 = arith.constant 64 : index
    %63 = vector.load %arg11[%c0_110, %c64_111] : memref<64x288xbf16, #tpu.memory_space<vmem>>, vector<64x32xbf16>
    tpu.vector_store %arg11[%c0_110, %c64_111], %62 {strides = array<i32>} : memref<64x288xbf16, #tpu.memory_space<vmem>>, vector<64x32xbf16>,
    %c0_112 = arith.constant 0 : index
    %c1_113 = arith.constant 1 : index
    %c0_114 = arith.constant 0 : index
    %c0_115 = arith.constant 0 : index
    %64 = vector.load %arg10[%c0_112, %c1_113, %c0_114, %c0_115] : memref<1x10x10x32xbf16, #tpu.memory_space<vmem>>, vector<1x8x8x32xbf16>
    %65 = vector.shape_cast %64 : vector<1x8x8x32xbf16> to vector<64x32xbf16>
    %c0_116 = arith.constant 0 : index
    %c96_117 = arith.constant 96 : index
    %66 = vector.load %arg11[%c0_116, %c96_117] : memref<64x288xbf16, #tpu.memory_space<vmem>>, vector<64x32xbf16>
    tpu.vector_store %arg11[%c0_116, %c96_117], %65 {strides = array<i32>} : memref<64x288xbf16, #tpu.memory_space<vmem>>, vector<64x32xbf16>,
    %c0_118 = arith.constant 0 : index
    %c1_119 = arith.constant 1 : index
    %c1_120 = arith.constant 1 : index
    %c0_121 = arith.constant 0 : index
    %67 = vector.load %arg10[%c0_118, %c1_119, %c1_120, %c0_121] : memref<1x10x10x32xbf16, #tpu.memory_space<vmem>>, vector<1x8x8x32xbf16>
    %68 = vector.shape_cast %67 : vector<1x8x8x32xbf16> to vector<64x32xbf16>
    %c0_122 = arith.constant 0 : index
    %c128_123 = arith.constant 128 : index
    %69 = vector.load %arg11[%c0_122, %c128_123] : memref<64x288xbf16, #tpu.memory_space<vmem>>, vector<64x32xbf16>
    tpu.vector_store %arg11[%c0_122, %c128_123], %68 {strides = array<i32>} : memref<64x288xbf16, #tpu.memory_space<vmem>>, vector<64x32xbf16>,
    %c0_124 = arith.constant 0 : index
    %c1_125 = arith.constant 1 : index
    %c2_126 = arith.constant 2 : index
    %c0_127 = arith.constant 0 : index
    %70 = vector.load %arg10[%c0_124, %c1_125, %c2_126, %c0_127] : memref<1x10x10x32xbf16, #tpu.memory_space<vmem>>, vector<1x8x8x32xbf16>
    %71 = vector.shape_cast %70 : vector<1x8x8x32xbf16> to vector<64x32xbf16>
    %c0_128 = arith.constant 0 : index
    %c160_129 = arith.constant 160 : index
    %72 = vector.load %arg11[%c0_128, %c160_129] : memref<64x288xbf16, #tpu.memory_space<vmem>>, vector<64x32xbf16>
    tpu.vector_store %arg11[%c0_128, %c160_129], %71 {strides = array<i32>} : memref<64x288xbf16, #tpu.memory_space<vmem>>, vector<64x32xbf16>,
    %c0_130 = arith.constant 0 : index
    %c2_131 = arith.constant 2 : index
    %c0_132 = arith.constant 0 : index
    %c0_133 = arith.constant 0 : index
    %73 = vector.load %arg10[%c0_130, %c2_131, %c0_132, %c0_133] : memref<1x10x10x32xbf16, #tpu.memory_space<vmem>>, vector<1x8x8x32xbf16>
    %74 = vector.shape_cast %73 : vector<1x8x8x32xbf16> to vector<64x32xbf16>
    %c0_134 = arith.constant 0 : index
    %c192_135 = arith.constant 192 : index
    %75 = vector.load %arg11[%c0_134, %c192_135] : memref<64x288xbf16, #tpu.memory_space<vmem>>, vector<64x32xbf16>
    tpu.vector_store %arg11[%c0_134, %c192_135], %74 {strides = array<i32>} : memref<64x288xbf16, #tpu.memory_space<vmem>>, vector<64x32xbf16>,
    %c0_136 = arith.constant 0 : index
    %c2_137 = arith.constant 2 : index
    %c1_138 = arith.constant 1 : index
    %c0_139 = arith.constant 0 : index
    %76 = vector.load %arg10[%c0_136, %c2_137, %c1_138, %c0_139] : memref<1x10x10x32xbf16, #tpu.memory_space<vmem>>, vector<1x8x8x32xbf16>
    %77 = vector.shape_cast %76 : vector<1x8x8x32xbf16> to vector<64x32xbf16>
    %c0_140 = arith.constant 0 : index
    %c224_141 = arith.constant 224 : index
    %78 = vector.load %arg11[%c0_140, %c224_141] : memref<64x288xbf16, #tpu.memory_space<vmem>>, vector<64x32xbf16>
    tpu.vector_store %arg11[%c0_140, %c224_141], %77 {strides = array<i32>} : memref<64x288xbf16, #tpu.memory_space<vmem>>, vector<64x32xbf16>,
    %c0_142 = arith.constant 0 : index
    %c2_143 = arith.constant 2 : index
    %c2_144 = arith.constant 2 : index
    %c0_145 = arith.constant 0 : index
    %79 = vector.load %arg10[%c0_142, %c2_143, %c2_144, %c0_145] : memref<1x10x10x32xbf16, #tpu.memory_space<vmem>>, vector<1x8x8x32xbf16>
    %80 = vector.shape_cast %79 : vector<1x8x8x32xbf16> to vector<64x32xbf16>
    %c0_146 = arith.constant 0 : index
    %c256_147 = arith.constant 256 : index
    %81 = vector.load %arg11[%c0_146, %c256_147] : memref<64x288xbf16, #tpu.memory_space<vmem>>, vector<64x32xbf16>
    tpu.vector_store %arg11[%c0_146, %c256_147], %80 {strides = array<i32>} : memref<64x288xbf16, #tpu.memory_space<vmem>>, vector<64x32xbf16>,
    %c0_148 = arith.constant 0 : index
    %c0_149 = arith.constant 0 : index
    %82 = vector.load %arg11[%c0_148, %c0_149] : memref<64x288xbf16, #tpu.memory_space<vmem>>, vector<64x288xbf16>
    %c1_150 = arith.constant 1 : index
    %c0_151 = arith.constant 0 : index
    %c0_152 = arith.constant 0 : index
    %83 = vector.load %arg2[%c1_150, %c0_151, %c0_152] : memref<4x288x32xbf16, #tpu.memory_space<vmem>>, vector<1x288x32xbf16>
    %84 = vector.shape_cast %83 : vector<1x288x32xbf16> to vector<288x32xbf16>
    %cst_153 = arith.constant dense<0.000000e+00> : vector<64x32xf32>
    %85 = tpu.matmul %82, %84, %cst_153 {dimension_numbers = #tpu.dot_dimension_numbers<[1], [0], [0], [1], [0, 0, 1, 1], [], []>} : vector<64x288xbf16>, vector<288x32xbf16>, vector<64x32xf32> -> vector<64x32xf32>
    %c1_154 = arith.constant 1 : index
    %c0_155 = arith.constant 0 : index
    %c0_156 = arith.constant 0 : index
    %86 = vector.load %arg3[%c1_154, %c0_155, %c0_156] : memref<4x1x32xf32, #tpu.memory_space<vmem>>, vector<1x1x32xf32>
    %87 = vector.shape_cast %86 : vector<1x1x32xf32> to vector<1x32xf32>
    %88 = vector.broadcast %87 : vector<1x32xf32> to vector<64x32xf32>
    %89 = arith.addf %85, %88 : vector<64x32xf32>
    %90 = vector.shape_cast %89 : vector<64x32xf32> to vector<1x8x8x32xf32>
    %c0_157 = arith.constant 0 : index
    %c0_158 = arith.constant 0 : index
    %c0_159 = arith.constant 0 : index
    %c32_160 = arith.constant 32 : index
    %91 = vector.load %arg9[%c0_157, %c0_158, %c0_159, %c32_160] : memref<1x8x8x128xf32, #tpu.memory_space<vmem>>, vector<1x8x8x32xf32>
    tpu.vector_store %arg9[%c0_157, %c0_158, %c0_159, %c32_160], %90 {strides = array<i32>} : memref<1x8x8x128xf32, #tpu.memory_space<vmem>>, vector<1x8x8x32xf32>,
    %c0_161 = arith.constant 0 : index
    %c0_162 = arith.constant 0 : index
    %92 = vector.load %arg4[%c0_161, %c0_162] : memref<5x64xf32, #tpu.memory_space<vmem>>, vector<5x64xf32>
    %cst_163 = arith.constant dense<0.000000e+00> : vector<5x32xf32>
    %93 = tpu.matmul %92, %89, %cst_163 {dimension_numbers = #tpu.dot_dimension_numbers<[1], [0], [0], [1], [0, 0, 1, 1], [], []>} : vector<5x64xf32>, vector<64x32xf32>, vector<5x32xf32> -> vector<5x32xf32>
    %c1_164 = arith.constant 1 : index
    %c0_165 = arith.constant 0 : index
    %c0_166 = arith.constant 0 : index
    %94 = vector.load %arg12[%c1_164, %c0_165, %c0_166] : memref<4x5x32xf32, #tpu.memory_space<vmem>>, vector<1x5x32xf32>
    %95 = vector.shape_cast %94 : vector<1x5x32xf32> to vector<5x32xf32>
    %96 = vector.shape_cast %93 : vector<5x32xf32> to vector<1x5x32xf32>
    tpu.vector_store %arg12[%c1_164, %c0_165, %c0_166], %96 {strides = array<i32>} : memref<4x5x32xf32, #tpu.memory_space<vmem>>, vector<1x5x32xf32>,
    %c0_167 = arith.constant 0 : index
    %c0_168 = arith.constant 0 : index
    %c0_169 = arith.constant 0 : index
    %c64_170 = arith.constant 64 : index
    %97 = vector.load %arg1[%c0_167, %c0_168, %c0_169, %c64_170] : memref<1x8x8x128xf32, #tpu.memory_space<vmem>>, vector<1x8x8x32xf32>
    %98 = arith.addf %90, %97 : vector<1x8x8x32xf32>
    %99 = arith.truncf %98 : vector<1x8x8x32xf32> to vector<1x8x8x32xbf16>
    %c0_171 = arith.constant 0 : index
    %c1_172 = arith.constant 1 : index
    %c1_173 = arith.constant 1 : index
    %c0_174 = arith.constant 0 : index
    %100 = vector.load %arg10[%c0_171, %c1_172, %c1_173, %c0_174] : memref<1x10x10x32xbf16, #tpu.memory_space<vmem>>, vector<1x8x8x32xbf16>
    tpu.vector_store %arg10[%c0_171, %c1_172, %c1_173, %c0_174], %99 {strides = array<i32>} : memref<1x10x10x32xbf16, #tpu.memory_space<vmem>>, vector<1x8x8x32xbf16>,
    %c0_175 = arith.constant 0 : index
    %c0_176 = arith.constant 0 : index
    %c0_177 = arith.constant 0 : index
    %c0_178 = arith.constant 0 : index
    %101 = vector.load %arg10[%c0_175, %c0_176, %c0_177, %c0_178] : memref<1x10x10x32xbf16, #tpu.memory_space<vmem>>, vector<1x8x8x32xbf16>
    %102 = vector.shape_cast %101 : vector<1x8x8x32xbf16> to vector<64x32xbf16>
    %c0_179 = arith.constant 0 : index
    %c0_180 = arith.constant 0 : index
    %103 = vector.load %arg11[%c0_179, %c0_180] : memref<64x288xbf16, #tpu.memory_space<vmem>>, vector<64x32xbf16>
    tpu.vector_store %arg11[%c0_179, %c0_180], %102 {strides = array<i32>} : memref<64x288xbf16, #tpu.memory_space<vmem>>, vector<64x32xbf16>,
    %c0_181 = arith.constant 0 : index
    %c0_182 = arith.constant 0 : index
    %c1_183 = arith.constant 1 : index
    %c0_184 = arith.constant 0 : index
    %104 = vector.load %arg10[%c0_181, %c0_182, %c1_183, %c0_184] : memref<1x10x10x32xbf16, #tpu.memory_space<vmem>>, vector<1x8x8x32xbf16>
    %105 = vector.shape_cast %104 : vector<1x8x8x32xbf16> to vector<64x32xbf16>
    %c0_185 = arith.constant 0 : index
    %c32_186 = arith.constant 32 : index
    %106 = vector.load %arg11[%c0_185, %c32_186] : memref<64x288xbf16, #tpu.memory_space<vmem>>, vector<64x32xbf16>
    tpu.vector_store %arg11[%c0_185, %c32_186], %105 {strides = array<i32>} : memref<64x288xbf16, #tpu.memory_space<vmem>>, vector<64x32xbf16>,
    %c0_187 = arith.constant 0 : index
    %c0_188 = arith.constant 0 : index
    %c2_189 = arith.constant 2 : index
    %c0_190 = arith.constant 0 : index
    %107 = vector.load %arg10[%c0_187, %c0_188, %c2_189, %c0_190] : memref<1x10x10x32xbf16, #tpu.memory_space<vmem>>, vector<1x8x8x32xbf16>
    %108 = vector.shape_cast %107 : vector<1x8x8x32xbf16> to vector<64x32xbf16>
    %c0_191 = arith.constant 0 : index
    %c64_192 = arith.constant 64 : index
    %109 = vector.load %arg11[%c0_191, %c64_192] : memref<64x288xbf16, #tpu.memory_space<vmem>>, vector<64x32xbf16>
    tpu.vector_store %arg11[%c0_191, %c64_192], %108 {strides = array<i32>} : memref<64x288xbf16, #tpu.memory_space<vmem>>, vector<64x32xbf16>,
    %c0_193 = arith.constant 0 : index
    %c1_194 = arith.constant 1 : index
    %c0_195 = arith.constant 0 : index
    %c0_196 = arith.constant 0 : index
    %110 = vector.load %arg10[%c0_193, %c1_194, %c0_195, %c0_196] : memref<1x10x10x32xbf16, #tpu.memory_space<vmem>>, vector<1x8x8x32xbf16>
    %111 = vector.shape_cast %110 : vector<1x8x8x32xbf16> to vector<64x32xbf16>
    %c0_197 = arith.constant 0 : index
    %c96_198 = arith.constant 96 : index
    %112 = vector.load %arg11[%c0_197, %c96_198] : memref<64x288xbf16, #tpu.memory_space<vmem>>, vector<64x32xbf16>
    tpu.vector_store %arg11[%c0_197, %c96_198], %111 {strides = array<i32>} : memref<64x288xbf16, #tpu.memory_space<vmem>>, vector<64x32xbf16>,
    %c0_199 = arith.constant 0 : index
    %c1_200 = arith.constant 1 : index
    %c1_201 = arith.constant 1 : index
    %c0_202 = arith.constant 0 : index
    %113 = vector.load %arg10[%c0_199, %c1_200, %c1_201, %c0_202] : memref<1x10x10x32xbf16, #tpu.memory_space<vmem>>, vector<1x8x8x32xbf16>
    %114 = vector.shape_cast %113 : vector<1x8x8x32xbf16> to vector<64x32xbf16>
    %c0_203 = arith.constant 0 : index
    %c128_204 = arith.constant 128 : index
    %115 = vector.load %arg11[%c0_203, %c128_204] : memref<64x288xbf16, #tpu.memory_space<vmem>>, vector<64x32xbf16>
    tpu.vector_store %arg11[%c0_203, %c128_204], %114 {strides = array<i32>} : memref<64x288xbf16, #tpu.memory_space<vmem>>, vector<64x32xbf16>,
    %c0_205 = arith.constant 0 : index
    %c1_206 = arith.constant 1 : index
    %c2_207 = arith.constant 2 : index
    %c0_208 = arith.constant 0 : index
    %116 = vector.load %arg10[%c0_205, %c1_206, %c2_207, %c0_208] : memref<1x10x10x32xbf16, #tpu.memory_space<vmem>>, vector<1x8x8x32xbf16>
    %117 = vector.shape_cast %116 : vector<1x8x8x32xbf16> to vector<64x32xbf16>
    %c0_209 = arith.constant 0 : index
    %c160_210 = arith.constant 160 : index
    %118 = vector.load %arg11[%c0_209, %c160_210] : memref<64x288xbf16, #tpu.memory_space<vmem>>, vector<64x32xbf16>
    tpu.vector_store %arg11[%c0_209, %c160_210], %117 {strides = array<i32>} : memref<64x288xbf16, #tpu.memory_space<vmem>>, vector<64x32xbf16>,
    %c0_211 = arith.constant 0 : index
    %c2_212 = arith.constant 2 : index
    %c0_213 = arith.constant 0 : index
    %c0_214 = arith.constant 0 : index
    %119 = vector.load %arg10[%c0_211, %c2_212, %c0_213, %c0_214] : memref<1x10x10x32xbf16, #tpu.memory_space<vmem>>, vector<1x8x8x32xbf16>
    %120 = vector.shape_cast %119 : vector<1x8x8x32xbf16> to vector<64x32xbf16>
    %c0_215 = arith.constant 0 : index
    %c192_216 = arith.constant 192 : index
    %121 = vector.load %arg11[%c0_215, %c192_216] : memref<64x288xbf16, #tpu.memory_space<vmem>>, vector<64x32xbf16>
    tpu.vector_store %arg11[%c0_215, %c192_216], %120 {strides = array<i32>} : memref<64x288xbf16, #tpu.memory_space<vmem>>, vector<64x32xbf16>,
    %c0_217 = arith.constant 0 : index
    %c2_218 = arith.constant 2 : index
    %c1_219 = arith.constant 1 : index
    %c0_220 = arith.constant 0 : index
    %122 = vector.load %arg10[%c0_217, %c2_218, %c1_219, %c0_220] : memref<1x10x10x32xbf16, #tpu.memory_space<vmem>>, vector<1x8x8x32xbf16>
    %123 = vector.shape_cast %122 : vector<1x8x8x32xbf16> to vector<64x32xbf16>
    %c0_221 = arith.constant 0 : index
    %c224_222 = arith.constant 224 : index
    %124 = vector.load %arg11[%c0_221, %c224_222] : memref<64x288xbf16, #tpu.memory_space<vmem>>, vector<64x32xbf16>
    tpu.vector_store %arg11[%c0_221, %c224_222], %123 {strides = array<i32>} : memref<64x288xbf16, #tpu.memory_space<vmem>>, vector<64x32xbf16>,
    %c0_223 = arith.constant 0 : index
    %c2_224 = arith.constant 2 : index
    %c2_225 = arith.constant 2 : index
    %c0_226 = arith.constant 0 : index
    %125 = vector.load %arg10[%c0_223, %c2_224, %c2_225, %c0_226] : memref<1x10x10x32xbf16, #tpu.memory_space<vmem>>, vector<1x8x8x32xbf16>
    %126 = vector.shape_cast %125 : vector<1x8x8x32xbf16> to vector<64x32xbf16>
    %c0_227 = arith.constant 0 : index
    %c256_228 = arith.constant 256 : index
    %127 = vector.load %arg11[%c0_227, %c256_228] : memref<64x288xbf16, #tpu.memory_space<vmem>>, vector<64x32xbf16>
    tpu.vector_store %arg11[%c0_227, %c256_228], %126 {strides = array<i32>} : memref<64x288xbf16, #tpu.memory_space<vmem>>, vector<64x32xbf16>,
    %c0_229 = arith.constant 0 : index
    %c0_230 = arith.constant 0 : index
    %128 = vector.load %arg11[%c0_229, %c0_230] : memref<64x288xbf16, #tpu.memory_space<vmem>>, vector<64x288xbf16>
    %c2_231 = arith.constant 2 : index
    %c0_232 = arith.constant 0 : index
    %c0_233 = arith.constant 0 : index
    %129 = vector.load %arg2[%c2_231, %c0_232, %c0_233] : memref<4x288x32xbf16, #tpu.memory_space<vmem>>, vector<1x288x32xbf16>
    %130 = vector.shape_cast %129 : vector<1x288x32xbf16> to vector<288x32xbf16>
    %cst_234 = arith.constant dense<0.000000e+00> : vector<64x32xf32>
    %131 = tpu.matmul %128, %130, %cst_234 {dimension_numbers = #tpu.dot_dimension_numbers<[1], [0], [0], [1], [0, 0, 1, 1], [], []>} : vector<64x288xbf16>, vector<288x32xbf16>, vector<64x32xf32> -> vector<64x32xf32>
    %c2_235 = arith.constant 2 : index
    %c0_236 = arith.constant 0 : index
    %c0_237 = arith.constant 0 : index
    %132 = vector.load %arg3[%c2_235, %c0_236, %c0_237] : memref<4x1x32xf32, #tpu.memory_space<vmem>>, vector<1x1x32xf32>
    %133 = vector.shape_cast %132 : vector<1x1x32xf32> to vector<1x32xf32>
    %134 = vector.broadcast %133 : vector<1x32xf32> to vector<64x32xf32>
    %135 = arith.addf %131, %134 : vector<64x32xf32>
    %136 = vector.shape_cast %135 : vector<64x32xf32> to vector<1x8x8x32xf32>
    %c0_238 = arith.constant 0 : index
    %c0_239 = arith.constant 0 : index
    %c0_240 = arith.constant 0 : index
    %c64_241 = arith.constant 64 : index
    %137 = vector.load %arg9[%c0_238, %c0_239, %c0_240, %c64_241] : memref<1x8x8x128xf32, #tpu.memory_space<vmem>>, vector<1x8x8x32xf32>
    tpu.vector_store %arg9[%c0_238, %c0_239, %c0_240, %c64_241], %136 {strides = array<i32>} : memref<1x8x8x128xf32, #tpu.memory_space<vmem>>, vector<1x8x8x32xf32>,
    %c0_242 = arith.constant 0 : index
    %c0_243 = arith.constant 0 : index
    %138 = vector.load %arg4[%c0_242, %c0_243] : memref<5x64xf32, #tpu.memory_space<vmem>>, vector<5x64xf32>
    %cst_244 = arith.constant dense<0.000000e+00> : vector<5x32xf32>
    %139 = tpu.matmul %138, %135, %cst_244 {dimension_numbers = #tpu.dot_dimension_numbers<[1], [0], [0], [1], [0, 0, 1, 1], [], []>} : vector<5x64xf32>, vector<64x32xf32>, vector<5x32xf32> -> vector<5x32xf32>
    %c2_245 = arith.constant 2 : index
    %c0_246 = arith.constant 0 : index
    %c0_247 = arith.constant 0 : index
    %140 = vector.load %arg12[%c2_245, %c0_246, %c0_247] : memref<4x5x32xf32, #tpu.memory_space<vmem>>, vector<1x5x32xf32>
    %141 = vector.shape_cast %140 : vector<1x5x32xf32> to vector<5x32xf32>
    %142 = vector.shape_cast %139 : vector<5x32xf32> to vector<1x5x32xf32>
    tpu.vector_store %arg12[%c2_245, %c0_246, %c0_247], %142 {strides = array<i32>} : memref<4x5x32xf32, #tpu.memory_space<vmem>>, vector<1x5x32xf32>,
    %c0_248 = arith.constant 0 : index
    %c0_249 = arith.constant 0 : index
    %c0_250 = arith.constant 0 : index
    %c96_251 = arith.constant 96 : index
    %143 = vector.load %arg1[%c0_248, %c0_249, %c0_250, %c96_251] : memref<1x8x8x128xf32, #tpu.memory_space<vmem>>, vector<1x8x8x32xf32>
    %144 = arith.addf %136, %143 : vector<1x8x8x32xf32>
    %145 = arith.truncf %144 : vector<1x8x8x32xf32> to vector<1x8x8x32xbf16>
    %c0_252 = arith.constant 0 : index
    %c1_253 = arith.constant 1 : index
    %c1_254 = arith.constant 1 : index
    %c0_255 = arith.constant 0 : index
    %146 = vector.load %arg10[%c0_252, %c1_253, %c1_254, %c0_255] : memref<1x10x10x32xbf16, #tpu.memory_space<vmem>>, vector<1x8x8x32xbf16>
    tpu.vector_store %arg10[%c0_252, %c1_253, %c1_254, %c0_255], %145 {strides = array<i32>} : memref<1x10x10x32xbf16, #tpu.memory_space<vmem>>, vector<1x8x8x32xbf16>,
    %c0_256 = arith.constant 0 : index
    %c0_257 = arith.constant 0 : index
    %c0_258 = arith.constant 0 : index
    %c0_259 = arith.constant 0 : index
    %147 = vector.load %arg10[%c0_256, %c0_257, %c0_258, %c0_259] : memref<1x10x10x32xbf16, #tpu.memory_space<vmem>>, vector<1x8x8x32xbf16>
    %148 = vector.shape_cast %147 : vector<1x8x8x32xbf16> to vector<64x32xbf16>
    %c0_260 = arith.constant 0 : index
    %c0_261 = arith.constant 0 : index
    %149 = vector.load %arg11[%c0_260, %c0_261] : memref<64x288xbf16, #tpu.memory_space<vmem>>, vector<64x32xbf16>
    tpu.vector_store %arg11[%c0_260, %c0_261], %148 {strides = array<i32>} : memref<64x288xbf16, #tpu.memory_space<vmem>>, vector<64x32xbf16>,
    %c0_262 = arith.constant 0 : index
    %c0_263 = arith.constant 0 : index
    %c1_264 = arith.constant 1 : index
    %c0_265 = arith.constant 0 : index
    %150 = vector.load %arg10[%c0_262, %c0_263, %c1_264, %c0_265] : memref<1x10x10x32xbf16, #tpu.memory_space<vmem>>, vector<1x8x8x32xbf16>
    %151 = vector.shape_cast %150 : vector<1x8x8x32xbf16> to vector<64x32xbf16>
    %c0_266 = arith.constant 0 : index
    %c32_267 = arith.constant 32 : index
    %152 = vector.load %arg11[%c0_266, %c32_267] : memref<64x288xbf16, #tpu.memory_space<vmem>>, vector<64x32xbf16>
    tpu.vector_store %arg11[%c0_266, %c32_267], %151 {strides = array<i32>} : memref<64x288xbf16, #tpu.memory_space<vmem>>, vector<64x32xbf16>,
    %c0_268 = arith.constant 0 : index
    %c0_269 = arith.constant 0 : index
    %c2_270 = arith.constant 2 : index
    %c0_271 = arith.constant 0 : index
    %153 = vector.load %arg10[%c0_268, %c0_269, %c2_270, %c0_271] : memref<1x10x10x32xbf16, #tpu.memory_space<vmem>>, vector<1x8x8x32xbf16>
    %154 = vector.shape_cast %153 : vector<1x8x8x32xbf16> to vector<64x32xbf16>
    %c0_272 = arith.constant 0 : index
    %c64_273 = arith.constant 64 : index
    %155 = vector.load %arg11[%c0_272, %c64_273] : memref<64x288xbf16, #tpu.memory_space<vmem>>, vector<64x32xbf16>
    tpu.vector_store %arg11[%c0_272, %c64_273], %154 {strides = array<i32>} : memref<64x288xbf16, #tpu.memory_space<vmem>>, vector<64x32xbf16>,
    %c0_274 = arith.constant 0 : index
    %c1_275 = arith.constant 1 : index
    %c0_276 = arith.constant 0 : index
    %c0_277 = arith.constant 0 : index
    %156 = vector.load %arg10[%c0_274, %c1_275, %c0_276, %c0_277] : memref<1x10x10x32xbf16, #tpu.memory_space<vmem>>, vector<1x8x8x32xbf16>
    %157 = vector.shape_cast %156 : vector<1x8x8x32xbf16> to vector<64x32xbf16>
    %c0_278 = arith.constant 0 : index
    %c96_279 = arith.constant 96 : index
    %158 = vector.load %arg11[%c0_278, %c96_279] : memref<64x288xbf16, #tpu.memory_space<vmem>>, vector<64x32xbf16>
    tpu.vector_store %arg11[%c0_278, %c96_279], %157 {strides = array<i32>} : memref<64x288xbf16, #tpu.memory_space<vmem>>, vector<64x32xbf16>,
    %c0_280 = arith.constant 0 : index
    %c1_281 = arith.constant 1 : index
    %c1_282 = arith.constant 1 : index
    %c0_283 = arith.constant 0 : index
    %159 = vector.load %arg10[%c0_280, %c1_281, %c1_282, %c0_283] : memref<1x10x10x32xbf16, #tpu.memory_space<vmem>>, vector<1x8x8x32xbf16>
    %160 = vector.shape_cast %159 : vector<1x8x8x32xbf16> to vector<64x32xbf16>
    %c0_284 = arith.constant 0 : index
    %c128_285 = arith.constant 128 : index
    %161 = vector.load %arg11[%c0_284, %c128_285] : memref<64x288xbf16, #tpu.memory_space<vmem>>, vector<64x32xbf16>
    tpu.vector_store %arg11[%c0_284, %c128_285], %160 {strides = array<i32>} : memref<64x288xbf16, #tpu.memory_space<vmem>>, vector<64x32xbf16>,
    %c0_286 = arith.constant 0 : index
    %c1_287 = arith.constant 1 : index
    %c2_288 = arith.constant 2 : index
    %c0_289 = arith.constant 0 : index
    %162 = vector.load %arg10[%c0_286, %c1_287, %c2_288, %c0_289] : memref<1x10x10x32xbf16, #tpu.memory_space<vmem>>, vector<1x8x8x32xbf16>
    %163 = vector.shape_cast %162 : vector<1x8x8x32xbf16> to vector<64x32xbf16>
    %c0_290 = arith.constant 0 : index
    %c160_291 = arith.constant 160 : index
    %164 = vector.load %arg11[%c0_290, %c160_291] : memref<64x288xbf16, #tpu.memory_space<vmem>>, vector<64x32xbf16>
    tpu.vector_store %arg11[%c0_290, %c160_291], %163 {strides = array<i32>} : memref<64x288xbf16, #tpu.memory_space<vmem>>, vector<64x32xbf16>,
    %c0_292 = arith.constant 0 : index
    %c2_293 = arith.constant 2 : index
    %c0_294 = arith.constant 0 : index
    %c0_295 = arith.constant 0 : index
    %165 = vector.load %arg10[%c0_292, %c2_293, %c0_294, %c0_295] : memref<1x10x10x32xbf16, #tpu.memory_space<vmem>>, vector<1x8x8x32xbf16>
    %166 = vector.shape_cast %165 : vector<1x8x8x32xbf16> to vector<64x32xbf16>
    %c0_296 = arith.constant 0 : index
    %c192_297 = arith.constant 192 : index
    %167 = vector.load %arg11[%c0_296, %c192_297] : memref<64x288xbf16, #tpu.memory_space<vmem>>, vector<64x32xbf16>
    tpu.vector_store %arg11[%c0_296, %c192_297], %166 {strides = array<i32>} : memref<64x288xbf16, #tpu.memory_space<vmem>>, vector<64x32xbf16>,
    %c0_298 = arith.constant 0 : index
    %c2_299 = arith.constant 2 : index
    %c1_300 = arith.constant 1 : index
    %c0_301 = arith.constant 0 : index
    %168 = vector.load %arg10[%c0_298, %c2_299, %c1_300, %c0_301] : memref<1x10x10x32xbf16, #tpu.memory_space<vmem>>, vector<1x8x8x32xbf16>
    %169 = vector.shape_cast %168 : vector<1x8x8x32xbf16> to vector<64x32xbf16>
    %c0_302 = arith.constant 0 : index
    %c224_303 = arith.constant 224 : index
    %170 = vector.load %arg11[%c0_302, %c224_303] : memref<64x288xbf16, #tpu.memory_space<vmem>>, vector<64x32xbf16>
    tpu.vector_store %arg11[%c0_302, %c224_303], %169 {strides = array<i32>} : memref<64x288xbf16, #tpu.memory_space<vmem>>, vector<64x32xbf16>,
    %c0_304 = arith.constant 0 : index
    %c2_305 = arith.constant 2 : index
    %c2_306 = arith.constant 2 : index
    %c0_307 = arith.constant 0 : index
    %171 = vector.load %arg10[%c0_304, %c2_305, %c2_306, %c0_307] : memref<1x10x10x32xbf16, #tpu.memory_space<vmem>>, vector<1x8x8x32xbf16>
    %172 = vector.shape_cast %171 : vector<1x8x8x32xbf16> to vector<64x32xbf16>
    %c0_308 = arith.constant 0 : index
    %c256_309 = arith.constant 256 : index
    %173 = vector.load %arg11[%c0_308, %c256_309] : memref<64x288xbf16, #tpu.memory_space<vmem>>, vector<64x32xbf16>
    tpu.vector_store %arg11[%c0_308, %c256_309], %172 {strides = array<i32>} : memref<64x288xbf16, #tpu.memory_space<vmem>>, vector<64x32xbf16>,
    %c0_310 = arith.constant 0 : index
    %c0_311 = arith.constant 0 : index
    %174 = vector.load %arg11[%c0_310, %c0_311] : memref<64x288xbf16, #tpu.memory_space<vmem>>, vector<64x288xbf16>
    %c3 = arith.constant 3 : index
    %c0_312 = arith.constant 0 : index
    %c0_313 = arith.constant 0 : index
    %175 = vector.load %arg2[%c3, %c0_312, %c0_313] : memref<4x288x32xbf16, #tpu.memory_space<vmem>>, vector<1x288x32xbf16>
    %176 = vector.shape_cast %175 : vector<1x288x32xbf16> to vector<288x32xbf16>
    %cst_314 = arith.constant dense<0.000000e+00> : vector<64x32xf32>
    %177 = tpu.matmul %174, %176, %cst_314 {dimension_numbers = #tpu.dot_dimension_numbers<[1], [0], [0], [1], [0, 0, 1, 1], [], []>} : vector<64x288xbf16>, vector<288x32xbf16>, vector<64x32xf32> -> vector<64x32xf32>
    %c3_315 = arith.constant 3 : index
    %c0_316 = arith.constant 0 : index
    %c0_317 = arith.constant 0 : index
    %178 = vector.load %arg3[%c3_315, %c0_316, %c0_317] : memref<4x1x32xf32, #tpu.memory_space<vmem>>, vector<1x1x32xf32>
    %179 = vector.shape_cast %178 : vector<1x1x32xf32> to vector<1x32xf32>
    %180 = vector.broadcast %179 : vector<1x32xf32> to vector<64x32xf32>
    %181 = arith.addf %177, %180 : vector<64x32xf32>
    %182 = vector.shape_cast %181 : vector<64x32xf32> to vector<1x8x8x32xf32>
    %c0_318 = arith.constant 0 : index
    %c0_319 = arith.constant 0 : index
    %c0_320 = arith.constant 0 : index
    %c96_321 = arith.constant 96 : index
    %183 = vector.load %arg9[%c0_318, %c0_319, %c0_320, %c96_321] : memref<1x8x8x128xf32, #tpu.memory_space<vmem>>, vector<1x8x8x32xf32>
    tpu.vector_store %arg9[%c0_318, %c0_319, %c0_320, %c96_321], %182 {strides = array<i32>} : memref<1x8x8x128xf32, #tpu.memory_space<vmem>>, vector<1x8x8x32xf32>,
    %c0_322 = arith.constant 0 : index
    %c0_323 = arith.constant 0 : index
    %184 = vector.load %arg4[%c0_322, %c0_323] : memref<5x64xf32, #tpu.memory_space<vmem>>, vector<5x64xf32>
    %cst_324 = arith.constant dense<0.000000e+00> : vector<5x32xf32>
    %185 = tpu.matmul %184, %181, %cst_324 {dimension_numbers = #tpu.dot_dimension_numbers<[1], [0], [0], [1], [0, 0, 1, 1], [], []>} : vector<5x64xf32>, vector<64x32xf32>, vector<5x32xf32> -> vector<5x32xf32>
    %c3_325 = arith.constant 3 : index
    %c0_326 = arith.constant 0 : index
    %c0_327 = arith.constant 0 : index
    %186 = vector.load %arg12[%c3_325, %c0_326, %c0_327] : memref<4x5x32xf32, #tpu.memory_space<vmem>>, vector<1x5x32xf32>
    %187 = vector.shape_cast %186 : vector<1x5x32xf32> to vector<5x32xf32>
    %188 = vector.shape_cast %185 : vector<5x32xf32> to vector<1x5x32xf32>
    tpu.vector_store %arg12[%c3_325, %c0_326, %c0_327], %188 {strides = array<i32>} : memref<4x5x32xf32, #tpu.memory_space<vmem>>, vector<1x5x32xf32>,
    %c0_328 = arith.constant 0 : index
    %c0_329 = arith.constant 0 : index
    %c0_330 = arith.constant 0 : index
    %189 = vector.load %arg12[%c0_328, %c0_329, %c0_330] : memref<4x5x32xf32, #tpu.memory_space<vmem>>, vector<4x5x32xf32>
    %190 = vector.extract_strided_slice %189 {offsets = [0, 0, 0], sizes = [4, 1, 32], strides = [1, 1, 1]} : vector<4x5x32xf32> to vector<4x1x32xf32>
    %191 = vector.shape_cast %190 : vector<4x1x32xf32> to vector<4x32xf32>
    %c0_331 = arith.constant 0 : index
    %c0_332 = arith.constant 0 : index
    %c0_333 = arith.constant 0 : index
    %192 = vector.load %arg5[%c0_331, %c0_332, %c0_333] : memref<5x32x2xf32, #tpu.memory_space<vmem>>, vector<1x32x2xf32>
    %193 = vector.shape_cast %192 : vector<1x32x2xf32> to vector<32x2xf32>
    %cst_334 = arith.constant dense<0.000000e+00> : vector<4x2xf32>
    %194 = tpu.matmul %191, %193, %cst_334 {dimension_numbers = #tpu.dot_dimension_numbers<[1], [0], [0], [1], [0, 0, 1, 1], [], []>} : vector<4x32xf32>, vector<32x2xf32>, vector<4x2xf32> -> vector<4x2xf32>
    %195 = vector.extract_strided_slice %189 {offsets = [0, 1, 0], sizes = [4, 1, 32], strides = [1, 1, 1]} : vector<4x5x32xf32> to vector<4x1x32xf32>
    %196 = vector.shape_cast %195 : vector<4x1x32xf32> to vector<4x32xf32>
    %c1_335 = arith.constant 1 : index
    %c0_336 = arith.constant 0 : index
    %c0_337 = arith.constant 0 : index
    %197 = vector.load %arg5[%c1_335, %c0_336, %c0_337] : memref<5x32x2xf32, #tpu.memory_space<vmem>>, vector<1x32x2xf32>
    %198 = vector.shape_cast %197 : vector<1x32x2xf32> to vector<32x2xf32>
    %cst_338 = arith.constant dense<0.000000e+00> : vector<4x2xf32>
    %199 = tpu.matmul %196, %198, %cst_338 {dimension_numbers = #tpu.dot_dimension_numbers<[1], [0], [0], [1], [0, 0, 1, 1], [], []>} : vector<4x32xf32>, vector<32x2xf32>, vector<4x2xf32> -> vector<4x2xf32>
    %200 = arith.addf %194, %199 : vector<4x2xf32>
    %201 = vector.extract_strided_slice %189 {offsets = [0, 2, 0], sizes = [4, 1, 32], strides = [1, 1, 1]} : vector<4x5x32xf32> to vector<4x1x32xf32>
    %202 = vector.shape_cast %201 : vector<4x1x32xf32> to vector<4x32xf32>
    %c2_339 = arith.constant 2 : index
    %c0_340 = arith.constant 0 : index
    %c0_341 = arith.constant 0 : index
    %203 = vector.load %arg5[%c2_339, %c0_340, %c0_341] : memref<5x32x2xf32, #tpu.memory_space<vmem>>, vector<1x32x2xf32>
    %204 = vector.shape_cast %203 : vector<1x32x2xf32> to vector<32x2xf32>
    %cst_342 = arith.constant dense<0.000000e+00> : vector<4x2xf32>
    %205 = tpu.matmul %202, %204, %cst_342 {dimension_numbers = #tpu.dot_dimension_numbers<[1], [0], [0], [1], [0, 0, 1, 1], [], []>} : vector<4x32xf32>, vector<32x2xf32>, vector<4x2xf32> -> vector<4x2xf32>
    %206 = arith.addf %200, %205 : vector<4x2xf32>
    %207 = vector.extract_strided_slice %189 {offsets = [0, 3, 0], sizes = [4, 1, 32], strides = [1, 1, 1]} : vector<4x5x32xf32> to vector<4x1x32xf32>
    %208 = vector.shape_cast %207 : vector<4x1x32xf32> to vector<4x32xf32>
    %c3_343 = arith.constant 3 : index
    %c0_344 = arith.constant 0 : index
    %c0_345 = arith.constant 0 : index
    %209 = vector.load %arg5[%c3_343, %c0_344, %c0_345] : memref<5x32x2xf32, #tpu.memory_space<vmem>>, vector<1x32x2xf32>
    %210 = vector.shape_cast %209 : vector<1x32x2xf32> to vector<32x2xf32>
    %cst_346 = arith.constant dense<0.000000e+00> : vector<4x2xf32>
    %211 = tpu.matmul %208, %210, %cst_346 {dimension_numbers = #tpu.dot_dimension_numbers<[1], [0], [0], [1], [0, 0, 1, 1], [], []>} : vector<4x32xf32>, vector<32x2xf32>, vector<4x2xf32> -> vector<4x2xf32>
    %212 = arith.addf %206, %211 : vector<4x2xf32>
    %213 = vector.extract_strided_slice %189 {offsets = [0, 4, 0], sizes = [4, 1, 32], strides = [1, 1, 1]} : vector<4x5x32xf32> to vector<4x1x32xf32>
    %214 = vector.shape_cast %213 : vector<4x1x32xf32> to vector<4x32xf32>
    %c4 = arith.constant 4 : index
    %c0_347 = arith.constant 0 : index
    %c0_348 = arith.constant 0 : index
    %215 = vector.load %arg5[%c4, %c0_347, %c0_348] : memref<5x32x2xf32, #tpu.memory_space<vmem>>, vector<1x32x2xf32>
    %216 = vector.shape_cast %215 : vector<1x32x2xf32> to vector<32x2xf32>
    %cst_349 = arith.constant dense<0.000000e+00> : vector<4x2xf32>
    %217 = tpu.matmul %214, %216, %cst_349 {dimension_numbers = #tpu.dot_dimension_numbers<[1], [0], [0], [1], [0, 0, 1, 1], [], []>} : vector<4x32xf32>, vector<32x2xf32>, vector<4x2xf32> -> vector<4x2xf32>
    %218 = arith.addf %212, %217 : vector<4x2xf32>
    %c0_350 = arith.constant 0 : index
    %c0_351 = arith.constant 0 : index
    %219 = vector.load %arg6[%c0_350, %c0_351] : memref<1x2xf32, #tpu.memory_space<vmem>>, vector<1x2xf32>
    %220 = vector.broadcast %219 : vector<1x2xf32> to vector<4x2xf32>
    %221 = arith.addf %218, %220 : vector<4x2xf32>
    %cst_352 = arith.constant 0.000000e+00 : f32
    %222 = vector.broadcast %cst_352 : f32 to vector<4x2xf32>
    %223 = arith.maximumf %221, %222 : vector<4x2xf32>
    %c0_353 = arith.constant 0 : index
    %c0_354 = arith.constant 0 : index
    %224 = vector.load %arg7[%c0_353, %c0_354] : memref<2x32xf32, #tpu.memory_space<vmem>>, vector<2x32xf32>
    %cst_355 = arith.constant dense<0.000000e+00> : vector<4x32xf32>
    %225 = tpu.matmul %223, %224, %cst_355 {dimension_numbers = #tpu.dot_dimension_numbers<[1], [0], [0], [1], [0, 0, 1, 1], [], []>} : vector<4x2xf32>, vector<2x32xf32>, vector<4x32xf32> -> vector<4x32xf32>
    %c0_356 = arith.constant 0 : index
    %c0_357 = arith.constant 0 : index
    %226 = vector.load %arg8[%c0_356, %c0_357] : memref<1x32xf32, #tpu.memory_space<vmem>>, vector<1x32xf32>
    %227 = vector.broadcast %226 : vector<1x32xf32> to vector<4x32xf32>
    %228 = arith.addf %225, %227 : vector<4x32xf32>
    %229 = math.absf %228 : vector<4x32xf32>
    %cst_358 = arith.constant 0.000000e+00 : f32
    %230 = vector.broadcast %cst_358 : f32 to vector<4x32xf32>
    %231 = arith.subf %230, %229 : vector<4x32xf32>
    %232 = math.exp %231 : vector<4x32xf32>
    %cst_359 = arith.constant 1.000000e+00 : f32
    %233 = vector.broadcast %cst_359 : f32 to vector<4x32xf32>
    %234 = arith.addf %233, %232 : vector<4x32xf32>
    %235 = tpu.reciprocal %234 {approx = true} : vector<4x32xf32> -> vector<4x32xf32>
    %cst_360 = arith.constant 0.000000e+00 : f32
    %236 = vector.broadcast %cst_360 : f32 to vector<4x32xf32>
    %237 = arith.cmpf oge, %228, %236 : vector<4x32xf32>
    %238 = arith.mulf %232, %235 : vector<4x32xf32>
    %239 = arith.select %237, %235, %238 : vector<4x32xi1>, vector<4x32xf32>
    %240 = vector.extract_strided_slice %239 {offsets = [0, 0], sizes = [1, 32], strides = [1, 1]} : vector<4x32xf32> to vector<1x32xf32>
    %241 = vector.extract_strided_slice %239 {offsets = [1, 0], sizes = [1, 32], strides = [1, 1]} : vector<4x32xf32> to vector<1x32xf32>
    %242 = vector.extract_strided_slice %239 {offsets = [2, 0], sizes = [1, 32], strides = [1, 1]} : vector<4x32xf32> to vector<1x32xf32>
    %243 = vector.extract_strided_slice %239 {offsets = [3, 0], sizes = [1, 32], strides = [1, 1]} : vector<4x32xf32> to vector<1x32xf32>
    %244 = arith.maximumf %240, %241 : vector<1x32xf32>
    %245 = arith.maximumf %244, %242 : vector<1x32xf32>
    %246 = arith.maximumf %245, %243 : vector<1x32xf32>
    %247 = arith.subf %240, %246 : vector<1x32xf32>
    %248 = math.exp %247 : vector<1x32xf32>
    %249 = arith.subf %241, %246 : vector<1x32xf32>
    %250 = math.exp %249 : vector<1x32xf32>
    %251 = arith.subf %242, %246 : vector<1x32xf32>
    %252 = math.exp %251 : vector<1x32xf32>
    %253 = arith.subf %243, %246 : vector<1x32xf32>
    %254 = math.exp %253 : vector<1x32xf32>
    %255 = arith.addf %248, %250 : vector<1x32xf32>
    %256 = arith.addf %255, %252 : vector<1x32xf32>
    %257 = arith.addf %256, %254 : vector<1x32xf32>
    %258 = tpu.reciprocal %257 {approx = true} : vector<1x32xf32> -> vector<1x32xf32>
    %259 = arith.mulf %248, %258 : vector<1x32xf32>
    %260 = arith.mulf %250, %258 : vector<1x32xf32>
    %261 = arith.mulf %252, %258 : vector<1x32xf32>
    %262 = arith.mulf %254, %258 : vector<1x32xf32>
    %263 = tpu.concatenate %259, %260, %261, %262 in 1 : vector<1x32xf32>, vector<1x32xf32>, vector<1x32xf32>, vector<1x32xf32> -> vector<1x128xf32>
    %c0_361 = arith.constant 0 : index
    %c0_362 = arith.constant 0 : index
    %c0_363 = arith.constant 0 : index
    %c0_364 = arith.constant 0 : index
    %264 = vector.load %arg9[%c0_361, %c0_362, %c0_363, %c0_364] : memref<1x8x8x128xf32, #tpu.memory_space<vmem>>, vector<1x8x8x128xf32>
    %265 = vector.shape_cast %263 : vector<1x128xf32> to vector<1x1x1x128xf32>
    %266 = vector.broadcast %265 : vector<1x1x1x128xf32> to vector<1x8x8x128xf32>
    %267 = arith.mulf %264, %266 : vector<1x8x8x128xf32>
    %c0_365 = arith.constant 0 : index
    %c0_366 = arith.constant 0 : index
    %c0_367 = arith.constant 0 : index
    %c0_368 = arith.constant 0 : index
    %268 = vector.load %arg9[%c0_365, %c0_366, %c0_367, %c0_368] : memref<1x8x8x128xf32, #tpu.memory_space<vmem>>, vector<1x8x8x128xf32>
    tpu.vector_store %arg9[%c0_365, %c0_366, %c0_367, %c0_368], %267 {strides = array<i32>} : memref<1x8x8x128xf32, #tpu.memory_space<vmem>>, vector<1x8x8x128xf32>,
    return
  }
  func.func @transform_0(%arg0: i32) -> (i32, i32, i32, i32) {
    %c0_i32 = arith.constant 0 : i32
    %c0_i32_0 = arith.constant 0 : i32
    %c0_i32_1 = arith.constant 0 : i32
    %c0_i32_2 = arith.constant 0 : i32
    return %arg0, %c0_i32, %c0_i32_0, %c0_i32_1 : i32, i32, i32, i32
  }
  func.func @transform_1(%arg0: i32) -> (i32, i32, i32) {
    %c0_i32 = arith.constant 0 : i32
    %c0_i32_0 = arith.constant 0 : i32
    %c0_i32_1 = arith.constant 0 : i32
    %c0_i32_2 = arith.constant 0 : i32
    return %c0_i32, %c0_i32_0, %c0_i32_1 : i32, i32, i32
  }
  func.func @transform_2(%arg0: i32) -> (i32, i32, i32) {
    %c0_i32 = arith.constant 0 : i32
    %c0_i32_0 = arith.constant 0 : i32
    %c0_i32_1 = arith.constant 0 : i32
    %c0_i32_2 = arith.constant 0 : i32
    return %c0_i32, %c0_i32_0, %c0_i32_1 : i32, i32, i32
  }
  func.func @transform_3(%arg0: i32) -> (i32, i32) {
    %c0_i32 = arith.constant 0 : i32
    %c0_i32_0 = arith.constant 0 : i32
    %c0_i32_1 = arith.constant 0 : i32
    return %c0_i32, %c0_i32_0 : i32, i32
  }
  func.func @transform_4(%arg0: i32) -> (i32, i32, i32) {
    %c0_i32 = arith.constant 0 : i32
    %c0_i32_0 = arith.constant 0 : i32
    %c0_i32_1 = arith.constant 0 : i32
    %c0_i32_2 = arith.constant 0 : i32
    return %c0_i32, %c0_i32_0, %c0_i32_1 : i32, i32, i32
  }
  func.func @transform_5(%arg0: i32) -> (i32, i32) {
    %c0_i32 = arith.constant 0 : i32
    %c0_i32_0 = arith.constant 0 : i32
    %c0_i32_1 = arith.constant 0 : i32
    return %c0_i32, %c0_i32_0 : i32, i32
  }
  func.func @transform_6(%arg0: i32) -> (i32, i32) {
    %c0_i32 = arith.constant 0 : i32
    %c0_i32_0 = arith.constant 0 : i32
    %c0_i32_1 = arith.constant 0 : i32
    return %c0_i32, %c0_i32_0 : i32, i32
  }
  func.func @transform_7(%arg0: i32) -> (i32, i32) {
    %c0_i32 = arith.constant 0 : i32
    %c0_i32_0 = arith.constant 0 : i32
    %c0_i32_1 = arith.constant 0 : i32
    return %c0_i32, %c0_i32_0 : i32, i32
  }
  func.func @transform_8(%arg0: i32) -> (i32, i32, i32, i32) {
    %c0_i32 = arith.constant 0 : i32
    %c0_i32_0 = arith.constant 0 : i32
    %c0_i32_1 = arith.constant 0 : i32
    %c0_i32_2 = arith.constant 0 : i32
    return %arg0, %c0_i32, %c0_i32_0, %c0_i32_1 : i32, i32, i32, i32
  }
}

</mosaic_0001>

<llo_original>
// kernel: tpu_custom_call.1
$region0: #{tpu_custom_call.1}
  #allocation0 [shape = 'u32[]', space=smem, size = 0x4, offset = 0x4, fixed_abs, tag = 'smem constant byte address 0x4 - core index']
  #allocation1 [shape = 'u32[144,128]{1,0:T(1,128)}', space=vmem, size = 0x12000, scoped, tag = 'internal scratch']
  #allocation2 [shape = 'bf16[1,10,10,32]{3,2,1,0:T(8,128)(2,1)}', space=vmem, size = 0xa000, scoped, tag = 'scratch operand']
  #allocation3 [shape = 'bf16[64,288]{1,0:T(16,128)(2,1)}', space=vmem, size = 0xc000, scoped, tag = 'scratch operand']
  #allocation4 [shape = 'f32[4,5,32]{2,1,0:T(8,128)}', space=vmem, size = 0x4000, scoped, tag = 'scratch operand']
  %s0 = inlined_call_operand.vmem [shape: f32[2,8,8,128], index: 0, kind: input, shape index: {}]
  %s1 = inlined_call_operand.vmem [shape: bf16[4,288,32], index: 1, kind: input, shape index: {}]
  %s2 = inlined_call_operand.vmem [shape: f32[4,1,32], index: 2, kind: input, shape index: {}]
  %s3 = inlined_call_operand.vmem [shape: f32[5,64], index: 3, kind: input, shape index: {}]
  %s4 = inlined_call_operand.vmem [shape: f32[5,32,2], index: 4, kind: input, shape index: {}]
  %s5 = inlined_call_operand.vmem [shape: f32[1,2], index: 5, kind: input, shape index: {}]
  %s6 = inlined_call_operand.vmem [shape: f32[2,32], index: 6, kind: input, shape index: {}]
  %s7 = inlined_call_operand.vmem [shape: f32[1,32], index: 7, kind: input, shape index: {}]
  %s8 = inlined_call_operand.hbm [shape: f32[2,8,8,128], index: 8, kind: output, shape index: {}]
  %s9 = sld [smem:[#allocation0]]
  $region65: #{tpu_custom_call.1} parent=0
    _
  %s11 = ssub.s32 1, %s9
  %s12 = scalar_select 0, %s11, %s9
  $region1: #{tpu_custom_call.1} parent=0
    #allocation5 [shape = 'u8[65536]{0}', space=vmem, size = 0x10000, scoped, tag = 'output window, operand 0']
    #allocation6 [shape = 's32[2]{0}', space=sflag, size = 0x8, scoped, tag = 'scoped memory for tpu_custom_call.1']
    %13 = vsyncpa [#allocation6], 0
    %s14 = scalar_lea.sflag [#allocation6], 1
    %15 = vsyncpa %s14, 0
    loop: start=0, step=1, limit=4
    $region2: #{tpu_custom_call.1} parent=1 // loop_pre_header
      _
    $region3: #{tpu_custom_call.1} parent=1 // loop_header
      %s17 = sphi 0, %s21
      %p18 = scmp.ge.s32.totalorder %s17, 4
      %s27 = sphi 0, %s29
      %s30 = sphi 0, %s27
      %s31 = sphi 0, %s30
      %s47 = sphi 0, %s31
      %s51 = sphi 0, %s51
      %s53 = sphi 0, %s51
      %s54 = sphi 0, %s53
      %s68 = sphi 0, %s54
      %s72 = sphi 0, %s72
      %s74 = sphi 0, %s72
      %s75 = sphi 0, %s74
      %s89 = sphi 0, %s75
      %s93 = sphi 0, %s93
      %s95 = sphi 0, %s93
      %s96 = sphi 0, %s95
      %s110 = sphi 0, %s96
      %s114 = sphi 0, %s114
      %s116 = sphi 0, %s114
      %s117 = sphi 0, %s116
      %s131 = sphi 0, %s117
      %s135 = sphi 0, %s135
      %s137 = sphi 0, %s135
      %s138 = sphi 0, %s137
      %s152 = sphi 0, %s138
      %s156 = sphi 0, %s156
      %s158 = sphi 0, %s156
      %s159 = sphi 0, %s158
      %s173 = sphi 0, %s159
      %s177 = sphi 0, %s177
      %s179 = sphi 0, %s177
      %s180 = sphi 0, %s179
      %s194 = sphi 0, %s180
      %s200 = sphi 0, %s202
      %s203 = sphi 0, %s200
      %s204 = sphi 0, %s203
      %s220 = sphi 0, %s204
    $region4: #{tpu_custom_call.1} parent=1 // loop_header_branch
      %20 = sbr.rel (%p18) target = $region8
    $region5: #{tpu_custom_call.1} parent=1 // loop_body
      %s22 = ssub.s32 %s17, 1
      %s23 = ssub.s32 %s17, 2
      %s24 = sadd.s32 %s17, 1
      %s25 = ssub.s32 %s17, %s24
      %p26 = scmp.eq.s32.totalorder %s25, 0
      %s28 = sadd.s32 %s27, 1
      %s29 = scalar_select %p26, %s27, %s28
      %p32 = pneg %p26
      %p33 = scmp.eq.s32.totalorder %s17, 1
      %p34 = por %p32, %p33
      %p35 = scmp.ne.s32.totalorder %s27, %s30
      %p36 = scmp.eq.s32.totalorder %s17, 0
      %p37 = por %p35, %p36
      %p38 = scmp.ne.s32.totalorder %s27, %s30
      %p39 = scmp.eq.s32.totalorder %s22, 1
      %p40 = por %p38, %p39
      %p41 = scmp.ne.s32.totalorder %s30, %s31
      %p42 = scmp.eq.s32.totalorder %s22, 0
      %p43 = por %p41, %p42
      %p44 = scmp.ne.s32.totalorder %s30, %s31
      %p45 = scmp.eq.s32.totalorder %s23, 1
      %p46 = por %p44, %p45
      %p48 = scmp.ne.s32.totalorder %s31, %s47
      %p49 = scmp.eq.s32.totalorder %s23, 0
      %p50 = por %p48, %p49
      %s52 = sadd.s32 %s51, 1
      %p55 = scmp.eq.s32.totalorder %s17, 1
      %p56 = scmp.ne.s32.totalorder %s51, %s53
      %p57 = scmp.eq.s32.totalorder %s17, 0
      %p58 = por %p56, %p57
      %p59 = scmp.ne.s32.totalorder %s51, %s53
      %p60 = scmp.eq.s32.totalorder %s22, 1
      %p61 = por %p59, %p60
      %p62 = scmp.ne.s32.totalorder %s53, %s54
      %p63 = scmp.eq.s32.totalorder %s22, 0
      %p64 = por %p62, %p63
      %p65 = scmp.ne.s32.totalorder %s53, %s54
      %p66 = scmp.eq.s32.totalorder %s23, 1
      %p67 = por %p65, %p66
      %p69 = scmp.ne.s32.totalorder %s54, %s68
      %p70 = scmp.eq.s32.totalorder %s23, 0
      %p71 = por %p69, %p70
      %s73 = sadd.s32 %s72, 1
      %p76 = scmp.eq.s32.totalorder %s17, 1
      %p77 = scmp.ne.s32.totalorder %s72, %s74
      %p78 = scmp.eq.s32.totalorder %s17, 0
      %p79 = por %p77, %p78
      %p80 = scmp.ne.s32.totalorder %s72, %s74
      %p81 = scmp.eq.s32.totalorder %s22, 1
      %p82 = por %p80, %p81
      %p83 = scmp.ne.s32.totalorder %s74, %s75
      %p84 = scmp.eq.s32.totalorder %s22, 0
      %p85 = por %p83, %p84
      %p86 = scmp.ne.s32.totalorder %s74, %s75
      %p87 = scmp.eq.s32.totalorder %s23, 1
      %p88 = por %p86, %p87
      %p90 = scmp.ne.s32.totalorder %s75, %s89
      %p91 = scmp.eq.s32.totalorder %s23, 0
      %p92 = por %p90, %p91
      %s94 = sadd.s32 %s93, 1
      %p97 = scmp.eq.s32.totalorder %s17, 1
      %p98 = scmp.ne.s32.totalorder %s93, %s95
      %p99 = scmp.eq.s32.totalorder %s17, 0
      %p100 = por %p98, %p99
      %p101 = scmp.ne.s32.totalorder %s93, %s95
      %p102 = scmp.eq.s32.totalorder %s22, 1
      %p103 = por %p101, %p102
      %p104 = scmp.ne.s32.totalorder %s95, %s96
      %p105 = scmp.eq.s32.totalorder %s22, 0
      %p106 = por %p104, %p105
      %p107 = scmp.ne.s32.totalorder %s95, %s96
      %p108 = scmp.eq.s32.totalorder %s23, 1
      %p109 = por %p107, %p108
      %p111 = scmp.ne.s32.totalorder %s96, %s110
      %p112 = scmp.eq.s32.totalorder %s23, 0
      %p113 = por %p111, %p112
      %s115 = sadd.s32 %s114, 1
      %p118 = scmp.eq.s32.totalorder %s17, 1
      %p119 = scmp.ne.s32.totalorder %s114, %s116
      %p120 = scmp.eq.s32.totalorder %s17, 0
      %p121 = por %p119, %p120
      %p122 = scmp.ne.s32.totalorder %s114, %s116
      %p123 = scmp.eq.s32.totalorder %s22, 1
      %p124 = por %p122, %p123
      %p125 = scmp.ne.s32.totalorder %s116, %s117
      %p126 = scmp.eq.s32.totalorder %s22, 0
      %p127 = por %p125, %p126
      %p128 = scmp.ne.s32.totalorder %s116, %s117
      %p129 = scmp.eq.s32.totalorder %s23, 1
      %p130 = por %p128, %p129
      %p132 = scmp.ne.s32.totalorder %s117, %s131
      %p133 = scmp.eq.s32.totalorder %s23, 0
      %p134 = por %p132, %p133
      %s136 = sadd.s32 %s135, 1
      %p139 = scmp.eq.s32.totalorder %s17, 1
      %p140 = scmp.ne.s32.totalorder %s135, %s137
      %p141 = scmp.eq.s32.totalorder %s17, 0
      %p142 = por %p140, %p141
      %p143 = scmp.ne.s32.totalorder %s135, %s137
      %p144 = scmp.eq.s32.totalorder %s22, 1
      %p145 = por %p143, %p144
      %p146 = scmp.ne.s32.totalorder %s137, %s138
      %p147 = scmp.eq.s32.totalorder %s22, 0
      %p148 = por %p146, %p147
      %p149 = scmp.ne.s32.totalorder %s137, %s138
      %p150 = scmp.eq.s32.totalorder %s23, 1
      %p151 = por %p149, %p150
      %p153 = scmp.ne.s32.totalorder %s138, %s152
      %p154 = scmp.eq.s32.totalorder %s23, 0
      %p155 = por %p153, %p154
      %s157 = sadd.s32 %s156, 1
      %p160 = scmp.eq.s32.totalorder %s17, 1
      %p161 = scmp.ne.s32.totalorder %s156, %s158
      %p162 = scmp.eq.s32.totalorder %s17, 0
      %p163 = por %p161, %p162
      %p164 = scmp.ne.s32.totalorder %s156, %s158
      %p165 = scmp.eq.s32.totalorder %s22, 1
      %p166 = por %p164, %p165
      %p167 = scmp.ne.s32.totalorder %s158, %s159
      %p168 = scmp.eq.s32.totalorder %s22, 0
      %p169 = por %p167, %p168
      %p170 = scmp.ne.s32.totalorder %s158, %s159
      %p171 = scmp.eq.s32.totalorder %s23, 1
      %p172 = por %p170, %p171
      %p174 = scmp.ne.s32.totalorder %s159, %s173
      %p175 = scmp.eq.s32.totalorder %s23, 0
      %p176 = por %p174, %p175
      %s178 = sadd.s32 %s177, 1
      %p181 = scmp.eq.s32.totalorder %s17, 1
      %p182 = scmp.ne.s32.totalorder %s177, %s179
      %p183 = scmp.eq.s32.totalorder %s17, 0
      %p184 = por %p182, %p183
      %p185 = scmp.ne.s32.totalorder %s177, %s179
      %p186 = scmp.eq.s32.totalorder %s22, 1
      %p187 = por %p185, %p186
      %p188 = scmp.ne.s32.totalorder %s179, %s180
      %p189 = scmp.eq.s32.totalorder %s22, 0
      %p190 = por %p188, %p189
      %p191 = scmp.ne.s32.totalorder %s179, %s180
      %p192 = scmp.eq.s32.totalorder %s23, 1
      %p193 = por %p191, %p192
      %p195 = scmp.ne.s32.totalorder %s180, %s194
      %p196 = scmp.eq.s32.totalorder %s23, 0
      %p197 = por %p195, %p196
      %s198 = ssub.s32 %s17, %s24
      %p199 = scmp.eq.s32.totalorder %s198, 0
      %s201 = sadd.s32 %s200, 1
      %s202 = scalar_select %p199, %s200, %s201
      %p205 = pneg %p199
      %p206 = scmp.eq.s32.totalorder %s17, 1
      %p207 = por %p205, %p206
      %p208 = scmp.ne.s32.totalorder %s200, %s203
      %p209 = scmp.eq.s32.totalorder %s17, 0
      %p210 = por %p208, %p209
      %p211 = scmp.ne.s32.totalorder %s200, %s203
      %p212 = scmp.eq.s32.totalorder %s22, 1
      %p213 = por %p211, %p212
      %p214 = scmp.ne.s32.totalorder %s203, %s204
      %p215 = scmp.eq.s32.totalorder %s22, 0
      %p216 = por %p214, %p215
      %p217 = scmp.ne.s32.totalorder %s203, %s204
      %p218 = scmp.eq.s32.totalorder %s23, 1
      %p219 = por %p217, %p218
      %p221 = scmp.ne.s32.totalorder %s204, %s220
      %p222 = scmp.eq.s32.totalorder %s23, 0
      %p223 = por %p221, %p222
      %p224 = scmp.le.s32.totalorder 1, %s17
      %p225 = scmp.lt.s32.totalorder %s17, 3
      %p226 = pnand %p224, %p225
      %p227 = pneg %p226
      // Predicated region
      $region9: #{tpu_custom_call.1} parent=5 // pred_check
        _
      $region10: #{tpu_custom_call.1} parent=5 // pred_check_branch
        %229 = sbr.rel (%p226) target = $region12
      $region11: #{tpu_custom_call.1} parent=5 // pred_region
        %s230 = ssub.s32 %s17, 1
        // Predicated region
        $region13: #{tpu_custom_call.1} parent=11 // pred_check
          %p231 = pneg %p64
        $region14: #{tpu_custom_call.1} parent=11 // pred_check_branch
          %233 = sbr.rel (%p231) target = $region16
        $region15: #{tpu_custom_call.1} parent=11 // pred_region
          _
        $region16: #{tpu_custom_call.1} parent=11 // pred_fallthru
          _
        // Predicated region
        $region17: #{tpu_custom_call.1} parent=11 // pred_check
          %p234 = pneg %p85
        $region18: #{tpu_custom_call.1} parent=11 // pred_check_branch
          %236 = sbr.rel (%p234) target = $region20
        $region19: #{tpu_custom_call.1} parent=11 // pred_region
          _
        $region20: #{tpu_custom_call.1} parent=11 // pred_fallthru
          _
        // Predicated region
        $region21: #{tpu_custom_call.1} parent=11 // pred_check
          %p237 = pneg %p106
        $region22: #{tpu_custom_call.1} parent=11 // pred_check_branch
          %239 = sbr.rel (%p237) target = $region24
        $region23: #{tpu_custom_call.1} parent=11 // pred_region
          _
        $region24: #{tpu_custom_call.1} parent=11 // pred_fallthru
          _
        // Predicated region
        $region25: #{tpu_custom_call.1} parent=11 // pred_check
          %p240 = pneg %p127
        $region26: #{tpu_custom_call.1} parent=11 // pred_check_branch
          %242 = sbr.rel (%p240) target = $region28
        $region27: #{tpu_custom_call.1} parent=11 // pred_region
          _
        $region28: #{tpu_custom_call.1} parent=11 // pred_fallthru
          _
        // Predicated region
        $region29: #{tpu_custom_call.1} parent=11 // pred_check
          %p243 = pneg %p148
        $region30: #{tpu_custom_call.1} parent=11 // pred_check_branch
          %245 = sbr.rel (%p243) target = $region32
        $region31: #{tpu_custom_call.1} parent=11 // pred_region
          _
        $region32: #{tpu_custom_call.1} parent=11 // pred_fallthru
          _
        // Predicated region
        $region33: #{tpu_custom_call.1} parent=11 // pred_check
          %p246 = pneg %p169
        $region34: #{tpu_custom_call.1} parent=11 // pred_check_branch
          %248 = sbr.rel (%p246) target = $region36
        $region35: #{tpu_custom_call.1} parent=11 // pred_region
          _
        $region36: #{tpu_custom_call.1} parent=11 // pred_fallthru
          _
        // Predicated region
        $region37: #{tpu_custom_call.1} parent=11 // pred_check
          %p249 = pneg %p190
        $region38: #{tpu_custom_call.1} parent=11 // pred_check_branch
          %251 = sbr.rel (%p249) target = $region40
        $region39: #{tpu_custom_call.1} parent=11 // pred_region
          _
        $region40: #{tpu_custom_call.1} parent=11 // pred_fallthru
          _
      $region12: #{tpu_custom_call.1} parent=5 // pred_fallthru
        _
      %p252 = scmp.lt.s32.totalorder %s17, 2
      // Predicated region
      $region41: #{tpu_custom_call.1} parent=5 // pred_check
        %p253 = pneg %p252
      $region42: #{tpu_custom_call.1} parent=5 // pred_check_branch
        %255 = sbr.rel (%p253) target = $region44
      $region43: #{tpu_custom_call.1} parent=5 // pred_region
        // Predicated region
        $region45: #{tpu_custom_call.1} parent=43 // pred_check
          %p256 = pneg %p37
        $region46: #{tpu_custom_call.1} parent=43 // pred_check_branch
          %258 = sbr.rel (%p256) target = $region48
        $region47: #{tpu_custom_call.1} parent=43 // pred_region
          %p259 = scmp.lt.s32.totalorder %s17, 1
          %s260 = scalar_select %p259, %s17, 1
          %s261 = smul.addr %s260, 8
          %s262 = smul.addr %s261, 8
          %s263 = scalar_lea.vmem %s0, %s262
        $region48: #{tpu_custom_call.1} parent=43 // pred_fallthru
          _
      $region44: #{tpu_custom_call.1} parent=5 // pred_fallthru
        _
      %p264 = scmp.le.s32.totalorder 1, %s17
      %p265 = scmp.lt.s32.totalorder %s17, 3
      %p266 = pnand %p264, %p265
      %p267 = pneg %p266
      // Predicated region
      $region49: #{tpu_custom_call.1} parent=5 // pred_check
        _
      $region50: #{tpu_custom_call.1} parent=5 // pred_check_branch
        %269 = sbr.rel (%p266) target = $region52
      $region51: #{tpu_custom_call.1} parent=5 // pred_region
        %s270 = ssub.s32 %s17, 1
        %p271 = scmp.lt.s32.totalorder %s22, 1
        %s272 = scalar_select %p271, %s22, 1
        %s273 = smul.addr %s272, 8
        %s274 = smul.addr %s273, 8
        %s275 = scalar_lea.vmem %s0, %s274
        %p276 = pneg %p43
        %p277 = pneg %p40
        %p278 = pneg %p64
        %p279 = pneg %p61
        %p280 = pneg %p85
        %p281 = pneg %p82
        %p282 = pneg %p106
        %p283 = pneg %p103
        %p284 = pneg %p127
        %p285 = pneg %p124
        %p286 = pneg %p148
        %p287 = pneg %p145
        %p288 = pneg %p169
        %p289 = pneg %p166
        %p290 = pneg %p190
        %p291 = pneg %p187
        %p292 = pneg %p216
        %p293 = pneg %p213
        %s294 = sand.u32 %s203, 1
        %s295 = scalar_lea.sflag [#allocation6], %s294
        %s296 = sand.u32 %s203, 1
        %s297 = smul.addr %s296, 64
        %s298 = scalar_lea.vmem [#allocation5], %s297
        %p299 = scmp.lt.s32.totalorder %s22, 1
        %s300 = scalar_select %p299, %s22, 1
        %s301 = smul.addr %s300, 8
        %s302 = smul.addr %s301, 8
        %s303 = scalar_lea.vmem %s0, %s302
        %vm305 = vcmask 257024
        %306 = vst.msk [vmem:[#allocation2] sm:$0xf] %vm305, 0
        %vm307 = vcmask 253952
        %308 = vst.msk [vmem:[#allocation2 + $0x4] sm:$0x1] %vm307, 0
        %s309 = scalar_lea.vmem [#allocation2], 72
        %310 = vst.msk [vmem:[%s309] sm:$0xf] %vm305, 0
        %311 = vst.msk [vmem:[%s309 + $0x4] sm:$0x1] %vm307, 0
        %vm312 = vcmask 253952
        %vm313 = vsmask.f32 256
        %vm314 = vmand %vm312, %vm313
        %v315 = vld [vmem:[#allocation2] sm:$0x1]
        %v316 = vsel %vm314, 0, %v315
        %317 = vst [vmem:[#allocation2] sm:$0x1] %v316
        %v318 = vld [vmem:[#allocation2 + $0x8] sm:$0x1]
        %v319 = vsel %vm314, 0, %v318
        %320 = vst [vmem:[#allocation2 + $0x8] sm:$0x1] %v319
        %v321 = vld [vmem:[#allocation2 + $0x10] sm:$0x1]
        %v322 = vsel %vm314, 0, %v321
        %323 = vst [vmem:[#allocation2 + $0x10] sm:$0x1] %v322
        %v324 = vld [vmem:[#allocation2 + $0x18] sm:$0x1]
        %v325 = vsel %vm314, 0, %v324
        %326 = vst [vmem:[#allocation2 + $0x18] sm:$0x1] %v325
        %v327 = vld [vmem:[#allocation2 + $0x20] sm:$0x1]
        %v328 = vsel %vm314, 0, %v327
        %329 = vst [vmem:[#allocation2 + $0x20] sm:$0x1] %v328
        %v330 = vld [vmem:[#allocation2 + $0x28] sm:$0x1]
        %v331 = vsel %vm314, 0, %v330
        %332 = vst [vmem:[#allocation2 + $0x28] sm:$0x1] %v331
        %v333 = vld [vmem:[#allocation2 + $0x30] sm:$0x1]
        %v334 = vsel %vm314, 0, %v333
        %335 = vst [vmem:[#allocation2 + $0x30] sm:$0x1] %v334
        %v336 = vld [vmem:[#allocation2 + $0x38] sm:$0x1]
        %v337 = vsel %vm314, 0, %v336
        %338 = vst [vmem:[#allocation2 + $0x38] sm:$0x1] %v337
        %v339 = vld [vmem:[#allocation2 + $0x40] sm:$0x1]
        %v340 = vsel %vm314, 0, %v339
        %341 = vst [vmem:[#allocation2 + $0x40] sm:$0x1] %v340
        %v342 = vld [vmem:[#allocation2 + $0x48] sm:$0x1]
        %v343 = vsel %vm314, 0, %v342
        %344 = vst [vmem:[#allocation2 + $0x48] sm:$0x1] %v343
        %vm345 = vsmask.f32 7938
        %vm346 = vmand %vm312, %vm345
        %v347 = vld [vmem:[#allocation2 + $0x4] sm:$0x1]
        %v348 = vsel %vm346, 0, %v347
        %349 = vst [vmem:[#allocation2 + $0x4] sm:$0x1] %v348
        %v350 = vld [vmem:[#allocation2 + $0xc] sm:$0x1]
        %v351 = vsel %vm346, 0, %v350
        %352 = vst [vmem:[#allocation2 + $0xc] sm:$0x1] %v351
        %v353 = vld [vmem:[#allocation2 + $0x14] sm:$0x1]
        %v354 = vsel %vm346, 0, %v353
        %355 = vst [vmem:[#allocation2 + $0x14] sm:$0x1] %v354
        %v356 = vld [vmem:[#allocation2 + $0x1c] sm:$0x1]
        %v357 = vsel %vm346, 0, %v356
        %358 = vst [vmem:[#allocation2 + $0x1c] sm:$0x1] %v357
        %v359 = vld [vmem:[#allocation2 + $0x24] sm:$0x1]
        %v360 = vsel %vm346, 0, %v359
        %361 = vst [vmem:[#allocation2 + $0x24] sm:$0x1] %v360
        %v362 = vld [vmem:[#allocation2 + $0x2c] sm:$0x1]
        %v363 = vsel %vm346, 0, %v362
        %364 = vst [vmem:[#allocation2 + $0x2c] sm:$0x1] %v363
        %v365 = vld [vmem:[#allocation2 + $0x34] sm:$0x1]
        %v366 = vsel %vm346, 0, %v365
        %367 = vst [vmem:[#allocation2 + $0x34] sm:$0x1] %v366
        %v368 = vld [vmem:[#allocation2 + $0x3c] sm:$0x1]
        %v369 = vsel %vm346, 0, %v368
        %370 = vst [vmem:[#allocation2 + $0x3c] sm:$0x1] %v369
        %v371 = vld [vmem:[#allocation2 + $0x44] sm:$0x1]
        %v372 = vsel %vm346, 0, %v371
        %373 = vst [vmem:[#allocation2 + $0x44] sm:$0x1] %v372
        %v374 = vld [vmem:[#allocation2 + $0x4c] sm:$0x1]
        %v375 = vsel %vm346, 0, %v374
        %376 = vst [vmem:[#allocation2 + $0x4c] sm:$0x1] %v375
        %v377 = vld [vmem:[%s303] sm:$0xff]
        %v378 = vld [vmem:[%s303 + $0x8] sm:$0xff]
        %v379 = vld [vmem:[%s303 + $0x10] sm:$0xff]
        %v380 = vld [vmem:[%s303 + $0x18] sm:$0xff]
        %v381 = vld [vmem:[%s303 + $0x20] sm:$0xff]
        %v382 = vld [vmem:[%s303 + $0x28] sm:$0xff]
        %v383 = vld [vmem:[%s303 + $0x30] sm:$0xff]
        %v384 = vld [vmem:[%s303 + $0x38] sm:$0xff]
        %v385 = vpack.c.bf16 %v377, %v377
        %v386 = vpack.c.bf16 %v378, %v378
        %v387 = vpack.c.bf16 %v379, %v379
        %v388 = vpack.c.bf16 %v380, %v380
        %v389 = vpack.c.bf16 %v381, %v381
        %v390 = vpack.c.bf16 %v382, %v382
        %v391 = vpack.c.bf16 %v383, %v383
        %v392 = vpack.c.bf16 %v384, %v384
        %v401 = vunpack.c.l.b16 %v385
        %v402 = vunpack.c.l.b16 %v386
        %v403 = vunpack.c.l.b16 %v387
        %v404 = vunpack.c.l.b16 %v388
        %v405 = vunpack.c.l.b16 %v389
        %v406 = vunpack.c.l.b16 %v390
        %v407 = vunpack.c.l.b16 %v391
        %v408 = vunpack.c.l.b16 %v392
        %v409 = vpack.c.b16 %v401, %v401
        %v410 = vpack.c.b16 %v402, %v402
        %v411 = vpack.c.b16 %v403, %v403
        %v412 = vpack.c.b16 %v404, %v404
        %v413 = vpack.c.b16 %v405, %v405
        %v414 = vpack.c.b16 %v406, %v406
        %v415 = vpack.c.b16 %v407, %v407
        %v416 = vpack.c.b16 %v408, %v408
        %v418 = vshrl.u32 %v409, 16
        %v420 = vrot.slane %v418, 7
        %v421 = vshll.u32 %v409, 16
        %v423 = vor.u32 %v420, %v421
        %v424 = vrot.slane %v420, 4
        %v426 = vshrl.u32 %v410, 16
        %v428 = vrot.slane %v426, 7
        %v429 = vshll.u32 %v410, 16
        %v431 = vor.u32 %v428, %v429
        %v432 = vrot.slane %v428, 4
        %v434 = vshrl.u32 %v411, 16
        %v436 = vrot.slane %v434, 7
        %v437 = vshll.u32 %v411, 16
        %v439 = vor.u32 %v436, %v437
        %v440 = vrot.slane %v436, 4
        %v442 = vshrl.u32 %v412, 16
        %v444 = vrot.slane %v442, 7
        %v445 = vshll.u32 %v412, 16
        %v447 = vor.u32 %v444, %v445
        %v448 = vrot.slane %v444, 4
        %v450 = vshrl.u32 %v413, 16
        %v452 = vrot.slane %v450, 7
        %v453 = vshll.u32 %v413, 16
        %v455 = vor.u32 %v452, %v453
        %v456 = vrot.slane %v452, 4
        %v458 = vshrl.u32 %v414, 16
        %v460 = vrot.slane %v458, 7
        %v461 = vshll.u32 %v414, 16
        %v463 = vor.u32 %v460, %v461
        %v464 = vrot.slane %v460, 4
        %v466 = vshrl.u32 %v415, 16
        %v468 = vrot.slane %v466, 7
        %v469 = vshll.u32 %v415, 16
        %v471 = vor.u32 %v468, %v469
        %v472 = vrot.slane %v468, 4
        %v474 = vshrl.u32 %v416, 16
        %v476 = vrot.slane %v474, 7
        %v477 = vshll.u32 %v416, 16
        %v479 = vor.u32 %v476, %v477
        %v480 = vrot.slane %v476, 4
        %s497 = scalar_lea.vmem [#allocation2], 8
        %vm498 = vcmask 257024
        %vm499 = vmand %vm498, %vm345
        %v500 = vld [vmem:[%s497] sm:$0xf]
        %v501 = vsel %vm499, %v423, %v500
        %502 = vst [vmem:[%s497] sm:$0xf] %v501
        %v503 = vld [vmem:[%s497 + $0x4] sm:$0x1]
        %v504 = vsel %vm314, %v424, %v503
        %505 = vst [vmem:[%s497 + $0x4] sm:$0x1] %v504
        %v506 = vld [vmem:[%s497 + $0x8] sm:$0xf]
        %v507 = vsel %vm499, %v431, %v506
        %508 = vst [vmem:[%s497 + $0x8] sm:$0xf] %v507
        %v509 = vld [vmem:[%s497 + $0xc] sm:$0x1]
        %v510 = vsel %vm314, %v432, %v509
        %511 = vst [vmem:[%s497 + $0xc] sm:$0x1] %v510
        %v512 = vld [vmem:[%s497 + $0x10] sm:$0xf]
        %v513 = vsel %vm499, %v439, %v512
        %514 = vst [vmem:[%s497 + $0x10] sm:$0xf] %v513
        %v515 = vld [vmem:[%s497 + $0x14] sm:$0x1]
        %v516 = vsel %vm314, %v440, %v515
        %517 = vst [vmem:[%s497 + $0x14] sm:$0x1] %v516
        %v518 = vld [vmem:[%s497 + $0x18] sm:$0xf]
        %v519 = vsel %vm499, %v447, %v518
        %520 = vst [vmem:[%s497 + $0x18] sm:$0xf] %v519
        %v521 = vld [vmem:[%s497 + $0x1c] sm:$0x1]
        %v522 = vsel %vm314, %v448, %v521
        %523 = vst [vmem:[%s497 + $0x1c] sm:$0x1] %v522
        %v524 = vld [vmem:[%s497 + $0x20] sm:$0xf]
        %v525 = vsel %vm499, %v455, %v524
        %526 = vst [vmem:[%s497 + $0x20] sm:$0xf] %v525
        %v527 = vld [vmem:[%s497 + $0x24] sm:$0x1]
        %v528 = vsel %vm314, %v456, %v527
        %529 = vst [vmem:[%s497 + $0x24] sm:$0x1] %v528
        %v530 = vld [vmem:[%s497 + $0x28] sm:$0xf]
        %v531 = vsel %vm499, %v463, %v530
        %532 = vst [vmem:[%s497 + $0x28] sm:$0xf] %v531
        %v533 = vld [vmem:[%s497 + $0x2c] sm:$0x1]
        %v534 = vsel %vm314, %v464, %v533
        %535 = vst [vmem:[%s497 + $0x2c] sm:$0x1] %v534
        %v536 = vld [vmem:[%s497 + $0x30] sm:$0xf]
        %v537 = vsel %vm499, %v471, %v536
        %538 = vst [vmem:[%s497 + $0x30] sm:$0xf] %v537
        %v539 = vld [vmem:[%s497 + $0x34] sm:$0x1]
        %v540 = vsel %vm314, %v472, %v539
        %541 = vst [vmem:[%s497 + $0x34] sm:$0x1] %v540
        %v542 = vld [vmem:[%s497 + $0x38] sm:$0xf]
        %v543 = vsel %vm499, %v479, %v542
        %544 = vst [vmem:[%s497 + $0x38] sm:$0xf] %v543
        %v545 = vld [vmem:[%s497 + $0x3c] sm:$0x1]
        %v546 = vsel %vm314, %v480, %v545
        %547 = vst [vmem:[%s497 + $0x3c] sm:$0x1] %v546
        %v548 = vld [vmem:[#allocation2] sm:$0xf]
        %v549 = vld [vmem:[#allocation2 + $0x8] sm:$0xf]
        %v550 = vld [vmem:[#allocation2 + $0x10] sm:$0xf]
        %v551 = vld [vmem:[#allocation2 + $0x18] sm:$0xf]
        %v552 = vld [vmem:[#allocation2 + $0x20] sm:$0xf]
        %v553 = vld [vmem:[#allocation2 + $0x28] sm:$0xf]
        %v554 = vld [vmem:[#allocation2 + $0x30] sm:$0xf]
        %v555 = vld [vmem:[#allocation2 + $0x38] sm:$0xf]
        %v564 = vunpack.c.l.b16 %v548
        %v565 = vunpack.c.l.b16 %v549
        %v566 = vunpack.c.l.b16 %v550
        %v567 = vunpack.c.l.b16 %v551
        %v568 = vunpack.c.l.b16 %v552
        %v569 = vunpack.c.l.b16 %v553
        %v570 = vunpack.c.l.b16 %v554
        %v571 = vunpack.c.l.b16 %v555
        %v572 = vpack.c.b16 %v565, %v564
        %v573 = vpack.c.b16 %v567, %v566
        %v574 = vpack.c.b16 %v569, %v568
        %v575 = vpack.c.b16 %v571, %v570
        %vm580 = vcmask 261120
        %581 = vst.msk [vmem:[#allocation3] sm:$0xff] %vm580, %v572
        %582 = vst.msk [vmem:[#allocation3 + $0x18] sm:$0xff] %vm580, %v573
        %583 = vst.msk [vmem:[#allocation3 + $0x30] sm:$0xff] %vm580, %v574
        %584 = vst.msk [vmem:[#allocation3 + $0x48] sm:$0xff] %vm580, %v575
        %v585 = vld [vmem:[#allocation2] sm:$0xf]
        %v586 = vld [vmem:[#allocation2 + $0x4] sm:$0x1]
        %v587 = vld [vmem:[#allocation2 + $0x8] sm:$0xf]
        %v588 = vld [vmem:[#allocation2 + $0xc] sm:$0x1]
        %v589 = vld [vmem:[#allocation2 + $0x10] sm:$0xf]
        %v590 = vld [vmem:[#allocation2 + $0x14] sm:$0x1]
        %v591 = vld [vmem:[#allocation2 + $0x18] sm:$0xf]
        %v592 = vld [vmem:[#allocation2 + $0x1c] sm:$0x1]
        %v593 = vld [vmem:[#allocation2 + $0x20] sm:$0xf]
        %v594 = vld [vmem:[#allocation2 + $0x24] sm:$0x1]
        %v595 = vld [vmem:[#allocation2 + $0x28] sm:$0xf]
        %v596 = vld [vmem:[#allocation2 + $0x2c] sm:$0x1]
        %v597 = vld [vmem:[#allocation2 + $0x30] sm:$0xf]
        %v598 = vld [vmem:[#allocation2 + $0x34] sm:$0x1]
        %v599 = vld [vmem:[#allocation2 + $0x38] sm:$0xf]
        %v600 = vld [vmem:[#allocation2 + $0x3c] sm:$0x1]
        %vm601 = vsmask.f32 3328
        %vm602 = vsmask.f32 7440
        %vm603 = vmor %vm601, %vm602
        %v605 = vshrl.u32 %v585, 16
        %v607 = vrot.slane %v605, 4
        %v608 = vshll.u32 %v585, 16
        %v610 = vrot.slane %v608, 5
        %v611 = vor.u32 %v607, %v610
        %v612 = vrot.slane %v611, 4
        %v614 = vshll.u32 %v586, 16
        %v616 = vrot.slane %v614, 5
        %v617 = vsel %vm603, %v612, %v616
        %v619 = vshrl.u32 %v587, 16
        %v621 = vrot.slane %v619, 4
        %v622 = vshll.u32 %v587, 16
        %v624 = vrot.slane %v622, 5
        %v625 = vor.u32 %v621, %v624
        %v626 = vrot.slane %v625, 4
        %v628 = vshll.u32 %v588, 16
        %v630 = vrot.slane %v628, 5
        %v631 = vsel %vm603, %v626, %v630
        %v633 = vshrl.u32 %v589, 16
        %v635 = vrot.slane %v633, 4
        %v636 = vshll.u32 %v589, 16
        %v638 = vrot.slane %v636, 5
        %v639 = vor.u32 %v635, %v638
        %v640 = vrot.slane %v639, 4
        %v642 = vshll.u32 %v590, 16
        %v644 = vrot.slane %v642, 5
        %v645 = vsel %vm603, %v640, %v644
        %v647 = vshrl.u32 %v591, 16
        %v649 = vrot.slane %v647, 4
        %v650 = vshll.u32 %v591, 16
        %v652 = vrot.slane %v650, 5
        %v653 = vor.u32 %v649, %v652
        %v654 = vrot.slane %v653, 4
        %v656 = vshll.u32 %v592, 16
        %v658 = vrot.slane %v656, 5
        %v659 = vsel %vm603, %v654, %v658
        %v661 = vshrl.u32 %v593, 16
        %v663 = vrot.slane %v661, 4
        %v664 = vshll.u32 %v593, 16
        %v666 = vrot.slane %v664, 5
        %v667 = vor.u32 %v663, %v666
        %v668 = vrot.slane %v667, 4
        %v670 = vshll.u32 %v594, 16
        %v672 = vrot.slane %v670, 5
        %v673 = vsel %vm603, %v668, %v672
        %v675 = vshrl.u32 %v595, 16
        %v677 = vrot.slane %v675, 4
        %v678 = vshll.u32 %v595, 16
        %v680 = vrot.slane %v678, 5
        %v681 = vor.u32 %v677, %v680
        %v682 = vrot.slane %v681, 4
        %v684 = vshll.u32 %v596, 16
        %v686 = vrot.slane %v684, 5
        %v687 = vsel %vm603, %v682, %v686
        %v689 = vshrl.u32 %v597, 16
        %v691 = vrot.slane %v689, 4
        %v692 = vshll.u32 %v597, 16
        %v694 = vrot.slane %v692, 5
        %v695 = vor.u32 %v691, %v694
        %v696 = vrot.slane %v695, 4
        %v698 = vshll.u32 %v598, 16
        %v700 = vrot.slane %v698, 5
        %v701 = vsel %vm603, %v696, %v700
        %v703 = vshrl.u32 %v599, 16
        %v705 = vrot.slane %v703, 4
        %v706 = vshll.u32 %v599, 16
        %v708 = vrot.slane %v706, 5
        %v709 = vor.u32 %v705, %v708
        %v710 = vrot.slane %v709, 4
        %v712 = vshll.u32 %v600, 16
        %v714 = vrot.slane %v712, 5
        %v715 = vsel %vm603, %v710, %v714
        %v716 = vunpack.c.l.b16 %v617
        %v717 = vunpack.c.l.b16 %v631
        %v718 = vunpack.c.l.b16 %v645
        %v719 = vunpack.c.l.b16 %v659
        %v720 = vunpack.c.l.b16 %v673
        %v721 = vunpack.c.l.b16 %v687
        %v722 = vunpack.c.l.b16 %v701
        %v723 = vunpack.c.l.b16 %v715
        %v724 = vpack.c.b16 %v717, %v716
        %v725 = vpack.c.b16 %v719, %v718
        %v726 = vpack.c.b16 %v721, %v720
        %v727 = vpack.c.b16 %v723, %v722
        %728 = vrot.lane.b32.xlu0 %v724, 32
        %v729 = vpop.permute.xlu0 %728
        %730 = vrot.lane.b32.xlu0 %v725, 32
        %v731 = vpop.permute.xlu0 %730
        %732 = vrot.lane.b32.xlu0 %v726, 32
        %v733 = vpop.permute.xlu0 %732
        %734 = vrot.lane.b32.xlu0 %v727, 32
        %v735 = vpop.permute.xlu0 %734
        %vm740 = vcmask 523520
        %741 = vst.msk [vmem:[#allocation3] sm:$0xff] %vm740, %v729
        %742 = vst.msk [vmem:[#allocation3 + $0x18] sm:$0xff] %vm740, %v731
        %743 = vst.msk [vmem:[#allocation3 + $0x30] sm:$0xff] %vm740, %v733
        %744 = vst.msk [vmem:[#allocation3 + $0x48] sm:$0xff] %vm740, %v735
        %v745 = vld [vmem:[#allocation2] sm:$0xe]
        %v746 = vld [vmem:[#allocation2 + $0x4] sm:$0x1]
        %v747 = vld [vmem:[#allocation2 + $0x8] sm:$0xe]
        %v748 = vld [vmem:[#allocation2 + $0xc] sm:$0x1]
        %v749 = vld [vmem:[#allocation2 + $0x10] sm:$0xe]
        %v750 = vld [vmem:[#allocation2 + $0x14] sm:$0x1]
        %v751 = vld [vmem:[#allocation2 + $0x18] sm:$0xe]
        %v752 = vld [vmem:[#allocation2 + $0x1c] sm:$0x1]
        %v753 = vld [vmem:[#allocation2 + $0x20] sm:$0xe]
        %v754 = vld [vmem:[#allocation2 + $0x24] sm:$0x1]
        %v755 = vld [vmem:[#allocation2 + $0x28] sm:$0xe]
        %v756 = vld [vmem:[#allocation2 + $0x2c] sm:$0x1]
        %v757 = vld [vmem:[#allocation2 + $0x30] sm:$0xe]
        %v758 = vld [vmem:[#allocation2 + $0x34] sm:$0x1]
        %v759 = vld [vmem:[#allocation2 + $0x38] sm:$0xe]
        %v760 = vld [vmem:[#allocation2 + $0x3c] sm:$0x1]
        %vm777 = vcmask 1042432
        %vm778 = vcmask 1046532
        %vm779 = vmor %vm777, %vm778
        %v780 = vrot.slane %v745, 5
        %v781 = vrot.slane %v780, 4
        %v782 = vrot.slane %v746, 5
        %v783 = vsel %vm779, %v781, %v782
        %v784 = vrot.slane %v747, 5
        %v785 = vrot.slane %v784, 4
        %v786 = vrot.slane %v748, 5
        %v787 = vsel %vm779, %v785, %v786
        %v788 = vrot.slane %v749, 5
        %v789 = vrot.slane %v788, 4
        %v790 = vrot.slane %v750, 5
        %v791 = vsel %vm779, %v789, %v790
        %v792 = vrot.slane %v751, 5
        %v793 = vrot.slane %v792, 4
        %v794 = vrot.slane %v752, 5
        %v795 = vsel %vm779, %v793, %v794
        %v796 = vrot.slane %v753, 5
        %v797 = vrot.slane %v796, 4
        %v798 = vrot.slane %v754, 5
        %v799 = vsel %vm779, %v797, %v798
        %v800 = vrot.slane %v755, 5
        %v801 = vrot.slane %v800, 4
        %v802 = vrot.slane %v756, 5
        %v803 = vsel %vm779, %v801, %v802
        %v804 = vrot.slane %v757, 5
        %v805 = vrot.slane %v804, 4
        %v806 = vrot.slane %v758, 5
        %v807 = vsel %vm779, %v805, %v806
        %v808 = vrot.slane %v759, 5
        %v809 = vrot.slane %v808, 4
        %v810 = vrot.slane %v760, 5
        %v811 = vsel %vm779, %v809, %v810
        %v812 = vunpack.c.l.b16 %v783
        %v813 = vunpack.c.l.b16 %v787
        %v814 = vunpack.c.l.b16 %v791
        %v815 = vunpack.c.l.b16 %v795
        %v816 = vunpack.c.l.b16 %v799
        %v817 = vunpack.c.l.b16 %v803
        %v818 = vunpack.c.l.b16 %v807
        %v819 = vunpack.c.l.b16 %v811
        %v820 = vpack.c.b16 %v813, %v812
        %v821 = vpack.c.b16 %v815, %v814
        %v822 = vpack.c.b16 %v817, %v816
        %v823 = vpack.c.b16 %v819, %v818
        %824 = vrot.lane.b32.xlu0 %v820, 64
        %v825 = vpop.permute.xlu0 %824
        %826 = vrot.lane.b32.xlu0 %v821, 64
        %v827 = vpop.permute.xlu0 %826
        %828 = vrot.lane.b32.xlu0 %v822, 64
        %v829 = vpop.permute.xlu0 %828
        %830 = vrot.lane.b32.xlu0 %v823, 64
        %v831 = vpop.permute.xlu0 %830
        %vm836 = vcmask 785920
        %837 = vst.msk [vmem:[#allocation3] sm:$0xff] %vm836, %v825
        %838 = vst.msk [vmem:[#allocation3 + $0x18] sm:$0xff] %vm836, %v827
        %839 = vst.msk [vmem:[#allocation3 + $0x30] sm:$0xff] %vm836, %v829
        %840 = vst.msk [vmem:[#allocation3 + $0x48] sm:$0xff] %vm836, %v831
        %v841 = vld [vmem:[%s497] sm:$0xf]
        %v842 = vld [vmem:[%s497 + $0x8] sm:$0xf]
        %v843 = vld [vmem:[%s497 + $0x10] sm:$0xf]
        %v844 = vld [vmem:[%s497 + $0x18] sm:$0xf]
        %v845 = vld [vmem:[%s497 + $0x20] sm:$0xf]
        %v846 = vld [vmem:[%s497 + $0x28] sm:$0xf]
        %v847 = vld [vmem:[%s497 + $0x30] sm:$0xf]
        %v848 = vld [vmem:[%s497 + $0x38] sm:$0xf]
        %v857 = vunpack.c.l.b16 %v841
        %v858 = vunpack.c.l.b16 %v842
        %v859 = vunpack.c.l.b16 %v843
        %v860 = vunpack.c.l.b16 %v844
        %v861 = vunpack.c.l.b16 %v845
        %v862 = vunpack.c.l.b16 %v846
        %v863 = vunpack.c.l.b16 %v847
        %v864 = vunpack.c.l.b16 %v848
        %v865 = vpack.c.b16 %v858, %v857
        %v866 = vpack.c.b16 %v860, %v859
        %v867 = vpack.c.b16 %v862, %v861
        %v868 = vpack.c.b16 %v864, %v863
        %869 = vrot.lane.b32.xlu0 %v865, 96
        %v870 = vpop.permute.xlu0 %869
        %871 = vrot.lane.b32.xlu0 %v866, 96
        %v872 = vpop.permute.xlu0 %871
        %873 = vrot.lane.b32.xlu0 %v867, 96
        %v874 = vpop.permute.xlu0 %873
        %875 = vrot.lane.b32.xlu0 %v868, 96
        %v876 = vpop.permute.xlu0 %875
        %vm881 = vcmask 1048320
        %882 = vst.msk [vmem:[#allocation3] sm:$0xff] %vm881, %v870
        %883 = vst.msk [vmem:[#allocation3 + $0x18] sm:$0xff] %vm881, %v872
        %884 = vst.msk [vmem:[#allocation3 + $0x30] sm:$0xff] %vm881, %v874
        %885 = vst.msk [vmem:[#allocation3 + $0x48] sm:$0xff] %vm881, %v876
        %v886 = vld [vmem:[%s497] sm:$0xf]
        %v887 = vld [vmem:[%s497 + $0x4] sm:$0x1]
        %v888 = vld [vmem:[%s497 + $0x8] sm:$0xf]
        %v889 = vld [vmem:[%s497 + $0xc] sm:$0x1]
        %v890 = vld [vmem:[%s497 + $0x10] sm:$0xf]
        %v891 = vld [vmem:[%s497 + $0x14] sm:$0x1]
        %v892 = vld [vmem:[%s497 + $0x18] sm:$0xf]
        %v893 = vld [vmem:[%s497 + $0x1c] sm:$0x1]
        %v894 = vld [vmem:[%s497 + $0x20] sm:$0xf]
        %v895 = vld [vmem:[%s497 + $0x24] sm:$0x1]
        %v896 = vld [vmem:[%s497 + $0x28] sm:$0xf]
        %v897 = vld [vmem:[%s497 + $0x2c] sm:$0x1]
        %v898 = vld [vmem:[%s497 + $0x30] sm:$0xf]
        %v899 = vld [vmem:[%s497 + $0x34] sm:$0x1]
        %v900 = vld [vmem:[%s497 + $0x38] sm:$0xf]
        %v901 = vld [vmem:[%s497 + $0x3c] sm:$0x1]
        %v903 = vshrl.u32 %v886, 16
        %v905 = vrot.slane %v903, 4
        %v906 = vshll.u32 %v886, 16
        %v908 = vrot.slane %v906, 5
        %v909 = vor.u32 %v905, %v908
        %v910 = vrot.slane %v909, 4
        %v912 = vshll.u32 %v887, 16
        %v914 = vrot.slane %v912, 5
        %v915 = vsel %vm603, %v910, %v914
        %v917 = vshrl.u32 %v888, 16
        %v919 = vrot.slane %v917, 4
        %v920 = vshll.u32 %v888, 16
        %v922 = vrot.slane %v920, 5
        %v923 = vor.u32 %v919, %v922
        %v924 = vrot.slane %v923, 4
        %v926 = vshll.u32 %v889, 16
        %v928 = vrot.slane %v926, 5
        %v929 = vsel %vm603, %v924, %v928
        %v931 = vshrl.u32 %v890, 16
        %v933 = vrot.slane %v931, 4
        %v934 = vshll.u32 %v890, 16
        %v936 = vrot.slane %v934, 5
        %v937 = vor.u32 %v933, %v936
        %v938 = vrot.slane %v937, 4
        %v940 = vshll.u32 %v891, 16
        %v942 = vrot.slane %v940, 5
        %v943 = vsel %vm603, %v938, %v942
        %v945 = vshrl.u32 %v892, 16
        %v947 = vrot.slane %v945, 4
        %v948 = vshll.u32 %v892, 16
        %v950 = vrot.slane %v948, 5
        %v951 = vor.u32 %v947, %v950
        %v952 = vrot.slane %v951, 4
        %v954 = vshll.u32 %v893, 16
        %v956 = vrot.slane %v954, 5
        %v957 = vsel %vm603, %v952, %v956
        %v959 = vshrl.u32 %v894, 16
        %v961 = vrot.slane %v959, 4
        %v962 = vshll.u32 %v894, 16
        %v964 = vrot.slane %v962, 5
        %v965 = vor.u32 %v961, %v964
        %v966 = vrot.slane %v965, 4
        %v968 = vshll.u32 %v895, 16
        %v970 = vrot.slane %v968, 5
        %v971 = vsel %vm603, %v966, %v970
        %v973 = vshrl.u32 %v896, 16
        %v975 = vrot.slane %v973, 4
        %v976 = vshll.u32 %v896, 16
        %v978 = vrot.slane %v976, 5
        %v979 = vor.u32 %v975, %v978
        %v980 = vrot.slane %v979, 4
        %v982 = vshll.u32 %v897, 16
        %v984 = vrot.slane %v982, 5
        %v985 = vsel %vm603, %v980, %v984
        %v987 = vshrl.u32 %v898, 16
        %v989 = vrot.slane %v987, 4
        %v990 = vshll.u32 %v898, 16
        %v992 = vrot.slane %v990, 5
        %v993 = vor.u32 %v989, %v992
        %v994 = vrot.slane %v993, 4
        %v996 = vshll.u32 %v899, 16
        %v998 = vrot.slane %v996, 5
        %v999 = vsel %vm603, %v994, %v998
        %v1001 = vshrl.u32 %v900, 16
        %v1003 = vrot.slane %v1001, 4
        %v1004 = vshll.u32 %v900, 16
        %v1006 = vrot.slane %v1004, 5
        %v1007 = vor.u32 %v1003, %v1006
        %v1008 = vrot.slane %v1007, 4
        %v1010 = vshll.u32 %v901, 16
        %v1012 = vrot.slane %v1010, 5
        %v1013 = vsel %vm603, %v1008, %v1012
        %v1014 = vunpack.c.l.b16 %v915
        %v1015 = vunpack.c.l.b16 %v929
        %v1016 = vunpack.c.l.b16 %v943
        %v1017 = vunpack.c.l.b16 %v957
        %v1018 = vunpack.c.l.b16 %v971
        %v1019 = vunpack.c.l.b16 %v985
        %v1020 = vunpack.c.l.b16 %v999
        %v1021 = vunpack.c.l.b16 %v1013
        %v1022 = vpack.c.b16 %v1015, %v1014
        %v1023 = vpack.c.b16 %v1017, %v1016
        %v1024 = vpack.c.b16 %v1019, %v1018
        %v1025 = vpack.c.b16 %v1021, %v1020
        %1030 = vst.msk [vmem:[#allocation3 + $0x8] sm:$0xff] %vm580, %v1022
        %1031 = vst.msk [vmem:[#allocation3 + $0x20] sm:$0xff] %vm580, %v1023
        %1032 = vst.msk [vmem:[#allocation3 + $0x38] sm:$0xff] %vm580, %v1024
        %1033 = vst.msk [vmem:[#allocation3 + $0x50] sm:$0xff] %vm580, %v1025
        %v1034 = vld [vmem:[%s497] sm:$0xe]
        %v1035 = vld [vmem:[%s497 + $0x4] sm:$0x1]
        %v1036 = vld [vmem:[%s497 + $0x8] sm:$0xe]
        %v1037 = vld [vmem:[%s497 + $0xc] sm:$0x1]
        %v1038 = vld [vmem:[%s497 + $0x10] sm:$0xe]
        %v1039 = vld [vmem:[%s497 + $0x14] sm:$0x1]
        %v1040 = vld [vmem:[%s497 + $0x18] sm:$0xe]
        %v1041 = vld [vmem:[%s497 + $0x1c] sm:$0x1]
        %v1042 = vld [vmem:[%s497 + $0x20] sm:$0xe]
        %v1043 = vld [vmem:[%s497 + $0x24] sm:$0x1]
        %v1044 = vld [vmem:[%s497 + $0x28] sm:$0xe]
        %v1045 = vld [vmem:[%s497 + $0x2c] sm:$0x1]
        %v1046 = vld [vmem:[%s497 + $0x30] sm:$0xe]
        %v1047 = vld [vmem:[%s497 + $0x34] sm:$0x1]
        %v1048 = vld [vmem:[%s497 + $0x38] sm:$0xe]
        %v1049 = vld [vmem:[%s497 + $0x3c] sm:$0x1]
        %v1066 = vrot.slane %v1034, 5
        %v1067 = vrot.slane %v1066, 4
        %v1068 = vrot.slane %v1035, 5
        %v1069 = vsel %vm779, %v1067, %v1068
        %v1070 = vrot.slane %v1036, 5
        %v1071 = vrot.slane %v1070, 4
        %v1072 = vrot.slane %v1037, 5
        %v1073 = vsel %vm779, %v1071, %v1072
        %v1074 = vrot.slane %v1038, 5
        %v1075 = vrot.slane %v1074, 4
        %v1076 = vrot.slane %v1039, 5
        %v1077 = vsel %vm779, %v1075, %v1076
        %v1078 = vrot.slane %v1040, 5
        %v1079 = vrot.slane %v1078, 4
        %v1080 = vrot.slane %v1041, 5
        %v1081 = vsel %vm779, %v1079, %v1080
        %v1082 = vrot.slane %v1042, 5
        %v1083 = vrot.slane %v1082, 4
        %v1084 = vrot.slane %v1043, 5
        %v1085 = vsel %vm779, %v1083, %v1084
        %v1086 = vrot.slane %v1044, 5
        %v1087 = vrot.slane %v1086, 4
        %v1088 = vrot.slane %v1045, 5
        %v1089 = vsel %vm779, %v1087, %v1088
        %v1090 = vrot.slane %v1046, 5
        %v1091 = vrot.slane %v1090, 4
        %v1092 = vrot.slane %v1047, 5
        %v1093 = vsel %vm779, %v1091, %v1092
        %v1094 = vrot.slane %v1048, 5
        %v1095 = vrot.slane %v1094, 4
        %v1096 = vrot.slane %v1049, 5
        %v1097 = vsel %vm779, %v1095, %v1096
        %v1098 = vunpack.c.l.b16 %v1069
        %v1099 = vunpack.c.l.b16 %v1073
        %v1100 = vunpack.c.l.b16 %v1077
        %v1101 = vunpack.c.l.b16 %v1081
        %v1102 = vunpack.c.l.b16 %v1085
        %v1103 = vunpack.c.l.b16 %v1089
        %v1104 = vunpack.c.l.b16 %v1093
        %v1105 = vunpack.c.l.b16 %v1097
        %v1106 = vpack.c.b16 %v1099, %v1098
        %v1107 = vpack.c.b16 %v1101, %v1100
        %v1108 = vpack.c.b16 %v1103, %v1102
        %v1109 = vpack.c.b16 %v1105, %v1104
        %1110 = vrot.lane.b32.xlu0 %v1106, 32
        %v1111 = vpop.permute.xlu0 %1110
        %1112 = vrot.lane.b32.xlu0 %v1107, 32
        %v1113 = vpop.permute.xlu0 %1112
        %1114 = vrot.lane.b32.xlu0 %v1108, 32
        %v1115 = vpop.permute.xlu0 %1114
        %1116 = vrot.lane.b32.xlu0 %v1109, 32
        %v1117 = vpop.permute.xlu0 %1116
        %1122 = vst.msk [vmem:[#allocation3 + $0x8] sm:$0xff] %vm740, %v1111
        %1123 = vst.msk [vmem:[#allocation3 + $0x20] sm:$0xff] %vm740, %v1113
        %1124 = vst.msk [vmem:[#allocation3 + $0x38] sm:$0xff] %vm740, %v1115
        %1125 = vst.msk [vmem:[#allocation3 + $0x50] sm:$0xff] %vm740, %v1117
        %s1126 = scalar_lea.vmem [#allocation2], 16
        %v1127 = vld [vmem:[%s1126] sm:$0xf]
        %v1128 = vld [vmem:[%s1126 + $0x8] sm:$0xf]
        %v1129 = vld [vmem:[%s1126 + $0x10] sm:$0xf]
        %v1130 = vld [vmem:[%s1126 + $0x18] sm:$0xf]
        %v1131 = vld [vmem:[%s1126 + $0x20] sm:$0xf]
        %v1132 = vld [vmem:[%s1126 + $0x28] sm:$0xf]
        %v1133 = vld [vmem:[%s1126 + $0x30] sm:$0xf]
        %v1134 = vld [vmem:[%s1126 + $0x38] sm:$0xf]
        %v1143 = vunpack.c.l.b16 %v1127
        %v1144 = vunpack.c.l.b16 %v1128
        %v1145 = vunpack.c.l.b16 %v1129
        %v1146 = vunpack.c.l.b16 %v1130
        %v1147 = vunpack.c.l.b16 %v1131
        %v1148 = vunpack.c.l.b16 %v1132
        %v1149 = vunpack.c.l.b16 %v1133
        %v1150 = vunpack.c.l.b16 %v1134
        %v1151 = vpack.c.b16 %v1144, %v1143
        %v1152 = vpack.c.b16 %v1146, %v1145
        %v1153 = vpack.c.b16 %v1148, %v1147
        %v1154 = vpack.c.b16 %v1150, %v1149
        %1155 = vrot.lane.b32.xlu0 %v1151, 64
        %v1156 = vpop.permute.xlu0 %1155
        %1157 = vrot.lane.b32.xlu0 %v1152, 64
        %v1158 = vpop.permute.xlu0 %1157
        %1159 = vrot.lane.b32.xlu0 %v1153, 64
        %v1160 = vpop.permute.xlu0 %1159
        %1161 = vrot.lane.b32.xlu0 %v1154, 64
        %v1162 = vpop.permute.xlu0 %1161
        %1167 = vst.msk [vmem:[#allocation3 + $0x8] sm:$0xff] %vm836, %v1156
        %1168 = vst.msk [vmem:[#allocation3 + $0x20] sm:$0xff] %vm836, %v1158
        %1169 = vst.msk [vmem:[#allocation3 + $0x38] sm:$0xff] %vm836, %v1160
        %1170 = vst.msk [vmem:[#allocation3 + $0x50] sm:$0xff] %vm836, %v1162
        %v1171 = vld [vmem:[%s1126] sm:$0xf]
        %v1172 = vld [vmem:[%s1126 + $0x4] sm:$0x1]
        %v1173 = vld [vmem:[%s1126 + $0x8] sm:$0xf]
        %v1174 = vld [vmem:[%s1126 + $0xc] sm:$0x1]
        %v1175 = vld [vmem:[%s1126 + $0x10] sm:$0xf]
        %v1176 = vld [vmem:[%s1126 + $0x14] sm:$0x1]
        %v1177 = vld [vmem:[%s1126 + $0x18] sm:$0xf]
        %v1178 = vld [vmem:[%s1126 + $0x1c] sm:$0x1]
        %v1179 = vld [vmem:[%s1126 + $0x20] sm:$0xf]
        %v1180 = vld [vmem:[%s1126 + $0x24] sm:$0x1]
        %v1181 = vld [vmem:[%s1126 + $0x28] sm:$0xf]
        %v1182 = vld [vmem:[%s1126 + $0x2c] sm:$0x1]
        %v1183 = vld [vmem:[%s1126 + $0x30] sm:$0xf]
        %v1184 = vld [vmem:[%s1126 + $0x34] sm:$0x1]
        %v1185 = vld [vmem:[%s1126 + $0x38] sm:$0xf]
        %v1186 = vld [vmem:[%s1126 + $0x3c] sm:$0x1]
        %v1188 = vshrl.u32 %v1171, 16
        %v1190 = vrot.slane %v1188, 4
        %v1191 = vshll.u32 %v1171, 16
        %v1193 = vrot.slane %v1191, 5
        %v1194 = vor.u32 %v1190, %v1193
        %v1195 = vrot.slane %v1194, 4
        %v1197 = vshll.u32 %v1172, 16
        %v1199 = vrot.slane %v1197, 5
        %v1200 = vsel %vm603, %v1195, %v1199
        %v1202 = vshrl.u32 %v1173, 16
        %v1204 = vrot.slane %v1202, 4
        %v1205 = vshll.u32 %v1173, 16
        %v1207 = vrot.slane %v1205, 5
        %v1208 = vor.u32 %v1204, %v1207
        %v1209 = vrot.slane %v1208, 4
        %v1211 = vshll.u32 %v1174, 16
        %v1213 = vrot.slane %v1211, 5
        %v1214 = vsel %vm603, %v1209, %v1213
        %v1216 = vshrl.u32 %v1175, 16
        %v1218 = vrot.slane %v1216, 4
        %v1219 = vshll.u32 %v1175, 16
        %v1221 = vrot.slane %v1219, 5
        %v1222 = vor.u32 %v1218, %v1221
        %v1223 = vrot.slane %v1222, 4
        %v1225 = vshll.u32 %v1176, 16
        %v1227 = vrot.slane %v1225, 5
        %v1228 = vsel %vm603, %v1223, %v1227
        %v1230 = vshrl.u32 %v1177, 16
        %v1232 = vrot.slane %v1230, 4
        %v1233 = vshll.u32 %v1177, 16
        %v1235 = vrot.slane %v1233, 5
        %v1236 = vor.u32 %v1232, %v1235
        %v1237 = vrot.slane %v1236, 4
        %v1239 = vshll.u32 %v1178, 16
        %v1241 = vrot.slane %v1239, 5
        %v1242 = vsel %vm603, %v1237, %v1241
        %v1244 = vshrl.u32 %v1179, 16
        %v1246 = vrot.slane %v1244, 4
        %v1247 = vshll.u32 %v1179, 16
        %v1249 = vrot.slane %v1247, 5
        %v1250 = vor.u32 %v1246, %v1249
        %v1251 = vrot.slane %v1250, 4
        %v1253 = vshll.u32 %v1180, 16
        %v1255 = vrot.slane %v1253, 5
        %v1256 = vsel %vm603, %v1251, %v1255
        %v1258 = vshrl.u32 %v1181, 16
        %v1260 = vrot.slane %v1258, 4
        %v1261 = vshll.u32 %v1181, 16
        %v1263 = vrot.slane %v1261, 5
        %v1264 = vor.u32 %v1260, %v1263
        %v1265 = vrot.slane %v1264, 4
        %v1267 = vshll.u32 %v1182, 16
        %v1269 = vrot.slane %v1267, 5
        %v1270 = vsel %vm603, %v1265, %v1269
        %v1272 = vshrl.u32 %v1183, 16
        %v1274 = vrot.slane %v1272, 4
        %v1275 = vshll.u32 %v1183, 16
        %v1277 = vrot.slane %v1275, 5
        %v1278 = vor.u32 %v1274, %v1277
        %v1279 = vrot.slane %v1278, 4
        %v1281 = vshll.u32 %v1184, 16
        %v1283 = vrot.slane %v1281, 5
        %v1284 = vsel %vm603, %v1279, %v1283
        %v1286 = vshrl.u32 %v1185, 16
        %v1288 = vrot.slane %v1286, 4
        %v1289 = vshll.u32 %v1185, 16
        %v1291 = vrot.slane %v1289, 5
        %v1292 = vor.u32 %v1288, %v1291
        %v1293 = vrot.slane %v1292, 4
        %v1295 = vshll.u32 %v1186, 16
        %v1297 = vrot.slane %v1295, 5
        %v1298 = vsel %vm603, %v1293, %v1297
        %v1299 = vunpack.c.l.b16 %v1200
        %v1300 = vunpack.c.l.b16 %v1214
        %v1301 = vunpack.c.l.b16 %v1228
        %v1302 = vunpack.c.l.b16 %v1242
        %v1303 = vunpack.c.l.b16 %v1256
        %v1304 = vunpack.c.l.b16 %v1270
        %v1305 = vunpack.c.l.b16 %v1284
        %v1306 = vunpack.c.l.b16 %v1298
        %v1307 = vpack.c.b16 %v1300, %v1299
        %v1308 = vpack.c.b16 %v1302, %v1301
        %v1309 = vpack.c.b16 %v1304, %v1303
        %v1310 = vpack.c.b16 %v1306, %v1305
        %1311 = vrot.lane.b32.xlu0 %v1307, 96
        %v1312 = vpop.permute.xlu0 %1311
        %1313 = vrot.lane.b32.xlu0 %v1308, 96
        %v1314 = vpop.permute.xlu0 %1313
        %1315 = vrot.lane.b32.xlu0 %v1309, 96
        %v1316 = vpop.permute.xlu0 %1315
        %1317 = vrot.lane.b32.xlu0 %v1310, 96
        %v1318 = vpop.permute.xlu0 %1317
        %1323 = vst.msk [vmem:[#allocation3 + $0x8] sm:$0xff] %vm881, %v1312
        %1324 = vst.msk [vmem:[#allocation3 + $0x20] sm:$0xff] %vm881, %v1314
        %1325 = vst.msk [vmem:[#allocation3 + $0x38] sm:$0xff] %vm881, %v1316
        %1326 = vst.msk [vmem:[#allocation3 + $0x50] sm:$0xff] %vm881, %v1318
        %v1327 = vld [vmem:[%s1126] sm:$0xe]
        %v1328 = vld [vmem:[%s1126 + $0x4] sm:$0x1]
        %v1329 = vld [vmem:[%s1126 + $0x8] sm:$0xe]
        %v1330 = vld [vmem:[%s1126 + $0xc] sm:$0x1]
        %v1331 = vld [vmem:[%s1126 + $0x10] sm:$0xe]
        %v1332 = vld [vmem:[%s1126 + $0x14] sm:$0x1]
        %v1333 = vld [vmem:[%s1126 + $0x18] sm:$0xe]
        %v1334 = vld [vmem:[%s1126 + $0x1c] sm:$0x1]
        %v1335 = vld [vmem:[%s1126 + $0x20] sm:$0xe]
        %v1336 = vld [vmem:[%s1126 + $0x24] sm:$0x1]
        %v1337 = vld [vmem:[%s1126 + $0x28] sm:$0xe]
        %v1338 = vld [vmem:[%s1126 + $0x2c] sm:$0x1]
        %v1339 = vld [vmem:[%s1126 + $0x30] sm:$0xe]
        %v1340 = vld [vmem:[%s1126 + $0x34] sm:$0x1]
        %v1341 = vld [vmem:[%s1126 + $0x38] sm:$0xe]
        %v1342 = vld [vmem:[%s1126 + $0x3c] sm:$0x1]
        %v1359 = vrot.slane %v1327, 5
        %v1360 = vrot.slane %v1359, 4
        %v1361 = vrot.slane %v1328, 5
        %v1362 = vsel %vm779, %v1360, %v1361
        %v1363 = vrot.slane %v1329, 5
        %v1364 = vrot.slane %v1363, 4
        %v1365 = vrot.slane %v1330, 5
        %v1366 = vsel %vm779, %v1364, %v1365
        %v1367 = vrot.slane %v1331, 5
        %v1368 = vrot.slane %v1367, 4
        %v1369 = vrot.slane %v1332, 5
        %v1370 = vsel %vm779, %v1368, %v1369
        %v1371 = vrot.slane %v1333, 5
        %v1372 = vrot.slane %v1371, 4
        %v1373 = vrot.slane %v1334, 5
        %v1374 = vsel %vm779, %v1372, %v1373
        %v1375 = vrot.slane %v1335, 5
        %v1376 = vrot.slane %v1375, 4
        %v1377 = vrot.slane %v1336, 5
        %v1378 = vsel %vm779, %v1376, %v1377
        %v1379 = vrot.slane %v1337, 5
        %v1380 = vrot.slane %v1379, 4
        %v1381 = vrot.slane %v1338, 5
        %v1382 = vsel %vm779, %v1380, %v1381
        %v1383 = vrot.slane %v1339, 5
        %v1384 = vrot.slane %v1383, 4
        %v1385 = vrot.slane %v1340, 5
        %v1386 = vsel %vm779, %v1384, %v1385
        %v1387 = vrot.slane %v1341, 5
        %v1388 = vrot.slane %v1387, 4
        %v1389 = vrot.slane %v1342, 5
        %v1390 = vsel %vm779, %v1388, %v1389
        %v1391 = vunpack.c.l.b16 %v1362
        %v1392 = vunpack.c.l.b16 %v1366
        %v1393 = vunpack.c.l.b16 %v1370
        %v1394 = vunpack.c.l.b16 %v1374
        %v1395 = vunpack.c.l.b16 %v1378
        %v1396 = vunpack.c.l.b16 %v1382
        %v1397 = vunpack.c.l.b16 %v1386
        %v1398 = vunpack.c.l.b16 %v1390
        %v1399 = vpack.c.b16 %v1392, %v1391
        %v1400 = vpack.c.b16 %v1394, %v1393
        %v1401 = vpack.c.b16 %v1396, %v1395
        %v1402 = vpack.c.b16 %v1398, %v1397
        %1407 = vst.msk [vmem:[#allocation3 + $0x10] sm:$0xff] %vm580, %v1399
        %1408 = vst.msk [vmem:[#allocation3 + $0x28] sm:$0xff] %vm580, %v1400
        %1409 = vst.msk [vmem:[#allocation3 + $0x40] sm:$0xff] %vm580, %v1401
        %1410 = vst.msk [vmem:[#allocation3 + $0x58] sm:$0xff] %vm580, %v1402
        %v1411 = vld [vmem:[#allocation3] sm:$0xff]
        %v1412 = vld [vmem:[#allocation3 + $0x8] sm:$0xff]
        %v1413 = vld [vmem:[#allocation3 + $0x10] sm:$0xff]
        %v1414 = vld [vmem:[#allocation3 + $0x18] sm:$0xff]
        %v1415 = vld [vmem:[#allocation3 + $0x20] sm:$0xff]
        %v1416 = vld [vmem:[#allocation3 + $0x28] sm:$0xff]
        %v1417 = vld [vmem:[#allocation3 + $0x30] sm:$0xff]
        %v1418 = vld [vmem:[#allocation3 + $0x38] sm:$0xff]
        %v1419 = vld [vmem:[#allocation3 + $0x40] sm:$0xff]
        %v1420 = vld [vmem:[#allocation3 + $0x48] sm:$0xff]
        %v1421 = vld [vmem:[#allocation3 + $0x50] sm:$0xff]
        %v1422 = vld [vmem:[#allocation3 + $0x58] sm:$0xff]
        %v1423 = vld [vmem:[%s1] sm:$0xf]
        %v1424 = vld [vmem:[%s1 + $0x4] sm:$0xf]
        %v1425 = vld [vmem:[%s1 + $0x8] sm:$0xf]
        %v1426 = vld [vmem:[%s1 + $0xc] sm:$0xf]
        %v1427 = vld [vmem:[%s1 + $0x10] sm:$0xf]
        %v1428 = vld [vmem:[%s1 + $0x14] sm:$0xf]
        %v1429 = vld [vmem:[%s1 + $0x18] sm:$0xf]
        %v1430 = vld [vmem:[%s1 + $0x1c] sm:$0xf]
        %v1431 = vld [vmem:[%s1 + $0x20] sm:$0xf]
        %v1432 = vld [vmem:[%s1 + $0x24] sm:$0xf]
        %v1433 = vld [vmem:[%s1 + $0x28] sm:$0xf]
        %v1434 = vld [vmem:[%s1 + $0x2c] sm:$0xf]
        %v1435 = vld [vmem:[%s1 + $0x30] sm:$0xf]
        %v1436 = vld [vmem:[%s1 + $0x34] sm:$0xf]
        %v1437 = vld [vmem:[%s1 + $0x38] sm:$0xf]
        %v1438 = vld [vmem:[%s1 + $0x3c] sm:$0xf]
        %v1439 = vld [vmem:[%s1 + $0x40] sm:$0xf]
        %v1440 = vld [vmem:[%s1 + $0x44] sm:$0xf]
        %v1441 = vld [vmem:[%s1 + $0x48] sm:$0xf]
        %v1442 = vld [vmem:[%s1 + $0x4c] sm:$0xf]
        %v1443 = vld [vmem:[%s1 + $0x50] sm:$0xf]
        %v1444 = vld [vmem:[%s1 + $0x54] sm:$0xf]
        %v1445 = vld [vmem:[%s1 + $0x58] sm:$0xf]
        %v1446 = vld [vmem:[%s1 + $0x5c] sm:$0xf]
        %v1447 = vld [vmem:[%s1 + $0x60] sm:$0xf]
        %v1448 = vld [vmem:[%s1 + $0x64] sm:$0xf]
        %v1449 = vld [vmem:[%s1 + $0x68] sm:$0xf]
        %v1450 = vld [vmem:[%s1 + $0x6c] sm:$0xf]
        %v1451 = vld [vmem:[%s1 + $0x70] sm:$0xf]
        %v1452 = vld [vmem:[%s1 + $0x74] sm:$0xf]
        %v1453 = vld [vmem:[%s1 + $0x78] sm:$0xf]
        %v1454 = vld [vmem:[%s1 + $0x7c] sm:$0xf]
        %v1455 = vld [vmem:[%s1 + $0x80] sm:$0xf]
        %v1456 = vld [vmem:[%s1 + $0x84] sm:$0xf]
        %v1457 = vld [vmem:[%s1 + $0x88] sm:$0xf]
        %v1458 = vld [vmem:[%s1 + $0x8c] sm:$0xf]
        %v1459 = vld [vmem:[%s2] sm:$0x1]
        %v1461 = vlaneseq
        %v1462 = vshrl.u32 %v1461, 7
        %v1463 = vsub.s32 0, %v1462
        %v1464 = vrot.slane %v1459, %v1463
        %v1502 = vunpack.c.l.b16 %v1423
        %v1503 = vunpack.c.l.b16 %v1424
        %v1504 = vunpack.c.l.b16 %v1425
        %v1505 = vunpack.c.l.b16 %v1426
        %v1506 = vunpack.c.l.b16 %v1427
        %v1507 = vunpack.c.l.b16 %v1428
        %v1508 = vunpack.c.l.b16 %v1429
        %v1509 = vunpack.c.l.b16 %v1430
        %v1510 = vunpack.c.l.b16 %v1431
        %v1511 = vunpack.c.l.b16 %v1432
        %v1512 = vunpack.c.l.b16 %v1433
        %v1513 = vunpack.c.l.b16 %v1434
        %v1514 = vunpack.c.l.b16 %v1435
        %v1515 = vunpack.c.l.b16 %v1436
        %v1516 = vunpack.c.l.b16 %v1437
        %v1517 = vunpack.c.l.b16 %v1438
        %v1518 = vunpack.c.l.b16 %v1439
        %v1519 = vunpack.c.l.b16 %v1440
        %v1520 = vunpack.c.l.b16 %v1441
        %v1521 = vunpack.c.l.b16 %v1442
        %v1522 = vunpack.c.l.b16 %v1443
        %v1523 = vunpack.c.l.b16 %v1444
        %v1524 = vunpack.c.l.b16 %v1445
        %v1525 = vunpack.c.l.b16 %v1446
        %v1526 = vunpack.c.l.b16 %v1447
        %v1527 = vunpack.c.l.b16 %v1448
        %v1528 = vunpack.c.l.b16 %v1449
        %v1529 = vunpack.c.l.b16 %v1450
        %v1530 = vunpack.c.l.b16 %v1451
        %v1531 = vunpack.c.l.b16 %v1452
        %v1532 = vunpack.c.l.b16 %v1453
        %v1533 = vunpack.c.l.b16 %v1454
        %v1534 = vunpack.c.l.b16 %v1455
        %v1535 = vunpack.c.l.b16 %v1456
        %v1536 = vunpack.c.l.b16 %v1457
        %v1537 = vunpack.c.l.b16 %v1458
        %v1538 = vpack.c.b16 %v1503, %v1502
        %v1539 = vpack.c.b16 %v1505, %v1504
        %v1540 = vpack.c.b16 %v1507, %v1506
        %v1541 = vpack.c.b16 %v1509, %v1508
        %v1542 = vpack.c.b16 %v1511, %v1510
        %v1543 = vpack.c.b16 %v1513, %v1512
        %v1544 = vpack.c.b16 %v1515, %v1514
        %v1545 = vpack.c.b16 %v1517, %v1516
        %v1546 = vpack.c.b16 %v1519, %v1518
        %v1547 = vpack.c.b16 %v1521, %v1520
        %v1548 = vpack.c.b16 %v1523, %v1522
        %v1549 = vpack.c.b16 %v1525, %v1524
        %v1550 = vpack.c.b16 %v1527, %v1526
        %v1551 = vpack.c.b16 %v1529, %v1528
        %v1552 = vpack.c.b16 %v1531, %v1530
        %v1553 = vpack.c.b16 %v1533, %v1532
        %v1554 = vpack.c.b16 %v1535, %v1534
        %v1555 = vpack.c.b16 %v1537, %v1536
        %v1575 = vsel %vm580, %v1413, 0
        %v1578 = vsel %vm580, %v1416, 0
        %v1581 = vsel %vm580, %v1419, 0
        %v1584 = vsel %vm580, %v1422, 0
        %1586 = vmatprep.subr.bf16.mxu0 0
        %1587 = vmatpush1.bf16.msra.mxu0 %v1538
        %1588 = vmatprep.subr.bf16.mxu0 0
        %1589 = vmatpush1.bf16.msra.mxu0 %v1539
        %1590 = vmatprep.subr.bf16.mxu0 0
        %1591 = vmatpush1.bf16.msra.mxu0 %v1540
        %1592 = vmatprep.subr.bf16.mxu0 0
        %1593 = vmatpush1.bf16.msra.mxu0 %v1541
        %1594 = vmatprep.subr.bf16.mxu0 0
        %1595 = vmatpush1.bf16.msra.mxu0 %v1542
        %1596 = vmatprep.subr.bf16.mxu0 0
        %1597 = vmatpush1.bf16.msra.mxu0 %v1543
        %1598 = vmatprep.subr.bf16.mxu0 0
        %1599 = vmatpush1.bf16.msra.mxu0 %v1544
        %1600 = vmatprep.subr.bf16.mxu0 0
        %1601 = vmatpush1.bf16.msra.mxu0 %v1545
        %1602 = vmatprep.subr.bf16.mxu0 0
        %1603 = vmatpush1.bf16.msra.mxu0 %v1546
        %1604 = vmatprep.subr.bf16.mxu0 0
        %1605 = vmatpush1.bf16.msra.mxu0 %v1547
        %1606 = vmatprep.subr.bf16.mxu0 0
        %1607 = vmatpush1.bf16.msra.mxu0 %v1548
        %1608 = vmatprep.subr.bf16.mxu0 0
        %1609 = vmatpush1.bf16.msra.mxu0 %v1549
        %1610 = vmatprep.subr.bf16.mxu0 0
        %1611 = vmatpush1.bf16.msra.mxu0 %v1550
        %1612 = vmatprep.subr.bf16.mxu0 0
        %1613 = vmatpush1.bf16.msra.mxu0 %v1551
        %1614 = vmatprep.subr.bf16.mxu0 0
        %1615 = vmatpush1.bf16.msra.mxu0 %v1552
        %1616 = vmatprep.subr.bf16.mxu0 0
        %1617 = vmatpush1.bf16.msra.mxu0 %v1553
        %1618 = vmatprep.mubr.bf16.mxu0 %v1412
        %1619 = vmatmul.mubr.bf16.gmra.mrb[0].mxu0 %v1411
        %v1620 = vpop.f32.mrb[0].mxu0
        %v1621 = vadd.f32 %v1464, %v1620
        %v1622 = vpop.f32.mrb[0].mxu0
        %v1623 = vpop.f32.mrb[0].mxu0
        %v1624 = vadd.f32 %v1464, %v1623
        %v1625 = vpop.f32.mrb[0].mxu0
        %1626 = vmatprep.mubr.bf16.mxu0 %v1415
        %1627 = vmatmul.mubr.bf16.gmra.mrb[0].mxu0 %v1414
        %v1628 = vpop.f32.mrb[0].mxu0
        %v1629 = vadd.f32 %v1464, %v1628
        %v1630 = vpop.f32.mrb[0].mxu0
        %v1631 = vpop.f32.mrb[0].mxu0
        %v1632 = vadd.f32 %v1464, %v1631
        %v1633 = vpop.f32.mrb[0].mxu0
        %1634 = vmatprep.mubr.bf16.mxu0 %v1418
        %1635 = vmatmul.mubr.bf16.gmra.mrb[0].mxu0 %v1417
        %v1636 = vpop.f32.mrb[0].mxu0
        %v1637 = vadd.f32 %v1464, %v1636
        %v1638 = vpop.f32.mrb[0].mxu0
        %v1639 = vpop.f32.mrb[0].mxu0
        %v1640 = vadd.f32 %v1464, %v1639
        %v1641 = vpop.f32.mrb[0].mxu0
        %1642 = vmatprep.mubr.bf16.mxu0 %v1421
        %1643 = vmatmul.mubr.bf16.gmra.mrb[0].mxu0 %v1420
        %v1644 = vpop.f32.mrb[0].mxu0
        %v1645 = vadd.f32 %v1464, %v1644
        %v1646 = vpop.f32.mrb[0].mxu0
        %v1647 = vpop.f32.mrb[0].mxu0
        %v1648 = vadd.f32 %v1464, %v1647
        %v1649 = vpop.f32.mrb[0].mxu0
        %1650 = vdwg.mxu0
        %1651 = vmatprep.subr.bf16.mxu0 0
        %1652 = vmatpush1.bf16.msra.mxu0 %v1554
        %1653 = vmatprep.subr.bf16.mxu0 0
        %1654 = vmatpush1.bf16.msra.mxu0 %v1555
        %1655 = vmatprep.subr.bf16.mxu0 0
        %1656 = vmatpush1.bf16.msra.mxu0 0
        %1657 = vmatprep.subr.bf16.mxu0 0
        %1658 = vmatpush1.bf16.msra.mxu0 0
        %1659 = vmatprep.subr.bf16.mxu0 0
        %1660 = vmatpush1.bf16.msra.mxu0 0
        %1661 = vmatprep.subr.bf16.mxu0 0
        %1662 = vmatpush1.bf16.msra.mxu0 0
        %1663 = vmatprep.subr.bf16.mxu0 0
        %1664 = vmatpush1.bf16.msra.mxu0 0
        %1665 = vmatprep.subr.bf16.mxu0 0
        %1666 = vmatpush1.bf16.msra.mxu0 0
        %1667 = vmatprep.subr.bf16.mxu0 0
        %1668 = vmatpush1.bf16.msra.mxu0 0
        %1669 = vmatprep.subr.bf16.mxu0 0
        %1670 = vmatpush1.bf16.msra.mxu0 0
        %1671 = vmatprep.subr.bf16.mxu0 0
        %1672 = vmatpush1.bf16.msra.mxu0 0
        %1673 = vmatprep.subr.bf16.mxu0 0
        %1674 = vmatpush1.bf16.msra.mxu0 0
        %1675 = vmatprep.subr.bf16.mxu0 0
        %1676 = vmatpush1.bf16.msra.mxu0 0
        %1677 = vmatprep.subr.bf16.mxu0 0
        %1678 = vmatpush1.bf16.msra.mxu0 0
        %1679 = vmatprep.subr.bf16.mxu0 0
        %1680 = vmatpush1.bf16.msra.mxu0 0
        %1681 = vmatprep.subr.bf16.mxu0 0
        %1682 = vmatpush1.bf16.msra.mxu0 0
        %1683 = vmatprep.mubr.bf16.mxu0 0
        %1684 = vmatmul.mubr.bf16.gmra.mrb[0].mxu0 %v1575
        %v1685 = vpop.f32.mrb[0].mxu0
        %v1686 = vadd.f32 %v1621, %v1685
        %v1687 = vpop.f32.mrb[0].mxu0
        %v1688 = vpop.f32.mrb[0].mxu0
        %v1689 = vadd.f32 %v1624, %v1688
        %v1690 = vpop.f32.mrb[0].mxu0
        %1691 = vmatprep.mubr.bf16.mxu0 0
        %1692 = vmatmul.mubr.bf16.gmra.mrb[0].mxu0 %v1578
        %v1693 = vpop.f32.mrb[0].mxu0
        %v1694 = vadd.f32 %v1629, %v1693
        %v1695 = vpop.f32.mrb[0].mxu0
        %v1696 = vpop.f32.mrb[0].mxu0
        %v1697 = vadd.f32 %v1632, %v1696
        %v1698 = vpop.f32.mrb[0].mxu0
        %1699 = vmatprep.mubr.bf16.mxu0 0
        %1700 = vmatmul.mubr.bf16.gmra.mrb[0].mxu0 %v1581
        %v1701 = vpop.f32.mrb[0].mxu0
        %v1702 = vadd.f32 %v1637, %v1701
        %v1703 = vpop.f32.mrb[0].mxu0
        %v1704 = vpop.f32.mrb[0].mxu0
        %v1705 = vadd.f32 %v1640, %v1704
        %v1706 = vpop.f32.mrb[0].mxu0
        %1707 = vmatprep.mubr.bf16.mxu0 0
        %1708 = vmatmul.mubr.bf16.gmra.mrb[0].mxu0 %v1584
        %v1709 = vpop.f32.mrb[0].mxu0
        %v1710 = vadd.f32 %v1645, %v1709
        %v1711 = vpop.f32.mrb[0].mxu0
        %v1712 = vpop.f32.mrb[0].mxu0
        %v1713 = vadd.f32 %v1648, %v1712
        %v1714 = vpop.f32.mrb[0].mxu0
        %1715 = vdwg.mxu0
        %1716 = vst.msk [vmem:[%s298] sm:$0xff] %vm580, %v1686
        %1717 = vst.msk [vmem:[%s298 + $0x8] sm:$0xff] %vm580, %v1689
        %1718 = vst.msk [vmem:[%s298 + $0x10] sm:$0xff] %vm580, %v1694
        %1719 = vst.msk [vmem:[%s298 + $0x18] sm:$0xff] %vm580, %v1697
        %1720 = vst.msk [vmem:[%s298 + $0x20] sm:$0xff] %vm580, %v1702
        %1721 = vst.msk [vmem:[%s298 + $0x28] sm:$0xff] %vm580, %v1705
        %1722 = vst.msk [vmem:[%s298 + $0x30] sm:$0xff] %vm580, %v1710
        %1723 = vst.msk [vmem:[%s298 + $0x38] sm:$0xff] %vm580, %v1713
        %v1724 = vld [vmem:[%s3] sm:$0x1f]
        %vm1725 = vcmask 523264
        %v1727 = vsel %vm1725, %v1724, 0
        %1729 = vmatprep.subr.mxu0 0.0
        %1730 = vmatpush1.msra.mxu0 %v1686
        %1731 = vmatprep.subr.mxu0 0.0
        %1732 = vmatpush1.msra.mxu0 %v1689
        %1733 = vmatprep.subr.mxu0 0.0
        %1734 = vmatpush1.msra.mxu0 %v1694
        %1735 = vmatprep.subr.mxu0 0.0
        %1736 = vmatpush1.msra.mxu0 %v1697
        %1737 = vmatprep.subr.mxu0 0.0
        %1738 = vmatpush1.msra.mxu0 %v1702
        %1739 = vmatprep.subr.mxu0 0.0
        %1740 = vmatpush1.msra.mxu0 %v1705
        %1741 = vmatprep.subr.mxu0 0.0
        %1742 = vmatpush1.msra.mxu0 %v1710
        %1743 = vmatprep.subr.mxu0 0.0
        %1744 = vmatpush1.msra.mxu0 %v1713
        %1745 = vmatprep.subr.mxu0 0.0
        %1746 = vmatpush1.msra.mxu0 0.0
        %1747 = vmatprep.subr.mxu0 0.0
        %1748 = vmatpush1.msra.mxu0 0.0
        %1749 = vmatprep.subr.mxu0 0.0
        %1750 = vmatpush1.msra.mxu0 0.0
        %1751 = vmatprep.subr.mxu0 0.0
        %1752 = vmatpush1.msra.mxu0 0.0
        %1753 = vmatprep.subr.mxu0 0.0
        %1754 = vmatpush1.msra.mxu0 0.0
        %1755 = vmatprep.subr.mxu0 0.0
        %1756 = vmatpush1.msra.mxu0 0.0
        %1757 = vmatprep.subr.mxu0 0.0
        %1758 = vmatpush1.msra.mxu0 0.0
        %1759 = vmatprep.subr.mxu0 0.0
        %1760 = vmatpush1.msra.mxu0 0.0
        %1761 = vmatprep.subr.mxu0 0.0
        %1762 = vmatpush1.msra.mxu0 0.0
        %1763 = vmatprep.subr.mxu0 0.0
        %1764 = vmatpush1.msra.mxu0 0.0
        %1765 = vmatprep.subr.mxu0 0.0
        %1766 = vmatpush1.msra.mxu0 0.0
        %1767 = vmatprep.subr.mxu0 0.0
        %1768 = vmatpush1.msra.mxu0 0.0
        %1769 = vmatprep.subr.mxu0 0.0
        %1770 = vmatpush1.msra.mxu0 0.0
        %1771 = vmatprep.subr.mxu0 0.0
        %1772 = vmatpush1.msra.mxu0 0.0
        %1773 = vmatprep.subr.mxu0 0.0
        %1774 = vmatpush1.msra.mxu0 0.0
        %1775 = vmatprep.subr.mxu0 0.0
        %1776 = vmatpush1.msra.mxu0 0.0
        %1777 = vmatprep.subr.mxu0 0.0
        %1778 = vmatpush1.msra.mxu0 0.0
        %1779 = vmatprep.subr.mxu0 0.0
        %1780 = vmatpush1.msra.mxu0 0.0
        %1781 = vmatprep.subr.mxu0 0.0
        %1782 = vmatpush1.msra.mxu0 0.0
        %1783 = vmatprep.subr.mxu0 0.0
        %1784 = vmatpush1.msra.mxu0 0.0
        %1785 = vmatprep.subr.mxu0 0.0
        %1786 = vmatpush1.msra.mxu0 0.0
        %1787 = vmatprep.subr.mxu0 0.0
        %1788 = vmatpush1.msra.mxu0 0.0
        %1789 = vmatprep.subr.mxu0 0.0
        %1790 = vmatpush1.msra.mxu0 0.0
        %1791 = vmatprep.subr.mxu0 0.0
        %1792 = vmatpush1.msra.mxu0 0.0
        %1793 = vmatprep.mubr.f32.mxu0 0.0
        %1794 = vmatmul.mubr.f32.gmra.mrb[0].mxu0 %v1727
        %v1795 = vpop.f32.mrb[0].mxu0
        %v1796 = vadd.f32 0.0, %v1795
        %v1797 = vpop.f32.mrb[0].mxu0
        %1798 = vdwg.mxu0
        %vm1799 = vcmask 258048
        %1800 = vst.msk [vmem:[#allocation4] sm:$0x1f] %vm1799, %v1796
        %v1801 = vld [vmem:[%s303] sm:$0xff]
        %v1802 = vld [vmem:[%s303 + $0x8] sm:$0xff]
        %v1803 = vld [vmem:[%s303 + $0x10] sm:$0xff]
        %v1804 = vld [vmem:[%s303 + $0x18] sm:$0xff]
        %v1805 = vld [vmem:[%s303 + $0x20] sm:$0xff]
        %v1806 = vld [vmem:[%s303 + $0x28] sm:$0xff]
        %v1807 = vld [vmem:[%s303 + $0x30] sm:$0xff]
        %v1808 = vld [vmem:[%s303 + $0x38] sm:$0xff]
        %1817 = vrot.lane.b32.xlu0 %v1801, 96
        %v1818 = vpop.permute.xlu0 %1817
        %1819 = vrot.lane.b32.xlu0 %v1802, 96
        %v1820 = vpop.permute.xlu0 %1819
        %1821 = vrot.lane.b32.xlu0 %v1803, 96
        %v1822 = vpop.permute.xlu0 %1821
        %1823 = vrot.lane.b32.xlu0 %v1804, 96
        %v1824 = vpop.permute.xlu0 %1823
        %1825 = vrot.lane.b32.xlu0 %v1805, 96
        %v1826 = vpop.permute.xlu0 %1825
        %1827 = vrot.lane.b32.xlu0 %v1806, 96
        %v1828 = vpop.permute.xlu0 %1827
        %1829 = vrot.lane.b32.xlu0 %v1807, 96
        %v1830 = vpop.permute.xlu0 %1829
        %1831 = vrot.lane.b32.xlu0 %v1808, 96
        %v1832 = vpop.permute.xlu0 %1831
        %v1841 = vadd.f32 %v1686, %v1818
        %v1842 = vadd.f32 %v1689, %v1820
        %v1843 = vadd.f32 %v1694, %v1822
        %v1844 = vadd.f32 %v1697, %v1824
        %v1845 = vadd.f32 %v1702, %v1826
        %v1846 = vadd.f32 %v1705, %v1828
        %v1847 = vadd.f32 %v1710, %v1830
        %v1848 = vadd.f32 %v1713, %v1832
        %v1849 = vpack.c.bf16 %v1841, %v1841
        %v1850 = vpack.c.bf16 %v1842, %v1842
        %v1851 = vpack.c.bf16 %v1843, %v1843
        %v1852 = vpack.c.bf16 %v1844, %v1844
        %v1853 = vpack.c.bf16 %v1845, %v1845
        %v1854 = vpack.c.bf16 %v1846, %v1846
        %v1855 = vpack.c.bf16 %v1847, %v1847
        %v1856 = vpack.c.bf16 %v1848, %v1848
        %v1865 = vunpack.c.l.b16 %v1849
        %v1866 = vunpack.c.l.b16 %v1850
        %v1867 = vunpack.c.l.b16 %v1851
        %v1868 = vunpack.c.l.b16 %v1852
        %v1869 = vunpack.c.l.b16 %v1853
        %v1870 = vunpack.c.l.b16 %v1854
        %v1871 = vunpack.c.l.b16 %v1855
        %v1872 = vunpack.c.l.b16 %v1856
        %v1873 = vpack.c.b16 %v1865, %v1865
        %v1874 = vpack.c.b16 %v1866, %v1866
        %v1875 = vpack.c.b16 %v1867, %v1867
        %v1876 = vpack.c.b16 %v1868, %v1868
        %v1877 = vpack.c.b16 %v1869, %v1869
        %v1878 = vpack.c.b16 %v1870, %v1870
        %v1879 = vpack.c.b16 %v1871, %v1871
        %v1880 = vpack.c.b16 %v1872, %v1872
        %v1882 = vshrl.u32 %v1873, 16
        %v1884 = vrot.slane %v1882, 7
        %v1885 = vshll.u32 %v1873, 16
        %v1887 = vor.u32 %v1884, %v1885
        %v1888 = vrot.slane %v1884, 4
        %v1890 = vshrl.u32 %v1874, 16
        %v1892 = vrot.slane %v1890, 7
        %v1893 = vshll.u32 %v1874, 16
        %v1895 = vor.u32 %v1892, %v1893
        %v1896 = vrot.slane %v1892, 4
        %v1898 = vshrl.u32 %v1875, 16
        %v1900 = vrot.slane %v1898, 7
        %v1901 = vshll.u32 %v1875, 16
        %v1903 = vor.u32 %v1900, %v1901
        %v1904 = vrot.slane %v1900, 4
        %v1906 = vshrl.u32 %v1876, 16
        %v1908 = vrot.slane %v1906, 7
        %v1909 = vshll.u32 %v1876, 16
        %v1911 = vor.u32 %v1908, %v1909
        %v1912 = vrot.slane %v1908, 4
        %v1914 = vshrl.u32 %v1877, 16
        %v1916 = vrot.slane %v1914, 7
        %v1917 = vshll.u32 %v1877, 16
        %v1919 = vor.u32 %v1916, %v1917
        %v1920 = vrot.slane %v1916, 4
        %v1922 = vshrl.u32 %v1878, 16
        %v1924 = vrot.slane %v1922, 7
        %v1925 = vshll.u32 %v1878, 16
        %v1927 = vor.u32 %v1924, %v1925
        %v1928 = vrot.slane %v1924, 4
        %v1930 = vshrl.u32 %v1879, 16
        %v1932 = vrot.slane %v1930, 7
        %v1933 = vshll.u32 %v1879, 16
        %v1935 = vor.u32 %v1932, %v1933
        %v1936 = vrot.slane %v1932, 4
        %v1938 = vshrl.u32 %v1880, 16
        %v1940 = vrot.slane %v1938, 7
        %v1941 = vshll.u32 %v1880, 16
        %v1943 = vor.u32 %v1940, %v1941
        %v1944 = vrot.slane %v1940, 4
        %v1961 = vld [vmem:[%s497] sm:$0xf]
        %v1962 = vsel %vm499, %v1887, %v1961
        %1963 = vst [vmem:[%s497] sm:$0xf] %v1962
        %v1964 = vld [vmem:[%s497 + $0x4] sm:$0x1]
        %v1965 = vsel %vm314, %v1888, %v1964
        %1966 = vst [vmem:[%s497 + $0x4] sm:$0x1] %v1965
        %v1967 = vld [vmem:[%s497 + $0x8] sm:$0xf]
        %v1968 = vsel %vm499, %v1895, %v1967
        %1969 = vst [vmem:[%s497 + $0x8] sm:$0xf] %v1968
        %v1970 = vld [vmem:[%s497 + $0xc] sm:$0x1]
        %v1971 = vsel %vm314, %v1896, %v1970
        %1972 = vst [vmem:[%s497 + $0xc] sm:$0x1] %v1971
        %v1973 = vld [vmem:[%s497 + $0x10] sm:$0xf]
        %v1974 = vsel %vm499, %v1903, %v1973
        %1975 = vst [vmem:[%s497 + $0x10] sm:$0xf] %v1974
        %v1976 = vld [vmem:[%s497 + $0x14] sm:$0x1]
        %v1977 = vsel %vm314, %v1904, %v1976
        %1978 = vst [vmem:[%s497 + $0x14] sm:$0x1] %v1977
        %v1979 = vld [vmem:[%s497 + $0x18] sm:$0xf]
        %v1980 = vsel %vm499, %v1911, %v1979
        %1981 = vst [vmem:[%s497 + $0x18] sm:$0xf] %v1980
        %v1982 = vld [vmem:[%s497 + $0x1c] sm:$0x1]
        %v1983 = vsel %vm314, %v1912, %v1982
        %1984 = vst [vmem:[%s497 + $0x1c] sm:$0x1] %v1983
        %v1985 = vld [vmem:[%s497 + $0x20] sm:$0xf]
        %v1986 = vsel %vm499, %v1919, %v1985
        %1987 = vst [vmem:[%s497 + $0x20] sm:$0xf] %v1986
        %v1988 = vld [vmem:[%s497 + $0x24] sm:$0x1]
        %v1989 = vsel %vm314, %v1920, %v1988
        %1990 = vst [vmem:[%s497 + $0x24] sm:$0x1] %v1989
        %v1991 = vld [vmem:[%s497 + $0x28] sm:$0xf]
        %v1992 = vsel %vm499, %v1927, %v1991
        %1993 = vst [vmem:[%s497 + $0x28] sm:$0xf] %v1992
        %v1994 = vld [vmem:[%s497 + $0x2c] sm:$0x1]
        %v1995 = vsel %vm314, %v1928, %v1994
        %1996 = vst [vmem:[%s497 + $0x2c] sm:$0x1] %v1995
        %v1997 = vld [vmem:[%s497 + $0x30] sm:$0xf]
        %v1998 = vsel %vm499, %v1935, %v1997
        %1999 = vst [vmem:[%s497 + $0x30] sm:$0xf] %v1998
        %v2000 = vld [vmem:[%s497 + $0x34] sm:$0x1]
        %v2001 = vsel %vm314, %v1936, %v2000
        %2002 = vst [vmem:[%s497 + $0x34] sm:$0x1] %v2001
        %v2003 = vld [vmem:[%s497 + $0x38] sm:$0xf]
        %v2004 = vsel %vm499, %v1943, %v2003
        %2005 = vst [vmem:[%s497 + $0x38] sm:$0xf] %v2004
        %v2006 = vld [vmem:[%s497 + $0x3c] sm:$0x1]
        %v2007 = vsel %vm314, %v1944, %v2006
        %2008 = vst [vmem:[%s497 + $0x3c] sm:$0x1] %v2007
        %v2009 = vld [vmem:[#allocation2] sm:$0xf]
        %v2010 = vld [vmem:[#allocation2 + $0x8] sm:$0xf]
        %v2011 = vld [vmem:[#allocation2 + $0x10] sm:$0xf]
        %v2012 = vld [vmem:[#allocation2 + $0x18] sm:$0xf]
        %v2013 = vld [vmem:[#allocation2 + $0x20] sm:$0xf]
        %v2014 = vld [vmem:[#allocation2 + $0x28] sm:$0xf]
        %v2015 = vld [vmem:[#allocation2 + $0x30] sm:$0xf]
        %v2016 = vld [vmem:[#allocation2 + $0x38] sm:$0xf]
        %v2025 = vunpack.c.l.b16 %v2009
        %v2026 = vunpack.c.l.b16 %v2010
        %v2027 = vunpack.c.l.b16 %v2011
        %v2028 = vunpack.c.l.b16 %v2012
        %v2029 = vunpack.c.l.b16 %v2013
        %v2030 = vunpack.c.l.b16 %v2014
        %v2031 = vunpack.c.l.b16 %v2015
        %v2032 = vunpack.c.l.b16 %v2016
        %v2033 = vpack.c.b16 %v2026, %v2025
        %v2034 = vpack.c.b16 %v2028, %v2027
        %v2035 = vpack.c.b16 %v2030, %v2029
        %v2036 = vpack.c.b16 %v2032, %v2031
        %2041 = vst.msk [vmem:[#allocation3] sm:$0xff] %vm580, %v2033
        %2042 = vst.msk [vmem:[#allocation3 + $0x18] sm:$0xff] %vm580, %v2034
        %2043 = vst.msk [vmem:[#allocation3 + $0x30] sm:$0xff] %vm580, %v2035
        %2044 = vst.msk [vmem:[#allocation3 + $0x48] sm:$0xff] %vm580, %v2036
        %v2045 = vld [vmem:[#allocation2] sm:$0xf]
        %v2046 = vld [vmem:[#allocation2 + $0x4] sm:$0x1]
        %v2047 = vld [vmem:[#allocation2 + $0x8] sm:$0xf]
        %v2048 = vld [vmem:[#allocation2 + $0xc] sm:$0x1]
        %v2049 = vld [vmem:[#allocation2 + $0x10] sm:$0xf]
        %v2050 = vld [vmem:[#allocation2 + $0x14] sm:$0x1]
        %v2051 = vld [vmem:[#allocation2 + $0x18] sm:$0xf]
        %v2052 = vld [vmem:[#allocation2 + $0x1c] sm:$0x1]
        %v2053 = vld [vmem:[#allocation2 + $0x20] sm:$0xf]
        %v2054 = vld [vmem:[#allocation2 + $0x24] sm:$0x1]
        %v2055 = vld [vmem:[#allocation2 + $0x28] sm:$0xf]
        %v2056 = vld [vmem:[#allocation2 + $0x2c] sm:$0x1]
        %v2057 = vld [vmem:[#allocation2 + $0x30] sm:$0xf]
        %v2058 = vld [vmem:[#allocation2 + $0x34] sm:$0x1]
        %v2059 = vld [vmem:[#allocation2 + $0x38] sm:$0xf]
        %v2060 = vld [vmem:[#allocation2 + $0x3c] sm:$0x1]
        %v2062 = vshrl.u32 %v2045, 16
        %v2064 = vrot.slane %v2062, 4
        %v2065 = vshll.u32 %v2045, 16
        %v2067 = vrot.slane %v2065, 5
        %v2068 = vor.u32 %v2064, %v2067
        %v2069 = vrot.slane %v2068, 4
        %v2071 = vshll.u32 %v2046, 16
        %v2073 = vrot.slane %v2071, 5
        %v2074 = vsel %vm603, %v2069, %v2073
        %v2076 = vshrl.u32 %v2047, 16
        %v2078 = vrot.slane %v2076, 4
        %v2079 = vshll.u32 %v2047, 16
        %v2081 = vrot.slane %v2079, 5
        %v2082 = vor.u32 %v2078, %v2081
        %v2083 = vrot.slane %v2082, 4
        %v2085 = vshll.u32 %v2048, 16
        %v2087 = vrot.slane %v2085, 5
        %v2088 = vsel %vm603, %v2083, %v2087
        %v2090 = vshrl.u32 %v2049, 16
        %v2092 = vrot.slane %v2090, 4
        %v2093 = vshll.u32 %v2049, 16
        %v2095 = vrot.slane %v2093, 5
        %v2096 = vor.u32 %v2092, %v2095
        %v2097 = vrot.slane %v2096, 4
        %v2099 = vshll.u32 %v2050, 16
        %v2101 = vrot.slane %v2099, 5
        %v2102 = vsel %vm603, %v2097, %v2101
        %v2104 = vshrl.u32 %v2051, 16
        %v2106 = vrot.slane %v2104, 4
        %v2107 = vshll.u32 %v2051, 16
        %v2109 = vrot.slane %v2107, 5
        %v2110 = vor.u32 %v2106, %v2109
        %v2111 = vrot.slane %v2110, 4
        %v2113 = vshll.u32 %v2052, 16
        %v2115 = vrot.slane %v2113, 5
        %v2116 = vsel %vm603, %v2111, %v2115
        %v2118 = vshrl.u32 %v2053, 16
        %v2120 = vrot.slane %v2118, 4
        %v2121 = vshll.u32 %v2053, 16
        %v2123 = vrot.slane %v2121, 5
        %v2124 = vor.u32 %v2120, %v2123
        %v2125 = vrot.slane %v2124, 4
        %v2127 = vshll.u32 %v2054, 16
        %v2129 = vrot.slane %v2127, 5
        %v2130 = vsel %vm603, %v2125, %v2129
        %v2132 = vshrl.u32 %v2055, 16
        %v2134 = vrot.slane %v2132, 4
        %v2135 = vshll.u32 %v2055, 16
        %v2137 = vrot.slane %v2135, 5
        %v2138 = vor.u32 %v2134, %v2137
        %v2139 = vrot.slane %v2138, 4
        %v2141 = vshll.u32 %v2056, 16
        %v2143 = vrot.slane %v2141, 5
        %v2144 = vsel %vm603, %v2139, %v2143
        %v2146 = vshrl.u32 %v2057, 16
        %v2148 = vrot.slane %v2146, 4
        %v2149 = vshll.u32 %v2057, 16
        %v2151 = vrot.slane %v2149, 5
        %v2152 = vor.u32 %v2148, %v2151
        %v2153 = vrot.slane %v2152, 4
        %v2155 = vshll.u32 %v2058, 16
        %v2157 = vrot.slane %v2155, 5
        %v2158 = vsel %vm603, %v2153, %v2157
        %v2160 = vshrl.u32 %v2059, 16
        %v2162 = vrot.slane %v2160, 4
        %v2163 = vshll.u32 %v2059, 16
        %v2165 = vrot.slane %v2163, 5
        %v2166 = vor.u32 %v2162, %v2165
        %v2167 = vrot.slane %v2166, 4
        %v2169 = vshll.u32 %v2060, 16
        %v2171 = vrot.slane %v2169, 5
        %v2172 = vsel %vm603, %v2167, %v2171
        %v2173 = vunpack.c.l.b16 %v2074
        %v2174 = vunpack.c.l.b16 %v2088
        %v2175 = vunpack.c.l.b16 %v2102
        %v2176 = vunpack.c.l.b16 %v2116
        %v2177 = vunpack.c.l.b16 %v2130
        %v2178 = vunpack.c.l.b16 %v2144
        %v2179 = vunpack.c.l.b16 %v2158
        %v2180 = vunpack.c.l.b16 %v2172
        %v2181 = vpack.c.b16 %v2174, %v2173
        %v2182 = vpack.c.b16 %v2176, %v2175
        %v2183 = vpack.c.b16 %v2178, %v2177
        %v2184 = vpack.c.b16 %v2180, %v2179
        %2185 = vrot.lane.b32.xlu0 %v2181, 32
        %v2186 = vpop.permute.xlu0 %2185
        %2187 = vrot.lane.b32.xlu0 %v2182, 32
        %v2188 = vpop.permute.xlu0 %2187
        %2189 = vrot.lane.b32.xlu0 %v2183, 32
        %v2190 = vpop.permute.xlu0 %2189
        %2191 = vrot.lane.b32.xlu0 %v2184, 32
        %v2192 = vpop.permute.xlu0 %2191
        %2197 = vst.msk [vmem:[#allocation3] sm:$0xff] %vm740, %v2186
        %2198 = vst.msk [vmem:[#allocation3 + $0x18] sm:$0xff] %vm740, %v2188
        %2199 = vst.msk [vmem:[#allocation3 + $0x30] sm:$0xff] %vm740, %v2190
        %2200 = vst.msk [vmem:[#allocation3 + $0x48] sm:$0xff] %vm740, %v2192
        %v2201 = vld [vmem:[#allocation2] sm:$0xe]
        %v2202 = vld [vmem:[#allocation2 + $0x4] sm:$0x1]
        %v2203 = vld [vmem:[#allocation2 + $0x8] sm:$0xe]
        %v2204 = vld [vmem:[#allocation2 + $0xc] sm:$0x1]
        %v2205 = vld [vmem:[#allocation2 + $0x10] sm:$0xe]
        %v2206 = vld [vmem:[#allocation2 + $0x14] sm:$0x1]
        %v2207 = vld [vmem:[#allocation2 + $0x18] sm:$0xe]
        %v2208 = vld [vmem:[#allocation2 + $0x1c] sm:$0x1]
        %v2209 = vld [vmem:[#allocation2 + $0x20] sm:$0xe]
        %v2210 = vld [vmem:[#allocation2 + $0x24] sm:$0x1]
        %v2211 = vld [vmem:[#allocation2 + $0x28] sm:$0xe]
        %v2212 = vld [vmem:[#allocation2 + $0x2c] sm:$0x1]
        %v2213 = vld [vmem:[#allocation2 + $0x30] sm:$0xe]
        %v2214 = vld [vmem:[#allocation2 + $0x34] sm:$0x1]
        %v2215 = vld [vmem:[#allocation2 + $0x38] sm:$0xe]
        %v2216 = vld [vmem:[#allocation2 + $0x3c] sm:$0x1]
        %v2233 = vrot.slane %v2201, 5
        %v2234 = vrot.slane %v2233, 4
        %v2235 = vrot.slane %v2202, 5
        %v2236 = vsel %vm779, %v2234, %v2235
        %v2237 = vrot.slane %v2203, 5
        %v2238 = vrot.slane %v2237, 4
        %v2239 = vrot.slane %v2204, 5
        %v2240 = vsel %vm779, %v2238, %v2239
        %v2241 = vrot.slane %v2205, 5
        %v2242 = vrot.slane %v2241, 4
        %v2243 = vrot.slane %v2206, 5
        %v2244 = vsel %vm779, %v2242, %v2243
        %v2245 = vrot.slane %v2207, 5
        %v2246 = vrot.slane %v2245, 4
        %v2247 = vrot.slane %v2208, 5
        %v2248 = vsel %vm779, %v2246, %v2247
        %v2249 = vrot.slane %v2209, 5
        %v2250 = vrot.slane %v2249, 4
        %v2251 = vrot.slane %v2210, 5
        %v2252 = vsel %vm779, %v2250, %v2251
        %v2253 = vrot.slane %v2211, 5
        %v2254 = vrot.slane %v2253, 4
        %v2255 = vrot.slane %v2212, 5
        %v2256 = vsel %vm779, %v2254, %v2255
        %v2257 = vrot.slane %v2213, 5
        %v2258 = vrot.slane %v2257, 4
        %v2259 = vrot.slane %v2214, 5
        %v2260 = vsel %vm779, %v2258, %v2259
        %v2261 = vrot.slane %v2215, 5
        %v2262 = vrot.slane %v2261, 4
        %v2263 = vrot.slane %v2216, 5
        %v2264 = vsel %vm779, %v2262, %v2263
        %v2265 = vunpack.c.l.b16 %v2236
        %v2266 = vunpack.c.l.b16 %v2240
        %v2267 = vunpack.c.l.b16 %v2244
        %v2268 = vunpack.c.l.b16 %v2248
        %v2269 = vunpack.c.l.b16 %v2252
        %v2270 = vunpack.c.l.b16 %v2256
        %v2271 = vunpack.c.l.b16 %v2260
        %v2272 = vunpack.c.l.b16 %v2264
        %v2273 = vpack.c.b16 %v2266, %v2265
        %v2274 = vpack.c.b16 %v2268, %v2267
        %v2275 = vpack.c.b16 %v2270, %v2269
        %v2276 = vpack.c.b16 %v2272, %v2271
        %2277 = vrot.lane.b32.xlu0 %v2273, 64
        %v2278 = vpop.permute.xlu0 %2277
        %2279 = vrot.lane.b32.xlu0 %v2274, 64
        %v2280 = vpop.permute.xlu0 %2279
        %2281 = vrot.lane.b32.xlu0 %v2275, 64
        %v2282 = vpop.permute.xlu0 %2281
        %2283 = vrot.lane.b32.xlu0 %v2276, 64
        %v2284 = vpop.permute.xlu0 %2283
        %2289 = vst.msk [vmem:[#allocation3] sm:$0xff] %vm836, %v2278
        %2290 = vst.msk [vmem:[#allocation3 + $0x18] sm:$0xff] %vm836, %v2280
        %2291 = vst.msk [vmem:[#allocation3 + $0x30] sm:$0xff] %vm836, %v2282
        %2292 = vst.msk [vmem:[#allocation3 + $0x48] sm:$0xff] %vm836, %v2284
        %v2293 = vld [vmem:[%s497] sm:$0xf]
        %v2294 = vld [vmem:[%s497 + $0x8] sm:$0xf]
        %v2295 = vld [vmem:[%s497 + $0x10] sm:$0xf]
        %v2296 = vld [vmem:[%s497 + $0x18] sm:$0xf]
        %v2297 = vld [vmem:[%s497 + $0x20] sm:$0xf]
        %v2298 = vld [vmem:[%s497 + $0x28] sm:$0xf]
        %v2299 = vld [vmem:[%s497 + $0x30] sm:$0xf]
        %v2300 = vld [vmem:[%s497 + $0x38] sm:$0xf]
        %v2309 = vunpack.c.l.b16 %v2293
        %v2310 = vunpack.c.l.b16 %v2294
        %v2311 = vunpack.c.l.b16 %v2295
        %v2312 = vunpack.c.l.b16 %v2296
        %v2313 = vunpack.c.l.b16 %v2297
        %v2314 = vunpack.c.l.b16 %v2298
        %v2315 = vunpack.c.l.b16 %v2299
        %v2316 = vunpack.c.l.b16 %v2300
        %v2317 = vpack.c.b16 %v2310, %v2309
        %v2318 = vpack.c.b16 %v2312, %v2311
        %v2319 = vpack.c.b16 %v2314, %v2313
        %v2320 = vpack.c.b16 %v2316, %v2315
        %2321 = vrot.lane.b32.xlu0 %v2317, 96
        %v2322 = vpop.permute.xlu0 %2321
        %2323 = vrot.lane.b32.xlu0 %v2318, 96
        %v2324 = vpop.permute.xlu0 %2323
        %2325 = vrot.lane.b32.xlu0 %v2319, 96
        %v2326 = vpop.permute.xlu0 %2325
        %2327 = vrot.lane.b32.xlu0 %v2320, 96
        %v2328 = vpop.permute.xlu0 %2327
        %2333 = vst.msk [vmem:[#allocation3] sm:$0xff] %vm881, %v2322
        %2334 = vst.msk [vmem:[#allocation3 + $0x18] sm:$0xff] %vm881, %v2324
        %2335 = vst.msk [vmem:[#allocation3 + $0x30] sm:$0xff] %vm881, %v2326
        %2336 = vst.msk [vmem:[#allocation3 + $0x48] sm:$0xff] %vm881, %v2328
        %v2337 = vld [vmem:[%s497] sm:$0xf]
        %v2338 = vld [vmem:[%s497 + $0x4] sm:$0x1]
        %v2339 = vld [vmem:[%s497 + $0x8] sm:$0xf]
        %v2340 = vld [vmem:[%s497 + $0xc] sm:$0x1]
        %v2341 = vld [vmem:[%s497 + $0x10] sm:$0xf]
        %v2342 = vld [vmem:[%s497 + $0x14] sm:$0x1]
        %v2343 = vld [vmem:[%s497 + $0x18] sm:$0xf]
        %v2344 = vld [vmem:[%s497 + $0x1c] sm:$0x1]
        %v2345 = vld [vmem:[%s497 + $0x20] sm:$0xf]
        %v2346 = vld [vmem:[%s497 + $0x24] sm:$0x1]
        %v2347 = vld [vmem:[%s497 + $0x28] sm:$0xf]
        %v2348 = vld [vmem:[%s497 + $0x2c] sm:$0x1]
        %v2349 = vld [vmem:[%s497 + $0x30] sm:$0xf]
        %v2350 = vld [vmem:[%s497 + $0x34] sm:$0x1]
        %v2351 = vld [vmem:[%s497 + $0x38] sm:$0xf]
        %v2352 = vld [vmem:[%s497 + $0x3c] sm:$0x1]
        %v2354 = vshrl.u32 %v2337, 16
        %v2356 = vrot.slane %v2354, 4
        %v2357 = vshll.u32 %v2337, 16
        %v2359 = vrot.slane %v2357, 5
        %v2360 = vor.u32 %v2356, %v2359
        %v2361 = vrot.slane %v2360, 4
        %v2363 = vshll.u32 %v2338, 16
        %v2365 = vrot.slane %v2363, 5
        %v2366 = vsel %vm603, %v2361, %v2365
        %v2368 = vshrl.u32 %v2339, 16
        %v2370 = vrot.slane %v2368, 4
        %v2371 = vshll.u32 %v2339, 16
        %v2373 = vrot.slane %v2371, 5
        %v2374 = vor.u32 %v2370, %v2373
        %v2375 = vrot.slane %v2374, 4
        %v2377 = vshll.u32 %v2340, 16
        %v2379 = vrot.slane %v2377, 5
        %v2380 = vsel %vm603, %v2375, %v2379
        %v2382 = vshrl.u32 %v2341, 16
        %v2384 = vrot.slane %v2382, 4
        %v2385 = vshll.u32 %v2341, 16
        %v2387 = vrot.slane %v2385, 5
        %v2388 = vor.u32 %v2384, %v2387
        %v2389 = vrot.slane %v2388, 4
        %v2391 = vshll.u32 %v2342, 16
        %v2393 = vrot.slane %v2391, 5
        %v2394 = vsel %vm603, %v2389, %v2393
        %v2396 = vshrl.u32 %v2343, 16
        %v2398 = vrot.slane %v2396, 4
        %v2399 = vshll.u32 %v2343, 16
        %v2401 = vrot.slane %v2399, 5
        %v2402 = vor.u32 %v2398, %v2401
        %v2403 = vrot.slane %v2402, 4
        %v2405 = vshll.u32 %v2344, 16
        %v2407 = vrot.slane %v2405, 5
        %v2408 = vsel %vm603, %v2403, %v2407
        %v2410 = vshrl.u32 %v2345, 16
        %v2412 = vrot.slane %v2410, 4
        %v2413 = vshll.u32 %v2345, 16
        %v2415 = vrot.slane %v2413, 5
        %v2416 = vor.u32 %v2412, %v2415
        %v2417 = vrot.slane %v2416, 4
        %v2419 = vshll.u32 %v2346, 16
        %v2421 = vrot.slane %v2419, 5
        %v2422 = vsel %vm603, %v2417, %v2421
        %v2424 = vshrl.u32 %v2347, 16
        %v2426 = vrot.slane %v2424, 4
        %v2427 = vshll.u32 %v2347, 16
        %v2429 = vrot.slane %v2427, 5
        %v2430 = vor.u32 %v2426, %v2429
        %v2431 = vrot.slane %v2430, 4
        %v2433 = vshll.u32 %v2348, 16
        %v2435 = vrot.slane %v2433, 5
        %v2436 = vsel %vm603, %v2431, %v2435
        %v2438 = vshrl.u32 %v2349, 16
        %v2440 = vrot.slane %v2438, 4
        %v2441 = vshll.u32 %v2349, 16
        %v2443 = vrot.slane %v2441, 5
        %v2444 = vor.u32 %v2440, %v2443
        %v2445 = vrot.slane %v2444, 4
        %v2447 = vshll.u32 %v2350, 16
        %v2449 = vrot.slane %v2447, 5
        %v2450 = vsel %vm603, %v2445, %v2449
        %v2452 = vshrl.u32 %v2351, 16
        %v2454 = vrot.slane %v2452, 4
        %v2455 = vshll.u32 %v2351, 16
        %v2457 = vrot.slane %v2455, 5
        %v2458 = vor.u32 %v2454, %v2457
        %v2459 = vrot.slane %v2458, 4
        %v2461 = vshll.u32 %v2352, 16
        %v2463 = vrot.slane %v2461, 5
        %v2464 = vsel %vm603, %v2459, %v2463
        %v2465 = vunpack.c.l.b16 %v2366
        %v2466 = vunpack.c.l.b16 %v2380
        %v2467 = vunpack.c.l.b16 %v2394
        %v2468 = vunpack.c.l.b16 %v2408
        %v2469 = vunpack.c.l.b16 %v2422
        %v2470 = vunpack.c.l.b16 %v2436
        %v2471 = vunpack.c.l.b16 %v2450
        %v2472 = vunpack.c.l.b16 %v2464
        %v2473 = vpack.c.b16 %v2466, %v2465
        %v2474 = vpack.c.b16 %v2468, %v2467
        %v2475 = vpack.c.b16 %v2470, %v2469
        %v2476 = vpack.c.b16 %v2472, %v2471
        %2481 = vst.msk [vmem:[#allocation3 + $0x8] sm:$0xff] %vm580, %v2473
        %2482 = vst.msk [vmem:[#allocation3 + $0x20] sm:$0xff] %vm580, %v2474
        %2483 = vst.msk [vmem:[#allocation3 + $0x38] sm:$0xff] %vm580, %v2475
        %2484 = vst.msk [vmem:[#allocation3 + $0x50] sm:$0xff] %vm580, %v2476
        %v2485 = vld [vmem:[%s497] sm:$0xe]
        %v2486 = vld [vmem:[%s497 + $0x4] sm:$0x1]
        %v2487 = vld [vmem:[%s497 + $0x8] sm:$0xe]
        %v2488 = vld [vmem:[%s497 + $0xc] sm:$0x1]
        %v2489 = vld [vmem:[%s497 + $0x10] sm:$0xe]
        %v2490 = vld [vmem:[%s497 + $0x14] sm:$0x1]
        %v2491 = vld [vmem:[%s497 + $0x18] sm:$0xe]
        %v2492 = vld [vmem:[%s497 + $0x1c] sm:$0x1]
        %v2493 = vld [vmem:[%s497 + $0x20] sm:$0xe]
        %v2494 = vld [vmem:[%s497 + $0x24] sm:$0x1]
        %v2495 = vld [vmem:[%s497 + $0x28] sm:$0xe]
        %v2496 = vld [vmem:[%s497 + $0x2c] sm:$0x1]
        %v2497 = vld [vmem:[%s497 + $0x30] sm:$0xe]
        %v2498 = vld [vmem:[%s497 + $0x34] sm:$0x1]
        %v2499 = vld [vmem:[%s497 + $0x38] sm:$0xe]
        %v2500 = vld [vmem:[%s497 + $0x3c] sm:$0x1]
        %v2517 = vrot.slane %v2485, 5
        %v2518 = vrot.slane %v2517, 4
        %v2519 = vrot.slane %v2486, 5
        %v2520 = vsel %vm779, %v2518, %v2519
        %v2521 = vrot.slane %v2487, 5
        %v2522 = vrot.slane %v2521, 4
        %v2523 = vrot.slane %v2488, 5
        %v2524 = vsel %vm779, %v2522, %v2523
        %v2525 = vrot.slane %v2489, 5
        %v2526 = vrot.slane %v2525, 4
        %v2527 = vrot.slane %v2490, 5
        %v2528 = vsel %vm779, %v2526, %v2527
        %v2529 = vrot.slane %v2491, 5
        %v2530 = vrot.slane %v2529, 4
        %v2531 = vrot.slane %v2492, 5
        %v2532 = vsel %vm779, %v2530, %v2531
        %v2533 = vrot.slane %v2493, 5
        %v2534 = vrot.slane %v2533, 4
        %v2535 = vrot.slane %v2494, 5
        %v2536 = vsel %vm779, %v2534, %v2535
        %v2537 = vrot.slane %v2495, 5
        %v2538 = vrot.slane %v2537, 4
        %v2539 = vrot.slane %v2496, 5
        %v2540 = vsel %vm779, %v2538, %v2539
        %v2541 = vrot.slane %v2497, 5
        %v2542 = vrot.slane %v2541, 4
        %v2543 = vrot.slane %v2498, 5
        %v2544 = vsel %vm779, %v2542, %v2543
        %v2545 = vrot.slane %v2499, 5
        %v2546 = vrot.slane %v2545, 4
        %v2547 = vrot.slane %v2500, 5
        %v2548 = vsel %vm779, %v2546, %v2547
        %v2549 = vunpack.c.l.b16 %v2520
        %v2550 = vunpack.c.l.b16 %v2524
        %v2551 = vunpack.c.l.b16 %v2528
        %v2552 = vunpack.c.l.b16 %v2532
        %v2553 = vunpack.c.l.b16 %v2536
        %v2554 = vunpack.c.l.b16 %v2540
        %v2555 = vunpack.c.l.b16 %v2544
        %v2556 = vunpack.c.l.b16 %v2548
        %v2557 = vpack.c.b16 %v2550, %v2549
        %v2558 = vpack.c.b16 %v2552, %v2551
        %v2559 = vpack.c.b16 %v2554, %v2553
        %v2560 = vpack.c.b16 %v2556, %v2555
        %2561 = vrot.lane.b32.xlu0 %v2557, 32
        %v2562 = vpop.permute.xlu0 %2561
        %2563 = vrot.lane.b32.xlu0 %v2558, 32
        %v2564 = vpop.permute.xlu0 %2563
        %2565 = vrot.lane.b32.xlu0 %v2559, 32
        %v2566 = vpop.permute.xlu0 %2565
        %2567 = vrot.lane.b32.xlu0 %v2560, 32
        %v2568 = vpop.permute.xlu0 %2567
        %2573 = vst.msk [vmem:[#allocation3 + $0x8] sm:$0xff] %vm740, %v2562
        %2574 = vst.msk [vmem:[#allocation3 + $0x20] sm:$0xff] %vm740, %v2564
        %2575 = vst.msk [vmem:[#allocation3 + $0x38] sm:$0xff] %vm740, %v2566
        %2576 = vst.msk [vmem:[#allocation3 + $0x50] sm:$0xff] %vm740, %v2568
        %v2577 = vld [vmem:[%s1126] sm:$0xf]
        %v2578 = vld [vmem:[%s1126 + $0x8] sm:$0xf]
        %v2579 = vld [vmem:[%s1126 + $0x10] sm:$0xf]
        %v2580 = vld [vmem:[%s1126 + $0x18] sm:$0xf]
        %v2581 = vld [vmem:[%s1126 + $0x20] sm:$0xf]
        %v2582 = vld [vmem:[%s1126 + $0x28] sm:$0xf]
        %v2583 = vld [vmem:[%s1126 + $0x30] sm:$0xf]
        %v2584 = vld [vmem:[%s1126 + $0x38] sm:$0xf]
        %v2593 = vunpack.c.l.b16 %v2577
        %v2594 = vunpack.c.l.b16 %v2578
        %v2595 = vunpack.c.l.b16 %v2579
        %v2596 = vunpack.c.l.b16 %v2580
        %v2597 = vunpack.c.l.b16 %v2581
        %v2598 = vunpack.c.l.b16 %v2582
        %v2599 = vunpack.c.l.b16 %v2583
        %v2600 = vunpack.c.l.b16 %v2584
        %v2601 = vpack.c.b16 %v2594, %v2593
        %v2602 = vpack.c.b16 %v2596, %v2595
        %v2603 = vpack.c.b16 %v2598, %v2597
        %v2604 = vpack.c.b16 %v2600, %v2599
        %2605 = vrot.lane.b32.xlu0 %v2601, 64
        %v2606 = vpop.permute.xlu0 %2605
        %2607 = vrot.lane.b32.xlu0 %v2602, 64
        %v2608 = vpop.permute.xlu0 %2607
        %2609 = vrot.lane.b32.xlu0 %v2603, 64
        %v2610 = vpop.permute.xlu0 %2609
        %2611 = vrot.lane.b32.xlu0 %v2604, 64
        %v2612 = vpop.permute.xlu0 %2611
        %2617 = vst.msk [vmem:[#allocation3 + $0x8] sm:$0xff] %vm836, %v2606
        %2618 = vst.msk [vmem:[#allocation3 + $0x20] sm:$0xff] %vm836, %v2608
        %2619 = vst.msk [vmem:[#allocation3 + $0x38] sm:$0xff] %vm836, %v2610
        %2620 = vst.msk [vmem:[#allocation3 + $0x50] sm:$0xff] %vm836, %v2612
        %v2621 = vld [vmem:[%s1126] sm:$0xf]
        %v2622 = vld [vmem:[%s1126 + $0x4] sm:$0x1]
        %v2623 = vld [vmem:[%s1126 + $0x8] sm:$0xf]
        %v2624 = vld [vmem:[%s1126 + $0xc] sm:$0x1]
        %v2625 = vld [vmem:[%s1126 + $0x10] sm:$0xf]
        %v2626 = vld [vmem:[%s1126 + $0x14] sm:$0x1]
        %v2627 = vld [vmem:[%s1126 + $0x18] sm:$0xf]
        %v2628 = vld [vmem:[%s1126 + $0x1c] sm:$0x1]
        %v2629 = vld [vmem:[%s1126 + $0x20] sm:$0xf]
        %v2630 = vld [vmem:[%s1126 + $0x24] sm:$0x1]
        %v2631 = vld [vmem:[%s1126 + $0x28] sm:$0xf]
        %v2632 = vld [vmem:[%s1126 + $0x2c] sm:$0x1]
        %v2633 = vld [vmem:[%s1126 + $0x30] sm:$0xf]
        %v2634 = vld [vmem:[%s1126 + $0x34] sm:$0x1]
        %v2635 = vld [vmem:[%s1126 + $0x38] sm:$0xf]
        %v2636 = vld [vmem:[%s1126 + $0x3c] sm:$0x1]
        %v2638 = vshrl.u32 %v2621, 16
        %v2640 = vrot.slane %v2638, 4
        %v2641 = vshll.u32 %v2621, 16
        %v2643 = vrot.slane %v2641, 5
        %v2644 = vor.u32 %v2640, %v2643
        %v2645 = vrot.slane %v2644, 4
        %v2647 = vshll.u32 %v2622, 16
        %v2649 = vrot.slane %v2647, 5
        %v2650 = vsel %vm603, %v2645, %v2649
        %v2652 = vshrl.u32 %v2623, 16
        %v2654 = vrot.slane %v2652, 4
        %v2655 = vshll.u32 %v2623, 16
        %v2657 = vrot.slane %v2655, 5
        %v2658 = vor.u32 %v2654, %v2657
        %v2659 = vrot.slane %v2658, 4
        %v2661 = vshll.u32 %v2624, 16
        %v2663 = vrot.slane %v2661, 5
        %v2664 = vsel %vm603, %v2659, %v2663
        %v2666 = vshrl.u32 %v2625, 16
        %v2668 = vrot.slane %v2666, 4
        %v2669 = vshll.u32 %v2625, 16
        %v2671 = vrot.slane %v2669, 5
        %v2672 = vor.u32 %v2668, %v2671
        %v2673 = vrot.slane %v2672, 4
        %v2675 = vshll.u32 %v2626, 16
        %v2677 = vrot.slane %v2675, 5
        %v2678 = vsel %vm603, %v2673, %v2677
        %v2680 = vshrl.u32 %v2627, 16
        %v2682 = vrot.slane %v2680, 4
        %v2683 = vshll.u32 %v2627, 16
        %v2685 = vrot.slane %v2683, 5
        %v2686 = vor.u32 %v2682, %v2685
        %v2687 = vrot.slane %v2686, 4
        %v2689 = vshll.u32 %v2628, 16
        %v2691 = vrot.slane %v2689, 5
        %v2692 = vsel %vm603, %v2687, %v2691
        %v2694 = vshrl.u32 %v2629, 16
        %v2696 = vrot.slane %v2694, 4
        %v2697 = vshll.u32 %v2629, 16
        %v2699 = vrot.slane %v2697, 5
        %v2700 = vor.u32 %v2696, %v2699
        %v2701 = vrot.slane %v2700, 4
        %v2703 = vshll.u32 %v2630, 16
        %v2705 = vrot.slane %v2703, 5
        %v2706 = vsel %vm603, %v2701, %v2705
        %v2708 = vshrl.u32 %v2631, 16
        %v2710 = vrot.slane %v2708, 4
        %v2711 = vshll.u32 %v2631, 16
        %v2713 = vrot.slane %v2711, 5
        %v2714 = vor.u32 %v2710, %v2713
        %v2715 = vrot.slane %v2714, 4
        %v2717 = vshll.u32 %v2632, 16
        %v2719 = vrot.slane %v2717, 5
        %v2720 = vsel %vm603, %v2715, %v2719
        %v2722 = vshrl.u32 %v2633, 16
        %v2724 = vrot.slane %v2722, 4
        %v2725 = vshll.u32 %v2633, 16
        %v2727 = vrot.slane %v2725, 5
        %v2728 = vor.u32 %v2724, %v2727
        %v2729 = vrot.slane %v2728, 4
        %v2731 = vshll.u32 %v2634, 16
        %v2733 = vrot.slane %v2731, 5
        %v2734 = vsel %vm603, %v2729, %v2733
        %v2736 = vshrl.u32 %v2635, 16
        %v2738 = vrot.slane %v2736, 4
        %v2739 = vshll.u32 %v2635, 16
        %v2741 = vrot.slane %v2739, 5
        %v2742 = vor.u32 %v2738, %v2741
        %v2743 = vrot.slane %v2742, 4
        %v2745 = vshll.u32 %v2636, 16
        %v2747 = vrot.slane %v2745, 5
        %v2748 = vsel %vm603, %v2743, %v2747
        %v2749 = vunpack.c.l.b16 %v2650
        %v2750 = vunpack.c.l.b16 %v2664
        %v2751 = vunpack.c.l.b16 %v2678
        %v2752 = vunpack.c.l.b16 %v2692
        %v2753 = vunpack.c.l.b16 %v2706
        %v2754 = vunpack.c.l.b16 %v2720
        %v2755 = vunpack.c.l.b16 %v2734
        %v2756 = vunpack.c.l.b16 %v2748
        %v2757 = vpack.c.b16 %v2750, %v2749
        %v2758 = vpack.c.b16 %v2752, %v2751
        %v2759 = vpack.c.b16 %v2754, %v2753
        %v2760 = vpack.c.b16 %v2756, %v2755
        %2761 = vrot.lane.b32.xlu0 %v2757, 96
        %v2762 = vpop.permute.xlu0 %2761
        %2763 = vrot.lane.b32.xlu0 %v2758, 96
        %v2764 = vpop.permute.xlu0 %2763
        %2765 = vrot.lane.b32.xlu0 %v2759, 96
        %v2766 = vpop.permute.xlu0 %2765
        %2767 = vrot.lane.b32.xlu0 %v2760, 96
        %v2768 = vpop.permute.xlu0 %2767
        %2773 = vst.msk [vmem:[#allocation3 + $0x8] sm:$0xff] %vm881, %v2762
        %2774 = vst.msk [vmem:[#allocation3 + $0x20] sm:$0xff] %vm881, %v2764
        %2775 = vst.msk [vmem:[#allocation3 + $0x38] sm:$0xff] %vm881, %v2766
        %2776 = vst.msk [vmem:[#allocation3 + $0x50] sm:$0xff] %vm881, %v2768
        %v2777 = vld [vmem:[%s1126] sm:$0xe]
        %v2778 = vld [vmem:[%s1126 + $0x4] sm:$0x1]
        %v2779 = vld [vmem:[%s1126 + $0x8] sm:$0xe]
        %v2780 = vld [vmem:[%s1126 + $0xc] sm:$0x1]
        %v2781 = vld [vmem:[%s1126 + $0x10] sm:$0xe]
        %v2782 = vld [vmem:[%s1126 + $0x14] sm:$0x1]
        %v2783 = vld [vmem:[%s1126 + $0x18] sm:$0xe]
        %v2784 = vld [vmem:[%s1126 + $0x1c] sm:$0x1]
        %v2785 = vld [vmem:[%s1126 + $0x20] sm:$0xe]
        %v2786 = vld [vmem:[%s1126 + $0x24] sm:$0x1]
        %v2787 = vld [vmem:[%s1126 + $0x28] sm:$0xe]
        %v2788 = vld [vmem:[%s1126 + $0x2c] sm:$0x1]
        %v2789 = vld [vmem:[%s1126 + $0x30] sm:$0xe]
        %v2790 = vld [vmem:[%s1126 + $0x34] sm:$0x1]
        %v2791 = vld [vmem:[%s1126 + $0x38] sm:$0xe]
        %v2792 = vld [vmem:[%s1126 + $0x3c] sm:$0x1]
        %v2809 = vrot.slane %v2777, 5
        %v2810 = vrot.slane %v2809, 4
        %v2811 = vrot.slane %v2778, 5
        %v2812 = vsel %vm779, %v2810, %v2811
        %v2813 = vrot.slane %v2779, 5
        %v2814 = vrot.slane %v2813, 4
        %v2815 = vrot.slane %v2780, 5
        %v2816 = vsel %vm779, %v2814, %v2815
        %v2817 = vrot.slane %v2781, 5
        %v2818 = vrot.slane %v2817, 4
        %v2819 = vrot.slane %v2782, 5
        %v2820 = vsel %vm779, %v2818, %v2819
        %v2821 = vrot.slane %v2783, 5
        %v2822 = vrot.slane %v2821, 4
        %v2823 = vrot.slane %v2784, 5
        %v2824 = vsel %vm779, %v2822, %v2823
        %v2825 = vrot.slane %v2785, 5
        %v2826 = vrot.slane %v2825, 4
        %v2827 = vrot.slane %v2786, 5
        %v2828 = vsel %vm779, %v2826, %v2827
        %v2829 = vrot.slane %v2787, 5
        %v2830 = vrot.slane %v2829, 4
        %v2831 = vrot.slane %v2788, 5
        %v2832 = vsel %vm779, %v2830, %v2831
        %v2833 = vrot.slane %v2789, 5
        %v2834 = vrot.slane %v2833, 4
        %v2835 = vrot.slane %v2790, 5
        %v2836 = vsel %vm779, %v2834, %v2835
        %v2837 = vrot.slane %v2791, 5
        %v2838 = vrot.slane %v2837, 4
        %v2839 = vrot.slane %v2792, 5
        %v2840 = vsel %vm779, %v2838, %v2839
        %v2841 = vunpack.c.l.b16 %v2812
        %v2842 = vunpack.c.l.b16 %v2816
        %v2843 = vunpack.c.l.b16 %v2820
        %v2844 = vunpack.c.l.b16 %v2824
        %v2845 = vunpack.c.l.b16 %v2828
        %v2846 = vunpack.c.l.b16 %v2832
        %v2847 = vunpack.c.l.b16 %v2836
        %v2848 = vunpack.c.l.b16 %v2840
        %v2849 = vpack.c.b16 %v2842, %v2841
        %v2850 = vpack.c.b16 %v2844, %v2843
        %v2851 = vpack.c.b16 %v2846, %v2845
        %v2852 = vpack.c.b16 %v2848, %v2847
        %2857 = vst.msk [vmem:[#allocation3 + $0x10] sm:$0xff] %vm580, %v2849
        %2858 = vst.msk [vmem:[#allocation3 + $0x28] sm:$0xff] %vm580, %v2850
        %2859 = vst.msk [vmem:[#allocation3 + $0x40] sm:$0xff] %vm580, %v2851
        %2860 = vst.msk [vmem:[#allocation3 + $0x58] sm:$0xff] %vm580, %v2852
        %v2861 = vld [vmem:[#allocation3] sm:$0xff]
        %v2862 = vld [vmem:[#allocation3 + $0x8] sm:$0xff]
        %v2863 = vld [vmem:[#allocation3 + $0x10] sm:$0xff]
        %v2864 = vld [vmem:[#allocation3 + $0x18] sm:$0xff]
        %v2865 = vld [vmem:[#allocation3 + $0x20] sm:$0xff]
        %v2866 = vld [vmem:[#allocation3 + $0x28] sm:$0xff]
        %v2867 = vld [vmem:[#allocation3 + $0x30] sm:$0xff]
        %v2868 = vld [vmem:[#allocation3 + $0x38] sm:$0xff]
        %v2869 = vld [vmem:[#allocation3 + $0x40] sm:$0xff]
        %v2870 = vld [vmem:[#allocation3 + $0x48] sm:$0xff]
        %v2871 = vld [vmem:[#allocation3 + $0x50] sm:$0xff]
        %v2872 = vld [vmem:[#allocation3 + $0x58] sm:$0xff]
        %s2873 = scalar_lea.vmem %s1, 144
        %v2874 = vld [vmem:[%s2873] sm:$0xf]
        %v2875 = vld [vmem:[%s2873 + $0x4] sm:$0xf]
        %v2876 = vld [vmem:[%s2873 + $0x8] sm:$0xf]
        %v2877 = vld [vmem:[%s2873 + $0xc] sm:$0xf]
        %v2878 = vld [vmem:[%s2873 + $0x10] sm:$0xf]
        %v2879 = vld [vmem:[%s2873 + $0x14] sm:$0xf]
        %v2880 = vld [vmem:[%s2873 + $0x18] sm:$0xf]
        %v2881 = vld [vmem:[%s2873 + $0x1c] sm:$0xf]
        %v2882 = vld [vmem:[%s2873 + $0x20] sm:$0xf]
        %v2883 = vld [vmem:[%s2873 + $0x24] sm:$0xf]
        %v2884 = vld [vmem:[%s2873 + $0x28] sm:$0xf]
        %v2885 = vld [vmem:[%s2873 + $0x2c] sm:$0xf]
        %v2886 = vld [vmem:[%s2873 + $0x30] sm:$0xf]
        %v2887 = vld [vmem:[%s2873 + $0x34] sm:$0xf]
        %v2888 = vld [vmem:[%s2873 + $0x38] sm:$0xf]
        %v2889 = vld [vmem:[%s2873 + $0x3c] sm:$0xf]
        %v2890 = vld [vmem:[%s2873 + $0x40] sm:$0xf]
        %v2891 = vld [vmem:[%s2873 + $0x44] sm:$0xf]
        %v2892 = vld [vmem:[%s2873 + $0x48] sm:$0xf]
        %v2893 = vld [vmem:[%s2873 + $0x4c] sm:$0xf]
        %v2894 = vld [vmem:[%s2873 + $0x50] sm:$0xf]
        %v2895 = vld [vmem:[%s2873 + $0x54] sm:$0xf]
        %v2896 = vld [vmem:[%s2873 + $0x58] sm:$0xf]
        %v2897 = vld [vmem:[%s2873 + $0x5c] sm:$0xf]
        %v2898 = vld [vmem:[%s2873 + $0x60] sm:$0xf]
        %v2899 = vld [vmem:[%s2873 + $0x64] sm:$0xf]
        %v2900 = vld [vmem:[%s2873 + $0x68] sm:$0xf]
        %v2901 = vld [vmem:[%s2873 + $0x6c] sm:$0xf]
        %v2902 = vld [vmem:[%s2873 + $0x70] sm:$0xf]
        %v2903 = vld [vmem:[%s2873 + $0x74] sm:$0xf]
        %v2904 = vld [vmem:[%s2873 + $0x78] sm:$0xf]
        %v2905 = vld [vmem:[%s2873 + $0x7c] sm:$0xf]
        %v2906 = vld [vmem:[%s2873 + $0x80] sm:$0xf]
        %v2907 = vld [vmem:[%s2873 + $0x84] sm:$0xf]
        %v2908 = vld [vmem:[%s2873 + $0x88] sm:$0xf]
        %v2909 = vld [vmem:[%s2873 + $0x8c] sm:$0xf]
        %s2910 = scalar_lea.vmem %s2, 1
        %v2911 = vld [vmem:[%s2910] sm:$0x1]
        %v2913 = vlaneseq
        %v2914 = vshrl.u32 %v2913, 7
        %v2915 = vsub.s32 0, %v2914
        %v2916 = vrot.slane %v2911, %v2915
        %v2954 = vunpack.c.l.b16 %v2874
        %v2955 = vunpack.c.l.b16 %v2875
        %v2956 = vunpack.c.l.b16 %v2876
        %v2957 = vunpack.c.l.b16 %v2877
        %v2958 = vunpack.c.l.b16 %v2878
        %v2959 = vunpack.c.l.b16 %v2879
        %v2960 = vunpack.c.l.b16 %v2880
        %v2961 = vunpack.c.l.b16 %v2881
        %v2962 = vunpack.c.l.b16 %v2882
        %v2963 = vunpack.c.l.b16 %v2883
        %v2964 = vunpack.c.l.b16 %v2884
        %v2965 = vunpack.c.l.b16 %v2885
        %v2966 = vunpack.c.l.b16 %v2886
        %v2967 = vunpack.c.l.b16 %v2887
        %v2968 = vunpack.c.l.b16 %v2888
        %v2969 = vunpack.c.l.b16 %v2889
        %v2970 = vunpack.c.l.b16 %v2890
        %v2971 = vunpack.c.l.b16 %v2891
        %v2972 = vunpack.c.l.b16 %v2892
        %v2973 = vunpack.c.l.b16 %v2893
        %v2974 = vunpack.c.l.b16 %v2894
        %v2975 = vunpack.c.l.b16 %v2895
        %v2976 = vunpack.c.l.b16 %v2896
        %v2977 = vunpack.c.l.b16 %v2897
        %v2978 = vunpack.c.l.b16 %v2898
        %v2979 = vunpack.c.l.b16 %v2899
        %v2980 = vunpack.c.l.b16 %v2900
        %v2981 = vunpack.c.l.b16 %v2901
        %v2982 = vunpack.c.l.b16 %v2902
        %v2983 = vunpack.c.l.b16 %v2903
        %v2984 = vunpack.c.l.b16 %v2904
        %v2985 = vunpack.c.l.b16 %v2905
        %v2986 = vunpack.c.l.b16 %v2906
        %v2987 = vunpack.c.l.b16 %v2907
        %v2988 = vunpack.c.l.b16 %v2908
        %v2989 = vunpack.c.l.b16 %v2909
        %v2990 = vpack.c.b16 %v2955, %v2954
        %v2991 = vpack.c.b16 %v2957, %v2956
        %v2992 = vpack.c.b16 %v2959, %v2958
        %v2993 = vpack.c.b16 %v2961, %v2960
        %v2994 = vpack.c.b16 %v2963, %v2962
        %v2995 = vpack.c.b16 %v2965, %v2964
        %v2996 = vpack.c.b16 %v2967, %v2966
        %v2997 = vpack.c.b16 %v2969, %v2968
        %v2998 = vpack.c.b16 %v2971, %v2970
        %v2999 = vpack.c.b16 %v2973, %v2972
        %v3000 = vpack.c.b16 %v2975, %v2974
        %v3001 = vpack.c.b16 %v2977, %v2976
        %v3002 = vpack.c.b16 %v2979, %v2978
        %v3003 = vpack.c.b16 %v2981, %v2980
        %v3004 = vpack.c.b16 %v2983, %v2982
        %v3005 = vpack.c.b16 %v2985, %v2984
        %v3006 = vpack.c.b16 %v2987, %v2986
        %v3007 = vpack.c.b16 %v2989, %v2988
        %v3027 = vsel %vm580, %v2863, 0
        %v3030 = vsel %vm580, %v2866, 0
        %v3033 = vsel %vm580, %v2869, 0
        %v3036 = vsel %vm580, %v2872, 0
        %3038 = vmatprep.subr.bf16.mxu0 0
        %3039 = vmatpush1.bf16.msra.mxu0 %v2990
        %3040 = vmatprep.subr.bf16.mxu0 0
        %3041 = vmatpush1.bf16.msra.mxu0 %v2991
        %3042 = vmatprep.subr.bf16.mxu0 0
        %3043 = vmatpush1.bf16.msra.mxu0 %v2992
        %3044 = vmatprep.subr.bf16.mxu0 0
        %3045 = vmatpush1.bf16.msra.mxu0 %v2993
        %3046 = vmatprep.subr.bf16.mxu0 0
        %3047 = vmatpush1.bf16.msra.mxu0 %v2994
        %3048 = vmatprep.subr.bf16.mxu0 0
        %3049 = vmatpush1.bf16.msra.mxu0 %v2995
        %3050 = vmatprep.subr.bf16.mxu0 0
        %3051 = vmatpush1.bf16.msra.mxu0 %v2996
        %3052 = vmatprep.subr.bf16.mxu0 0
        %3053 = vmatpush1.bf16.msra.mxu0 %v2997
        %3054 = vmatprep.subr.bf16.mxu0 0
        %3055 = vmatpush1.bf16.msra.mxu0 %v2998
        %3056 = vmatprep.subr.bf16.mxu0 0
        %3057 = vmatpush1.bf16.msra.mxu0 %v2999
        %3058 = vmatprep.subr.bf16.mxu0 0
        %3059 = vmatpush1.bf16.msra.mxu0 %v3000
        %3060 = vmatprep.subr.bf16.mxu0 0
        %3061 = vmatpush1.bf16.msra.mxu0 %v3001
        %3062 = vmatprep.subr.bf16.mxu0 0
        %3063 = vmatpush1.bf16.msra.mxu0 %v3002
        %3064 = vmatprep.subr.bf16.mxu0 0
        %3065 = vmatpush1.bf16.msra.mxu0 %v3003
        %3066 = vmatprep.subr.bf16.mxu0 0
        %3067 = vmatpush1.bf16.msra.mxu0 %v3004
        %3068 = vmatprep.subr.bf16.mxu0 0
        %3069 = vmatpush1.bf16.msra.mxu0 %v3005
        %3070 = vmatprep.mubr.bf16.mxu0 %v2862
        %3071 = vmatmul.mubr.bf16.gmra.mrb[0].mxu0 %v2861
        %v3072 = vpop.f32.mrb[0].mxu0
        %v3073 = vadd.f32 %v2916, %v3072
        %v3074 = vpop.f32.mrb[0].mxu0
        %v3075 = vpop.f32.mrb[0].mxu0
        %v3076 = vadd.f32 %v2916, %v3075
        %v3077 = vpop.f32.mrb[0].mxu0
        %3078 = vmatprep.mubr.bf16.mxu0 %v2865
        %3079 = vmatmul.mubr.bf16.gmra.mrb[0].mxu0 %v2864
        %v3080 = vpop.f32.mrb[0].mxu0
        %v3081 = vadd.f32 %v2916, %v3080
        %v3082 = vpop.f32.mrb[0].mxu0
        %v3083 = vpop.f32.mrb[0].mxu0
        %v3084 = vadd.f32 %v2916, %v3083
        %v3085 = vpop.f32.mrb[0].mxu0
        %3086 = vmatprep.mubr.bf16.mxu0 %v2868
        %3087 = vmatmul.mubr.bf16.gmra.mrb[0].mxu0 %v2867
        %v3088 = vpop.f32.mrb[0].mxu0
        %v3089 = vadd.f32 %v2916, %v3088
        %v3090 = vpop.f32.mrb[0].mxu0
        %v3091 = vpop.f32.mrb[0].mxu0
        %v3092 = vadd.f32 %v2916, %v3091
        %v3093 = vpop.f32.mrb[0].mxu0
        %3094 = vmatprep.mubr.bf16.mxu0 %v2871
        %3095 = vmatmul.mubr.bf16.gmra.mrb[0].mxu0 %v2870
        %v3096 = vpop.f32.mrb[0].mxu0
        %v3097 = vadd.f32 %v2916, %v3096
        %v3098 = vpop.f32.mrb[0].mxu0
        %v3099 = vpop.f32.mrb[0].mxu0
        %v3100 = vadd.f32 %v2916, %v3099
        %v3101 = vpop.f32.mrb[0].mxu0
        %3102 = vdwg.mxu0
        %3103 = vmatprep.subr.bf16.mxu0 0
        %3104 = vmatpush1.bf16.msra.mxu0 %v3006
        %3105 = vmatprep.subr.bf16.mxu0 0
        %3106 = vmatpush1.bf16.msra.mxu0 %v3007
        %3107 = vmatprep.subr.bf16.mxu0 0
        %3108 = vmatpush1.bf16.msra.mxu0 0
        %3109 = vmatprep.subr.bf16.mxu0 0
        %3110 = vmatpush1.bf16.msra.mxu0 0
        %3111 = vmatprep.subr.bf16.mxu0 0
        %3112 = vmatpush1.bf16.msra.mxu0 0
        %3113 = vmatprep.subr.bf16.mxu0 0
        %3114 = vmatpush1.bf16.msra.mxu0 0
        %3115 = vmatprep.subr.bf16.mxu0 0
        %3116 = vmatpush1.bf16.msra.mxu0 0
        %3117 = vmatprep.subr.bf16.mxu0 0
        %3118 = vmatpush1.bf16.msra.mxu0 0
        %3119 = vmatprep.subr.bf16.mxu0 0
        %3120 = vmatpush1.bf16.msra.mxu0 0
        %3121 = vmatprep.subr.bf16.mxu0 0
        %3122 = vmatpush1.bf16.msra.mxu0 0
        %3123 = vmatprep.subr.bf16.mxu0 0
        %3124 = vmatpush1.bf16.msra.mxu0 0
        %3125 = vmatprep.subr.bf16.mxu0 0
        %3126 = vmatpush1.bf16.msra.mxu0 0
        %3127 = vmatprep.subr.bf16.mxu0 0
        %3128 = vmatpush1.bf16.msra.mxu0 0
        %3129 = vmatprep.subr.bf16.mxu0 0
        %3130 = vmatpush1.bf16.msra.mxu0 0
        %3131 = vmatprep.subr.bf16.mxu0 0
        %3132 = vmatpush1.bf16.msra.mxu0 0
        %3133 = vmatprep.subr.bf16.mxu0 0
        %3134 = vmatpush1.bf16.msra.mxu0 0
        %3135 = vmatprep.mubr.bf16.mxu0 0
        %3136 = vmatmul.mubr.bf16.gmra.mrb[0].mxu0 %v3027
        %v3137 = vpop.f32.mrb[0].mxu0
        %v3138 = vadd.f32 %v3073, %v3137
        %v3139 = vpop.f32.mrb[0].mxu0
        %v3140 = vpop.f32.mrb[0].mxu0
        %v3141 = vadd.f32 %v3076, %v3140
        %v3142 = vpop.f32.mrb[0].mxu0
        %3143 = vmatprep.mubr.bf16.mxu0 0
        %3144 = vmatmul.mubr.bf16.gmra.mrb[0].mxu0 %v3030
        %v3145 = vpop.f32.mrb[0].mxu0
        %v3146 = vadd.f32 %v3081, %v3145
        %v3147 = vpop.f32.mrb[0].mxu0
        %v3148 = vpop.f32.mrb[0].mxu0
        %v3149 = vadd.f32 %v3084, %v3148
        %v3150 = vpop.f32.mrb[0].mxu0
        %3151 = vmatprep.mubr.bf16.mxu0 0
        %3152 = vmatmul.mubr.bf16.gmra.mrb[0].mxu0 %v3033
        %v3153 = vpop.f32.mrb[0].mxu0
        %v3154 = vadd.f32 %v3089, %v3153
        %v3155 = vpop.f32.mrb[0].mxu0
        %v3156 = vpop.f32.mrb[0].mxu0
        %v3157 = vadd.f32 %v3092, %v3156
        %v3158 = vpop.f32.mrb[0].mxu0
        %3159 = vmatprep.mubr.bf16.mxu0 0
        %3160 = vmatmul.mubr.bf16.gmra.mrb[0].mxu0 %v3036
        %v3161 = vpop.f32.mrb[0].mxu0
        %v3162 = vadd.f32 %v3097, %v3161
        %v3163 = vpop.f32.mrb[0].mxu0
        %v3164 = vpop.f32.mrb[0].mxu0
        %v3165 = vadd.f32 %v3100, %v3164
        %v3166 = vpop.f32.mrb[0].mxu0
        %3167 = vdwg.mxu0
        %3176 = vrot.lane.b32.xlu0 %v3138, 32
        %v3177 = vpop.permute.xlu0 %3176
        %3178 = vrot.lane.b32.xlu0 %v3141, 32
        %v3179 = vpop.permute.xlu0 %3178
        %3180 = vrot.lane.b32.xlu0 %v3146, 32
        %v3181 = vpop.permute.xlu0 %3180
        %3182 = vrot.lane.b32.xlu0 %v3149, 32
        %v3183 = vpop.permute.xlu0 %3182
        %3184 = vrot.lane.b32.xlu0 %v3154, 32
        %v3185 = vpop.permute.xlu0 %3184
        %3186 = vrot.lane.b32.xlu0 %v3157, 32
        %v3187 = vpop.permute.xlu0 %3186
        %3188 = vrot.lane.b32.xlu0 %v3162, 32
        %v3189 = vpop.permute.xlu0 %3188
        %3190 = vrot.lane.b32.xlu0 %v3165, 32
        %v3191 = vpop.permute.xlu0 %3190
        %3200 = vst.msk [vmem:[%s298] sm:$0xff] %vm740, %v3177
        %3201 = vst.msk [vmem:[%s298 + $0x8] sm:$0xff] %vm740, %v3179
        %3202 = vst.msk [vmem:[%s298 + $0x10] sm:$0xff] %vm740, %v3181
        %3203 = vst.msk [vmem:[%s298 + $0x18] sm:$0xff] %vm740, %v3183
        %3204 = vst.msk [vmem:[%s298 + $0x20] sm:$0xff] %vm740, %v3185
        %3205 = vst.msk [vmem:[%s298 + $0x28] sm:$0xff] %vm740, %v3187
        %3206 = vst.msk [vmem:[%s298 + $0x30] sm:$0xff] %vm740, %v3189
        %3207 = vst.msk [vmem:[%s298 + $0x38] sm:$0xff] %vm740, %v3191
        %v3208 = vld [vmem:[%s3] sm:$0x1f]
        %v3210 = vsel %vm1725, %v3208, 0
        %3212 = vmatprep.subr.mxu0 0.0
        %3213 = vmatpush1.msra.mxu0 %v3138
        %3214 = vmatprep.subr.mxu0 0.0
        %3215 = vmatpush1.msra.mxu0 %v3141
        %3216 = vmatprep.subr.mxu0 0.0
        %3217 = vmatpush1.msra.mxu0 %v3146
        %3218 = vmatprep.subr.mxu0 0.0
        %3219 = vmatpush1.msra.mxu0 %v3149
        %3220 = vmatprep.subr.mxu0 0.0
        %3221 = vmatpush1.msra.mxu0 %v3154
        %3222 = vmatprep.subr.mxu0 0.0
        %3223 = vmatpush1.msra.mxu0 %v3157
        %3224 = vmatprep.subr.mxu0 0.0
        %3225 = vmatpush1.msra.mxu0 %v3162
        %3226 = vmatprep.subr.mxu0 0.0
        %3227 = vmatpush1.msra.mxu0 %v3165
        %3228 = vmatprep.subr.mxu0 0.0
        %3229 = vmatpush1.msra.mxu0 0.0
        %3230 = vmatprep.subr.mxu0 0.0
        %3231 = vmatpush1.msra.mxu0 0.0
        %3232 = vmatprep.subr.mxu0 0.0
        %3233 = vmatpush1.msra.mxu0 0.0
        %3234 = vmatprep.subr.mxu0 0.0
        %3235 = vmatpush1.msra.mxu0 0.0
        %3236 = vmatprep.subr.mxu0 0.0
        %3237 = vmatpush1.msra.mxu0 0.0
        %3238 = vmatprep.subr.mxu0 0.0
        %3239 = vmatpush1.msra.mxu0 0.0
        %3240 = vmatprep.subr.mxu0 0.0
        %3241 = vmatpush1.msra.mxu0 0.0
        %3242 = vmatprep.subr.mxu0 0.0
        %3243 = vmatpush1.msra.mxu0 0.0
        %3244 = vmatprep.subr.mxu0 0.0
        %3245 = vmatpush1.msra.mxu0 0.0
        %3246 = vmatprep.subr.mxu0 0.0
        %3247 = vmatpush1.msra.mxu0 0.0
        %3248 = vmatprep.subr.mxu0 0.0
        %3249 = vmatpush1.msra.mxu0 0.0
        %3250 = vmatprep.subr.mxu0 0.0
        %3251 = vmatpush1.msra.mxu0 0.0
        %3252 = vmatprep.subr.mxu0 0.0
        %3253 = vmatpush1.msra.mxu0 0.0
        %3254 = vmatprep.subr.mxu0 0.0
        %3255 = vmatpush1.msra.mxu0 0.0
        %3256 = vmatprep.subr.mxu0 0.0
        %3257 = vmatpush1.msra.mxu0 0.0
        %3258 = vmatprep.subr.mxu0 0.0
        %3259 = vmatpush1.msra.mxu0 0.0
        %3260 = vmatprep.subr.mxu0 0.0
        %3261 = vmatpush1.msra.mxu0 0.0
        %3262 = vmatprep.subr.mxu0 0.0
        %3263 = vmatpush1.msra.mxu0 0.0
        %3264 = vmatprep.subr.mxu0 0.0
        %3265 = vmatpush1.msra.mxu0 0.0
        %3266 = vmatprep.subr.mxu0 0.0
        %3267 = vmatpush1.msra.mxu0 0.0
        %3268 = vmatprep.subr.mxu0 0.0
        %3269 = vmatpush1.msra.mxu0 0.0
        %3270 = vmatprep.subr.mxu0 0.0
        %3271 = vmatpush1.msra.mxu0 0.0
        %3272 = vmatprep.subr.mxu0 0.0
        %3273 = vmatpush1.msra.mxu0 0.0
        %3274 = vmatprep.subr.mxu0 0.0
        %3275 = vmatpush1.msra.mxu0 0.0
        %3276 = vmatprep.mubr.f32.mxu0 0.0
        %3277 = vmatmul.mubr.f32.gmra.mrb[0].mxu0 %v3210
        %v3278 = vpop.f32.mrb[0].mxu0
        %v3279 = vadd.f32 0.0, %v3278
        %v3280 = vpop.f32.mrb[0].mxu0
        %3281 = vdwg.mxu0
        %s3282 = scalar_lea.vmem [#allocation4], 8
        %3283 = vst.msk [vmem:[%s3282] sm:$0x1f] %vm1799, %v3279
        %v3284 = vld [vmem:[%s303] sm:$0xff]
        %v3285 = vld [vmem:[%s303 + $0x8] sm:$0xff]
        %v3286 = vld [vmem:[%s303 + $0x10] sm:$0xff]
        %v3287 = vld [vmem:[%s303 + $0x18] sm:$0xff]
        %v3288 = vld [vmem:[%s303 + $0x20] sm:$0xff]
        %v3289 = vld [vmem:[%s303 + $0x28] sm:$0xff]
        %v3290 = vld [vmem:[%s303 + $0x30] sm:$0xff]
        %v3291 = vld [vmem:[%s303 + $0x38] sm:$0xff]
        %3300 = vrot.lane.b32.xlu0 %v3284, 64
        %v3301 = vpop.permute.xlu0 %3300
        %3302 = vrot.lane.b32.xlu0 %v3285, 64
        %v3303 = vpop.permute.xlu0 %3302
        %3304 = vrot.lane.b32.xlu0 %v3286, 64
        %v3305 = vpop.permute.xlu0 %3304
        %3306 = vrot.lane.b32.xlu0 %v3287, 64
        %v3307 = vpop.permute.xlu0 %3306
        %3308 = vrot.lane.b32.xlu0 %v3288, 64
        %v3309 = vpop.permute.xlu0 %3308
        %3310 = vrot.lane.b32.xlu0 %v3289, 64
        %v3311 = vpop.permute.xlu0 %3310
        %3312 = vrot.lane.b32.xlu0 %v3290, 64
        %v3313 = vpop.permute.xlu0 %3312
        %3314 = vrot.lane.b32.xlu0 %v3291, 64
        %v3315 = vpop.permute.xlu0 %3314
        %v3324 = vadd.f32 %v3138, %v3301
        %v3325 = vadd.f32 %v3141, %v3303
        %v3326 = vadd.f32 %v3146, %v3305
        %v3327 = vadd.f32 %v3149, %v3307
        %v3328 = vadd.f32 %v3154, %v3309
        %v3329 = vadd.f32 %v3157, %v3311
        %v3330 = vadd.f32 %v3162, %v3313
        %v3331 = vadd.f32 %v3165, %v3315
        %v3332 = vpack.c.bf16 %v3324, %v3324
        %v3333 = vpack.c.bf16 %v3325, %v3325
        %v3334 = vpack.c.bf16 %v3326, %v3326
        %v3335 = vpack.c.bf16 %v3327, %v3327
        %v3336 = vpack.c.bf16 %v3328, %v3328
        %v3337 = vpack.c.bf16 %v3329, %v3329
        %v3338 = vpack.c.bf16 %v3330, %v3330
        %v3339 = vpack.c.bf16 %v3331, %v3331
        %v3348 = vunpack.c.l.b16 %v3332
        %v3349 = vunpack.c.l.b16 %v3333
        %v3350 = vunpack.c.l.b16 %v3334
        %v3351 = vunpack.c.l.b16 %v3335
        %v3352 = vunpack.c.l.b16 %v3336
        %v3353 = vunpack.c.l.b16 %v3337
        %v3354 = vunpack.c.l.b16 %v3338
        %v3355 = vunpack.c.l.b16 %v3339
        %v3356 = vpack.c.b16 %v3348, %v3348
        %v3357 = vpack.c.b16 %v3349, %v3349
        %v3358 = vpack.c.b16 %v3350, %v3350
        %v3359 = vpack.c.b16 %v3351, %v3351
        %v3360 = vpack.c.b16 %v3352, %v3352
        %v3361 = vpack.c.b16 %v3353, %v3353
        %v3362 = vpack.c.b16 %v3354, %v3354
        %v3363 = vpack.c.b16 %v3355, %v3355
        %v3365 = vshrl.u32 %v3356, 16
        %v3367 = vrot.slane %v3365, 7
        %v3368 = vshll.u32 %v3356, 16
        %v3370 = vor.u32 %v3367, %v3368
        %v3371 = vrot.slane %v3367, 4
        %v3373 = vshrl.u32 %v3357, 16
        %v3375 = vrot.slane %v3373, 7
        %v3376 = vshll.u32 %v3357, 16
        %v3378 = vor.u32 %v3375, %v3376
        %v3379 = vrot.slane %v3375, 4
        %v3381 = vshrl.u32 %v3358, 16
        %v3383 = vrot.slane %v3381, 7
        %v3384 = vshll.u32 %v3358, 16
        %v3386 = vor.u32 %v3383, %v3384
        %v3387 = vrot.slane %v3383, 4
        %v3389 = vshrl.u32 %v3359, 16
        %v3391 = vrot.slane %v3389, 7
        %v3392 = vshll.u32 %v3359, 16
        %v3394 = vor.u32 %v3391, %v3392
        %v3395 = vrot.slane %v3391, 4
        %v3397 = vshrl.u32 %v3360, 16
        %v3399 = vrot.slane %v3397, 7
        %v3400 = vshll.u32 %v3360, 16
        %v3402 = vor.u32 %v3399, %v3400
        %v3403 = vrot.slane %v3399, 4
        %v3405 = vshrl.u32 %v3361, 16
        %v3407 = vrot.slane %v3405, 7
        %v3408 = vshll.u32 %v3361, 16
        %v3410 = vor.u32 %v3407, %v3408
        %v3411 = vrot.slane %v3407, 4
        %v3413 = vshrl.u32 %v3362, 16
        %v3415 = vrot.slane %v3413, 7
        %v3416 = vshll.u32 %v3362, 16
        %v3418 = vor.u32 %v3415, %v3416
        %v3419 = vrot.slane %v3415, 4
        %v3421 = vshrl.u32 %v3363, 16
        %v3423 = vrot.slane %v3421, 7
        %v3424 = vshll.u32 %v3363, 16
        %v3426 = vor.u32 %v3423, %v3424
        %v3427 = vrot.slane %v3423, 4
        %v3444 = vld [vmem:[%s497] sm:$0xf]
        %v3445 = vsel %vm499, %v3370, %v3444
        %3446 = vst [vmem:[%s497] sm:$0xf] %v3445
        %v3447 = vld [vmem:[%s497 + $0x4] sm:$0x1]
        %v3448 = vsel %vm314, %v3371, %v3447
        %3449 = vst [vmem:[%s497 + $0x4] sm:$0x1] %v3448
        %v3450 = vld [vmem:[%s497 + $0x8] sm:$0xf]
        %v3451 = vsel %vm499, %v3378, %v3450
        %3452 = vst [vmem:[%s497 + $0x8] sm:$0xf] %v3451
        %v3453 = vld [vmem:[%s497 + $0xc] sm:$0x1]
        %v3454 = vsel %vm314, %v3379, %v3453
        %3455 = vst [vmem:[%s497 + $0xc] sm:$0x1] %v3454
        %v3456 = vld [vmem:[%s497 + $0x10] sm:$0xf]
        %v3457 = vsel %vm499, %v3386, %v3456
        %3458 = vst [vmem:[%s497 + $0x10] sm:$0xf] %v3457
        %v3459 = vld [vmem:[%s497 + $0x14] sm:$0x1]
        %v3460 = vsel %vm314, %v3387, %v3459
        %3461 = vst [vmem:[%s497 + $0x14] sm:$0x1] %v3460
        %v3462 = vld [vmem:[%s497 + $0x18] sm:$0xf]
        %v3463 = vsel %vm499, %v3394, %v3462
        %3464 = vst [vmem:[%s497 + $0x18] sm:$0xf] %v3463
        %v3465 = vld [vmem:[%s497 + $0x1c] sm:$0x1]
        %v3466 = vsel %vm314, %v3395, %v3465
        %3467 = vst [vmem:[%s497 + $0x1c] sm:$0x1] %v3466
        %v3468 = vld [vmem:[%s497 + $0x20] sm:$0xf]
        %v3469 = vsel %vm499, %v3402, %v3468
        %3470 = vst [vmem:[%s497 + $0x20] sm:$0xf] %v3469
        %v3471 = vld [vmem:[%s497 + $0x24] sm:$0x1]
        %v3472 = vsel %vm314, %v3403, %v3471
        %3473 = vst [vmem:[%s497 + $0x24] sm:$0x1] %v3472
        %v3474 = vld [vmem:[%s497 + $0x28] sm:$0xf]
        %v3475 = vsel %vm499, %v3410, %v3474
        %3476 = vst [vmem:[%s497 + $0x28] sm:$0xf] %v3475
        %v3477 = vld [vmem:[%s497 + $0x2c] sm:$0x1]
        %v3478 = vsel %vm314, %v3411, %v3477
        %3479 = vst [vmem:[%s497 + $0x2c] sm:$0x1] %v3478
        %v3480 = vld [vmem:[%s497 + $0x30] sm:$0xf]
        %v3481 = vsel %vm499, %v3418, %v3480
        %3482 = vst [vmem:[%s497 + $0x30] sm:$0xf] %v3481
        %v3483 = vld [vmem:[%s497 + $0x34] sm:$0x1]
        %v3484 = vsel %vm314, %v3419, %v3483
        %3485 = vst [vmem:[%s497 + $0x34] sm:$0x1] %v3484
        %v3486 = vld [vmem:[%s497 + $0x38] sm:$0xf]
        %v3487 = vsel %vm499, %v3426, %v3486
        %3488 = vst [vmem:[%s497 + $0x38] sm:$0xf] %v3487
        %v3489 = vld [vmem:[%s497 + $0x3c] sm:$0x1]
        %v3490 = vsel %vm314, %v3427, %v3489
        %3491 = vst [vmem:[%s497 + $0x3c] sm:$0x1] %v3490
        %v3492 = vld [vmem:[#allocation2] sm:$0xf]
        %v3493 = vld [vmem:[#allocation2 + $0x8] sm:$0xf]
        %v3494 = vld [vmem:[#allocation2 + $0x10] sm:$0xf]
        %v3495 = vld [vmem:[#allocation2 + $0x18] sm:$0xf]
        %v3496 = vld [vmem:[#allocation2 + $0x20] sm:$0xf]
        %v3497 = vld [vmem:[#allocation2 + $0x28] sm:$0xf]
        %v3498 = vld [vmem:[#allocation2 + $0x30] sm:$0xf]
        %v3499 = vld [vmem:[#allocation2 + $0x38] sm:$0xf]
        %v3508 = vunpack.c.l.b16 %v3492
        %v3509 = vunpack.c.l.b16 %v3493
        %v3510 = vunpack.c.l.b16 %v3494
        %v3511 = vunpack.c.l.b16 %v3495
        %v3512 = vunpack.c.l.b16 %v3496
        %v3513 = vunpack.c.l.b16 %v3497
        %v3514 = vunpack.c.l.b16 %v3498
        %v3515 = vunpack.c.l.b16 %v3499
        %v3516 = vpack.c.b16 %v3509, %v3508
        %v3517 = vpack.c.b16 %v3511, %v3510
        %v3518 = vpack.c.b16 %v3513, %v3512
        %v3519 = vpack.c.b16 %v3515, %v3514
        %3524 = vst.msk [vmem:[#allocation3] sm:$0xff] %vm580, %v3516
        %3525 = vst.msk [vmem:[#allocation3 + $0x18] sm:$0xff] %vm580, %v3517
        %3526 = vst.msk [vmem:[#allocation3 + $0x30] sm:$0xff] %vm580, %v3518
        %3527 = vst.msk [vmem:[#allocation3 + $0x48] sm:$0xff] %vm580, %v3519
        %v3528 = vld [vmem:[#allocation2] sm:$0xf]
        %v3529 = vld [vmem:[#allocation2 + $0x4] sm:$0x1]
        %v3530 = vld [vmem:[#allocation2 + $0x8] sm:$0xf]
        %v3531 = vld [vmem:[#allocation2 + $0xc] sm:$0x1]
        %v3532 = vld [vmem:[#allocation2 + $0x10] sm:$0xf]
        %v3533 = vld [vmem:[#allocation2 + $0x14] sm:$0x1]
        %v3534 = vld [vmem:[#allocation2 + $0x18] sm:$0xf]
        %v3535 = vld [vmem:[#allocation2 + $0x1c] sm:$0x1]
        %v3536 = vld [vmem:[#allocation2 + $0x20] sm:$0xf]
        %v3537 = vld [vmem:[#allocation2 + $0x24] sm:$0x1]
        %v3538 = vld [vmem:[#allocation2 + $0x28] sm:$0xf]
        %v3539 = vld [vmem:[#allocation2 + $0x2c] sm:$0x1]
        %v3540 = vld [vmem:[#allocation2 + $0x30] sm:$0xf]
        %v3541 = vld [vmem:[#allocation2 + $0x34] sm:$0x1]
        %v3542 = vld [vmem:[#allocation2 + $0x38] sm:$0xf]
        %v3543 = vld [vmem:[#allocation2 + $0x3c] sm:$0x1]
        %v3545 = vshrl.u32 %v3528, 16
        %v3547 = vrot.slane %v3545, 4
        %v3548 = vshll.u32 %v3528, 16
        %v3550 = vrot.slane %v3548, 5
        %v3551 = vor.u32 %v3547, %v3550
        %v3552 = vrot.slane %v3551, 4
        %v3554 = vshll.u32 %v3529, 16
        %v3556 = vrot.slane %v3554, 5
        %v3557 = vsel %vm603, %v3552, %v3556
        %v3559 = vshrl.u32 %v3530, 16
        %v3561 = vrot.slane %v3559, 4
        %v3562 = vshll.u32 %v3530, 16
        %v3564 = vrot.slane %v3562, 5
        %v3565 = vor.u32 %v3561, %v3564
        %v3566 = vrot.slane %v3565, 4
        %v3568 = vshll.u32 %v3531, 16
        %v3570 = vrot.slane %v3568, 5
        %v3571 = vsel %vm603, %v3566, %v3570
        %v3573 = vshrl.u32 %v3532, 16
        %v3575 = vrot.slane %v3573, 4
        %v3576 = vshll.u32 %v3532, 16
        %v3578 = vrot.slane %v3576, 5
        %v3579 = vor.u32 %v3575, %v3578
        %v3580 = vrot.slane %v3579, 4
        %v3582 = vshll.u32 %v3533, 16
        %v3584 = vrot.slane %v3582, 5
        %v3585 = vsel %vm603, %v3580, %v3584
        %v3587 = vshrl.u32 %v3534, 16
        %v3589 = vrot.slane %v3587, 4
        %v3590 = vshll.u32 %v3534, 16
        %v3592 = vrot.slane %v3590, 5
        %v3593 = vor.u32 %v3589, %v3592
        %v3594 = vrot.slane %v3593, 4
        %v3596 = vshll.u32 %v3535, 16
        %v3598 = vrot.slane %v3596, 5
        %v3599 = vsel %vm603, %v3594, %v3598
        %v3601 = vshrl.u32 %v3536, 16
        %v3603 = vrot.slane %v3601, 4
        %v3604 = vshll.u32 %v3536, 16
        %v3606 = vrot.slane %v3604, 5
        %v3607 = vor.u32 %v3603, %v3606
        %v3608 = vrot.slane %v3607, 4
        %v3610 = vshll.u32 %v3537, 16
        %v3612 = vrot.slane %v3610, 5
        %v3613 = vsel %vm603, %v3608, %v3612
        %v3615 = vshrl.u32 %v3538, 16
        %v3617 = vrot.slane %v3615, 4
        %v3618 = vshll.u32 %v3538, 16
        %v3620 = vrot.slane %v3618, 5
        %v3621 = vor.u32 %v3617, %v3620
        %v3622 = vrot.slane %v3621, 4
        %v3624 = vshll.u32 %v3539, 16
        %v3626 = vrot.slane %v3624, 5
        %v3627 = vsel %vm603, %v3622, %v3626
        %v3629 = vshrl.u32 %v3540, 16
        %v3631 = vrot.slane %v3629, 4
        %v3632 = vshll.u32 %v3540, 16
        %v3634 = vrot.slane %v3632, 5
        %v3635 = vor.u32 %v3631, %v3634
        %v3636 = vrot.slane %v3635, 4
        %v3638 = vshll.u32 %v3541, 16
        %v3640 = vrot.slane %v3638, 5
        %v3641 = vsel %vm603, %v3636, %v3640
        %v3643 = vshrl.u32 %v3542, 16
        %v3645 = vrot.slane %v3643, 4
        %v3646 = vshll.u32 %v3542, 16
        %v3648 = vrot.slane %v3646, 5
        %v3649 = vor.u32 %v3645, %v3648
        %v3650 = vrot.slane %v3649, 4
        %v3652 = vshll.u32 %v3543, 16
        %v3654 = vrot.slane %v3652, 5
        %v3655 = vsel %vm603, %v3650, %v3654
        %v3656 = vunpack.c.l.b16 %v3557
        %v3657 = vunpack.c.l.b16 %v3571
        %v3658 = vunpack.c.l.b16 %v3585
        %v3659 = vunpack.c.l.b16 %v3599
        %v3660 = vunpack.c.l.b16 %v3613
        %v3661 = vunpack.c.l.b16 %v3627
        %v3662 = vunpack.c.l.b16 %v3641
        %v3663 = vunpack.c.l.b16 %v3655
        %v3664 = vpack.c.b16 %v3657, %v3656
        %v3665 = vpack.c.b16 %v3659, %v3658
        %v3666 = vpack.c.b16 %v3661, %v3660
        %v3667 = vpack.c.b16 %v3663, %v3662
        %3668 = vrot.lane.b32.xlu0 %v3664, 32
        %v3669 = vpop.permute.xlu0 %3668
        %3670 = vrot.lane.b32.xlu0 %v3665, 32
        %v3671 = vpop.permute.xlu0 %3670
        %3672 = vrot.lane.b32.xlu0 %v3666, 32
        %v3673 = vpop.permute.xlu0 %3672
        %3674 = vrot.lane.b32.xlu0 %v3667, 32
        %v3675 = vpop.permute.xlu0 %3674
        %3680 = vst.msk [vmem:[#allocation3] sm:$0xff] %vm740, %v3669
        %3681 = vst.msk [vmem:[#allocation3 + $0x18] sm:$0xff] %vm740, %v3671
        %3682 = vst.msk [vmem:[#allocation3 + $0x30] sm:$0xff] %vm740, %v3673
        %3683 = vst.msk [vmem:[#allocation3 + $0x48] sm:$0xff] %vm740, %v3675
        %v3684 = vld [vmem:[#allocation2] sm:$0xe]
        %v3685 = vld [vmem:[#allocation2 + $0x4] sm:$0x1]
        %v3686 = vld [vmem:[#allocation2 + $0x8] sm:$0xe]
        %v3687 = vld [vmem:[#allocation2 + $0xc] sm:$0x1]
        %v3688 = vld [vmem:[#allocation2 + $0x10] sm:$0xe]
        %v3689 = vld [vmem:[#allocation2 + $0x14] sm:$0x1]
        %v3690 = vld [vmem:[#allocation2 + $0x18] sm:$0xe]
        %v3691 = vld [vmem:[#allocation2 + $0x1c] sm:$0x1]
        %v3692 = vld [vmem:[#allocation2 + $0x20] sm:$0xe]
        %v3693 = vld [vmem:[#allocation2 + $0x24] sm:$0x1]
        %v3694 = vld [vmem:[#allocation2 + $0x28] sm:$0xe]
        %v3695 = vld [vmem:[#allocation2 + $0x2c] sm:$0x1]
        %v3696 = vld [vmem:[#allocation2 + $0x30] sm:$0xe]
        %v3697 = vld [vmem:[#allocation2 + $0x34] sm:$0x1]
        %v3698 = vld [vmem:[#allocation2 + $0x38] sm:$0xe]
        %v3699 = vld [vmem:[#allocation2 + $0x3c] sm:$0x1]
        %v3716 = vrot.slane %v3684, 5
        %v3717 = vrot.slane %v3716, 4
        %v3718 = vrot.slane %v3685, 5
        %v3719 = vsel %vm779, %v3717, %v3718
        %v3720 = vrot.slane %v3686, 5
        %v3721 = vrot.slane %v3720, 4
        %v3722 = vrot.slane %v3687, 5
        %v3723 = vsel %vm779, %v3721, %v3722
        %v3724 = vrot.slane %v3688, 5
        %v3725 = vrot.slane %v3724, 4
        %v3726 = vrot.slane %v3689, 5
        %v3727 = vsel %vm779, %v3725, %v3726
        %v3728 = vrot.slane %v3690, 5
        %v3729 = vrot.slane %v3728, 4
        %v3730 = vrot.slane %v3691, 5
        %v3731 = vsel %vm779, %v3729, %v3730
        %v3732 = vrot.slane %v3692, 5
        %v3733 = vrot.slane %v3732, 4
        %v3734 = vrot.slane %v3693, 5
        %v3735 = vsel %vm779, %v3733, %v3734
        %v3736 = vrot.slane %v3694, 5
        %v3737 = vrot.slane %v3736, 4
        %v3738 = vrot.slane %v3695, 5
        %v3739 = vsel %vm779, %v3737, %v3738
        %v3740 = vrot.slane %v3696, 5
        %v3741 = vrot.slane %v3740, 4
        %v3742 = vrot.slane %v3697, 5
        %v3743 = vsel %vm779, %v3741, %v3742
        %v3744 = vrot.slane %v3698, 5
        %v3745 = vrot.slane %v3744, 4
        %v3746 = vrot.slane %v3699, 5
        %v3747 = vsel %vm779, %v3745, %v3746
        %v3748 = vunpack.c.l.b16 %v3719
        %v3749 = vunpack.c.l.b16 %v3723
        %v3750 = vunpack.c.l.b16 %v3727
        %v3751 = vunpack.c.l.b16 %v3731
        %v3752 = vunpack.c.l.b16 %v3735
        %v3753 = vunpack.c.l.b16 %v3739
        %v3754 = vunpack.c.l.b16 %v3743
        %v3755 = vunpack.c.l.b16 %v3747
        %v3756 = vpack.c.b16 %v3749, %v3748
        %v3757 = vpack.c.b16 %v3751, %v3750
        %v3758 = vpack.c.b16 %v3753, %v3752
        %v3759 = vpack.c.b16 %v3755, %v3754
        %3760 = vrot.lane.b32.xlu0 %v3756, 64
        %v3761 = vpop.permute.xlu0 %3760
        %3762 = vrot.lane.b32.xlu0 %v3757, 64
        %v3763 = vpop.permute.xlu0 %3762
        %3764 = vrot.lane.b32.xlu0 %v3758, 64
        %v3765 = vpop.permute.xlu0 %3764
        %3766 = vrot.lane.b32.xlu0 %v3759, 64
        %v3767 = vpop.permute.xlu0 %3766
        %3772 = vst.msk [vmem:[#allocation3] sm:$0xff] %vm836, %v3761
        %3773 = vst.msk [vmem:[#allocation3 + $0x18] sm:$0xff] %vm836, %v3763
        %3774 = vst.msk [vmem:[#allocation3 + $0x30] sm:$0xff] %vm836, %v3765
        %3775 = vst.msk [vmem:[#allocation3 + $0x48] sm:$0xff] %vm836, %v3767
        %v3776 = vld [vmem:[%s497] sm:$0xf]
        %v3777 = vld [vmem:[%s497 + $0x8] sm:$0xf]
        %v3778 = vld [vmem:[%s497 + $0x10] sm:$0xf]
        %v3779 = vld [vmem:[%s497 + $0x18] sm:$0xf]
        %v3780 = vld [vmem:[%s497 + $0x20] sm:$0xf]
        %v3781 = vld [vmem:[%s497 + $0x28] sm:$0xf]
        %v3782 = vld [vmem:[%s497 + $0x30] sm:$0xf]
        %v3783 = vld [vmem:[%s497 + $0x38] sm:$0xf]
        %v3792 = vunpack.c.l.b16 %v3776
        %v3793 = vunpack.c.l.b16 %v3777
        %v3794 = vunpack.c.l.b16 %v3778
        %v3795 = vunpack.c.l.b16 %v3779
        %v3796 = vunpack.c.l.b16 %v3780
        %v3797 = vunpack.c.l.b16 %v3781
        %v3798 = vunpack.c.l.b16 %v3782
        %v3799 = vunpack.c.l.b16 %v3783
        %v3800 = vpack.c.b16 %v3793, %v3792
        %v3801 = vpack.c.b16 %v3795, %v3794
        %v3802 = vpack.c.b16 %v3797, %v3796
        %v3803 = vpack.c.b16 %v3799, %v3798
        %3804 = vrot.lane.b32.xlu0 %v3800, 96
        %v3805 = vpop.permute.xlu0 %3804
        %3806 = vrot.lane.b32.xlu0 %v3801, 96
        %v3807 = vpop.permute.xlu0 %3806
        %3808 = vrot.lane.b32.xlu0 %v3802, 96
        %v3809 = vpop.permute.xlu0 %3808
        %3810 = vrot.lane.b32.xlu0 %v3803, 96
        %v3811 = vpop.permute.xlu0 %3810
        %3816 = vst.msk [vmem:[#allocation3] sm:$0xff] %vm881, %v3805
        %3817 = vst.msk [vmem:[#allocation3 + $0x18] sm:$0xff] %vm881, %v3807
        %3818 = vst.msk [vmem:[#allocation3 + $0x30] sm:$0xff] %vm881, %v3809
        %3819 = vst.msk [vmem:[#allocation3 + $0x48] sm:$0xff] %vm881, %v3811
        %v3820 = vld [vmem:[%s497] sm:$0xf]
        %v3821 = vld [vmem:[%s497 + $0x4] sm:$0x1]
        %v3822 = vld [vmem:[%s497 + $0x8] sm:$0xf]
        %v3823 = vld [vmem:[%s497 + $0xc] sm:$0x1]
        %v3824 = vld [vmem:[%s497 + $0x10] sm:$0xf]
        %v3825 = vld [vmem:[%s497 + $0x14] sm:$0x1]
        %v3826 = vld [vmem:[%s497 + $0x18] sm:$0xf]
        %v3827 = vld [vmem:[%s497 + $0x1c] sm:$0x1]
        %v3828 = vld [vmem:[%s497 + $0x20] sm:$0xf]
        %v3829 = vld [vmem:[%s497 + $0x24] sm:$0x1]
        %v3830 = vld [vmem:[%s497 + $0x28] sm:$0xf]
        %v3831 = vld [vmem:[%s497 + $0x2c] sm:$0x1]
        %v3832 = vld [vmem:[%s497 + $0x30] sm:$0xf]
        %v3833 = vld [vmem:[%s497 + $0x34] sm:$0x1]
        %v3834 = vld [vmem:[%s497 + $0x38] sm:$0xf]
        %v3835 = vld [vmem:[%s497 + $0x3c] sm:$0x1]
        %v3837 = vshrl.u32 %v3820, 16
        %v3839 = vrot.slane %v3837, 4
        %v3840 = vshll.u32 %v3820, 16
        %v3842 = vrot.slane %v3840, 5
        %v3843 = vor.u32 %v3839, %v3842
        %v3844 = vrot.slane %v3843, 4
        %v3846 = vshll.u32 %v3821, 16
        %v3848 = vrot.slane %v3846, 5
        %v3849 = vsel %vm603, %v3844, %v3848
        %v3851 = vshrl.u32 %v3822, 16
        %v3853 = vrot.slane %v3851, 4
        %v3854 = vshll.u32 %v3822, 16
        %v3856 = vrot.slane %v3854, 5
        %v3857 = vor.u32 %v3853, %v3856
        %v3858 = vrot.slane %v3857, 4
        %v3860 = vshll.u32 %v3823, 16
        %v3862 = vrot.slane %v3860, 5
        %v3863 = vsel %vm603, %v3858, %v3862
        %v3865 = vshrl.u32 %v3824, 16
        %v3867 = vrot.slane %v3865, 4
        %v3868 = vshll.u32 %v3824, 16
        %v3870 = vrot.slane %v3868, 5
        %v3871 = vor.u32 %v3867, %v3870
        %v3872 = vrot.slane %v3871, 4
        %v3874 = vshll.u32 %v3825, 16
        %v3876 = vrot.slane %v3874, 5
        %v3877 = vsel %vm603, %v3872, %v3876
        %v3879 = vshrl.u32 %v3826, 16
        %v3881 = vrot.slane %v3879, 4
        %v3882 = vshll.u32 %v3826, 16
        %v3884 = vrot.slane %v3882, 5
        %v3885 = vor.u32 %v3881, %v3884
        %v3886 = vrot.slane %v3885, 4
        %v3888 = vshll.u32 %v3827, 16
        %v3890 = vrot.slane %v3888, 5
        %v3891 = vsel %vm603, %v3886, %v3890
        %v3893 = vshrl.u32 %v3828, 16
        %v3895 = vrot.slane %v3893, 4
        %v3896 = vshll.u32 %v3828, 16
        %v3898 = vrot.slane %v3896, 5
        %v3899 = vor.u32 %v3895, %v3898
        %v3900 = vrot.slane %v3899, 4
        %v3902 = vshll.u32 %v3829, 16
        %v3904 = vrot.slane %v3902, 5
        %v3905 = vsel %vm603, %v3900, %v3904
        %v3907 = vshrl.u32 %v3830, 16
        %v3909 = vrot.slane %v3907, 4
        %v3910 = vshll.u32 %v3830, 16
        %v3912 = vrot.slane %v3910, 5
        %v3913 = vor.u32 %v3909, %v3912
        %v3914 = vrot.slane %v3913, 4
        %v3916 = vshll.u32 %v3831, 16
        %v3918 = vrot.slane %v3916, 5
        %v3919 = vsel %vm603, %v3914, %v3918
        %v3921 = vshrl.u32 %v3832, 16
        %v3923 = vrot.slane %v3921, 4
        %v3924 = vshll.u32 %v3832, 16
        %v3926 = vrot.slane %v3924, 5
        %v3927 = vor.u32 %v3923, %v3926
        %v3928 = vrot.slane %v3927, 4
        %v3930 = vshll.u32 %v3833, 16
        %v3932 = vrot.slane %v3930, 5
        %v3933 = vsel %vm603, %v3928, %v3932
        %v3935 = vshrl.u32 %v3834, 16
        %v3937 = vrot.slane %v3935, 4
        %v3938 = vshll.u32 %v3834, 16
        %v3940 = vrot.slane %v3938, 5
        %v3941 = vor.u32 %v3937, %v3940
        %v3942 = vrot.slane %v3941, 4
        %v3944 = vshll.u32 %v3835, 16
        %v3946 = vrot.slane %v3944, 5
        %v3947 = vsel %vm603, %v3942, %v3946
        %v3948 = vunpack.c.l.b16 %v3849
        %v3949 = vunpack.c.l.b16 %v3863
        %v3950 = vunpack.c.l.b16 %v3877
        %v3951 = vunpack.c.l.b16 %v3891
        %v3952 = vunpack.c.l.b16 %v3905
        %v3953 = vunpack.c.l.b16 %v3919
        %v3954 = vunpack.c.l.b16 %v3933
        %v3955 = vunpack.c.l.b16 %v3947
        %v3956 = vpack.c.b16 %v3949, %v3948
        %v3957 = vpack.c.b16 %v3951, %v3950
        %v3958 = vpack.c.b16 %v3953, %v3952
        %v3959 = vpack.c.b16 %v3955, %v3954
        %3964 = vst.msk [vmem:[#allocation3 + $0x8] sm:$0xff] %vm580, %v3956
        %3965 = vst.msk [vmem:[#allocation3 + $0x20] sm:$0xff] %vm580, %v3957
        %3966 = vst.msk [vmem:[#allocation3 + $0x38] sm:$0xff] %vm580, %v3958
        %3967 = vst.msk [vmem:[#allocation3 + $0x50] sm:$0xff] %vm580, %v3959
        %v3968 = vld [vmem:[%s497] sm:$0xe]
        %v3969 = vld [vmem:[%s497 + $0x4] sm:$0x1]
        %v3970 = vld [vmem:[%s497 + $0x8] sm:$0xe]
        %v3971 = vld [vmem:[%s497 + $0xc] sm:$0x1]
        %v3972 = vld [vmem:[%s497 + $0x10] sm:$0xe]
        %v3973 = vld [vmem:[%s497 + $0x14] sm:$0x1]
        %v3974 = vld [vmem:[%s497 + $0x18] sm:$0xe]
        %v3975 = vld [vmem:[%s497 + $0x1c] sm:$0x1]
        %v3976 = vld [vmem:[%s497 + $0x20] sm:$0xe]
        %v3977 = vld [vmem:[%s497 + $0x24] sm:$0x1]
        %v3978 = vld [vmem:[%s497 + $0x28] sm:$0xe]
        %v3979 = vld [vmem:[%s497 + $0x2c] sm:$0x1]
        %v3980 = vld [vmem:[%s497 + $0x30] sm:$0xe]
        %v3981 = vld [vmem:[%s497 + $0x34] sm:$0x1]
        %v3982 = vld [vmem:[%s497 + $0x38] sm:$0xe]
        %v3983 = vld [vmem:[%s497 + $0x3c] sm:$0x1]
        %v4000 = vrot.slane %v3968, 5
        %v4001 = vrot.slane %v4000, 4
        %v4002 = vrot.slane %v3969, 5
        %v4003 = vsel %vm779, %v4001, %v4002
        %v4004 = vrot.slane %v3970, 5
        %v4005 = vrot.slane %v4004, 4
        %v4006 = vrot.slane %v3971, 5
        %v4007 = vsel %vm779, %v4005, %v4006
        %v4008 = vrot.slane %v3972, 5
        %v4009 = vrot.slane %v4008, 4
        %v4010 = vrot.slane %v3973, 5
        %v4011 = vsel %vm779, %v4009, %v4010
        %v4012 = vrot.slane %v3974, 5
        %v4013 = vrot.slane %v4012, 4
        %v4014 = vrot.slane %v3975, 5
        %v4015 = vsel %vm779, %v4013, %v4014
        %v4016 = vrot.slane %v3976, 5
        %v4017 = vrot.slane %v4016, 4
        %v4018 = vrot.slane %v3977, 5
        %v4019 = vsel %vm779, %v4017, %v4018
        %v4020 = vrot.slane %v3978, 5
        %v4021 = vrot.slane %v4020, 4
        %v4022 = vrot.slane %v3979, 5
        %v4023 = vsel %vm779, %v4021, %v4022
        %v4024 = vrot.slane %v3980, 5
        %v4025 = vrot.slane %v4024, 4
        %v4026 = vrot.slane %v3981, 5
        %v4027 = vsel %vm779, %v4025, %v4026
        %v4028 = vrot.slane %v3982, 5
        %v4029 = vrot.slane %v4028, 4
        %v4030 = vrot.slane %v3983, 5
        %v4031 = vsel %vm779, %v4029, %v4030
        %v4032 = vunpack.c.l.b16 %v4003
        %v4033 = vunpack.c.l.b16 %v4007
        %v4034 = vunpack.c.l.b16 %v4011
        %v4035 = vunpack.c.l.b16 %v4015
        %v4036 = vunpack.c.l.b16 %v4019
        %v4037 = vunpack.c.l.b16 %v4023
        %v4038 = vunpack.c.l.b16 %v4027
        %v4039 = vunpack.c.l.b16 %v4031
        %v4040 = vpack.c.b16 %v4033, %v4032
        %v4041 = vpack.c.b16 %v4035, %v4034
        %v4042 = vpack.c.b16 %v4037, %v4036
        %v4043 = vpack.c.b16 %v4039, %v4038
        %4044 = vrot.lane.b32.xlu0 %v4040, 32
        %v4045 = vpop.permute.xlu0 %4044
        %4046 = vrot.lane.b32.xlu0 %v4041, 32
        %v4047 = vpop.permute.xlu0 %4046
        %4048 = vrot.lane.b32.xlu0 %v4042, 32
        %v4049 = vpop.permute.xlu0 %4048
        %4050 = vrot.lane.b32.xlu0 %v4043, 32
        %v4051 = vpop.permute.xlu0 %4050
        %4056 = vst.msk [vmem:[#allocation3 + $0x8] sm:$0xff] %vm740, %v4045
        %4057 = vst.msk [vmem:[#allocation3 + $0x20] sm:$0xff] %vm740, %v4047
        %4058 = vst.msk [vmem:[#allocation3 + $0x38] sm:$0xff] %vm740, %v4049
        %4059 = vst.msk [vmem:[#allocation3 + $0x50] sm:$0xff] %vm740, %v4051
        %v4060 = vld [vmem:[%s1126] sm:$0xf]
        %v4061 = vld [vmem:[%s1126 + $0x8] sm:$0xf]
        %v4062 = vld [vmem:[%s1126 + $0x10] sm:$0xf]
        %v4063 = vld [vmem:[%s1126 + $0x18] sm:$0xf]
        %v4064 = vld [vmem:[%s1126 + $0x20] sm:$0xf]
        %v4065 = vld [vmem:[%s1126 + $0x28] sm:$0xf]
        %v4066 = vld [vmem:[%s1126 + $0x30] sm:$0xf]
        %v4067 = vld [vmem:[%s1126 + $0x38] sm:$0xf]
        %v4076 = vunpack.c.l.b16 %v4060
        %v4077 = vunpack.c.l.b16 %v4061
        %v4078 = vunpack.c.l.b16 %v4062
        %v4079 = vunpack.c.l.b16 %v4063
        %v4080 = vunpack.c.l.b16 %v4064
        %v4081 = vunpack.c.l.b16 %v4065
        %v4082 = vunpack.c.l.b16 %v4066
        %v4083 = vunpack.c.l.b16 %v4067
        %v4084 = vpack.c.b16 %v4077, %v4076
        %v4085 = vpack.c.b16 %v4079, %v4078
        %v4086 = vpack.c.b16 %v4081, %v4080
        %v4087 = vpack.c.b16 %v4083, %v4082
        %4088 = vrot.lane.b32.xlu0 %v4084, 64
        %v4089 = vpop.permute.xlu0 %4088
        %4090 = vrot.lane.b32.xlu0 %v4085, 64
        %v4091 = vpop.permute.xlu0 %4090
        %4092 = vrot.lane.b32.xlu0 %v4086, 64
        %v4093 = vpop.permute.xlu0 %4092
        %4094 = vrot.lane.b32.xlu0 %v4087, 64
        %v4095 = vpop.permute.xlu0 %4094
        %4100 = vst.msk [vmem:[#allocation3 + $0x8] sm:$0xff] %vm836, %v4089
        %4101 = vst.msk [vmem:[#allocation3 + $0x20] sm:$0xff] %vm836, %v4091
        %4102 = vst.msk [vmem:[#allocation3 + $0x38] sm:$0xff] %vm836, %v4093
        %4103 = vst.msk [vmem:[#allocation3 + $0x50] sm:$0xff] %vm836, %v4095
        %v4104 = vld [vmem:[%s1126] sm:$0xf]
        %v4105 = vld [vmem:[%s1126 + $0x4] sm:$0x1]
        %v4106 = vld [vmem:[%s1126 + $0x8] sm:$0xf]
        %v4107 = vld [vmem:[%s1126 + $0xc] sm:$0x1]
        %v4108 = vld [vmem:[%s1126 + $0x10] sm:$0xf]
        %v4109 = vld [vmem:[%s1126 + $0x14] sm:$0x1]
        %v4110 = vld [vmem:[%s1126 + $0x18] sm:$0xf]
        %v4111 = vld [vmem:[%s1126 + $0x1c] sm:$0x1]
        %v4112 = vld [vmem:[%s1126 + $0x20] sm:$0xf]
        %v4113 = vld [vmem:[%s1126 + $0x24] sm:$0x1]
        %v4114 = vld [vmem:[%s1126 + $0x28] sm:$0xf]
        %v4115 = vld [vmem:[%s1126 + $0x2c] sm:$0x1]
        %v4116 = vld [vmem:[%s1126 + $0x30] sm:$0xf]
        %v4117 = vld [vmem:[%s1126 + $0x34] sm:$0x1]
        %v4118 = vld [vmem:[%s1126 + $0x38] sm:$0xf]
        %v4119 = vld [vmem:[%s1126 + $0x3c] sm:$0x1]
        %v4121 = vshrl.u32 %v4104, 16
        %v4123 = vrot.slane %v4121, 4
        %v4124 = vshll.u32 %v4104, 16
        %v4126 = vrot.slane %v4124, 5
        %v4127 = vor.u32 %v4123, %v4126
        %v4128 = vrot.slane %v4127, 4
        %v4130 = vshll.u32 %v4105, 16
        %v4132 = vrot.slane %v4130, 5
        %v4133 = vsel %vm603, %v4128, %v4132
        %v4135 = vshrl.u32 %v4106, 16
        %v4137 = vrot.slane %v4135, 4
        %v4138 = vshll.u32 %v4106, 16
        %v4140 = vrot.slane %v4138, 5
        %v4141 = vor.u32 %v4137, %v4140
        %v4142 = vrot.slane %v4141, 4
        %v4144 = vshll.u32 %v4107, 16
        %v4146 = vrot.slane %v4144, 5
        %v4147 = vsel %vm603, %v4142, %v4146
        %v4149 = vshrl.u32 %v4108, 16
        %v4151 = vrot.slane %v4149, 4
        %v4152 = vshll.u32 %v4108, 16
        %v4154 = vrot.slane %v4152, 5
        %v4155 = vor.u32 %v4151, %v4154
        %v4156 = vrot.slane %v4155, 4
        %v4158 = vshll.u32 %v4109, 16
        %v4160 = vrot.slane %v4158, 5
        %v4161 = vsel %vm603, %v4156, %v4160
        %v4163 = vshrl.u32 %v4110, 16
        %v4165 = vrot.slane %v4163, 4
        %v4166 = vshll.u32 %v4110, 16
        %v4168 = vrot.slane %v4166, 5
        %v4169 = vor.u32 %v4165, %v4168
        %v4170 = vrot.slane %v4169, 4
        %v4172 = vshll.u32 %v4111, 16
        %v4174 = vrot.slane %v4172, 5
        %v4175 = vsel %vm603, %v4170, %v4174
        %v4177 = vshrl.u32 %v4112, 16
        %v4179 = vrot.slane %v4177, 4
        %v4180 = vshll.u32 %v4112, 16
        %v4182 = vrot.slane %v4180, 5
        %v4183 = vor.u32 %v4179, %v4182
        %v4184 = vrot.slane %v4183, 4
        %v4186 = vshll.u32 %v4113, 16
        %v4188 = vrot.slane %v4186, 5
        %v4189 = vsel %vm603, %v4184, %v4188
        %v4191 = vshrl.u32 %v4114, 16
        %v4193 = vrot.slane %v4191, 4
        %v4194 = vshll.u32 %v4114, 16
        %v4196 = vrot.slane %v4194, 5
        %v4197 = vor.u32 %v4193, %v4196
        %v4198 = vrot.slane %v4197, 4
        %v4200 = vshll.u32 %v4115, 16
        %v4202 = vrot.slane %v4200, 5
        %v4203 = vsel %vm603, %v4198, %v4202
        %v4205 = vshrl.u32 %v4116, 16
        %v4207 = vrot.slane %v4205, 4
        %v4208 = vshll.u32 %v4116, 16
        %v4210 = vrot.slane %v4208, 5
        %v4211 = vor.u32 %v4207, %v4210
        %v4212 = vrot.slane %v4211, 4
        %v4214 = vshll.u32 %v4117, 16
        %v4216 = vrot.slane %v4214, 5
        %v4217 = vsel %vm603, %v4212, %v4216
        %v4219 = vshrl.u32 %v4118, 16
        %v4221 = vrot.slane %v4219, 4
        %v4222 = vshll.u32 %v4118, 16
        %v4224 = vrot.slane %v4222, 5
        %v4225 = vor.u32 %v4221, %v4224
        %v4226 = vrot.slane %v4225, 4
        %v4228 = vshll.u32 %v4119, 16
        %v4230 = vrot.slane %v4228, 5
        %v4231 = vsel %vm603, %v4226, %v4230
        %v4232 = vunpack.c.l.b16 %v4133
        %v4233 = vunpack.c.l.b16 %v4147
        %v4234 = vunpack.c.l.b16 %v4161
        %v4235 = vunpack.c.l.b16 %v4175
        %v4236 = vunpack.c.l.b16 %v4189
        %v4237 = vunpack.c.l.b16 %v4203
        %v4238 = vunpack.c.l.b16 %v4217
        %v4239 = vunpack.c.l.b16 %v4231
        %v4240 = vpack.c.b16 %v4233, %v4232
        %v4241 = vpack.c.b16 %v4235, %v4234
        %v4242 = vpack.c.b16 %v4237, %v4236
        %v4243 = vpack.c.b16 %v4239, %v4238
        %4244 = vrot.lane.b32.xlu0 %v4240, 96
        %v4245 = vpop.permute.xlu0 %4244
        %4246 = vrot.lane.b32.xlu0 %v4241, 96
        %v4247 = vpop.permute.xlu0 %4246
        %4248 = vrot.lane.b32.xlu0 %v4242, 96
        %v4249 = vpop.permute.xlu0 %4248
        %4250 = vrot.lane.b32.xlu0 %v4243, 96
        %v4251 = vpop.permute.xlu0 %4250
        %4256 = vst.msk [vmem:[#allocation3 + $0x8] sm:$0xff] %vm881, %v4245
        %4257 = vst.msk [vmem:[#allocation3 + $0x20] sm:$0xff] %vm881, %v4247
        %4258 = vst.msk [vmem:[#allocation3 + $0x38] sm:$0xff] %vm881, %v4249
        %4259 = vst.msk [vmem:[#allocation3 + $0x50] sm:$0xff] %vm881, %v4251
        %v4260 = vld [vmem:[%s1126] sm:$0xe]
        %v4261 = vld [vmem:[%s1126 + $0x4] sm:$0x1]
        %v4262 = vld [vmem:[%s1126 + $0x8] sm:$0xe]
        %v4263 = vld [vmem:[%s1126 + $0xc] sm:$0x1]
        %v4264 = vld [vmem:[%s1126 + $0x10] sm:$0xe]
        %v4265 = vld [vmem:[%s1126 + $0x14] sm:$0x1]
        %v4266 = vld [vmem:[%s1126 + $0x18] sm:$0xe]
        %v4267 = vld [vmem:[%s1126 + $0x1c] sm:$0x1]
        %v4268 = vld [vmem:[%s1126 + $0x20] sm:$0xe]
        %v4269 = vld [vmem:[%s1126 + $0x24] sm:$0x1]
        %v4270 = vld [vmem:[%s1126 + $0x28] sm:$0xe]
        %v4271 = vld [vmem:[%s1126 + $0x2c] sm:$0x1]
        %v4272 = vld [vmem:[%s1126 + $0x30] sm:$0xe]
        %v4273 = vld [vmem:[%s1126 + $0x34] sm:$0x1]
        %v4274 = vld [vmem:[%s1126 + $0x38] sm:$0xe]
        %v4275 = vld [vmem:[%s1126 + $0x3c] sm:$0x1]
        %v4292 = vrot.slane %v4260, 5
        %v4293 = vrot.slane %v4292, 4
        %v4294 = vrot.slane %v4261, 5
        %v4295 = vsel %vm779, %v4293, %v4294
        %v4296 = vrot.slane %v4262, 5
        %v4297 = vrot.slane %v4296, 4
        %v4298 = vrot.slane %v4263, 5
        %v4299 = vsel %vm779, %v4297, %v4298
        %v4300 = vrot.slane %v4264, 5
        %v4301 = vrot.slane %v4300, 4
        %v4302 = vrot.slane %v4265, 5
        %v4303 = vsel %vm779, %v4301, %v4302
        %v4304 = vrot.slane %v4266, 5
        %v4305 = vrot.slane %v4304, 4
        %v4306 = vrot.slane %v4267, 5
        %v4307 = vsel %vm779, %v4305, %v4306
        %v4308 = vrot.slane %v4268, 5
        %v4309 = vrot.slane %v4308, 4
        %v4310 = vrot.slane %v4269, 5
        %v4311 = vsel %vm779, %v4309, %v4310
        %v4312 = vrot.slane %v4270, 5
        %v4313 = vrot.slane %v4312, 4
        %v4314 = vrot.slane %v4271, 5
        %v4315 = vsel %vm779, %v4313, %v4314
        %v4316 = vrot.slane %v4272, 5
        %v4317 = vrot.slane %v4316, 4
        %v4318 = vrot.slane %v4273, 5
        %v4319 = vsel %vm779, %v4317, %v4318
        %v4320 = vrot.slane %v4274, 5
        %v4321 = vrot.slane %v4320, 4
        %v4322 = vrot.slane %v4275, 5
        %v4323 = vsel %vm779, %v4321, %v4322
        %v4324 = vunpack.c.l.b16 %v4295
        %v4325 = vunpack.c.l.b16 %v4299
        %v4326 = vunpack.c.l.b16 %v4303
        %v4327 = vunpack.c.l.b16 %v4307
        %v4328 = vunpack.c.l.b16 %v4311
        %v4329 = vunpack.c.l.b16 %v4315
        %v4330 = vunpack.c.l.b16 %v4319
        %v4331 = vunpack.c.l.b16 %v4323
        %v4332 = vpack.c.b16 %v4325, %v4324
        %v4333 = vpack.c.b16 %v4327, %v4326
        %v4334 = vpack.c.b16 %v4329, %v4328
        %v4335 = vpack.c.b16 %v4331, %v4330
        %4340 = vst.msk [vmem:[#allocation3 + $0x10] sm:$0xff] %vm580, %v4332
        %4341 = vst.msk [vmem:[#allocation3 + $0x28] sm:$0xff] %vm580, %v4333
        %4342 = vst.msk [vmem:[#allocation3 + $0x40] sm:$0xff] %vm580, %v4334
        %4343 = vst.msk [vmem:[#allocation3 + $0x58] sm:$0xff] %vm580, %v4335
        %v4344 = vld [vmem:[#allocation3] sm:$0xff]
        %v4345 = vld [vmem:[#allocation3 + $0x8] sm:$0xff]
        %v4346 = vld [vmem:[#allocation3 + $0x10] sm:$0xff]
        %v4347 = vld [vmem:[#allocation3 + $0x18] sm:$0xff]
        %v4348 = vld [vmem:[#allocation3 + $0x20] sm:$0xff]
        %v4349 = vld [vmem:[#allocation3 + $0x28] sm:$0xff]
        %v4350 = vld [vmem:[#allocation3 + $0x30] sm:$0xff]
        %v4351 = vld [vmem:[#allocation3 + $0x38] sm:$0xff]
        %v4352 = vld [vmem:[#allocation3 + $0x40] sm:$0xff]
        %v4353 = vld [vmem:[#allocation3 + $0x48] sm:$0xff]
        %v4354 = vld [vmem:[#allocation3 + $0x50] sm:$0xff]
        %v4355 = vld [vmem:[#allocation3 + $0x58] sm:$0xff]
        %s4356 = scalar_lea.vmem %s1, 288
        %v4357 = vld [vmem:[%s4356] sm:$0xf]
        %v4358 = vld [vmem:[%s4356 + $0x4] sm:$0xf]
        %v4359 = vld [vmem:[%s4356 + $0x8] sm:$0xf]
        %v4360 = vld [vmem:[%s4356 + $0xc] sm:$0xf]
        %v4361 = vld [vmem:[%s4356 + $0x10] sm:$0xf]
        %v4362 = vld [vmem:[%s4356 + $0x14] sm:$0xf]
        %v4363 = vld [vmem:[%s4356 + $0x18] sm:$0xf]
        %v4364 = vld [vmem:[%s4356 + $0x1c] sm:$0xf]
        %v4365 = vld [vmem:[%s4356 + $0x20] sm:$0xf]
        %v4366 = vld [vmem:[%s4356 + $0x24] sm:$0xf]
        %v4367 = vld [vmem:[%s4356 + $0x28] sm:$0xf]
        %v4368 = vld [vmem:[%s4356 + $0x2c] sm:$0xf]
        %v4369 = vld [vmem:[%s4356 + $0x30] sm:$0xf]
        %v4370 = vld [vmem:[%s4356 + $0x34] sm:$0xf]
        %v4371 = vld [vmem:[%s4356 + $0x38] sm:$0xf]
        %v4372 = vld [vmem:[%s4356 + $0x3c] sm:$0xf]
        %v4373 = vld [vmem:[%s4356 + $0x40] sm:$0xf]
        %v4374 = vld [vmem:[%s4356 + $0x44] sm:$0xf]
        %v4375 = vld [vmem:[%s4356 + $0x48] sm:$0xf]
        %v4376 = vld [vmem:[%s4356 + $0x4c] sm:$0xf]
        %v4377 = vld [vmem:[%s4356 + $0x50] sm:$0xf]
        %v4378 = vld [vmem:[%s4356 + $0x54] sm:$0xf]
        %v4379 = vld [vmem:[%s4356 + $0x58] sm:$0xf]
        %v4380 = vld [vmem:[%s4356 + $0x5c] sm:$0xf]
        %v4381 = vld [vmem:[%s4356 + $0x60] sm:$0xf]
        %v4382 = vld [vmem:[%s4356 + $0x64] sm:$0xf]
        %v4383 = vld [vmem:[%s4356 + $0x68] sm:$0xf]
        %v4384 = vld [vmem:[%s4356 + $0x6c] sm:$0xf]
        %v4385 = vld [vmem:[%s4356 + $0x70] sm:$0xf]
        %v4386 = vld [vmem:[%s4356 + $0x74] sm:$0xf]
        %v4387 = vld [vmem:[%s4356 + $0x78] sm:$0xf]
        %v4388 = vld [vmem:[%s4356 + $0x7c] sm:$0xf]
        %v4389 = vld [vmem:[%s4356 + $0x80] sm:$0xf]
        %v4390 = vld [vmem:[%s4356 + $0x84] sm:$0xf]
        %v4391 = vld [vmem:[%s4356 + $0x88] sm:$0xf]
        %v4392 = vld [vmem:[%s4356 + $0x8c] sm:$0xf]
        %s4393 = scalar_lea.vmem %s2, 2
        %v4394 = vld [vmem:[%s4393] sm:$0x1]
        %v4396 = vlaneseq
        %v4397 = vshrl.u32 %v4396, 7
        %v4398 = vsub.s32 0, %v4397
        %v4399 = vrot.slane %v4394, %v4398
        %v4437 = vunpack.c.l.b16 %v4357
        %v4438 = vunpack.c.l.b16 %v4358
        %v4439 = vunpack.c.l.b16 %v4359
        %v4440 = vunpack.c.l.b16 %v4360
        %v4441 = vunpack.c.l.b16 %v4361
        %v4442 = vunpack.c.l.b16 %v4362
        %v4443 = vunpack.c.l.b16 %v4363
        %v4444 = vunpack.c.l.b16 %v4364
        %v4445 = vunpack.c.l.b16 %v4365
        %v4446 = vunpack.c.l.b16 %v4366
        %v4447 = vunpack.c.l.b16 %v4367
        %v4448 = vunpack.c.l.b16 %v4368
        %v4449 = vunpack.c.l.b16 %v4369
        %v4450 = vunpack.c.l.b16 %v4370
        %v4451 = vunpack.c.l.b16 %v4371
        %v4452 = vunpack.c.l.b16 %v4372
        %v4453 = vunpack.c.l.b16 %v4373
        %v4454 = vunpack.c.l.b16 %v4374
        %v4455 = vunpack.c.l.b16 %v4375
        %v4456 = vunpack.c.l.b16 %v4376
        %v4457 = vunpack.c.l.b16 %v4377
        %v4458 = vunpack.c.l.b16 %v4378
        %v4459 = vunpack.c.l.b16 %v4379
        %v4460 = vunpack.c.l.b16 %v4380
        %v4461 = vunpack.c.l.b16 %v4381
        %v4462 = vunpack.c.l.b16 %v4382
        %v4463 = vunpack.c.l.b16 %v4383
        %v4464 = vunpack.c.l.b16 %v4384
        %v4465 = vunpack.c.l.b16 %v4385
        %v4466 = vunpack.c.l.b16 %v4386
        %v4467 = vunpack.c.l.b16 %v4387
        %v4468 = vunpack.c.l.b16 %v4388
        %v4469 = vunpack.c.l.b16 %v4389
        %v4470 = vunpack.c.l.b16 %v4390
        %v4471 = vunpack.c.l.b16 %v4391
        %v4472 = vunpack.c.l.b16 %v4392
        %v4473 = vpack.c.b16 %v4438, %v4437
        %v4474 = vpack.c.b16 %v4440, %v4439
        %v4475 = vpack.c.b16 %v4442, %v4441
        %v4476 = vpack.c.b16 %v4444, %v4443
        %v4477 = vpack.c.b16 %v4446, %v4445
        %v4478 = vpack.c.b16 %v4448, %v4447
        %v4479 = vpack.c.b16 %v4450, %v4449
        %v4480 = vpack.c.b16 %v4452, %v4451
        %v4481 = vpack.c.b16 %v4454, %v4453
        %v4482 = vpack.c.b16 %v4456, %v4455
        %v4483 = vpack.c.b16 %v4458, %v4457
        %v4484 = vpack.c.b16 %v4460, %v4459
        %v4485 = vpack.c.b16 %v4462, %v4461
        %v4486 = vpack.c.b16 %v4464, %v4463
        %v4487 = vpack.c.b16 %v4466, %v4465
        %v4488 = vpack.c.b16 %v4468, %v4467
        %v4489 = vpack.c.b16 %v4470, %v4469
        %v4490 = vpack.c.b16 %v4472, %v4471
        %v4510 = vsel %vm580, %v4346, 0
        %v4513 = vsel %vm580, %v4349, 0
        %v4516 = vsel %vm580, %v4352, 0
        %v4519 = vsel %vm580, %v4355, 0
        %4521 = vmatprep.subr.bf16.mxu0 0
        %4522 = vmatpush1.bf16.msra.mxu0 %v4473
        %4523 = vmatprep.subr.bf16.mxu0 0
        %4524 = vmatpush1.bf16.msra.mxu0 %v4474
        %4525 = vmatprep.subr.bf16.mxu0 0
        %4526 = vmatpush1.bf16.msra.mxu0 %v4475
        %4527 = vmatprep.subr.bf16.mxu0 0
        %4528 = vmatpush1.bf16.msra.mxu0 %v4476
        %4529 = vmatprep.subr.bf16.mxu0 0
        %4530 = vmatpush1.bf16.msra.mxu0 %v4477
        %4531 = vmatprep.subr.bf16.mxu0 0
        %4532 = vmatpush1.bf16.msra.mxu0 %v4478
        %4533 = vmatprep.subr.bf16.mxu0 0
        %4534 = vmatpush1.bf16.msra.mxu0 %v4479
        %4535 = vmatprep.subr.bf16.mxu0 0
        %4536 = vmatpush1.bf16.msra.mxu0 %v4480
        %4537 = vmatprep.subr.bf16.mxu0 0
        %4538 = vmatpush1.bf16.msra.mxu0 %v4481
        %4539 = vmatprep.subr.bf16.mxu0 0
        %4540 = vmatpush1.bf16.msra.mxu0 %v4482
        %4541 = vmatprep.subr.bf16.mxu0 0
        %4542 = vmatpush1.bf16.msra.mxu0 %v4483
        %4543 = vmatprep.subr.bf16.mxu0 0
        %4544 = vmatpush1.bf16.msra.mxu0 %v4484
        %4545 = vmatprep.subr.bf16.mxu0 0
        %4546 = vmatpush1.bf16.msra.mxu0 %v4485
        %4547 = vmatprep.subr.bf16.mxu0 0
        %4548 = vmatpush1.bf16.msra.mxu0 %v4486
        %4549 = vmatprep.subr.bf16.mxu0 0
        %4550 = vmatpush1.bf16.msra.mxu0 %v4487
        %4551 = vmatprep.subr.bf16.mxu0 0
        %4552 = vmatpush1.bf16.msra.mxu0 %v4488
        %4553 = vmatprep.mubr.bf16.mxu0 %v4345
        %4554 = vmatmul.mubr.bf16.gmra.mrb[0].mxu0 %v4344
        %v4555 = vpop.f32.mrb[0].mxu0
        %v4556 = vadd.f32 %v4399, %v4555
        %v4557 = vpop.f32.mrb[0].mxu0
        %v4558 = vpop.f32.mrb[0].mxu0
        %v4559 = vadd.f32 %v4399, %v4558
        %v4560 = vpop.f32.mrb[0].mxu0
        %4561 = vmatprep.mubr.bf16.mxu0 %v4348
        %4562 = vmatmul.mubr.bf16.gmra.mrb[0].mxu0 %v4347
        %v4563 = vpop.f32.mrb[0].mxu0
        %v4564 = vadd.f32 %v4399, %v4563
        %v4565 = vpop.f32.mrb[0].mxu0
        %v4566 = vpop.f32.mrb[0].mxu0
        %v4567 = vadd.f32 %v4399, %v4566
        %v4568 = vpop.f32.mrb[0].mxu0
        %4569 = vmatprep.mubr.bf16.mxu0 %v4351
        %4570 = vmatmul.mubr.bf16.gmra.mrb[0].mxu0 %v4350
        %v4571 = vpop.f32.mrb[0].mxu0
        %v4572 = vadd.f32 %v4399, %v4571
        %v4573 = vpop.f32.mrb[0].mxu0
        %v4574 = vpop.f32.mrb[0].mxu0
        %v4575 = vadd.f32 %v4399, %v4574
        %v4576 = vpop.f32.mrb[0].mxu0
        %4577 = vmatprep.mubr.bf16.mxu0 %v4354
        %4578 = vmatmul.mubr.bf16.gmra.mrb[0].mxu0 %v4353
        %v4579 = vpop.f32.mrb[0].mxu0
        %v4580 = vadd.f32 %v4399, %v4579
        %v4581 = vpop.f32.mrb[0].mxu0
        %v4582 = vpop.f32.mrb[0].mxu0
        %v4583 = vadd.f32 %v4399, %v4582
        %v4584 = vpop.f32.mrb[0].mxu0
        %4585 = vdwg.mxu0
        %4586 = vmatprep.subr.bf16.mxu0 0
        %4587 = vmatpush1.bf16.msra.mxu0 %v4489
        %4588 = vmatprep.subr.bf16.mxu0 0
        %4589 = vmatpush1.bf16.msra.mxu0 %v4490
        %4590 = vmatprep.subr.bf16.mxu0 0
        %4591 = vmatpush1.bf16.msra.mxu0 0
        %4592 = vmatprep.subr.bf16.mxu0 0
        %4593 = vmatpush1.bf16.msra.mxu0 0
        %4594 = vmatprep.subr.bf16.mxu0 0
        %4595 = vmatpush1.bf16.msra.mxu0 0
        %4596 = vmatprep.subr.bf16.mxu0 0
        %4597 = vmatpush1.bf16.msra.mxu0 0
        %4598 = vmatprep.subr.bf16.mxu0 0
        %4599 = vmatpush1.bf16.msra.mxu0 0
        %4600 = vmatprep.subr.bf16.mxu0 0
        %4601 = vmatpush1.bf16.msra.mxu0 0
        %4602 = vmatprep.subr.bf16.mxu0 0
        %4603 = vmatpush1.bf16.msra.mxu0 0
        %4604 = vmatprep.subr.bf16.mxu0 0
        %4605 = vmatpush1.bf16.msra.mxu0 0
        %4606 = vmatprep.subr.bf16.mxu0 0
        %4607 = vmatpush1.bf16.msra.mxu0 0
        %4608 = vmatprep.subr.bf16.mxu0 0
        %4609 = vmatpush1.bf16.msra.mxu0 0
        %4610 = vmatprep.subr.bf16.mxu0 0
        %4611 = vmatpush1.bf16.msra.mxu0 0
        %4612 = vmatprep.subr.bf16.mxu0 0
        %4613 = vmatpush1.bf16.msra.mxu0 0
        %4614 = vmatprep.subr.bf16.mxu0 0
        %4615 = vmatpush1.bf16.msra.mxu0 0
        %4616 = vmatprep.subr.bf16.mxu0 0
        %4617 = vmatpush1.bf16.msra.mxu0 0
        %4618 = vmatprep.mubr.bf16.mxu0 0
        %4619 = vmatmul.mubr.bf16.gmra.mrb[0].mxu0 %v4510
        %v4620 = vpop.f32.mrb[0].mxu0
        %v4621 = vadd.f32 %v4556, %v4620
        %v4622 = vpop.f32.mrb[0].mxu0
        %v4623 = vpop.f32.mrb[0].mxu0
        %v4624 = vadd.f32 %v4559, %v4623
        %v4625 = vpop.f32.mrb[0].mxu0
        %4626 = vmatprep.mubr.bf16.mxu0 0
        %4627 = vmatmul.mubr.bf16.gmra.mrb[0].mxu0 %v4513
        %v4628 = vpop.f32.mrb[0].mxu0
        %v4629 = vadd.f32 %v4564, %v4628
        %v4630 = vpop.f32.mrb[0].mxu0
        %v4631 = vpop.f32.mrb[0].mxu0
        %v4632 = vadd.f32 %v4567, %v4631
        %v4633 = vpop.f32.mrb[0].mxu0
        %4634 = vmatprep.mubr.bf16.mxu0 0
        %4635 = vmatmul.mubr.bf16.gmra.mrb[0].mxu0 %v4516
        %v4636 = vpop.f32.mrb[0].mxu0
        %v4637 = vadd.f32 %v4572, %v4636
        %v4638 = vpop.f32.mrb[0].mxu0
        %v4639 = vpop.f32.mrb[0].mxu0
        %v4640 = vadd.f32 %v4575, %v4639
        %v4641 = vpop.f32.mrb[0].mxu0
        %4642 = vmatprep.mubr.bf16.mxu0 0
        %4643 = vmatmul.mubr.bf16.gmra.mrb[0].mxu0 %v4519
        %v4644 = vpop.f32.mrb[0].mxu0
        %v4645 = vadd.f32 %v4580, %v4644
        %v4646 = vpop.f32.mrb[0].mxu0
        %v4647 = vpop.f32.mrb[0].mxu0
        %v4648 = vadd.f32 %v4583, %v4647
        %v4649 = vpop.f32.mrb[0].mxu0
        %4650 = vdwg.mxu0
        %4659 = vrot.lane.b32.xlu0 %v4621, 64
        %v4660 = vpop.permute.xlu0 %4659
        %4661 = vrot.lane.b32.xlu0 %v4624, 64
        %v4662 = vpop.permute.xlu0 %4661
        %4663 = vrot.lane.b32.xlu0 %v4629, 64
        %v4664 = vpop.permute.xlu0 %4663
        %4665 = vrot.lane.b32.xlu0 %v4632, 64
        %v4666 = vpop.permute.xlu0 %4665
        %4667 = vrot.lane.b32.xlu0 %v4637, 64
        %v4668 = vpop.permute.xlu0 %4667
        %4669 = vrot.lane.b32.xlu0 %v4640, 64
        %v4670 = vpop.permute.xlu0 %4669
        %4671 = vrot.lane.b32.xlu0 %v4645, 64
        %v4672 = vpop.permute.xlu0 %4671
        %4673 = vrot.lane.b32.xlu0 %v4648, 64
        %v4674 = vpop.permute.xlu0 %4673
        %4683 = vst.msk [vmem:[%s298] sm:$0xff] %vm836, %v4660
        %4684 = vst.msk [vmem:[%s298 + $0x8] sm:$0xff] %vm836, %v4662
        %4685 = vst.msk [vmem:[%s298 + $0x10] sm:$0xff] %vm836, %v4664
        %4686 = vst.msk [vmem:[%s298 + $0x18] sm:$0xff] %vm836, %v4666
        %4687 = vst.msk [vmem:[%s298 + $0x20] sm:$0xff] %vm836, %v4668
        %4688 = vst.msk [vmem:[%s298 + $0x28] sm:$0xff] %vm836, %v4670
        %4689 = vst.msk [vmem:[%s298 + $0x30] sm:$0xff] %vm836, %v4672
        %4690 = vst.msk [vmem:[%s298 + $0x38] sm:$0xff] %vm836, %v4674
        %v4691 = vld [vmem:[%s3] sm:$0x1f]
        %v4693 = vsel %vm1725, %v4691, 0
        %4695 = vmatprep.subr.mxu0 0.0
        %4696 = vmatpush1.msra.mxu0 %v4621
        %4697 = vmatprep.subr.mxu0 0.0
        %4698 = vmatpush1.msra.mxu0 %v4624
        %4699 = vmatprep.subr.mxu0 0.0
        %4700 = vmatpush1.msra.mxu0 %v4629
        %4701 = vmatprep.subr.mxu0 0.0
        %4702 = vmatpush1.msra.mxu0 %v4632
        %4703 = vmatprep.subr.mxu0 0.0
        %4704 = vmatpush1.msra.mxu0 %v4637
        %4705 = vmatprep.subr.mxu0 0.0
        %4706 = vmatpush1.msra.mxu0 %v4640
        %4707 = vmatprep.subr.mxu0 0.0
        %4708 = vmatpush1.msra.mxu0 %v4645
        %4709 = vmatprep.subr.mxu0 0.0
        %4710 = vmatpush1.msra.mxu0 %v4648
        %4711 = vmatprep.subr.mxu0 0.0
        %4712 = vmatpush1.msra.mxu0 0.0
        %4713 = vmatprep.subr.mxu0 0.0
        %4714 = vmatpush1.msra.mxu0 0.0
        %4715 = vmatprep.subr.mxu0 0.0
        %4716 = vmatpush1.msra.mxu0 0.0
        %4717 = vmatprep.subr.mxu0 0.0
        %4718 = vmatpush1.msra.mxu0 0.0
        %4719 = vmatprep.subr.mxu0 0.0
        %4720 = vmatpush1.msra.mxu0 0.0
        %4721 = vmatprep.subr.mxu0 0.0
        %4722 = vmatpush1.msra.mxu0 0.0
        %4723 = vmatprep.subr.mxu0 0.0
        %4724 = vmatpush1.msra.mxu0 0.0
        %4725 = vmatprep.subr.mxu0 0.0
        %4726 = vmatpush1.msra.mxu0 0.0
        %4727 = vmatprep.subr.mxu0 0.0
        %4728 = vmatpush1.msra.mxu0 0.0
        %4729 = vmatprep.subr.mxu0 0.0
        %4730 = vmatpush1.msra.mxu0 0.0
        %4731 = vmatprep.subr.mxu0 0.0
        %4732 = vmatpush1.msra.mxu0 0.0
        %4733 = vmatprep.subr.mxu0 0.0
        %4734 = vmatpush1.msra.mxu0 0.0
        %4735 = vmatprep.subr.mxu0 0.0
        %4736 = vmatpush1.msra.mxu0 0.0
        %4737 = vmatprep.subr.mxu0 0.0
        %4738 = vmatpush1.msra.mxu0 0.0
        %4739 = vmatprep.subr.mxu0 0.0
        %4740 = vmatpush1.msra.mxu0 0.0
        %4741 = vmatprep.subr.mxu0 0.0
        %4742 = vmatpush1.msra.mxu0 0.0
        %4743 = vmatprep.subr.mxu0 0.0
        %4744 = vmatpush1.msra.mxu0 0.0
        %4745 = vmatprep.subr.mxu0 0.0
        %4746 = vmatpush1.msra.mxu0 0.0
        %4747 = vmatprep.subr.mxu0 0.0
        %4748 = vmatpush1.msra.mxu0 0.0
        %4749 = vmatprep.subr.mxu0 0.0
        %4750 = vmatpush1.msra.mxu0 0.0
        %4751 = vmatprep.subr.mxu0 0.0
        %4752 = vmatpush1.msra.mxu0 0.0
        %4753 = vmatprep.subr.mxu0 0.0
        %4754 = vmatpush1.msra.mxu0 0.0
        %4755 = vmatprep.subr.mxu0 0.0
        %4756 = vmatpush1.msra.mxu0 0.0
        %4757 = vmatprep.subr.mxu0 0.0
        %4758 = vmatpush1.msra.mxu0 0.0
        %4759 = vmatprep.mubr.f32.mxu0 0.0
        %4760 = vmatmul.mubr.f32.gmra.mrb[0].mxu0 %v4693
        %v4761 = vpop.f32.mrb[0].mxu0
        %v4762 = vadd.f32 0.0, %v4761
        %v4763 = vpop.f32.mrb[0].mxu0
        %4764 = vdwg.mxu0
        %s4765 = scalar_lea.vmem [#allocation4], 16
        %4766 = vst.msk [vmem:[%s4765] sm:$0x1f] %vm1799, %v4762
        %v4767 = vld [vmem:[%s303] sm:$0xff]
        %v4768 = vld [vmem:[%s303 + $0x8] sm:$0xff]
        %v4769 = vld [vmem:[%s303 + $0x10] sm:$0xff]
        %v4770 = vld [vmem:[%s303 + $0x18] sm:$0xff]
        %v4771 = vld [vmem:[%s303 + $0x20] sm:$0xff]
        %v4772 = vld [vmem:[%s303 + $0x28] sm:$0xff]
        %v4773 = vld [vmem:[%s303 + $0x30] sm:$0xff]
        %v4774 = vld [vmem:[%s303 + $0x38] sm:$0xff]
        %4783 = vrot.lane.b32.xlu0 %v4767, 32
        %v4784 = vpop.permute.xlu0 %4783
        %4785 = vrot.lane.b32.xlu0 %v4768, 32
        %v4786 = vpop.permute.xlu0 %4785
        %4787 = vrot.lane.b32.xlu0 %v4769, 32
        %v4788 = vpop.permute.xlu0 %4787
        %4789 = vrot.lane.b32.xlu0 %v4770, 32
        %v4790 = vpop.permute.xlu0 %4789
        %4791 = vrot.lane.b32.xlu0 %v4771, 32
        %v4792 = vpop.permute.xlu0 %4791
        %4793 = vrot.lane.b32.xlu0 %v4772, 32
        %v4794 = vpop.permute.xlu0 %4793
        %4795 = vrot.lane.b32.xlu0 %v4773, 32
        %v4796 = vpop.permute.xlu0 %4795
        %4797 = vrot.lane.b32.xlu0 %v4774, 32
        %v4798 = vpop.permute.xlu0 %4797
        %v4807 = vadd.f32 %v4621, %v4784
        %v4808 = vadd.f32 %v4624, %v4786
        %v4809 = vadd.f32 %v4629, %v4788
        %v4810 = vadd.f32 %v4632, %v4790
        %v4811 = vadd.f32 %v4637, %v4792
        %v4812 = vadd.f32 %v4640, %v4794
        %v4813 = vadd.f32 %v4645, %v4796
        %v4814 = vadd.f32 %v4648, %v4798
        %v4815 = vpack.c.bf16 %v4807, %v4807
        %v4816 = vpack.c.bf16 %v4808, %v4808
        %v4817 = vpack.c.bf16 %v4809, %v4809
        %v4818 = vpack.c.bf16 %v4810, %v4810
        %v4819 = vpack.c.bf16 %v4811, %v4811
        %v4820 = vpack.c.bf16 %v4812, %v4812
        %v4821 = vpack.c.bf16 %v4813, %v4813
        %v4822 = vpack.c.bf16 %v4814, %v4814
        %v4831 = vunpack.c.l.b16 %v4815
        %v4832 = vunpack.c.l.b16 %v4816
        %v4833 = vunpack.c.l.b16 %v4817
        %v4834 = vunpack.c.l.b16 %v4818
        %v4835 = vunpack.c.l.b16 %v4819
        %v4836 = vunpack.c.l.b16 %v4820
        %v4837 = vunpack.c.l.b16 %v4821
        %v4838 = vunpack.c.l.b16 %v4822
        %v4839 = vpack.c.b16 %v4831, %v4831
        %v4840 = vpack.c.b16 %v4832, %v4832
        %v4841 = vpack.c.b16 %v4833, %v4833
        %v4842 = vpack.c.b16 %v4834, %v4834
        %v4843 = vpack.c.b16 %v4835, %v4835
        %v4844 = vpack.c.b16 %v4836, %v4836
        %v4845 = vpack.c.b16 %v4837, %v4837
        %v4846 = vpack.c.b16 %v4838, %v4838
        %v4848 = vshrl.u32 %v4839, 16
        %v4850 = vrot.slane %v4848, 7
        %v4851 = vshll.u32 %v4839, 16
        %v4853 = vor.u32 %v4850, %v4851
        %v4854 = vrot.slane %v4850, 4
        %v4856 = vshrl.u32 %v4840, 16
        %v4858 = vrot.slane %v4856, 7
        %v4859 = vshll.u32 %v4840, 16
        %v4861 = vor.u32 %v4858, %v4859
        %v4862 = vrot.slane %v4858, 4
        %v4864 = vshrl.u32 %v4841, 16
        %v4866 = vrot.slane %v4864, 7
        %v4867 = vshll.u32 %v4841, 16
        %v4869 = vor.u32 %v4866, %v4867
        %v4870 = vrot.slane %v4866, 4
        %v4872 = vshrl.u32 %v4842, 16
        %v4874 = vrot.slane %v4872, 7
        %v4875 = vshll.u32 %v4842, 16
        %v4877 = vor.u32 %v4874, %v4875
        %v4878 = vrot.slane %v4874, 4
        %v4880 = vshrl.u32 %v4843, 16
        %v4882 = vrot.slane %v4880, 7
        %v4883 = vshll.u32 %v4843, 16
        %v4885 = vor.u32 %v4882, %v4883
        %v4886 = vrot.slane %v4882, 4
        %v4888 = vshrl.u32 %v4844, 16
        %v4890 = vrot.slane %v4888, 7
        %v4891 = vshll.u32 %v4844, 16
        %v4893 = vor.u32 %v4890, %v4891
        %v4894 = vrot.slane %v4890, 4
        %v4896 = vshrl.u32 %v4845, 16
        %v4898 = vrot.slane %v4896, 7
        %v4899 = vshll.u32 %v4845, 16
        %v4901 = vor.u32 %v4898, %v4899
        %v4902 = vrot.slane %v4898, 4
        %v4904 = vshrl.u32 %v4846, 16
        %v4906 = vrot.slane %v4904, 7
        %v4907 = vshll.u32 %v4846, 16
        %v4909 = vor.u32 %v4906, %v4907
        %v4910 = vrot.slane %v4906, 4
        %v4927 = vld [vmem:[%s497] sm:$0xf]
        %v4928 = vsel %vm499, %v4853, %v4927
        %4929 = vst [vmem:[%s497] sm:$0xf] %v4928
        %v4930 = vld [vmem:[%s497 + $0x4] sm:$0x1]
        %v4931 = vsel %vm314, %v4854, %v4930
        %4932 = vst [vmem:[%s497 + $0x4] sm:$0x1] %v4931
        %v4933 = vld [vmem:[%s497 + $0x8] sm:$0xf]
        %v4934 = vsel %vm499, %v4861, %v4933
        %4935 = vst [vmem:[%s497 + $0x8] sm:$0xf] %v4934
        %v4936 = vld [vmem:[%s497 + $0xc] sm:$0x1]
        %v4937 = vsel %vm314, %v4862, %v4936
        %4938 = vst [vmem:[%s497 + $0xc] sm:$0x1] %v4937
        %v4939 = vld [vmem:[%s497 + $0x10] sm:$0xf]
        %v4940 = vsel %vm499, %v4869, %v4939
        %4941 = vst [vmem:[%s497 + $0x10] sm:$0xf] %v4940
        %v4942 = vld [vmem:[%s497 + $0x14] sm:$0x1]
        %v4943 = vsel %vm314, %v4870, %v4942
        %4944 = vst [vmem:[%s497 + $0x14] sm:$0x1] %v4943
        %v4945 = vld [vmem:[%s497 + $0x18] sm:$0xf]
        %v4946 = vsel %vm499, %v4877, %v4945
        %4947 = vst [vmem:[%s497 + $0x18] sm:$0xf] %v4946
        %v4948 = vld [vmem:[%s497 + $0x1c] sm:$0x1]
        %v4949 = vsel %vm314, %v4878, %v4948
        %4950 = vst [vmem:[%s497 + $0x1c] sm:$0x1] %v4949
        %v4951 = vld [vmem:[%s497 + $0x20] sm:$0xf]
        %v4952 = vsel %vm499, %v4885, %v4951
        %4953 = vst [vmem:[%s497 + $0x20] sm:$0xf] %v4952
        %v4954 = vld [vmem:[%s497 + $0x24] sm:$0x1]
        %v4955 = vsel %vm314, %v4886, %v4954
        %4956 = vst [vmem:[%s497 + $0x24] sm:$0x1] %v4955
        %v4957 = vld [vmem:[%s497 + $0x28] sm:$0xf]
        %v4958 = vsel %vm499, %v4893, %v4957
        %4959 = vst [vmem:[%s497 + $0x28] sm:$0xf] %v4958
        %v4960 = vld [vmem:[%s497 + $0x2c] sm:$0x1]
        %v4961 = vsel %vm314, %v4894, %v4960
        %4962 = vst [vmem:[%s497 + $0x2c] sm:$0x1] %v4961
        %v4963 = vld [vmem:[%s497 + $0x30] sm:$0xf]
        %v4964 = vsel %vm499, %v4901, %v4963
        %4965 = vst [vmem:[%s497 + $0x30] sm:$0xf] %v4964
        %v4966 = vld [vmem:[%s497 + $0x34] sm:$0x1]
        %v4967 = vsel %vm314, %v4902, %v4966
        %4968 = vst [vmem:[%s497 + $0x34] sm:$0x1] %v4967
        %v4969 = vld [vmem:[%s497 + $0x38] sm:$0xf]
        %v4970 = vsel %vm499, %v4909, %v4969
        %4971 = vst [vmem:[%s497 + $0x38] sm:$0xf] %v4970
        %v4972 = vld [vmem:[%s497 + $0x3c] sm:$0x1]
        %v4973 = vsel %vm314, %v4910, %v4972
        %4974 = vst [vmem:[%s497 + $0x3c] sm:$0x1] %v4973
        %v4975 = vld [vmem:[#allocation2] sm:$0xf]
        %v4976 = vld [vmem:[#allocation2 + $0x8] sm:$0xf]
        %v4977 = vld [vmem:[#allocation2 + $0x10] sm:$0xf]
        %v4978 = vld [vmem:[#allocation2 + $0x18] sm:$0xf]
        %v4979 = vld [vmem:[#allocation2 + $0x20] sm:$0xf]
        %v4980 = vld [vmem:[#allocation2 + $0x28] sm:$0xf]
        %v4981 = vld [vmem:[#allocation2 + $0x30] sm:$0xf]
        %v4982 = vld [vmem:[#allocation2 + $0x38] sm:$0xf]
        %v4991 = vunpack.c.l.b16 %v4975
        %v4992 = vunpack.c.l.b16 %v4976
        %v4993 = vunpack.c.l.b16 %v4977
        %v4994 = vunpack.c.l.b16 %v4978
        %v4995 = vunpack.c.l.b16 %v4979
        %v4996 = vunpack.c.l.b16 %v4980
        %v4997 = vunpack.c.l.b16 %v4981
        %v4998 = vunpack.c.l.b16 %v4982
        %v4999 = vpack.c.b16 %v4992, %v4991
        %v5000 = vpack.c.b16 %v4994, %v4993
        %v5001 = vpack.c.b16 %v4996, %v4995
        %v5002 = vpack.c.b16 %v4998, %v4997
        %5007 = vst.msk [vmem:[#allocation3] sm:$0xff] %vm580, %v4999
        %5008 = vst.msk [vmem:[#allocation3 + $0x18] sm:$0xff] %vm580, %v5000
        %5009 = vst.msk [vmem:[#allocation3 + $0x30] sm:$0xff] %vm580, %v5001
        %5010 = vst.msk [vmem:[#allocation3 + $0x48] sm:$0xff] %vm580, %v5002
        %v5011 = vld [vmem:[#allocation2] sm:$0xf]
        %v5012 = vld [vmem:[#allocation2 + $0x4] sm:$0x1]
        %v5013 = vld [vmem:[#allocation2 + $0x8] sm:$0xf]
        %v5014 = vld [vmem:[#allocation2 + $0xc] sm:$0x1]
        %v5015 = vld [vmem:[#allocation2 + $0x10] sm:$0xf]
        %v5016 = vld [vmem:[#allocation2 + $0x14] sm:$0x1]
        %v5017 = vld [vmem:[#allocation2 + $0x18] sm:$0xf]
        %v5018 = vld [vmem:[#allocation2 + $0x1c] sm:$0x1]
        %v5019 = vld [vmem:[#allocation2 + $0x20] sm:$0xf]
        %v5020 = vld [vmem:[#allocation2 + $0x24] sm:$0x1]
        %v5021 = vld [vmem:[#allocation2 + $0x28] sm:$0xf]
        %v5022 = vld [vmem:[#allocation2 + $0x2c] sm:$0x1]
        %v5023 = vld [vmem:[#allocation2 + $0x30] sm:$0xf]
        %v5024 = vld [vmem:[#allocation2 + $0x34] sm:$0x1]
        %v5025 = vld [vmem:[#allocation2 + $0x38] sm:$0xf]
        %v5026 = vld [vmem:[#allocation2 + $0x3c] sm:$0x1]
        %v5028 = vshrl.u32 %v5011, 16
        %v5030 = vrot.slane %v5028, 4
        %v5031 = vshll.u32 %v5011, 16
        %v5033 = vrot.slane %v5031, 5
        %v5034 = vor.u32 %v5030, %v5033
        %v5035 = vrot.slane %v5034, 4
        %v5037 = vshll.u32 %v5012, 16
        %v5039 = vrot.slane %v5037, 5
        %v5040 = vsel %vm603, %v5035, %v5039
        %v5042 = vshrl.u32 %v5013, 16
        %v5044 = vrot.slane %v5042, 4
        %v5045 = vshll.u32 %v5013, 16
        %v5047 = vrot.slane %v5045, 5
        %v5048 = vor.u32 %v5044, %v5047
        %v5049 = vrot.slane %v5048, 4
        %v5051 = vshll.u32 %v5014, 16
        %v5053 = vrot.slane %v5051, 5
        %v5054 = vsel %vm603, %v5049, %v5053
        %v5056 = vshrl.u32 %v5015, 16
        %v5058 = vrot.slane %v5056, 4
        %v5059 = vshll.u32 %v5015, 16
        %v5061 = vrot.slane %v5059, 5
        %v5062 = vor.u32 %v5058, %v5061
        %v5063 = vrot.slane %v5062, 4
        %v5065 = vshll.u32 %v5016, 16
        %v5067 = vrot.slane %v5065, 5
        %v5068 = vsel %vm603, %v5063, %v5067
        %v5070 = vshrl.u32 %v5017, 16
        %v5072 = vrot.slane %v5070, 4
        %v5073 = vshll.u32 %v5017, 16
        %v5075 = vrot.slane %v5073, 5
        %v5076 = vor.u32 %v5072, %v5075
        %v5077 = vrot.slane %v5076, 4
        %v5079 = vshll.u32 %v5018, 16
        %v5081 = vrot.slane %v5079, 5
        %v5082 = vsel %vm603, %v5077, %v5081
        %v5084 = vshrl.u32 %v5019, 16
        %v5086 = vrot.slane %v5084, 4
        %v5087 = vshll.u32 %v5019, 16
        %v5089 = vrot.slane %v5087, 5
        %v5090 = vor.u32 %v5086, %v5089
        %v5091 = vrot.slane %v5090, 4
        %v5093 = vshll.u32 %v5020, 16
        %v5095 = vrot.slane %v5093, 5
        %v5096 = vsel %vm603, %v5091, %v5095
        %v5098 = vshrl.u32 %v5021, 16
        %v5100 = vrot.slane %v5098, 4
        %v5101 = vshll.u32 %v5021, 16
        %v5103 = vrot.slane %v5101, 5
        %v5104 = vor.u32 %v5100, %v5103
        %v5105 = vrot.slane %v5104, 4
        %v5107 = vshll.u32 %v5022, 16
        %v5109 = vrot.slane %v5107, 5
        %v5110 = vsel %vm603, %v5105, %v5109
        %v5112 = vshrl.u32 %v5023, 16
        %v5114 = vrot.slane %v5112, 4
        %v5115 = vshll.u32 %v5023, 16
        %v5117 = vrot.slane %v5115, 5
        %v5118 = vor.u32 %v5114, %v5117
        %v5119 = vrot.slane %v5118, 4
        %v5121 = vshll.u32 %v5024, 16
        %v5123 = vrot.slane %v5121, 5
        %v5124 = vsel %vm603, %v5119, %v5123
        %v5126 = vshrl.u32 %v5025, 16
        %v5128 = vrot.slane %v5126, 4
        %v5129 = vshll.u32 %v5025, 16
        %v5131 = vrot.slane %v5129, 5
        %v5132 = vor.u32 %v5128, %v5131
        %v5133 = vrot.slane %v5132, 4
        %v5135 = vshll.u32 %v5026, 16
        %v5137 = vrot.slane %v5135, 5
        %v5138 = vsel %vm603, %v5133, %v5137
        %v5139 = vunpack.c.l.b16 %v5040
        %v5140 = vunpack.c.l.b16 %v5054
        %v5141 = vunpack.c.l.b16 %v5068
        %v5142 = vunpack.c.l.b16 %v5082
        %v5143 = vunpack.c.l.b16 %v5096
        %v5144 = vunpack.c.l.b16 %v5110
        %v5145 = vunpack.c.l.b16 %v5124
        %v5146 = vunpack.c.l.b16 %v5138
        %v5147 = vpack.c.b16 %v5140, %v5139
        %v5148 = vpack.c.b16 %v5142, %v5141
        %v5149 = vpack.c.b16 %v5144, %v5143
        %v5150 = vpack.c.b16 %v5146, %v5145
        %5151 = vrot.lane.b32.xlu0 %v5147, 32
        %v5152 = vpop.permute.xlu0 %5151
        %5153 = vrot.lane.b32.xlu0 %v5148, 32
        %v5154 = vpop.permute.xlu0 %5153
        %5155 = vrot.lane.b32.xlu0 %v5149, 32
        %v5156 = vpop.permute.xlu0 %5155
        %5157 = vrot.lane.b32.xlu0 %v5150, 32
        %v5158 = vpop.permute.xlu0 %5157
        %5163 = vst.msk [vmem:[#allocation3] sm:$0xff] %vm740, %v5152
        %5164 = vst.msk [vmem:[#allocation3 + $0x18] sm:$0xff] %vm740, %v5154
        %5165 = vst.msk [vmem:[#allocation3 + $0x30] sm:$0xff] %vm740, %v5156
        %5166 = vst.msk [vmem:[#allocation3 + $0x48] sm:$0xff] %vm740, %v5158
        %v5167 = vld [vmem:[#allocation2] sm:$0xe]
        %v5168 = vld [vmem:[#allocation2 + $0x4] sm:$0x1]
        %v5169 = vld [vmem:[#allocation2 + $0x8] sm:$0xe]
        %v5170 = vld [vmem:[#allocation2 + $0xc] sm:$0x1]
        %v5171 = vld [vmem:[#allocation2 + $0x10] sm:$0xe]
        %v5172 = vld [vmem:[#allocation2 + $0x14] sm:$0x1]
        %v5173 = vld [vmem:[#allocation2 + $0x18] sm:$0xe]
        %v5174 = vld [vmem:[#allocation2 + $0x1c] sm:$0x1]
        %v5175 = vld [vmem:[#allocation2 + $0x20] sm:$0xe]
        %v5176 = vld [vmem:[#allocation2 + $0x24] sm:$0x1]
        %v5177 = vld [vmem:[#allocation2 + $0x28] sm:$0xe]
        %v5178 = vld [vmem:[#allocation2 + $0x2c] sm:$0x1]
        %v5179 = vld [vmem:[#allocation2 + $0x30] sm:$0xe]
        %v5180 = vld [vmem:[#allocation2 + $0x34] sm:$0x1]
        %v5181 = vld [vmem:[#allocation2 + $0x38] sm:$0xe]
        %v5182 = vld [vmem:[#allocation2 + $0x3c] sm:$0x1]
        %v5199 = vrot.slane %v5167, 5
        %v5200 = vrot.slane %v5199, 4
        %v5201 = vrot.slane %v5168, 5
        %v5202 = vsel %vm779, %v5200, %v5201
        %v5203 = vrot.slane %v5169, 5
        %v5204 = vrot.slane %v5203, 4
        %v5205 = vrot.slane %v5170, 5
        %v5206 = vsel %vm779, %v5204, %v5205
        %v5207 = vrot.slane %v5171, 5
        %v5208 = vrot.slane %v5207, 4
        %v5209 = vrot.slane %v5172, 5
        %v5210 = vsel %vm779, %v5208, %v5209
        %v5211 = vrot.slane %v5173, 5
        %v5212 = vrot.slane %v5211, 4
        %v5213 = vrot.slane %v5174, 5
        %v5214 = vsel %vm779, %v5212, %v5213
        %v5215 = vrot.slane %v5175, 5
        %v5216 = vrot.slane %v5215, 4
        %v5217 = vrot.slane %v5176, 5
        %v5218 = vsel %vm779, %v5216, %v5217
        %v5219 = vrot.slane %v5177, 5
        %v5220 = vrot.slane %v5219, 4
        %v5221 = vrot.slane %v5178, 5
        %v5222 = vsel %vm779, %v5220, %v5221
        %v5223 = vrot.slane %v5179, 5
        %v5224 = vrot.slane %v5223, 4
        %v5225 = vrot.slane %v5180, 5
        %v5226 = vsel %vm779, %v5224, %v5225
        %v5227 = vrot.slane %v5181, 5
        %v5228 = vrot.slane %v5227, 4
        %v5229 = vrot.slane %v5182, 5
        %v5230 = vsel %vm779, %v5228, %v5229
        %v5231 = vunpack.c.l.b16 %v5202
        %v5232 = vunpack.c.l.b16 %v5206
        %v5233 = vunpack.c.l.b16 %v5210
        %v5234 = vunpack.c.l.b16 %v5214
        %v5235 = vunpack.c.l.b16 %v5218
        %v5236 = vunpack.c.l.b16 %v5222
        %v5237 = vunpack.c.l.b16 %v5226
        %v5238 = vunpack.c.l.b16 %v5230
        %v5239 = vpack.c.b16 %v5232, %v5231
        %v5240 = vpack.c.b16 %v5234, %v5233
        %v5241 = vpack.c.b16 %v5236, %v5235
        %v5242 = vpack.c.b16 %v5238, %v5237
        %5243 = vrot.lane.b32.xlu0 %v5239, 64
        %v5244 = vpop.permute.xlu0 %5243
        %5245 = vrot.lane.b32.xlu0 %v5240, 64
        %v5246 = vpop.permute.xlu0 %5245
        %5247 = vrot.lane.b32.xlu0 %v5241, 64
        %v5248 = vpop.permute.xlu0 %5247
        %5249 = vrot.lane.b32.xlu0 %v5242, 64
        %v5250 = vpop.permute.xlu0 %5249
        %5255 = vst.msk [vmem:[#allocation3] sm:$0xff] %vm836, %v5244
        %5256 = vst.msk [vmem:[#allocation3 + $0x18] sm:$0xff] %vm836, %v5246
        %5257 = vst.msk [vmem:[#allocation3 + $0x30] sm:$0xff] %vm836, %v5248
        %5258 = vst.msk [vmem:[#allocation3 + $0x48] sm:$0xff] %vm836, %v5250
        %v5259 = vld [vmem:[%s497] sm:$0xf]
        %v5260 = vld [vmem:[%s497 + $0x8] sm:$0xf]
        %v5261 = vld [vmem:[%s497 + $0x10] sm:$0xf]
        %v5262 = vld [vmem:[%s497 + $0x18] sm:$0xf]
        %v5263 = vld [vmem:[%s497 + $0x20] sm:$0xf]
        %v5264 = vld [vmem:[%s497 + $0x28] sm:$0xf]
        %v5265 = vld [vmem:[%s497 + $0x30] sm:$0xf]
        %v5266 = vld [vmem:[%s497 + $0x38] sm:$0xf]
        %v5275 = vunpack.c.l.b16 %v5259
        %v5276 = vunpack.c.l.b16 %v5260
        %v5277 = vunpack.c.l.b16 %v5261
        %v5278 = vunpack.c.l.b16 %v5262
        %v5279 = vunpack.c.l.b16 %v5263
        %v5280 = vunpack.c.l.b16 %v5264
        %v5281 = vunpack.c.l.b16 %v5265
        %v5282 = vunpack.c.l.b16 %v5266
        %v5283 = vpack.c.b16 %v5276, %v5275
        %v5284 = vpack.c.b16 %v5278, %v5277
        %v5285 = vpack.c.b16 %v5280, %v5279
        %v5286 = vpack.c.b16 %v5282, %v5281
        %5287 = vrot.lane.b32.xlu0 %v5283, 96
        %v5288 = vpop.permute.xlu0 %5287
        %5289 = vrot.lane.b32.xlu0 %v5284, 96
        %v5290 = vpop.permute.xlu0 %5289
        %5291 = vrot.lane.b32.xlu0 %v5285, 96
        %v5292 = vpop.permute.xlu0 %5291
        %5293 = vrot.lane.b32.xlu0 %v5286, 96
        %v5294 = vpop.permute.xlu0 %5293
        %5299 = vst.msk [vmem:[#allocation3] sm:$0xff] %vm881, %v5288
        %5300 = vst.msk [vmem:[#allocation3 + $0x18] sm:$0xff] %vm881, %v5290
        %5301 = vst.msk [vmem:[#allocation3 + $0x30] sm:$0xff] %vm881, %v5292
        %5302 = vst.msk [vmem:[#allocation3 + $0x48] sm:$0xff] %vm881, %v5294
        %v5303 = vld [vmem:[%s497] sm:$0xf]
        %v5304 = vld [vmem:[%s497 + $0x4] sm:$0x1]
        %v5305 = vld [vmem:[%s497 + $0x8] sm:$0xf]
        %v5306 = vld [vmem:[%s497 + $0xc] sm:$0x1]
        %v5307 = vld [vmem:[%s497 + $0x10] sm:$0xf]
        %v5308 = vld [vmem:[%s497 + $0x14] sm:$0x1]
        %v5309 = vld [vmem:[%s497 + $0x18] sm:$0xf]
        %v5310 = vld [vmem:[%s497 + $0x1c] sm:$0x1]
        %v5311 = vld [vmem:[%s497 + $0x20] sm:$0xf]
        %v5312 = vld [vmem:[%s497 + $0x24] sm:$0x1]
        %v5313 = vld [vmem:[%s497 + $0x28] sm:$0xf]
        %v5314 = vld [vmem:[%s497 + $0x2c] sm:$0x1]
        %v5315 = vld [vmem:[%s497 + $0x30] sm:$0xf]
        %v5316 = vld [vmem:[%s497 + $0x34] sm:$0x1]
        %v5317 = vld [vmem:[%s497 + $0x38] sm:$0xf]
        %v5318 = vld [vmem:[%s497 + $0x3c] sm:$0x1]
        %v5320 = vshrl.u32 %v5303, 16
        %v5322 = vrot.slane %v5320, 4
        %v5323 = vshll.u32 %v5303, 16
        %v5325 = vrot.slane %v5323, 5
        %v5326 = vor.u32 %v5322, %v5325
        %v5327 = vrot.slane %v5326, 4
        %v5329 = vshll.u32 %v5304, 16
        %v5331 = vrot.slane %v5329, 5
        %v5332 = vsel %vm603, %v5327, %v5331
        %v5334 = vshrl.u32 %v5305, 16
        %v5336 = vrot.slane %v5334, 4
        %v5337 = vshll.u32 %v5305, 16
        %v5339 = vrot.slane %v5337, 5
        %v5340 = vor.u32 %v5336, %v5339
        %v5341 = vrot.slane %v5340, 4
        %v5343 = vshll.u32 %v5306, 16
        %v5345 = vrot.slane %v5343, 5
        %v5346 = vsel %vm603, %v5341, %v5345
        %v5348 = vshrl.u32 %v5307, 16
        %v5350 = vrot.slane %v5348, 4
        %v5351 = vshll.u32 %v5307, 16
        %v5353 = vrot.slane %v5351, 5
        %v5354 = vor.u32 %v5350, %v5353
        %v5355 = vrot.slane %v5354, 4
        %v5357 = vshll.u32 %v5308, 16
        %v5359 = vrot.slane %v5357, 5
        %v5360 = vsel %vm603, %v5355, %v5359
        %v5362 = vshrl.u32 %v5309, 16
        %v5364 = vrot.slane %v5362, 4
        %v5365 = vshll.u32 %v5309, 16
        %v5367 = vrot.slane %v5365, 5
        %v5368 = vor.u32 %v5364, %v5367
        %v5369 = vrot.slane %v5368, 4
        %v5371 = vshll.u32 %v5310, 16
        %v5373 = vrot.slane %v5371, 5
        %v5374 = vsel %vm603, %v5369, %v5373
        %v5376 = vshrl.u32 %v5311, 16
        %v5378 = vrot.slane %v5376, 4
        %v5379 = vshll.u32 %v5311, 16
        %v5381 = vrot.slane %v5379, 5
        %v5382 = vor.u32 %v5378, %v5381
        %v5383 = vrot.slane %v5382, 4
        %v5385 = vshll.u32 %v5312, 16
        %v5387 = vrot.slane %v5385, 5
        %v5388 = vsel %vm603, %v5383, %v5387
        %v5390 = vshrl.u32 %v5313, 16
        %v5392 = vrot.slane %v5390, 4
        %v5393 = vshll.u32 %v5313, 16
        %v5395 = vrot.slane %v5393, 5
        %v5396 = vor.u32 %v5392, %v5395
        %v5397 = vrot.slane %v5396, 4
        %v5399 = vshll.u32 %v5314, 16
        %v5401 = vrot.slane %v5399, 5
        %v5402 = vsel %vm603, %v5397, %v5401
        %v5404 = vshrl.u32 %v5315, 16
        %v5406 = vrot.slane %v5404, 4
        %v5407 = vshll.u32 %v5315, 16
        %v5409 = vrot.slane %v5407, 5
        %v5410 = vor.u32 %v5406, %v5409
        %v5411 = vrot.slane %v5410, 4
        %v5413 = vshll.u32 %v5316, 16
        %v5415 = vrot.slane %v5413, 5
        %v5416 = vsel %vm603, %v5411, %v5415
        %v5418 = vshrl.u32 %v5317, 16
        %v5420 = vrot.slane %v5418, 4
        %v5421 = vshll.u32 %v5317, 16
        %v5423 = vrot.slane %v5421, 5
        %v5424 = vor.u32 %v5420, %v5423
        %v5425 = vrot.slane %v5424, 4
        %v5427 = vshll.u32 %v5318, 16
        %v5429 = vrot.slane %v5427, 5
        %v5430 = vsel %vm603, %v5425, %v5429
        %v5431 = vunpack.c.l.b16 %v5332
        %v5432 = vunpack.c.l.b16 %v5346
        %v5433 = vunpack.c.l.b16 %v5360
        %v5434 = vunpack.c.l.b16 %v5374
        %v5435 = vunpack.c.l.b16 %v5388
        %v5436 = vunpack.c.l.b16 %v5402
        %v5437 = vunpack.c.l.b16 %v5416
        %v5438 = vunpack.c.l.b16 %v5430
        %v5439 = vpack.c.b16 %v5432, %v5431
        %v5440 = vpack.c.b16 %v5434, %v5433
        %v5441 = vpack.c.b16 %v5436, %v5435
        %v5442 = vpack.c.b16 %v5438, %v5437
        %5447 = vst.msk [vmem:[#allocation3 + $0x8] sm:$0xff] %vm580, %v5439
        %5448 = vst.msk [vmem:[#allocation3 + $0x20] sm:$0xff] %vm580, %v5440
        %5449 = vst.msk [vmem:[#allocation3 + $0x38] sm:$0xff] %vm580, %v5441
        %5450 = vst.msk [vmem:[#allocation3 + $0x50] sm:$0xff] %vm580, %v5442
        %v5451 = vld [vmem:[%s497] sm:$0xe]
        %v5452 = vld [vmem:[%s497 + $0x4] sm:$0x1]
        %v5453 = vld [vmem:[%s497 + $0x8] sm:$0xe]
        %v5454 = vld [vmem:[%s497 + $0xc] sm:$0x1]
        %v5455 = vld [vmem:[%s497 + $0x10] sm:$0xe]
        %v5456 = vld [vmem:[%s497 + $0x14] sm:$0x1]
        %v5457 = vld [vmem:[%s497 + $0x18] sm:$0xe]
        %v5458 = vld [vmem:[%s497 + $0x1c] sm:$0x1]
        %v5459 = vld [vmem:[%s497 + $0x20] sm:$0xe]
        %v5460 = vld [vmem:[%s497 + $0x24] sm:$0x1]
        %v5461 = vld [vmem:[%s497 + $0x28] sm:$0xe]
        %v5462 = vld [vmem:[%s497 + $0x2c] sm:$0x1]
        %v5463 = vld [vmem:[%s497 + $0x30] sm:$0xe]
        %v5464 = vld [vmem:[%s497 + $0x34] sm:$0x1]
        %v5465 = vld [vmem:[%s497 + $0x38] sm:$0xe]
        %v5466 = vld [vmem:[%s497 + $0x3c] sm:$0x1]
        %v5483 = vrot.slane %v5451, 5
        %v5484 = vrot.slane %v5483, 4
        %v5485 = vrot.slane %v5452, 5
        %v5486 = vsel %vm779, %v5484, %v5485
        %v5487 = vrot.slane %v5453, 5
        %v5488 = vrot.slane %v5487, 4
        %v5489 = vrot.slane %v5454, 5
        %v5490 = vsel %vm779, %v5488, %v5489
        %v5491 = vrot.slane %v5455, 5
        %v5492 = vrot.slane %v5491, 4
        %v5493 = vrot.slane %v5456, 5
        %v5494 = vsel %vm779, %v5492, %v5493
        %v5495 = vrot.slane %v5457, 5
        %v5496 = vrot.slane %v5495, 4
        %v5497 = vrot.slane %v5458, 5
        %v5498 = vsel %vm779, %v5496, %v5497
        %v5499 = vrot.slane %v5459, 5
        %v5500 = vrot.slane %v5499, 4
        %v5501 = vrot.slane %v5460, 5
        %v5502 = vsel %vm779, %v5500, %v5501
        %v5503 = vrot.slane %v5461, 5
        %v5504 = vrot.slane %v5503, 4
        %v5505 = vrot.slane %v5462, 5
        %v5506 = vsel %vm779, %v5504, %v5505
        %v5507 = vrot.slane %v5463, 5
        %v5508 = vrot.slane %v5507, 4
        %v5509 = vrot.slane %v5464, 5
        %v5510 = vsel %vm779, %v5508, %v5509
        %v5511 = vrot.slane %v5465, 5
        %v5512 = vrot.slane %v5511, 4
        %v5513 = vrot.slane %v5466, 5
        %v5514 = vsel %vm779, %v5512, %v5513
        %v5515 = vunpack.c.l.b16 %v5486
        %v5516 = vunpack.c.l.b16 %v5490
        %v5517 = vunpack.c.l.b16 %v5494
        %v5518 = vunpack.c.l.b16 %v5498
        %v5519 = vunpack.c.l.b16 %v5502
        %v5520 = vunpack.c.l.b16 %v5506
        %v5521 = vunpack.c.l.b16 %v5510
        %v5522 = vunpack.c.l.b16 %v5514
        %v5523 = vpack.c.b16 %v5516, %v5515
        %v5524 = vpack.c.b16 %v5518, %v5517
        %v5525 = vpack.c.b16 %v5520, %v5519
        %v5526 = vpack.c.b16 %v5522, %v5521
        %5527 = vrot.lane.b32.xlu0 %v5523, 32
        %v5528 = vpop.permute.xlu0 %5527
        %5529 = vrot.lane.b32.xlu0 %v5524, 32
        %v5530 = vpop.permute.xlu0 %5529
        %5531 = vrot.lane.b32.xlu0 %v5525, 32
        %v5532 = vpop.permute.xlu0 %5531
        %5533 = vrot.lane.b32.xlu0 %v5526, 32
        %v5534 = vpop.permute.xlu0 %5533
        %5539 = vst.msk [vmem:[#allocation3 + $0x8] sm:$0xff] %vm740, %v5528
        %5540 = vst.msk [vmem:[#allocation3 + $0x20] sm:$0xff] %vm740, %v5530
        %5541 = vst.msk [vmem:[#allocation3 + $0x38] sm:$0xff] %vm740, %v5532
        %5542 = vst.msk [vmem:[#allocation3 + $0x50] sm:$0xff] %vm740, %v5534
        %v5543 = vld [vmem:[%s1126] sm:$0xf]
        %v5544 = vld [vmem:[%s1126 + $0x8] sm:$0xf]
        %v5545 = vld [vmem:[%s1126 + $0x10] sm:$0xf]
        %v5546 = vld [vmem:[%s1126 + $0x18] sm:$0xf]
        %v5547 = vld [vmem:[%s1126 + $0x20] sm:$0xf]
        %v5548 = vld [vmem:[%s1126 + $0x28] sm:$0xf]
        %v5549 = vld [vmem:[%s1126 + $0x30] sm:$0xf]
        %v5550 = vld [vmem:[%s1126 + $0x38] sm:$0xf]
        %v5559 = vunpack.c.l.b16 %v5543
        %v5560 = vunpack.c.l.b16 %v5544
        %v5561 = vunpack.c.l.b16 %v5545
        %v5562 = vunpack.c.l.b16 %v5546
        %v5563 = vunpack.c.l.b16 %v5547
        %v5564 = vunpack.c.l.b16 %v5548
        %v5565 = vunpack.c.l.b16 %v5549
        %v5566 = vunpack.c.l.b16 %v5550
        %v5567 = vpack.c.b16 %v5560, %v5559
        %v5568 = vpack.c.b16 %v5562, %v5561
        %v5569 = vpack.c.b16 %v5564, %v5563
        %v5570 = vpack.c.b16 %v5566, %v5565
        %5571 = vrot.lane.b32.xlu0 %v5567, 64
        %v5572 = vpop.permute.xlu0 %5571
        %5573 = vrot.lane.b32.xlu0 %v5568, 64
        %v5574 = vpop.permute.xlu0 %5573
        %5575 = vrot.lane.b32.xlu0 %v5569, 64
        %v5576 = vpop.permute.xlu0 %5575
        %5577 = vrot.lane.b32.xlu0 %v5570, 64
        %v5578 = vpop.permute.xlu0 %5577
        %5583 = vst.msk [vmem:[#allocation3 + $0x8] sm:$0xff] %vm836, %v5572
        %5584 = vst.msk [vmem:[#allocation3 + $0x20] sm:$0xff] %vm836, %v5574
        %5585 = vst.msk [vmem:[#allocation3 + $0x38] sm:$0xff] %vm836, %v5576
        %5586 = vst.msk [vmem:[#allocation3 + $0x50] sm:$0xff] %vm836, %v5578
        %v5587 = vld [vmem:[%s1126] sm:$0xf]
        %v5588 = vld [vmem:[%s1126 + $0x4] sm:$0x1]
        %v5589 = vld [vmem:[%s1126 + $0x8] sm:$0xf]
        %v5590 = vld [vmem:[%s1126 + $0xc] sm:$0x1]
        %v5591 = vld [vmem:[%s1126 + $0x10] sm:$0xf]
        %v5592 = vld [vmem:[%s1126 + $0x14] sm:$0x1]
        %v5593 = vld [vmem:[%s1126 + $0x18] sm:$0xf]
        %v5594 = vld [vmem:[%s1126 + $0x1c] sm:$0x1]
        %v5595 = vld [vmem:[%s1126 + $0x20] sm:$0xf]
        %v5596 = vld [vmem:[%s1126 + $0x24] sm:$0x1]
        %v5597 = vld [vmem:[%s1126 + $0x28] sm:$0xf]
        %v5598 = vld [vmem:[%s1126 + $0x2c] sm:$0x1]
        %v5599 = vld [vmem:[%s1126 + $0x30] sm:$0xf]
        %v5600 = vld [vmem:[%s1126 + $0x34] sm:$0x1]
        %v5601 = vld [vmem:[%s1126 + $0x38] sm:$0xf]
        %v5602 = vld [vmem:[%s1126 + $0x3c] sm:$0x1]
        %v5604 = vshrl.u32 %v5587, 16
        %v5606 = vrot.slane %v5604, 4
        %v5607 = vshll.u32 %v5587, 16
        %v5609 = vrot.slane %v5607, 5
        %v5610 = vor.u32 %v5606, %v5609
        %v5611 = vrot.slane %v5610, 4
        %v5613 = vshll.u32 %v5588, 16
        %v5615 = vrot.slane %v5613, 5
        %v5616 = vsel %vm603, %v5611, %v5615
        %v5618 = vshrl.u32 %v5589, 16
        %v5620 = vrot.slane %v5618, 4
        %v5621 = vshll.u32 %v5589, 16
        %v5623 = vrot.slane %v5621, 5
        %v5624 = vor.u32 %v5620, %v5623
        %v5625 = vrot.slane %v5624, 4
        %v5627 = vshll.u32 %v5590, 16
        %v5629 = vrot.slane %v5627, 5
        %v5630 = vsel %vm603, %v5625, %v5629
        %v5632 = vshrl.u32 %v5591, 16
        %v5634 = vrot.slane %v5632, 4
        %v5635 = vshll.u32 %v5591, 16
        %v5637 = vrot.slane %v5635, 5
        %v5638 = vor.u32 %v5634, %v5637
        %v5639 = vrot.slane %v5638, 4
        %v5641 = vshll.u32 %v5592, 16
        %v5643 = vrot.slane %v5641, 5
        %v5644 = vsel %vm603, %v5639, %v5643
        %v5646 = vshrl.u32 %v5593, 16
        %v5648 = vrot.slane %v5646, 4
        %v5649 = vshll.u32 %v5593, 16
        %v5651 = vrot.slane %v5649, 5
        %v5652 = vor.u32 %v5648, %v5651
        %v5653 = vrot.slane %v5652, 4
        %v5655 = vshll.u32 %v5594, 16
        %v5657 = vrot.slane %v5655, 5
        %v5658 = vsel %vm603, %v5653, %v5657
        %v5660 = vshrl.u32 %v5595, 16
        %v5662 = vrot.slane %v5660, 4
        %v5663 = vshll.u32 %v5595, 16
        %v5665 = vrot.slane %v5663, 5
        %v5666 = vor.u32 %v5662, %v5665
        %v5667 = vrot.slane %v5666, 4
        %v5669 = vshll.u32 %v5596, 16
        %v5671 = vrot.slane %v5669, 5
        %v5672 = vsel %vm603, %v5667, %v5671
        %v5674 = vshrl.u32 %v5597, 16
        %v5676 = vrot.slane %v5674, 4
        %v5677 = vshll.u32 %v5597, 16
        %v5679 = vrot.slane %v5677, 5
        %v5680 = vor.u32 %v5676, %v5679
        %v5681 = vrot.slane %v5680, 4
        %v5683 = vshll.u32 %v5598, 16
        %v5685 = vrot.slane %v5683, 5
        %v5686 = vsel %vm603, %v5681, %v5685
        %v5688 = vshrl.u32 %v5599, 16
        %v5690 = vrot.slane %v5688, 4
        %v5691 = vshll.u32 %v5599, 16
        %v5693 = vrot.slane %v5691, 5
        %v5694 = vor.u32 %v5690, %v5693
        %v5695 = vrot.slane %v5694, 4
        %v5697 = vshll.u32 %v5600, 16
        %v5699 = vrot.slane %v5697, 5
        %v5700 = vsel %vm603, %v5695, %v5699
        %v5702 = vshrl.u32 %v5601, 16
        %v5704 = vrot.slane %v5702, 4
        %v5705 = vshll.u32 %v5601, 16
        %v5707 = vrot.slane %v5705, 5
        %v5708 = vor.u32 %v5704, %v5707
        %v5709 = vrot.slane %v5708, 4
        %v5711 = vshll.u32 %v5602, 16
        %v5713 = vrot.slane %v5711, 5
        %v5714 = vsel %vm603, %v5709, %v5713
        %v5715 = vunpack.c.l.b16 %v5616
        %v5716 = vunpack.c.l.b16 %v5630
        %v5717 = vunpack.c.l.b16 %v5644
        %v5718 = vunpack.c.l.b16 %v5658
        %v5719 = vunpack.c.l.b16 %v5672
        %v5720 = vunpack.c.l.b16 %v5686
        %v5721 = vunpack.c.l.b16 %v5700
        %v5722 = vunpack.c.l.b16 %v5714
        %v5723 = vpack.c.b16 %v5716, %v5715
        %v5724 = vpack.c.b16 %v5718, %v5717
        %v5725 = vpack.c.b16 %v5720, %v5719
        %v5726 = vpack.c.b16 %v5722, %v5721
        %5727 = vrot.lane.b32.xlu0 %v5723, 96
        %v5728 = vpop.permute.xlu0 %5727
        %5729 = vrot.lane.b32.xlu0 %v5724, 96
        %v5730 = vpop.permute.xlu0 %5729
        %5731 = vrot.lane.b32.xlu0 %v5725, 96
        %v5732 = vpop.permute.xlu0 %5731
        %5733 = vrot.lane.b32.xlu0 %v5726, 96
        %v5734 = vpop.permute.xlu0 %5733
        %5739 = vst.msk [vmem:[#allocation3 + $0x8] sm:$0xff] %vm881, %v5728
        %5740 = vst.msk [vmem:[#allocation3 + $0x20] sm:$0xff] %vm881, %v5730
        %5741 = vst.msk [vmem:[#allocation3 + $0x38] sm:$0xff] %vm881, %v5732
        %5742 = vst.msk [vmem:[#allocation3 + $0x50] sm:$0xff] %vm881, %v5734
        %v5743 = vld [vmem:[%s1126] sm:$0xe]
        %v5744 = vld [vmem:[%s1126 + $0x4] sm:$0x1]
        %v5745 = vld [vmem:[%s1126 + $0x8] sm:$0xe]
        %v5746 = vld [vmem:[%s1126 + $0xc] sm:$0x1]
        %v5747 = vld [vmem:[%s1126 + $0x10] sm:$0xe]
        %v5748 = vld [vmem:[%s1126 + $0x14] sm:$0x1]
        %v5749 = vld [vmem:[%s1126 + $0x18] sm:$0xe]
        %v5750 = vld [vmem:[%s1126 + $0x1c] sm:$0x1]
        %v5751 = vld [vmem:[%s1126 + $0x20] sm:$0xe]
        %v5752 = vld [vmem:[%s1126 + $0x24] sm:$0x1]
        %v5753 = vld [vmem:[%s1126 + $0x28] sm:$0xe]
        %v5754 = vld [vmem:[%s1126 + $0x2c] sm:$0x1]
        %v5755 = vld [vmem:[%s1126 + $0x30] sm:$0xe]
        %v5756 = vld [vmem:[%s1126 + $0x34] sm:$0x1]
        %v5757 = vld [vmem:[%s1126 + $0x38] sm:$0xe]
        %v5758 = vld [vmem:[%s1126 + $0x3c] sm:$0x1]
        %v5775 = vrot.slane %v5743, 5
        %v5776 = vrot.slane %v5775, 4
        %v5777 = vrot.slane %v5744, 5
        %v5778 = vsel %vm779, %v5776, %v5777
        %v5779 = vrot.slane %v5745, 5
        %v5780 = vrot.slane %v5779, 4
        %v5781 = vrot.slane %v5746, 5
        %v5782 = vsel %vm779, %v5780, %v5781
        %v5783 = vrot.slane %v5747, 5
        %v5784 = vrot.slane %v5783, 4
        %v5785 = vrot.slane %v5748, 5
        %v5786 = vsel %vm779, %v5784, %v5785
        %v5787 = vrot.slane %v5749, 5
        %v5788 = vrot.slane %v5787, 4
        %v5789 = vrot.slane %v5750, 5
        %v5790 = vsel %vm779, %v5788, %v5789
        %v5791 = vrot.slane %v5751, 5
        %v5792 = vrot.slane %v5791, 4
        %v5793 = vrot.slane %v5752, 5
        %v5794 = vsel %vm779, %v5792, %v5793
        %v5795 = vrot.slane %v5753, 5
        %v5796 = vrot.slane %v5795, 4
        %v5797 = vrot.slane %v5754, 5
        %v5798 = vsel %vm779, %v5796, %v5797
        %v5799 = vrot.slane %v5755, 5
        %v5800 = vrot.slane %v5799, 4
        %v5801 = vrot.slane %v5756, 5
        %v5802 = vsel %vm779, %v5800, %v5801
        %v5803 = vrot.slane %v5757, 5
        %v5804 = vrot.slane %v5803, 4
        %v5805 = vrot.slane %v5758, 5
        %v5806 = vsel %vm779, %v5804, %v5805
        %v5807 = vunpack.c.l.b16 %v5778
        %v5808 = vunpack.c.l.b16 %v5782
        %v5809 = vunpack.c.l.b16 %v5786
        %v5810 = vunpack.c.l.b16 %v5790
        %v5811 = vunpack.c.l.b16 %v5794
        %v5812 = vunpack.c.l.b16 %v5798
        %v5813 = vunpack.c.l.b16 %v5802
        %v5814 = vunpack.c.l.b16 %v5806
        %v5815 = vpack.c.b16 %v5808, %v5807
        %v5816 = vpack.c.b16 %v5810, %v5809
        %v5817 = vpack.c.b16 %v5812, %v5811
        %v5818 = vpack.c.b16 %v5814, %v5813
        %5823 = vst.msk [vmem:[#allocation3 + $0x10] sm:$0xff] %vm580, %v5815
        %5824 = vst.msk [vmem:[#allocation3 + $0x28] sm:$0xff] %vm580, %v5816
        %5825 = vst.msk [vmem:[#allocation3 + $0x40] sm:$0xff] %vm580, %v5817
        %5826 = vst.msk [vmem:[#allocation3 + $0x58] sm:$0xff] %vm580, %v5818
        %v5827 = vld [vmem:[#allocation3] sm:$0xff]
        %v5828 = vld [vmem:[#allocation3 + $0x8] sm:$0xff]
        %v5829 = vld [vmem:[#allocation3 + $0x10] sm:$0xff]
        %v5830 = vld [vmem:[#allocation3 + $0x18] sm:$0xff]
        %v5831 = vld [vmem:[#allocation3 + $0x20] sm:$0xff]
        %v5832 = vld [vmem:[#allocation3 + $0x28] sm:$0xff]
        %v5833 = vld [vmem:[#allocation3 + $0x30] sm:$0xff]
        %v5834 = vld [vmem:[#allocation3 + $0x38] sm:$0xff]
        %v5835 = vld [vmem:[#allocation3 + $0x40] sm:$0xff]
        %v5836 = vld [vmem:[#allocation3 + $0x48] sm:$0xff]
        %v5837 = vld [vmem:[#allocation3 + $0x50] sm:$0xff]
        %v5838 = vld [vmem:[#allocation3 + $0x58] sm:$0xff]
        %s5839 = scalar_lea.vmem %s1, 432
        %v5840 = vld [vmem:[%s5839] sm:$0xf]
        %v5841 = vld [vmem:[%s5839 + $0x4] sm:$0xf]
        %v5842 = vld [vmem:[%s5839 + $0x8] sm:$0xf]
        %v5843 = vld [vmem:[%s5839 + $0xc] sm:$0xf]
        %v5844 = vld [vmem:[%s5839 + $0x10] sm:$0xf]
        %v5845 = vld [vmem:[%s5839 + $0x14] sm:$0xf]
        %v5846 = vld [vmem:[%s5839 + $0x18] sm:$0xf]
        %v5847 = vld [vmem:[%s5839 + $0x1c] sm:$0xf]
        %v5848 = vld [vmem:[%s5839 + $0x20] sm:$0xf]
        %v5849 = vld [vmem:[%s5839 + $0x24] sm:$0xf]
        %v5850 = vld [vmem:[%s5839 + $0x28] sm:$0xf]
        %v5851 = vld [vmem:[%s5839 + $0x2c] sm:$0xf]
        %v5852 = vld [vmem:[%s5839 + $0x30] sm:$0xf]
        %v5853 = vld [vmem:[%s5839 + $0x34] sm:$0xf]
        %v5854 = vld [vmem:[%s5839 + $0x38] sm:$0xf]
        %v5855 = vld [vmem:[%s5839 + $0x3c] sm:$0xf]
        %v5856 = vld [vmem:[%s5839 + $0x40] sm:$0xf]
        %v5857 = vld [vmem:[%s5839 + $0x44] sm:$0xf]
        %v5858 = vld [vmem:[%s5839 + $0x48] sm:$0xf]
        %v5859 = vld [vmem:[%s5839 + $0x4c] sm:$0xf]
        %v5860 = vld [vmem:[%s5839 + $0x50] sm:$0xf]
        %v5861 = vld [vmem:[%s5839 + $0x54] sm:$0xf]
        %v5862 = vld [vmem:[%s5839 + $0x58] sm:$0xf]
        %v5863 = vld [vmem:[%s5839 + $0x5c] sm:$0xf]
        %v5864 = vld [vmem:[%s5839 + $0x60] sm:$0xf]
        %v5865 = vld [vmem:[%s5839 + $0x64] sm:$0xf]
        %v5866 = vld [vmem:[%s5839 + $0x68] sm:$0xf]
        %v5867 = vld [vmem:[%s5839 + $0x6c] sm:$0xf]
        %v5868 = vld [vmem:[%s5839 + $0x70] sm:$0xf]
        %v5869 = vld [vmem:[%s5839 + $0x74] sm:$0xf]
        %v5870 = vld [vmem:[%s5839 + $0x78] sm:$0xf]
        %v5871 = vld [vmem:[%s5839 + $0x7c] sm:$0xf]
        %v5872 = vld [vmem:[%s5839 + $0x80] sm:$0xf]
        %v5873 = vld [vmem:[%s5839 + $0x84] sm:$0xf]
        %v5874 = vld [vmem:[%s5839 + $0x88] sm:$0xf]
        %v5875 = vld [vmem:[%s5839 + $0x8c] sm:$0xf]
        %s5876 = scalar_lea.vmem %s2, 3
        %v5877 = vld [vmem:[%s5876] sm:$0x1]
        %v5879 = vlaneseq
        %v5880 = vshrl.u32 %v5879, 7
        %v5881 = vsub.s32 0, %v5880
        %v5882 = vrot.slane %v5877, %v5881
        %v5920 = vunpack.c.l.b16 %v5840
        %v5921 = vunpack.c.l.b16 %v5841
        %v5922 = vunpack.c.l.b16 %v5842
        %v5923 = vunpack.c.l.b16 %v5843
        %v5924 = vunpack.c.l.b16 %v5844
        %v5925 = vunpack.c.l.b16 %v5845
        %v5926 = vunpack.c.l.b16 %v5846
        %v5927 = vunpack.c.l.b16 %v5847
        %v5928 = vunpack.c.l.b16 %v5848
        %v5929 = vunpack.c.l.b16 %v5849
        %v5930 = vunpack.c.l.b16 %v5850
        %v5931 = vunpack.c.l.b16 %v5851
        %v5932 = vunpack.c.l.b16 %v5852
        %v5933 = vunpack.c.l.b16 %v5853
        %v5934 = vunpack.c.l.b16 %v5854
        %v5935 = vunpack.c.l.b16 %v5855
        %v5936 = vunpack.c.l.b16 %v5856
        %v5937 = vunpack.c.l.b16 %v5857
        %v5938 = vunpack.c.l.b16 %v5858
        %v5939 = vunpack.c.l.b16 %v5859
        %v5940 = vunpack.c.l.b16 %v5860
        %v5941 = vunpack.c.l.b16 %v5861
        %v5942 = vunpack.c.l.b16 %v5862
        %v5943 = vunpack.c.l.b16 %v5863
        %v5944 = vunpack.c.l.b16 %v5864
        %v5945 = vunpack.c.l.b16 %v5865
        %v5946 = vunpack.c.l.b16 %v5866
        %v5947 = vunpack.c.l.b16 %v5867
        %v5948 = vunpack.c.l.b16 %v5868
        %v5949 = vunpack.c.l.b16 %v5869
        %v5950 = vunpack.c.l.b16 %v5870
        %v5951 = vunpack.c.l.b16 %v5871
        %v5952 = vunpack.c.l.b16 %v5872
        %v5953 = vunpack.c.l.b16 %v5873
        %v5954 = vunpack.c.l.b16 %v5874
        %v5955 = vunpack.c.l.b16 %v5875
        %v5956 = vpack.c.b16 %v5921, %v5920
        %v5957 = vpack.c.b16 %v5923, %v5922
        %v5958 = vpack.c.b16 %v5925, %v5924
        %v5959 = vpack.c.b16 %v5927, %v5926
        %v5960 = vpack.c.b16 %v5929, %v5928
        %v5961 = vpack.c.b16 %v5931, %v5930
        %v5962 = vpack.c.b16 %v5933, %v5932
        %v5963 = vpack.c.b16 %v5935, %v5934
        %v5964 = vpack.c.b16 %v5937, %v5936
        %v5965 = vpack.c.b16 %v5939, %v5938
        %v5966 = vpack.c.b16 %v5941, %v5940
        %v5967 = vpack.c.b16 %v5943, %v5942
        %v5968 = vpack.c.b16 %v5945, %v5944
        %v5969 = vpack.c.b16 %v5947, %v5946
        %v5970 = vpack.c.b16 %v5949, %v5948
        %v5971 = vpack.c.b16 %v5951, %v5950
        %v5972 = vpack.c.b16 %v5953, %v5952
        %v5973 = vpack.c.b16 %v5955, %v5954
        %v5993 = vsel %vm580, %v5829, 0
        %v5996 = vsel %vm580, %v5832, 0
        %v5999 = vsel %vm580, %v5835, 0
        %v6002 = vsel %vm580, %v5838, 0
        %6004 = vmatprep.subr.bf16.mxu0 0
        %6005 = vmatpush1.bf16.msra.mxu0 %v5956
        %6006 = vmatprep.subr.bf16.mxu0 0
        %6007 = vmatpush1.bf16.msra.mxu0 %v5957
        %6008 = vmatprep.subr.bf16.mxu0 0
        %6009 = vmatpush1.bf16.msra.mxu0 %v5958
        %6010 = vmatprep.subr.bf16.mxu0 0
        %6011 = vmatpush1.bf16.msra.mxu0 %v5959
        %6012 = vmatprep.subr.bf16.mxu0 0
        %6013 = vmatpush1.bf16.msra.mxu0 %v5960
        %6014 = vmatprep.subr.bf16.mxu0 0
        %6015 = vmatpush1.bf16.msra.mxu0 %v5961
        %6016 = vmatprep.subr.bf16.mxu0 0
        %6017 = vmatpush1.bf16.msra.mxu0 %v5962
        %6018 = vmatprep.subr.bf16.mxu0 0
        %6019 = vmatpush1.bf16.msra.mxu0 %v5963
        %6020 = vmatprep.subr.bf16.mxu0 0
        %6021 = vmatpush1.bf16.msra.mxu0 %v5964
        %6022 = vmatprep.subr.bf16.mxu0 0
        %6023 = vmatpush1.bf16.msra.mxu0 %v5965
        %6024 = vmatprep.subr.bf16.mxu0 0
        %6025 = vmatpush1.bf16.msra.mxu0 %v5966
        %6026 = vmatprep.subr.bf16.mxu0 0
        %6027 = vmatpush1.bf16.msra.mxu0 %v5967
        %6028 = vmatprep.subr.bf16.mxu0 0
        %6029 = vmatpush1.bf16.msra.mxu0 %v5968
        %6030 = vmatprep.subr.bf16.mxu0 0
        %6031 = vmatpush1.bf16.msra.mxu0 %v5969
        %6032 = vmatprep.subr.bf16.mxu0 0
        %6033 = vmatpush1.bf16.msra.mxu0 %v5970
        %6034 = vmatprep.subr.bf16.mxu0 0
        %6035 = vmatpush1.bf16.msra.mxu0 %v5971
        %6036 = vmatprep.mubr.bf16.mxu0 %v5828
        %6037 = vmatmul.mubr.bf16.gmra.mrb[0].mxu0 %v5827
        %v6038 = vpop.f32.mrb[0].mxu0
        %v6039 = vadd.f32 %v5882, %v6038
        %v6040 = vpop.f32.mrb[0].mxu0
        %v6041 = vpop.f32.mrb[0].mxu0
        %v6042 = vadd.f32 %v5882, %v6041
        %v6043 = vpop.f32.mrb[0].mxu0
        %6044 = vmatprep.mubr.bf16.mxu0 %v5831
        %6045 = vmatmul.mubr.bf16.gmra.mrb[0].mxu0 %v5830
        %v6046 = vpop.f32.mrb[0].mxu0
        %v6047 = vadd.f32 %v5882, %v6046
        %v6048 = vpop.f32.mrb[0].mxu0
        %v6049 = vpop.f32.mrb[0].mxu0
        %v6050 = vadd.f32 %v5882, %v6049
        %v6051 = vpop.f32.mrb[0].mxu0
        %6052 = vmatprep.mubr.bf16.mxu0 %v5834
        %6053 = vmatmul.mubr.bf16.gmra.mrb[0].mxu0 %v5833
        %v6054 = vpop.f32.mrb[0].mxu0
        %v6055 = vadd.f32 %v5882, %v6054
        %v6056 = vpop.f32.mrb[0].mxu0
        %v6057 = vpop.f32.mrb[0].mxu0
        %v6058 = vadd.f32 %v5882, %v6057
        %v6059 = vpop.f32.mrb[0].mxu0
        %6060 = vmatprep.mubr.bf16.mxu0 %v5837
        %6061 = vmatmul.mubr.bf16.gmra.mrb[0].mxu0 %v5836
        %v6062 = vpop.f32.mrb[0].mxu0
        %v6063 = vadd.f32 %v5882, %v6062
        %v6064 = vpop.f32.mrb[0].mxu0
        %v6065 = vpop.f32.mrb[0].mxu0
        %v6066 = vadd.f32 %v5882, %v6065
        %v6067 = vpop.f32.mrb[0].mxu0
        %6068 = vdwg.mxu0
        %6069 = vmatprep.subr.bf16.mxu0 0
        %6070 = vmatpush1.bf16.msra.mxu0 %v5972
        %6071 = vmatprep.subr.bf16.mxu0 0
        %6072 = vmatpush1.bf16.msra.mxu0 %v5973
        %6073 = vmatprep.subr.bf16.mxu0 0
        %6074 = vmatpush1.bf16.msra.mxu0 0
        %6075 = vmatprep.subr.bf16.mxu0 0
        %6076 = vmatpush1.bf16.msra.mxu0 0
        %6077 = vmatprep.subr.bf16.mxu0 0
        %6078 = vmatpush1.bf16.msra.mxu0 0
        %6079 = vmatprep.subr.bf16.mxu0 0
        %6080 = vmatpush1.bf16.msra.mxu0 0
        %6081 = vmatprep.subr.bf16.mxu0 0
        %6082 = vmatpush1.bf16.msra.mxu0 0
        %6083 = vmatprep.subr.bf16.mxu0 0
        %6084 = vmatpush1.bf16.msra.mxu0 0
        %6085 = vmatprep.subr.bf16.mxu0 0
        %6086 = vmatpush1.bf16.msra.mxu0 0
        %6087 = vmatprep.subr.bf16.mxu0 0
        %6088 = vmatpush1.bf16.msra.mxu0 0
        %6089 = vmatprep.subr.bf16.mxu0 0
        %6090 = vmatpush1.bf16.msra.mxu0 0
        %6091 = vmatprep.subr.bf16.mxu0 0
        %6092 = vmatpush1.bf16.msra.mxu0 0
        %6093 = vmatprep.subr.bf16.mxu0 0
        %6094 = vmatpush1.bf16.msra.mxu0 0
        %6095 = vmatprep.subr.bf16.mxu0 0
        %6096 = vmatpush1.bf16.msra.mxu0 0
        %6097 = vmatprep.subr.bf16.mxu0 0
        %6098 = vmatpush1.bf16.msra.mxu0 0
        %6099 = vmatprep.subr.bf16.mxu0 0
        %6100 = vmatpush1.bf16.msra.mxu0 0
        %6101 = vmatprep.mubr.bf16.mxu0 0
        %6102 = vmatmul.mubr.bf16.gmra.mrb[0].mxu0 %v5993
        %v6103 = vpop.f32.mrb[0].mxu0
        %v6104 = vadd.f32 %v6039, %v6103
        %v6105 = vpop.f32.mrb[0].mxu0
        %v6106 = vpop.f32.mrb[0].mxu0
        %v6107 = vadd.f32 %v6042, %v6106
        %v6108 = vpop.f32.mrb[0].mxu0
        %6109 = vmatprep.mubr.bf16.mxu0 0
        %6110 = vmatmul.mubr.bf16.gmra.mrb[0].mxu0 %v5996
        %v6111 = vpop.f32.mrb[0].mxu0
        %v6112 = vadd.f32 %v6047, %v6111
        %v6113 = vpop.f32.mrb[0].mxu0
        %v6114 = vpop.f32.mrb[0].mxu0
        %v6115 = vadd.f32 %v6050, %v6114
        %v6116 = vpop.f32.mrb[0].mxu0
        %6117 = vmatprep.mubr.bf16.mxu0 0
        %6118 = vmatmul.mubr.bf16.gmra.mrb[0].mxu0 %v5999
        %v6119 = vpop.f32.mrb[0].mxu0
        %v6120 = vadd.f32 %v6055, %v6119
        %v6121 = vpop.f32.mrb[0].mxu0
        %v6122 = vpop.f32.mrb[0].mxu0
        %v6123 = vadd.f32 %v6058, %v6122
        %v6124 = vpop.f32.mrb[0].mxu0
        %6125 = vmatprep.mubr.bf16.mxu0 0
        %6126 = vmatmul.mubr.bf16.gmra.mrb[0].mxu0 %v6002
        %v6127 = vpop.f32.mrb[0].mxu0
        %v6128 = vadd.f32 %v6063, %v6127
        %v6129 = vpop.f32.mrb[0].mxu0
        %v6130 = vpop.f32.mrb[0].mxu0
        %v6131 = vadd.f32 %v6066, %v6130
        %v6132 = vpop.f32.mrb[0].mxu0
        %6133 = vdwg.mxu0
        %6142 = vrot.lane.b32.xlu0 %v6104, 96
        %v6143 = vpop.permute.xlu0 %6142
        %6144 = vrot.lane.b32.xlu0 %v6107, 96
        %v6145 = vpop.permute.xlu0 %6144
        %6146 = vrot.lane.b32.xlu0 %v6112, 96
        %v6147 = vpop.permute.xlu0 %6146
        %6148 = vrot.lane.b32.xlu0 %v6115, 96
        %v6149 = vpop.permute.xlu0 %6148
        %6150 = vrot.lane.b32.xlu0 %v6120, 96
        %v6151 = vpop.permute.xlu0 %6150
        %6152 = vrot.lane.b32.xlu0 %v6123, 96
        %v6153 = vpop.permute.xlu0 %6152
        %6154 = vrot.lane.b32.xlu0 %v6128, 96
        %v6155 = vpop.permute.xlu0 %6154
        %6156 = vrot.lane.b32.xlu0 %v6131, 96
        %v6157 = vpop.permute.xlu0 %6156
        %6166 = vst.msk [vmem:[%s298] sm:$0xff] %vm881, %v6143
        %6167 = vst.msk [vmem:[%s298 + $0x8] sm:$0xff] %vm881, %v6145
        %6168 = vst.msk [vmem:[%s298 + $0x10] sm:$0xff] %vm881, %v6147
        %6169 = vst.msk [vmem:[%s298 + $0x18] sm:$0xff] %vm881, %v6149
        %6170 = vst.msk [vmem:[%s298 + $0x20] sm:$0xff] %vm881, %v6151
        %6171 = vst.msk [vmem:[%s298 + $0x28] sm:$0xff] %vm881, %v6153
        %6172 = vst.msk [vmem:[%s298 + $0x30] sm:$0xff] %vm881, %v6155
        %6173 = vst.msk [vmem:[%s298 + $0x38] sm:$0xff] %vm881, %v6157
        %v6174 = vld [vmem:[%s3] sm:$0x1f]
        %v6176 = vsel %vm1725, %v6174, 0
        %6178 = vmatprep.subr.mxu0 0.0
        %6179 = vmatpush1.msra.mxu0 %v6104
        %6180 = vmatprep.subr.mxu0 0.0
        %6181 = vmatpush1.msra.mxu0 %v6107
        %6182 = vmatprep.subr.mxu0 0.0
        %6183 = vmatpush1.msra.mxu0 %v6112
        %6184 = vmatprep.subr.mxu0 0.0
        %6185 = vmatpush1.msra.mxu0 %v6115
        %6186 = vmatprep.subr.mxu0 0.0
        %6187 = vmatpush1.msra.mxu0 %v6120
        %6188 = vmatprep.subr.mxu0 0.0
        %6189 = vmatpush1.msra.mxu0 %v6123
        %6190 = vmatprep.subr.mxu0 0.0
        %6191 = vmatpush1.msra.mxu0 %v6128
        %6192 = vmatprep.subr.mxu0 0.0
        %6193 = vmatpush1.msra.mxu0 %v6131
        %6194 = vmatprep.subr.mxu0 0.0
        %6195 = vmatpush1.msra.mxu0 0.0
        %6196 = vmatprep.subr.mxu0 0.0
        %6197 = vmatpush1.msra.mxu0 0.0
        %6198 = vmatprep.subr.mxu0 0.0
        %6199 = vmatpush1.msra.mxu0 0.0
        %6200 = vmatprep.subr.mxu0 0.0
        %6201 = vmatpush1.msra.mxu0 0.0
        %6202 = vmatprep.subr.mxu0 0.0
        %6203 = vmatpush1.msra.mxu0 0.0
        %6204 = vmatprep.subr.mxu0 0.0
        %6205 = vmatpush1.msra.mxu0 0.0
        %6206 = vmatprep.subr.mxu0 0.0
        %6207 = vmatpush1.msra.mxu0 0.0
        %6208 = vmatprep.subr.mxu0 0.0
        %6209 = vmatpush1.msra.mxu0 0.0
        %6210 = vmatprep.subr.mxu0 0.0
        %6211 = vmatpush1.msra.mxu0 0.0
        %6212 = vmatprep.subr.mxu0 0.0
        %6213 = vmatpush1.msra.mxu0 0.0
        %6214 = vmatprep.subr.mxu0 0.0
        %6215 = vmatpush1.msra.mxu0 0.0
        %6216 = vmatprep.subr.mxu0 0.0
        %6217 = vmatpush1.msra.mxu0 0.0
        %6218 = vmatprep.subr.mxu0 0.0
        %6219 = vmatpush1.msra.mxu0 0.0
        %6220 = vmatprep.subr.mxu0 0.0
        %6221 = vmatpush1.msra.mxu0 0.0
        %6222 = vmatprep.subr.mxu0 0.0
        %6223 = vmatpush1.msra.mxu0 0.0
        %6224 = vmatprep.subr.mxu0 0.0
        %6225 = vmatpush1.msra.mxu0 0.0
        %6226 = vmatprep.subr.mxu0 0.0
        %6227 = vmatpush1.msra.mxu0 0.0
        %6228 = vmatprep.subr.mxu0 0.0
        %6229 = vmatpush1.msra.mxu0 0.0
        %6230 = vmatprep.subr.mxu0 0.0
        %6231 = vmatpush1.msra.mxu0 0.0
        %6232 = vmatprep.subr.mxu0 0.0
        %6233 = vmatpush1.msra.mxu0 0.0
        %6234 = vmatprep.subr.mxu0 0.0
        %6235 = vmatpush1.msra.mxu0 0.0
        %6236 = vmatprep.subr.mxu0 0.0
        %6237 = vmatpush1.msra.mxu0 0.0
        %6238 = vmatprep.subr.mxu0 0.0
        %6239 = vmatpush1.msra.mxu0 0.0
        %6240 = vmatprep.subr.mxu0 0.0
        %6241 = vmatpush1.msra.mxu0 0.0
        %6242 = vmatprep.mubr.f32.mxu0 0.0
        %6243 = vmatmul.mubr.f32.gmra.mrb[0].mxu0 %v6176
        %v6244 = vpop.f32.mrb[0].mxu0
        %v6245 = vadd.f32 0.0, %v6244
        %v6246 = vpop.f32.mrb[0].mxu0
        %6247 = vdwg.mxu0
        %s6248 = scalar_lea.vmem [#allocation4], 24
        %6249 = vst.msk [vmem:[%s6248] sm:$0x1f] %vm1799, %v6245
        %v6250 = vld [vmem:[#allocation4] sm:$0x1f]
        %v6251 = vld [vmem:[#allocation4 + $0x8] sm:$0x1f]
        %v6252 = vld [vmem:[#allocation4 + $0x10] sm:$0x1f]
        %v6253 = vld [vmem:[#allocation4 + $0x18] sm:$0x1f]
        %v6254 = vld [vmem:[%s4] sm:$0xff]
        %v6255 = vld [vmem:[%s4 + $0x8] sm:$0xff]
        %v6256 = vld [vmem:[%s4 + $0x10] sm:$0xff]
        %v6257 = vld [vmem:[%s4 + $0x18] sm:$0xff]
        %s6258 = scalar_lea.vmem %s4, 32
        %v6259 = vld [vmem:[%s6258] sm:$0xff]
        %v6260 = vld [vmem:[%s6258 + $0x8] sm:$0xff]
        %v6261 = vld [vmem:[%s6258 + $0x10] sm:$0xff]
        %v6262 = vld [vmem:[%s6258 + $0x18] sm:$0xff]
        %v6267 = vrot.slane %v6250, 1
        %vm6268 = vcmask 1041409
        %v6269 = vsel %vm6268, %v6251, %v6267
        %v6270 = vrot.slane %v6252, 7
        %vm6271 = vcmask 1042434
        %v6272 = vsel %vm6271, %v6270, %v6269
        %v6273 = vrot.slane %v6253, 6
        %vm6274 = vcmask 1043459
        %v6275 = vsel %vm6274, %v6273, %v6272
        %v6276 = vsel %vm580, %v6275, 0
        %6278 = vmatprep.subr.mxu0 0.0
        %6279 = vmatpush1.msra.mxu0 %v6259
        %6280 = vmatprep.subr.mxu0 0.0
        %6281 = vmatpush1.msra.mxu0 %v6260
        %6282 = vmatprep.subr.mxu0 0.0
        %6283 = vmatpush1.msra.mxu0 %v6261
        %6284 = vmatprep.subr.mxu0 0.0
        %6285 = vmatpush1.msra.mxu0 %v6262
        %6286 = vmatprep.subr.mxu0 0.0
        %6287 = vmatpush1.msra.mxu0 0.0
        %6288 = vmatprep.subr.mxu0 0.0
        %6289 = vmatpush1.msra.mxu0 0.0
        %6290 = vmatprep.subr.mxu0 0.0
        %6291 = vmatpush1.msra.mxu0 0.0
        %6292 = vmatprep.subr.mxu0 0.0
        %6293 = vmatpush1.msra.mxu0 0.0
        %6294 = vmatprep.subr.mxu0 0.0
        %6295 = vmatpush1.msra.mxu0 0.0
        %6296 = vmatprep.subr.mxu0 0.0
        %6297 = vmatpush1.msra.mxu0 0.0
        %6298 = vmatprep.subr.mxu0 0.0
        %6299 = vmatpush1.msra.mxu0 0.0
        %6300 = vmatprep.subr.mxu0 0.0
        %6301 = vmatpush1.msra.mxu0 0.0
        %6302 = vmatprep.subr.mxu0 0.0
        %6303 = vmatpush1.msra.mxu0 0.0
        %6304 = vmatprep.subr.mxu0 0.0
        %6305 = vmatpush1.msra.mxu0 0.0
        %6306 = vmatprep.subr.mxu0 0.0
        %6307 = vmatpush1.msra.mxu0 0.0
        %6308 = vmatprep.subr.mxu0 0.0
        %6309 = vmatpush1.msra.mxu0 0.0
        %6310 = vmatprep.subr.mxu0 0.0
        %6311 = vmatpush1.msra.mxu0 0.0
        %6312 = vmatprep.subr.mxu0 0.0
        %6313 = vmatpush1.msra.mxu0 0.0
        %6314 = vmatprep.subr.mxu0 0.0
        %6315 = vmatpush1.msra.mxu0 0.0
        %6316 = vmatprep.subr.mxu0 0.0
        %6317 = vmatpush1.msra.mxu0 0.0
        %6318 = vmatprep.subr.mxu0 0.0
        %6319 = vmatpush1.msra.mxu0 0.0
        %6320 = vmatprep.subr.mxu0 0.0
        %6321 = vmatpush1.msra.mxu0 0.0
        %6322 = vmatprep.subr.mxu0 0.0
        %6323 = vmatpush1.msra.mxu0 0.0
        %6324 = vmatprep.subr.mxu0 0.0
        %6325 = vmatpush1.msra.mxu0 0.0
        %6326 = vmatprep.subr.mxu0 0.0
        %6327 = vmatpush1.msra.mxu0 0.0
        %6328 = vmatprep.subr.mxu0 0.0
        %6329 = vmatpush1.msra.mxu0 0.0
        %6330 = vmatprep.subr.mxu0 0.0
        %6331 = vmatpush1.msra.mxu0 0.0
        %6332 = vmatprep.subr.mxu0 0.0
        %6333 = vmatpush1.msra.mxu0 0.0
        %6334 = vmatprep.subr.mxu0 0.0
        %6335 = vmatpush1.msra.mxu0 0.0
        %6336 = vmatprep.subr.mxu0 0.0
        %6337 = vmatpush1.msra.mxu0 0.0
        %6338 = vmatprep.subr.mxu0 0.0
        %6339 = vmatpush1.msra.mxu0 0.0
        %6340 = vmatprep.subr.mxu0 0.0
        %6341 = vmatpush1.msra.mxu0 0.0
        %6342 = vmatprep.mubr.f32.mxu0 0.0
        %6343 = vmatmul.mubr.f32.gmra.mrb[0].mxu0 %v6276
        %v6344 = vpop.f32.mrb[0].mxu0
        %v6345 = vadd.f32 0.0, %v6344
        %v6346 = vpop.f32.mrb[0].mxu0
        %6347 = vdwg.mxu0
        %v6348 = vrot.slane %v6251, 7
        %v6349 = vsel %vm6268, %v6348, %v6250
        %v6350 = vrot.slane %v6252, 6
        %v6351 = vsel %vm6271, %v6350, %v6349
        %v6352 = vrot.slane %v6253, 5
        %v6353 = vsel %vm6274, %v6352, %v6351
        %v6354 = vsel %vm580, %v6353, 0
        %6356 = vmatprep.subr.mxu0 0.0
        %6357 = vmatpush1.msra.mxu0 %v6254
        %6358 = vmatprep.subr.mxu0 0.0
        %6359 = vmatpush1.msra.mxu0 %v6255
        %6360 = vmatprep.subr.mxu0 0.0
        %6361 = vmatpush1.msra.mxu0 %v6256
        %6362 = vmatprep.subr.mxu0 0.0
        %6363 = vmatpush1.msra.mxu0 %v6257
        %6364 = vmatprep.subr.mxu0 0.0
        %6365 = vmatpush1.msra.mxu0 0.0
        %6366 = vmatprep.subr.mxu0 0.0
        %6367 = vmatpush1.msra.mxu0 0.0
        %6368 = vmatprep.subr.mxu0 0.0
        %6369 = vmatpush1.msra.mxu0 0.0
        %6370 = vmatprep.subr.mxu0 0.0
        %6371 = vmatpush1.msra.mxu0 0.0
        %6372 = vmatprep.subr.mxu0 0.0
        %6373 = vmatpush1.msra.mxu0 0.0
        %6374 = vmatprep.subr.mxu0 0.0
        %6375 = vmatpush1.msra.mxu0 0.0
        %6376 = vmatprep.subr.mxu0 0.0
        %6377 = vmatpush1.msra.mxu0 0.0
        %6378 = vmatprep.subr.mxu0 0.0
        %6379 = vmatpush1.msra.mxu0 0.0
        %6380 = vmatprep.subr.mxu0 0.0
        %6381 = vmatpush1.msra.mxu0 0.0
        %6382 = vmatprep.subr.mxu0 0.0
        %6383 = vmatpush1.msra.mxu0 0.0
        %6384 = vmatprep.subr.mxu0 0.0
        %6385 = vmatpush1.msra.mxu0 0.0
        %6386 = vmatprep.subr.mxu0 0.0
        %6387 = vmatpush1.msra.mxu0 0.0
        %6388 = vmatprep.subr.mxu0 0.0
        %6389 = vmatpush1.msra.mxu0 0.0
        %6390 = vmatprep.subr.mxu0 0.0
        %6391 = vmatpush1.msra.mxu0 0.0
        %6392 = vmatprep.subr.mxu0 0.0
        %6393 = vmatpush1.msra.mxu0 0.0
        %6394 = vmatprep.subr.mxu0 0.0
        %6395 = vmatpush1.msra.mxu0 0.0
        %6396 = vmatprep.subr.mxu0 0.0
        %6397 = vmatpush1.msra.mxu0 0.0
        %6398 = vmatprep.subr.mxu0 0.0
        %6399 = vmatpush1.msra.mxu0 0.0
        %6400 = vmatprep.subr.mxu0 0.0
        %6401 = vmatpush1.msra.mxu0 0.0
        %6402 = vmatprep.subr.mxu0 0.0
        %6403 = vmatpush1.msra.mxu0 0.0
        %6404 = vmatprep.subr.mxu0 0.0
        %6405 = vmatpush1.msra.mxu0 0.0
        %6406 = vmatprep.subr.mxu0 0.0
        %6407 = vmatpush1.msra.mxu0 0.0
        %6408 = vmatprep.subr.mxu0 0.0
        %6409 = vmatpush1.msra.mxu0 0.0
        %6410 = vmatprep.subr.mxu0 0.0
        %6411 = vmatpush1.msra.mxu0 0.0
        %6412 = vmatprep.subr.mxu0 0.0
        %6413 = vmatpush1.msra.mxu0 0.0
        %6414 = vmatprep.subr.mxu0 0.0
        %6415 = vmatpush1.msra.mxu0 0.0
        %6416 = vmatprep.subr.mxu0 0.0
        %6417 = vmatpush1.msra.mxu0 0.0
        %6418 = vmatprep.subr.mxu0 0.0
        %6419 = vmatpush1.msra.mxu0 0.0
        %6420 = vmatprep.mubr.f32.mxu0 0.0
        %6421 = vmatmul.mubr.f32.gmra.mrb[0].mxu0 %v6354
        %v6422 = vpop.f32.mrb[0].mxu0
        %v6423 = vadd.f32 %v6345, %v6422
        %v6424 = vpop.f32.mrb[0].mxu0
        %6425 = vdwg.mxu0
        %s6426 = scalar_lea.vmem %s4, 64
        %v6427 = vld [vmem:[%s6426] sm:$0xff]
        %v6428 = vld [vmem:[%s6426 + $0x8] sm:$0xff]
        %v6429 = vld [vmem:[%s6426 + $0x10] sm:$0xff]
        %v6430 = vld [vmem:[%s6426 + $0x18] sm:$0xff]
        %v6431 = vrot.slane %v6250, 2
        %v6432 = vrot.slane %v6251, 1
        %v6433 = vsel %vm6268, %v6432, %v6431
        %v6434 = vsel %vm6271, %v6252, %v6433
        %v6435 = vrot.slane %v6253, 7
        %v6436 = vsel %vm6274, %v6435, %v6434
        %v6437 = vsel %vm580, %v6436, 0
        %6439 = vmatprep.subr.mxu0 0.0
        %6440 = vmatpush1.msra.mxu0 %v6427
        %6441 = vmatprep.subr.mxu0 0.0
        %6442 = vmatpush1.msra.mxu0 %v6428
        %6443 = vmatprep.subr.mxu0 0.0
        %6444 = vmatpush1.msra.mxu0 %v6429
        %6445 = vmatprep.subr.mxu0 0.0
        %6446 = vmatpush1.msra.mxu0 %v6430
        %6447 = vmatprep.subr.mxu0 0.0
        %6448 = vmatpush1.msra.mxu0 0.0
        %6449 = vmatprep.subr.mxu0 0.0
        %6450 = vmatpush1.msra.mxu0 0.0
        %6451 = vmatprep.subr.mxu0 0.0
        %6452 = vmatpush1.msra.mxu0 0.0
        %6453 = vmatprep.subr.mxu0 0.0
        %6454 = vmatpush1.msra.mxu0 0.0
        %6455 = vmatprep.subr.mxu0 0.0
        %6456 = vmatpush1.msra.mxu0 0.0
        %6457 = vmatprep.subr.mxu0 0.0
        %6458 = vmatpush1.msra.mxu0 0.0
        %6459 = vmatprep.subr.mxu0 0.0
        %6460 = vmatpush1.msra.mxu0 0.0
        %6461 = vmatprep.subr.mxu0 0.0
        %6462 = vmatpush1.msra.mxu0 0.0
        %6463 = vmatprep.subr.mxu0 0.0
        %6464 = vmatpush1.msra.mxu0 0.0
        %6465 = vmatprep.subr.mxu0 0.0
        %6466 = vmatpush1.msra.mxu0 0.0
        %6467 = vmatprep.subr.mxu0 0.0
        %6468 = vmatpush1.msra.mxu0 0.0
        %6469 = vmatprep.subr.mxu0 0.0
        %6470 = vmatpush1.msra.mxu0 0.0
        %6471 = vmatprep.subr.mxu0 0.0
        %6472 = vmatpush1.msra.mxu0 0.0
        %6473 = vmatprep.subr.mxu0 0.0
        %6474 = vmatpush1.msra.mxu0 0.0
        %6475 = vmatprep.subr.mxu0 0.0
        %6476 = vmatpush1.msra.mxu0 0.0
        %6477 = vmatprep.subr.mxu0 0.0
        %6478 = vmatpush1.msra.mxu0 0.0
        %6479 = vmatprep.subr.mxu0 0.0
        %6480 = vmatpush1.msra.mxu0 0.0
        %6481 = vmatprep.subr.mxu0 0.0
        %6482 = vmatpush1.msra.mxu0 0.0
        %6483 = vmatprep.subr.mxu0 0.0
        %6484 = vmatpush1.msra.mxu0 0.0
        %6485 = vmatprep.subr.mxu0 0.0
        %6486 = vmatpush1.msra.mxu0 0.0
        %6487 = vmatprep.subr.mxu0 0.0
        %6488 = vmatpush1.msra.mxu0 0.0
        %6489 = vmatprep.subr.mxu0 0.0
        %6490 = vmatpush1.msra.mxu0 0.0
        %6491 = vmatprep.subr.mxu0 0.0
        %6492 = vmatpush1.msra.mxu0 0.0
        %6493 = vmatprep.subr.mxu0 0.0
        %6494 = vmatpush1.msra.mxu0 0.0
        %6495 = vmatprep.subr.mxu0 0.0
        %6496 = vmatpush1.msra.mxu0 0.0
        %6497 = vmatprep.subr.mxu0 0.0
        %6498 = vmatpush1.msra.mxu0 0.0
        %6499 = vmatprep.subr.mxu0 0.0
        %6500 = vmatpush1.msra.mxu0 0.0
        %6501 = vmatprep.subr.mxu0 0.0
        %6502 = vmatpush1.msra.mxu0 0.0
        %6503 = vmatprep.mubr.f32.mxu0 0.0
        %6504 = vmatmul.mubr.f32.gmra.mrb[0].mxu0 %v6437
        %v6505 = vpop.f32.mrb[0].mxu0
        %v6506 = vadd.f32 0.0, %v6505
        %v6507 = vpop.f32.mrb[0].mxu0
        %6508 = vdwg.mxu0
        %v6509 = vadd.f32 %v6423, %v6506
        %s6510 = scalar_lea.vmem %s4, 96
        %v6511 = vld [vmem:[%s6510] sm:$0xff]
        %v6512 = vld [vmem:[%s6510 + $0x8] sm:$0xff]
        %v6513 = vld [vmem:[%s6510 + $0x10] sm:$0xff]
        %v6514 = vld [vmem:[%s6510 + $0x18] sm:$0xff]
        %v6515 = vrot.slane %v6250, 3
        %v6516 = vrot.slane %v6251, 2
        %v6517 = vsel %vm6268, %v6516, %v6515
        %v6518 = vrot.slane %v6252, 1
        %v6519 = vsel %vm6271, %v6518, %v6517
        %v6520 = vsel %vm6274, %v6253, %v6519
        %v6521 = vsel %vm580, %v6520, 0
        %6523 = vmatprep.subr.mxu0 0.0
        %6524 = vmatpush1.msra.mxu0 %v6511
        %6525 = vmatprep.subr.mxu0 0.0
        %6526 = vmatpush1.msra.mxu0 %v6512
        %6527 = vmatprep.subr.mxu0 0.0
        %6528 = vmatpush1.msra.mxu0 %v6513
        %6529 = vmatprep.subr.mxu0 0.0
        %6530 = vmatpush1.msra.mxu0 %v6514
        %6531 = vmatprep.subr.mxu0 0.0
        %6532 = vmatpush1.msra.mxu0 0.0
        %6533 = vmatprep.subr.mxu0 0.0
        %6534 = vmatpush1.msra.mxu0 0.0
        %6535 = vmatprep.subr.mxu0 0.0
        %6536 = vmatpush1.msra.mxu0 0.0
        %6537 = vmatprep.subr.mxu0 0.0
        %6538 = vmatpush1.msra.mxu0 0.0
        %6539 = vmatprep.subr.mxu0 0.0
        %6540 = vmatpush1.msra.mxu0 0.0
        %6541 = vmatprep.subr.mxu0 0.0
        %6542 = vmatpush1.msra.mxu0 0.0
        %6543 = vmatprep.subr.mxu0 0.0
        %6544 = vmatpush1.msra.mxu0 0.0
        %6545 = vmatprep.subr.mxu0 0.0
        %6546 = vmatpush1.msra.mxu0 0.0
        %6547 = vmatprep.subr.mxu0 0.0
        %6548 = vmatpush1.msra.mxu0 0.0
        %6549 = vmatprep.subr.mxu0 0.0
        %6550 = vmatpush1.msra.mxu0 0.0
        %6551 = vmatprep.subr.mxu0 0.0
        %6552 = vmatpush1.msra.mxu0 0.0
        %6553 = vmatprep.subr.mxu0 0.0
        %6554 = vmatpush1.msra.mxu0 0.0
        %6555 = vmatprep.subr.mxu0 0.0
        %6556 = vmatpush1.msra.mxu0 0.0
        %6557 = vmatprep.subr.mxu0 0.0
        %6558 = vmatpush1.msra.mxu0 0.0
        %6559 = vmatprep.subr.mxu0 0.0
        %6560 = vmatpush1.msra.mxu0 0.0
        %6561 = vmatprep.subr.mxu0 0.0
        %6562 = vmatpush1.msra.mxu0 0.0
        %6563 = vmatprep.subr.mxu0 0.0
        %6564 = vmatpush1.msra.mxu0 0.0
        %6565 = vmatprep.subr.mxu0 0.0
        %6566 = vmatpush1.msra.mxu0 0.0
        %6567 = vmatprep.subr.mxu0 0.0
        %6568 = vmatpush1.msra.mxu0 0.0
        %6569 = vmatprep.subr.mxu0 0.0
        %6570 = vmatpush1.msra.mxu0 0.0
        %6571 = vmatprep.subr.mxu0 0.0
        %6572 = vmatpush1.msra.mxu0 0.0
        %6573 = vmatprep.subr.mxu0 0.0
        %6574 = vmatpush1.msra.mxu0 0.0
        %6575 = vmatprep.subr.mxu0 0.0
        %6576 = vmatpush1.msra.mxu0 0.0
        %6577 = vmatprep.subr.mxu0 0.0
        %6578 = vmatpush1.msra.mxu0 0.0
        %6579 = vmatprep.subr.mxu0 0.0
        %6580 = vmatpush1.msra.mxu0 0.0
        %6581 = vmatprep.subr.mxu0 0.0
        %6582 = vmatpush1.msra.mxu0 0.0
        %6583 = vmatprep.subr.mxu0 0.0
        %6584 = vmatpush1.msra.mxu0 0.0
        %6585 = vmatprep.subr.mxu0 0.0
        %6586 = vmatpush1.msra.mxu0 0.0
        %6587 = vmatprep.mubr.f32.mxu0 0.0
        %6588 = vmatmul.mubr.f32.gmra.mrb[0].mxu0 %v6521
        %v6589 = vpop.f32.mrb[0].mxu0
        %v6590 = vadd.f32 0.0, %v6589
        %v6591 = vpop.f32.mrb[0].mxu0
        %6592 = vdwg.mxu0
        %v6593 = vadd.f32 %v6509, %v6590
        %s6594 = scalar_lea.vmem %s4, 128
        %v6595 = vld [vmem:[%s6594] sm:$0xff]
        %v6596 = vld [vmem:[%s6594 + $0x8] sm:$0xff]
        %v6597 = vld [vmem:[%s6594 + $0x10] sm:$0xff]
        %v6598 = vld [vmem:[%s6594 + $0x18] sm:$0xff]
        %v6599 = vrot.slane %v6250, 4
        %v6600 = vrot.slane %v6251, 3
        %v6601 = vsel %vm6268, %v6600, %v6599
        %v6602 = vrot.slane %v6252, 2
        %v6603 = vsel %vm6271, %v6602, %v6601
        %v6604 = vrot.slane %v6253, 1
        %v6605 = vsel %vm6274, %v6604, %v6603
        %v6606 = vsel %vm580, %v6605, 0
        %6608 = vmatprep.subr.mxu0 0.0
        %6609 = vmatpush1.msra.mxu0 %v6595
        %6610 = vmatprep.subr.mxu0 0.0
        %6611 = vmatpush1.msra.mxu0 %v6596
        %6612 = vmatprep.subr.mxu0 0.0
        %6613 = vmatpush1.msra.mxu0 %v6597
        %6614 = vmatprep.subr.mxu0 0.0
        %6615 = vmatpush1.msra.mxu0 %v6598
        %6616 = vmatprep.subr.mxu0 0.0
        %6617 = vmatpush1.msra.mxu0 0.0
        %6618 = vmatprep.subr.mxu0 0.0
        %6619 = vmatpush1.msra.mxu0 0.0
        %6620 = vmatprep.subr.mxu0 0.0
        %6621 = vmatpush1.msra.mxu0 0.0
        %6622 = vmatprep.subr.mxu0 0.0
        %6623 = vmatpush1.msra.mxu0 0.0
        %6624 = vmatprep.subr.mxu0 0.0
        %6625 = vmatpush1.msra.mxu0 0.0
        %6626 = vmatprep.subr.mxu0 0.0
        %6627 = vmatpush1.msra.mxu0 0.0
        %6628 = vmatprep.subr.mxu0 0.0
        %6629 = vmatpush1.msra.mxu0 0.0
        %6630 = vmatprep.subr.mxu0 0.0
        %6631 = vmatpush1.msra.mxu0 0.0
        %6632 = vmatprep.subr.mxu0 0.0
        %6633 = vmatpush1.msra.mxu0 0.0
        %6634 = vmatprep.subr.mxu0 0.0
        %6635 = vmatpush1.msra.mxu0 0.0
        %6636 = vmatprep.subr.mxu0 0.0
        %6637 = vmatpush1.msra.mxu0 0.0
        %6638 = vmatprep.subr.mxu0 0.0
        %6639 = vmatpush1.msra.mxu0 0.0
        %6640 = vmatprep.subr.mxu0 0.0
        %6641 = vmatpush1.msra.mxu0 0.0
        %6642 = vmatprep.subr.mxu0 0.0
        %6643 = vmatpush1.msra.mxu0 0.0
        %6644 = vmatprep.subr.mxu0 0.0
        %6645 = vmatpush1.msra.mxu0 0.0
        %6646 = vmatprep.subr.mxu0 0.0
        %6647 = vmatpush1.msra.mxu0 0.0
        %6648 = vmatprep.subr.mxu0 0.0
        %6649 = vmatpush1.msra.mxu0 0.0
        %6650 = vmatprep.subr.mxu0 0.0
        %6651 = vmatpush1.msra.mxu0 0.0
        %6652 = vmatprep.subr.mxu0 0.0
        %6653 = vmatpush1.msra.mxu0 0.0
        %6654 = vmatprep.subr.mxu0 0.0
        %6655 = vmatpush1.msra.mxu0 0.0
        %6656 = vmatprep.subr.mxu0 0.0
        %6657 = vmatpush1.msra.mxu0 0.0
        %6658 = vmatprep.subr.mxu0 0.0
        %6659 = vmatpush1.msra.mxu0 0.0
        %6660 = vmatprep.subr.mxu0 0.0
        %6661 = vmatpush1.msra.mxu0 0.0
        %6662 = vmatprep.subr.mxu0 0.0
        %6663 = vmatpush1.msra.mxu0 0.0
        %6664 = vmatprep.subr.mxu0 0.0
        %6665 = vmatpush1.msra.mxu0 0.0
        %6666 = vmatprep.subr.mxu0 0.0
        %6667 = vmatpush1.msra.mxu0 0.0
        %6668 = vmatprep.subr.mxu0 0.0
        %6669 = vmatpush1.msra.mxu0 0.0
        %6670 = vmatprep.subr.mxu0 0.0
        %6671 = vmatpush1.msra.mxu0 0.0
        %6672 = vmatprep.mubr.f32.mxu0 0.0
        %6673 = vmatmul.mubr.f32.gmra.mrb[0].mxu0 %v6606
        %v6674 = vpop.f32.mrb[0].mxu0
        %v6675 = vadd.f32 0.0, %v6674
        %v6676 = vpop.f32.mrb[0].mxu0
        %6677 = vdwg.mxu0
        %v6678 = vadd.f32 %v6593, %v6675
        %v6679 = vld [vmem:[%s5] sm:$0x1]
        %v6681 = vlaneseq
        %v6682 = vshrl.u32 %v6681, 7
        %v6683 = vsub.s32 0, %v6682
        %v6684 = vrot.slane %v6679, %v6683
        %v6686 = vadd.f32 %v6678, %v6684
        %v6687 = vmax.f32 %v6686, 0.0
        %v6688 = vld [vmem:[%s6] sm:$0x3]
        %v6689 = vld [vmem:[%s7] sm:$0x1]
        %v6691 = vlaneseq
        %v6692 = vshrl.u32 %v6691, 7
        %v6693 = vsub.s32 0, %v6692
        %v6694 = vrot.slane %v6689, %v6693
        %vm6696 = vcmask 15360
        %v6698 = vsel %vm6696, %v6687, 0
        %vm6700 = vcmask 1041408
        %v6702 = vsel %vm6700, %v6688, 0
        %6704 = vmatprep.subr.mxu0 0.0
        %6705 = vmatpush1.msra.mxu0 %v6702
        %6706 = vmatprep.subr.mxu0 0.0
        %6707 = vmatpush1.msra.mxu0 0.0
        %6708 = vmatprep.subr.mxu0 0.0
        %6709 = vmatpush1.msra.mxu0 0.0
        %6710 = vmatprep.subr.mxu0 0.0
        %6711 = vmatpush1.msra.mxu0 0.0
        %6712 = vmatprep.subr.mxu0 0.0
        %6713 = vmatpush1.msra.mxu0 0.0
        %6714 = vmatprep.subr.mxu0 0.0
        %6715 = vmatpush1.msra.mxu0 0.0
        %6716 = vmatprep.subr.mxu0 0.0
        %6717 = vmatpush1.msra.mxu0 0.0
        %6718 = vmatprep.subr.mxu0 0.0
        %6719 = vmatpush1.msra.mxu0 0.0
        %6720 = vmatprep.subr.mxu0 0.0
        %6721 = vmatpush1.msra.mxu0 0.0
        %6722 = vmatprep.subr.mxu0 0.0
        %6723 = vmatpush1.msra.mxu0 0.0
        %6724 = vmatprep.subr.mxu0 0.0
        %6725 = vmatpush1.msra.mxu0 0.0
        %6726 = vmatprep.subr.mxu0 0.0
        %6727 = vmatpush1.msra.mxu0 0.0
        %6728 = vmatprep.subr.mxu0 0.0
        %6729 = vmatpush1.msra.mxu0 0.0
        %6730 = vmatprep.subr.mxu0 0.0
        %6731 = vmatpush1.msra.mxu0 0.0
        %6732 = vmatprep.subr.mxu0 0.0
        %6733 = vmatpush1.msra.mxu0 0.0
        %6734 = vmatprep.subr.mxu0 0.0
        %6735 = vmatpush1.msra.mxu0 0.0
        %6736 = vmatprep.subr.mxu0 0.0
        %6737 = vmatpush1.msra.mxu0 0.0
        %6738 = vmatprep.subr.mxu0 0.0
        %6739 = vmatpush1.msra.mxu0 0.0
        %6740 = vmatprep.subr.mxu0 0.0
        %6741 = vmatpush1.msra.mxu0 0.0
        %6742 = vmatprep.subr.mxu0 0.0
        %6743 = vmatpush1.msra.mxu0 0.0
        %6744 = vmatprep.subr.mxu0 0.0
        %6745 = vmatpush1.msra.mxu0 0.0
        %6746 = vmatprep.subr.mxu0 0.0
        %6747 = vmatpush1.msra.mxu0 0.0
        %6748 = vmatprep.subr.mxu0 0.0
        %6749 = vmatpush1.msra.mxu0 0.0
        %6750 = vmatprep.subr.mxu0 0.0
        %6751 = vmatpush1.msra.mxu0 0.0
        %6752 = vmatprep.subr.mxu0 0.0
        %6753 = vmatpush1.msra.mxu0 0.0
        %6754 = vmatprep.subr.mxu0 0.0
        %6755 = vmatpush1.msra.mxu0 0.0
        %6756 = vmatprep.subr.mxu0 0.0
        %6757 = vmatpush1.msra.mxu0 0.0
        %6758 = vmatprep.subr.mxu0 0.0
        %6759 = vmatpush1.msra.mxu0 0.0
        %6760 = vmatprep.subr.mxu0 0.0
        %6761 = vmatpush1.msra.mxu0 0.0
        %6762 = vmatprep.subr.mxu0 0.0
        %6763 = vmatpush1.msra.mxu0 0.0
        %6764 = vmatprep.subr.mxu0 0.0
        %6765 = vmatpush1.msra.mxu0 0.0
        %6766 = vmatprep.subr.mxu0 0.0
        %6767 = vmatpush1.msra.mxu0 0.0
        %6768 = vmatprep.mubr.f32.mxu0 0.0
        %6769 = vmatmul.mubr.f32.gmra.mrb[0].mxu0 %v6698
        %v6770 = vpop.f32.mrb[0].mxu0
        %v6771 = vadd.f32 %v6694, %v6770
        %v6772 = vpop.f32.mrb[0].mxu0
        %6773 = vdwg.mxu0
        %v6774 = vand.u32 2147483647, %v6771
        %v6775 = vsub.f32 0.0, %v6774
        %v6776 = vmul.f32 %v6775, 1.442695
        %v6777 = vpow.pop %v6776
        %v6778 = vadd.f32 %v6777, 1.0
        %v6779 = vrcp.pop %v6778
        %vm6780 = vcmp.ge.f32.partialorder %v6771, 0.0
        %v6781 = vmul.f32 %v6777, %v6779
        %v6782 = vsel %vm6780, %v6779, %v6781
        %v6784 = vrot.slane %v6782, 1
        %v6786 = vmax.f32 %v6782, %v6784
        %v6787 = vrot.slane %v6782, 2
        %v6789 = vmax.f32 %v6786, %v6787
        %v6790 = vrot.slane %v6782, 3
        %v6792 = vmax.f32 %v6789, %v6790
        %v6793 = vsub.f32 %v6782, %v6792
        %v6794 = vmul.f32 %v6793, 1.442695
        %v6795 = vpow.pop %v6794
        %v6797 = vrot.slane %v6792, 7
        %v6799 = vsub.f32 %v6782, %v6797
        %v6800 = vmul.f32 %v6799, 1.442695
        %v6801 = vpow.pop %v6800
        %v6802 = vrot.slane %v6792, 6
        %v6804 = vsub.f32 %v6782, %v6802
        %v6805 = vmul.f32 %v6804, 1.442695
        %v6806 = vpow.pop %v6805
        %v6807 = vrot.slane %v6792, 5
        %v6809 = vsub.f32 %v6782, %v6807
        %v6810 = vmul.f32 %v6809, 1.442695
        %v6811 = vpow.pop %v6810
        %v6813 = vrot.slane %v6801, 1
        %v6815 = vadd.f32 %v6795, %v6813
        %v6817 = vrot.slane %v6806, 2
        %v6819 = vadd.f32 %v6815, %v6817
        %v6821 = vrot.slane %v6811, 3
        %v6823 = vadd.f32 %v6819, %v6821
        %v6824 = vrcp.pop %v6823
        %v6825 = vmul.f32 %v6795, %v6824
        %v6827 = vrot.slane %v6824, 7
        %v6829 = vmul.f32 %v6801, %v6827
        %v6830 = vrot.slane %v6824, 6
        %v6832 = vmul.f32 %v6806, %v6830
        %v6833 = vrot.slane %v6824, 5
        %v6835 = vmul.f32 %v6811, %v6833
        %v6837 = vrot.slane %v6829, 1
        %6838 = vrot.lane.b32.xlu0 %v6837, 32
        %v6839 = vpop.permute.xlu0 %6838
        %v6842 = vrot.slane %v6832, 2
        %6843 = vrot.lane.b32.xlu0 %v6842, 64
        %v6844 = vpop.permute.xlu0 %6843
        %v6847 = vrot.slane %v6835, 3
        %6848 = vrot.lane.b32.xlu0 %v6847, 96
        %v6849 = vpop.permute.xlu0 %6848
        %v6851 = vsel %vm580, %v6825, %v6839
        %v6852 = vsel %vm1725, %v6851, %v6844
        %vm6853 = vcmask 785408
        %v6854 = vsel %vm6853, %v6852, %v6849
        %v6855 = vld [vmem:[%s298] sm:$0xff]
        %v6856 = vld [vmem:[%s298 + $0x8] sm:$0xff]
        %v6857 = vld [vmem:[%s298 + $0x10] sm:$0xff]
        %v6858 = vld [vmem:[%s298 + $0x18] sm:$0xff]
        %v6859 = vld [vmem:[%s298 + $0x20] sm:$0xff]
        %v6860 = vld [vmem:[%s298 + $0x28] sm:$0xff]
        %v6861 = vld [vmem:[%s298 + $0x30] sm:$0xff]
        %v6862 = vld [vmem:[%s298 + $0x38] sm:$0xff]
        %v6863 = vlaneseq
        %v6864 = vshrl.u32 %v6863, 7
        %v6865 = vsub.s32 0, %v6864
        %v6866 = vrot.slane %v6854, %v6865
        %v6867 = vmul.f32 %v6855, %v6866
        %v6868 = vmul.f32 %v6856, %v6866
        %v6869 = vmul.f32 %v6857, %v6866
        %v6870 = vmul.f32 %v6858, %v6866
        %v6871 = vmul.f32 %v6859, %v6866
        %v6872 = vmul.f32 %v6860, %v6866
        %v6873 = vmul.f32 %v6861, %v6866
        %v6874 = vmul.f32 %v6862, %v6866
        %6875 = vst [vmem:[%s298] sm:$0xff] %v6867
        %6876 = vst [vmem:[%s298 + $0x8] sm:$0xff] %v6868
        %6877 = vst [vmem:[%s298 + $0x10] sm:$0xff] %v6869
        %6878 = vst [vmem:[%s298 + $0x18] sm:$0xff] %v6870
        %6879 = vst [vmem:[%s298 + $0x20] sm:$0xff] %v6871
        %6880 = vst [vmem:[%s298 + $0x28] sm:$0xff] %v6872
        %6881 = vst [vmem:[%s298 + $0x30] sm:$0xff] %v6873
        %6882 = vst [vmem:[%s298 + $0x38] sm:$0xff] %v6874
        %s6883 = sand.u32 %s203, 1
        %s6884 = scalar_lea.sflag [#allocation6], %s6883
        %s6885 = sand.u32 %s203, 1
        %s6886 = smul.addr %s6885, 64
        %s6887 = scalar_lea.vmem [#allocation5], %s6886
        // Predicated region
        $region53: #{tpu_custom_call.1} parent=51 // pred_check
          %p6888 = pneg %p213
        $region54: #{tpu_custom_call.1} parent=51 // pred_check_branch
          %6890 = sbr.rel (%p6888) target = $region56
        $region55: #{tpu_custom_call.1} parent=51 // pred_region
          %s6892 = ssub.s32 1024, 1024
          %6893 = vsyncadd %s6884, %s6892
          %s6894 = smul.addr %s22, 8
          %s6895 = smul.addr %s6894, 128
          %s6896 = scalar_lea.hbm %s8, %s6895
          %s6897 = sshll.u32 %s6887, 4
          %s6898 = int_to_ptr.vmem [resolvable:$true] %s6897
          %6903 = dma.vmem_to_hbm [thread:$0]  %s6898, 1024, %s6896, %s6884, 128, 128, 8
        $region56: #{tpu_custom_call.1} parent=51 // pred_fallthru
          _
      $region52: #{tpu_custom_call.1} parent=5 // pred_fallthru
        _
      %p6904 = scmp.le.s32.totalorder 2, %s17
      // Predicated region
      $region57: #{tpu_custom_call.1} parent=5 // pred_check
        %p6905 = pneg %p6904
      $region58: #{tpu_custom_call.1} parent=5 // pred_check_branch
        %6907 = sbr.rel (%p6905) target = $region60
      $region59: #{tpu_custom_call.1} parent=5 // pred_region
        %s6908 = ssub.s32 %s17, 2
        // Predicated region
        $region61: #{tpu_custom_call.1} parent=59 // pred_check
          %p6909 = pneg %p219
        $region62: #{tpu_custom_call.1} parent=59 // pred_check_branch
          %6911 = sbr.rel (%p6909) target = $region64
        $region63: #{tpu_custom_call.1} parent=59 // pred_region
          %s6912 = sand.u32 %s204, 1
          %s6913 = scalar_lea.sflag [#allocation6], %s6912
          %s6914 = sand.u32 %s204, 1
          %s6915 = smul.addr %s6914, 64
          %s6916 = scalar_lea.vmem [#allocation5], %s6915
          %6917 = dma.done %s6913, 1024
        $region64: #{tpu_custom_call.1} parent=59 // pred_fallthru
          _
      $region60: #{tpu_custom_call.1} parent=5 // pred_fallthru
        _
    $region6: #{tpu_custom_call.1} parent=1 // loop_footer
      %s21 = sadd.s32 1, %s17
    $region7: #{tpu_custom_call.1} parent=1 // loop_footer_branch
      %16 = sbr.rel target = $region3
    $region8: #{tpu_custom_call.1} parent=1 // loop_exit
      _
    %6918 = vsyncpa [#allocation6], 1
    %s6919 = scalar_lea.sflag [#allocation6], 1
    %6920 = vsyncpa %s6919, 1

</llo_original>
